<compile_context>
chip_gen: v7x
topology: tpu7x:2x2x1
jax: 0.10.0
libtpu: 0.0.40
codegen_flags: <defaults>
</compile_context>

<pallas_src>
import functools
import math

import jax
import jax.numpy as jnp
from jax.experimental import pallas as pl
from jax.experimental.pallas import tpu as pltpu


_VMEM_LIMIT = 32 * 1024 * 1024   # safe on v5e/v6e (128 MiB) and v7x (64 MiB phys)
_PAR = pltpu.CompilerParams(dimension_semantics=("parallel",),
                            vmem_limit_bytes=_VMEM_LIMIT)
_SEQ = pltpu.CompilerParams(dimension_semantics=("arbitrary",),
                            vmem_limit_bytes=_VMEM_LIMIT)


# ----------------------------- in-kernel helpers -----------------------------

def _elu(x):
    return jnp.where(x > 0, x, jnp.exp(jnp.minimum(x, 0.0)) - 1.0)


def _sigmoid(x):
    # numerically stable: never exponentiates a positive argument
    z = jnp.exp(-jnp.abs(x))
    return jnp.where(x >= 0, 1.0 / (1.0 + z), z / (1.0 + z))


def _mxu(a_f32, w_bf16):
    # activations cast to bf16 at the MXU input; weights already arrive bf16;
    # fp32 accumulation.
    return jnp.dot(a_f32.astype(jnp.bfloat16), w_bf16,
                   preferred_element_type=jnp.float32)


# ------------------------- fused GAT + norm (+score) -------------------------

def _gat_norm_body(x_ref, adj_ref, w_ref, asrc_ref, adst_ref, bias_ref,
                   g_ref, bt_ref, pw_ref, o_ref, s_ref, gat_sc,
                   heads, out_ch, concat, eps):
    """One graph: GATConv (project / dense masked attention softmax with
    multiplicities + self-loops / aggregate / bias) fused with ELU +
    InstanceNorm(affine) and optionally the TopKPooling sigmoid gate score."""
    x = x_ref[0]                                             # (n, Cin) fp32
    n = x.shape[0]
    h = _mxu(x, w_ref[...])                                  # (n, H*Cout) on MXU

    adj = adj_ref[0].astype(jnp.float32)                     # (n, n) edge counts j->i
    row = jax.lax.broadcasted_iota(jnp.int32, (n, n), 0)
    col = jax.lax.broadcasted_iota(jnp.int32, (n, n), 1)
    eye = (row == col).astype(jnp.float32)
    cnt = adj * (1.0 - eye) + eye                            # remove self-loops, add one

    asrc = asrc_ref[...]                                     # (H, Cout) fp32
    adst = adst_ref[...]
    for hd in range(heads):
        hh = h[:, hd * out_ch:(hd + 1) * out_ch]             # (n, Cout)
        a_s = jnp.sum(hh * asrc[hd:hd + 1, :], axis=-1, keepdims=True)   # (n, 1)
        a_d = jnp.sum(hh * adst[hd:hd + 1, :], axis=-1, keepdims=True)   # (n, 1)
        alpha = a_d + jnp.transpose(a_s)                     # alpha[i,j]=a_dst[i]+a_src[j]
        alpha = jnp.where(alpha >= 0, alpha, 0.2 * alpha)    # leaky_relu(0.2)
        logits = jnp.where(cnt > 0, alpha, -1e30)
        m = jnp.max(logits, axis=1, keepdims=True)
        ex = jnp.exp(logits - m) * cnt                       # multiplicity-weighted
        den = jnp.sum(ex, axis=1, keepdims=True)             # >= 1 (self-loop)
        coef = ex * pl.reciprocal(den, approx=True)          # EUP, not VALU divide
        agg = jnp.dot(coef.astype(jnp.bfloat16), hh.astype(jnp.bfloat16),
                      preferred_element_type=jnp.float32)    # (n, Cout) on MXU
        # write each head directly into its slab slice (no concatenate relayout)
        if concat:
            gat_sc[:, hd * out_ch:(hd + 1) * out_ch] = agg
        elif hd == 0:
            gat_sc[...] = agg
        else:
            gat_sc[...] += agg

    y = gat_sc[...]
    if not concat:
        y = y * (1.0 / float(heads))                         # mean over heads
    y = y + bias_ref[...]

    # fused ELU + per-graph InstanceNorm (biased variance, affine)
    y = _elu(y)
    mean = jnp.mean(y, axis=0, keepdims=True)
    yc = y - mean
    var = jnp.mean(yc * yc, axis=0, keepdims=True)
    y = yc * jax.lax.rsqrt(var + eps) * g_ref[...] + bt_ref[...]
    o_ref[0] = y

    if s_ref is not None:
        # TopKPooling gate: sigmoid(y @ w/||w||) as a VPU lane reduction,
        # stored lane-dense as a (1, n) row.
        s = jnp.sum(y * pw_ref[...], axis=-1, keepdims=True)  # (n, 1)
        s_ref[0] = jnp.transpose(_sigmoid(s))                  # (1, n)


def _gat_norm_kernel(x_ref, adj_ref, w_ref, asrc_ref, adst_ref, bias_ref,
                     g_ref, bt_ref, o_ref, gat_sc, *, heads, out_ch, concat, eps):
    _gat_norm_body(x_ref, adj_ref, w_ref, asrc_ref, adst_ref, bias_ref,
                   g_ref, bt_ref, None, o_ref, None, gat_sc,
                   heads, out_ch, concat, eps)


def _gat_norm_score_kernel(x_ref, adj_ref, w_ref, asrc_ref, adst_ref, bias_ref,
                           g_ref, bt_ref, pw_ref, o_ref, s_ref, gat_sc,
                           *, heads, out_ch, concat, eps):
    _gat_norm_body(x_ref, adj_ref, w_ref, asrc_ref, adst_ref, bias_ref,
                   g_ref, bt_ref, pw_ref, o_ref, s_ref, gat_sc,
                   heads, out_ch, concat, eps)


def gat_norm_pallas(x, adj, p, gamma, beta, *, heads, out_ch, concat,
                    pool_w=None, eps=1e-5):
    """Fused GATConv + ELU + InstanceNorm (+ optional TopK gate score)."""
    B, n, cin = x.shape
    out_dim = heads * out_ch if concat else out_ch

    W = p["W"].astype(jnp.float32)
    if W.shape[0] != cin:                                    # conv1: K padded 3 -> 8
        W = jnp.pad(W, ((0, cin - W.shape[0]), (0, 0)))
    W = W.astype(jnp.bfloat16)                               # weights travel bf16
    bias = p["bias"].reshape(1, out_dim).astype(jnp.float32)
    g = gamma.reshape(1, out_dim).astype(jnp.float32)
    bt = beta.reshape(1, out_dim).astype(jnp.float32)

    in_specs = [
        pl.BlockSpec((1, n, cin), lambda b: (b, 0, 0)),
        pl.BlockSpec((1, n, n), lambda b: (b, 0, 0)),
        pl.BlockSpec((cin, heads * out_ch), lambda b: (0, 0)),
        pl.BlockSpec((heads, out_ch), lambda b: (0, 0)),
        pl.BlockSpec((heads, out_ch), lambda b: (0, 0)),
        pl.BlockSpec((1, out_dim), lambda b: (0, 0)),
        pl.BlockSpec((1, out_dim), lambda b: (0, 0)),
        pl.BlockSpec((1, out_dim), lambda b: (0, 0)),
    ]
    args = [x.astype(jnp.float32), adj, W,
            p["att_src"].astype(jnp.float32), p["att_dst"].astype(jnp.float32),
            bias, g, bt]
    scratch = [pltpu.VMEM((n, out_dim), jnp.float32)]

    if pool_w is None:
        out = pl.pallas_call(
            functools.partial(_gat_norm_kernel, heads=heads, out_ch=out_ch,
                              concat=concat, eps=eps),
            grid=(B,),
            in_specs=in_specs,
            out_specs=pl.BlockSpec((1, n, out_dim), lambda b: (b, 0, 0)),
            out_shape=jax.ShapeDtypeStruct((B, n, out_dim), jnp.float32),
            scratch_shapes=scratch,
            compiler_params=_PAR,
        )(*args)
        return out, None

    w_unit = (pool_w / jnp.linalg.norm(pool_w)).reshape(1, out_dim).astype(jnp.float32)
    in_specs = in_specs + [pl.BlockSpec((1, out_dim), lambda b: (0, 0))]
    args = args + [w_unit]
    out, score = pl.pallas_call(
        functools.partial(_gat_norm_score_kernel, heads=heads, out_ch=out_ch,
                          concat=concat, eps=eps),
        grid=(B,),
        in_specs=in_specs,
        out_specs=[pl.BlockSpec((1, n, out_dim), lambda b: (b, 0, 0)),
                   pl.BlockSpec((1, 1, n), lambda b: (b, 0, 0))],
        out_shape=(jax.ShapeDtypeStruct((B, n, out_dim), jnp.float32),
                   jax.ShapeDtypeStruct((B, 1, n), jnp.float32)),
        scratch_shapes=scratch,
        compiler_params=_PAR,
    )(*args)
    return out, score.reshape(B, n)


# ------------------- fused GlobalAttention + classifier head -----------------

def _att_head_kernel(x_ref, w1_ref, b1_ref, w2_ref, b2_ref, w3_ref, b3_ref,
                     wn_ref, bn_ref, l1w_ref, l1b_ref, l2w_ref, l2b_ref,
                     l3w_ref, l3b_ref, o_ref, pooled_sc, *, B):
    """All graphs in one block: gate MLP (512->256->128->1), att_net, per-graph
    softmax pooling (VPU mul + sublane reduce, no M=1 matmul), then the
    lin1/lin2/lin3 head with log_softmax."""
    for b in range(B):                                       # static unroll, B is tiny
        xb = x_ref[b]                                        # (n, 512)
        g = _elu(_mxu(xb, w1_ref[...]) + b1_ref[...])        # (n, 256)
        g = _elu(_mxu(g, w2_ref[...]) + b2_ref[...])         # (n, 128)
        # final 128 -> 1 projection as a VPU lane reduction (no 1-wide matmul)
        gate = jnp.sum(g * w3_ref[...], axis=-1, keepdims=True) + b3_ref[...]  # (n, 1)
        h = _elu(_mxu(xb, wn_ref[...]) + bn_ref[...])        # (n, 512)
        m = jnp.max(gate, axis=0, keepdims=True)
        e = jnp.exp(gate - m)
        wt = e * pl.reciprocal(jnp.sum(e, axis=0, keepdims=True), approx=True)
        # weighted pooling: elementwise multiply + cross-sublane reduce (no MXU,
        # no transpose, stays fp32)
        pooled_sc[b:b + 1, :] = jnp.sum(wt * h, axis=0, keepdims=True)

    p = pooled_sc[...]                                       # (B, 512)
    # TODO(synk): F.dropout(p=0.5, training=True) not implemented; inference
    # semantics (identity) used for all three dropout calls.
    y = _elu(_mxu(p, l1w_ref[...]) + l1b_ref[...])
    y = _elu(_mxu(y, l2w_ref[...]) + l2b_ref[...])
    z = _mxu(y, l3w_ref[...]) + l3b_ref[...]
    z = z - jnp.max(z, axis=1, keepdims=True)
    o_ref[...] = z - jnp.log(jnp.sum(jnp.exp(z), axis=1, keepdims=True))


def attention_head_pallas(x, p_w1, p_w2, p_w3, p_net, p_l1, p_l2, p_l3):
    B, n, D = x.shape
    w1, b1 = p_w1
    w2, b2 = p_w2
    w3, b3 = p_w3
    wn, bn = p_net
    l1w, l1b = p_l1
    l2w, l2b = p_l2
    l3w, l3b = p_l3
    d1, d2 = w1.shape[1], w2.shape[1]
    h1, h2, nc = l1w.shape[1], l2w.shape[1], l3w.shape[1]
    return pl.pallas_call(
        functools.partial(_att_head_kernel, B=B),
        grid=(1,),
        in_specs=[
            pl.BlockSpec((B, n, D), lambda i: (0, 0, 0)),
            pl.BlockSpec((D, d1), lambda i: (0, 0)),
            pl.BlockSpec((1, d1), lambda i: (0, 0)),
            pl.BlockSpec((d1, d2), lambda i: (0, 0)),
            pl.BlockSpec((1, d2), lambda i: (0, 0)),
            pl.BlockSpec((1, d2), lambda i: (0, 0)),         # w3 as lane-dense row
            pl.BlockSpec((1, 1), lambda i: (0, 0)),          # b3
            pl.BlockSpec((D, D), lambda i: (0, 0)),
            pl.BlockSpec((1, D), lambda i: (0, 0)),
            pl.BlockSpec((D, h1), lambda i: (0, 0)),
            pl.BlockSpec((1, h1), lambda i: (0, 0)),
            pl.BlockSpec((h1, h2), lambda i: (0, 0)),
            pl.BlockSpec((1, h2), lambda i: (0, 0)),
            pl.BlockSpec((h2, nc), lambda i: (0, 0)),
            pl.BlockSpec((1, nc), lambda i: (0, 0)),
        ],
        out_specs=pl.BlockSpec((B, nc), lambda i: (0, 0)),
        out_shape=jax.ShapeDtypeStruct((B, nc), jnp.float32),
        scratch_shapes=[pltpu.VMEM((B, D), jnp.float32)],
        compiler_params=_SEQ,
    )(x,
      w1.astype(jnp.bfloat16), b1.reshape(1, d1).astype(jnp.float32),
      w2.astype(jnp.bfloat16), b2.reshape(1, d2).astype(jnp.float32),
      w3.reshape(1, d2).astype(jnp.float32), b3.reshape(1, 1).astype(jnp.float32),
      wn.astype(jnp.bfloat16), bn.reshape(1, D).astype(jnp.float32),
      l1w.astype(jnp.bfloat16), l1b.reshape(1, h1).astype(jnp.float32),
      l2w.astype(jnp.bfloat16), l2b.reshape(1, h2).astype(jnp.float32),
      l3w.astype(jnp.bfloat16), l3b.reshape(1, nc).astype(jnp.float32))


# --------------------------- JAX glue (graph ops) ---------------------------

def build_adjacency(edge_index, B, n):
    """Dense per-graph adjacency multiplicity: adj[b, i, j] = #edges j -> i.
    Stored bf16 (small-integer counts are exact) to halve DMA / VMEM bytes."""
    src, dst = edge_index[0], edge_index[1]
    g = dst // n
    adj = jnp.zeros((B, n, n), jnp.float32)
    adj = adj.at[g, dst % n, src % n].add(1.0)
    return adj.astype(jnp.bfloat16)


def topk_pool_dense(x, adj, score, ratio=0.3):
    """PyG TopKPooling on the dense layout: keep top-k scored nodes per graph,
    scale kept features by their sigmoid score, slice the adjacency."""
    B, n, _ = x.shape
    k = math.ceil(ratio * n)
    vals, idx = jax.lax.top_k(score, k)                                  # (B, k)
    x_new = jnp.take_along_axis(x, idx[:, :, None], axis=1) * vals[:, :, None]
    adj_rows = jnp.take_along_axis(adj, idx[:, :, None], axis=1)
    adj_new = jnp.take_along_axis(adj_rows, idx[:, None, :], axis=2)
    return x_new, adj_new, k


# ------------------------------- parameters ---------------------------------

def _init_linear(key, fi, fo):
    k1, k2 = jax.random.split(key)
    bd = 1.0 / math.sqrt(fi)
    W = jax.random.uniform(k1, (fi, fo), minval=-bd, maxval=bd, dtype=jnp.float32)
    b = jax.random.uniform(k2, (fo,), minval=-bd, maxval=bd, dtype=jnp.float32)
    return W, b


def _init_gat(key, in_ch, out_ch, heads, concat):
    k1, k2, k3 = jax.random.split(key, 3)
    s = math.sqrt(6.0 / (in_ch + heads * out_ch))
    sa = math.sqrt(6.0 / (out_ch + 1))
    return dict(
        W=jax.random.uniform(k1, (in_ch, heads * out_ch), minval=-s, maxval=s,
                             dtype=jnp.float32),
        att_src=jax.random.uniform(k2, (heads, out_ch), minval=-sa, maxval=sa,
                                   dtype=jnp.float32),
        att_dst=jax.random.uniform(k3, (heads, out_ch), minval=-sa, maxval=sa,
                                   dtype=jnp.float32),
        bias=jnp.zeros((heads * out_ch if concat else out_ch,), jnp.float32),
    )


def init_params(key, num_classes):
    ks = jax.random.split(key, 12)
    return dict(
        conv1=_init_gat(ks[0], 3, 32, 2, True),
        norm1=dict(w=jnp.ones((64,), jnp.float32), b=jnp.zeros((64,), jnp.float32)),
        pool1=dict(w=jax.random.uniform(ks[1], (64,), minval=-0.125, maxval=0.125,
                                        dtype=jnp.float32)),
        conv2=_init_gat(ks[2], 64, 128, 2, True),
        norm2=dict(w=jnp.ones((256,), jnp.float32), b=jnp.zeros((256,), jnp.float32)),
        pool2=dict(w=jax.random.uniform(ks[3], (256,), minval=-0.0625, maxval=0.0625,
                                        dtype=jnp.float32)),
        conv3=_init_gat(ks[4], 256, 512, 2, False),
        norm3=dict(w=jnp.ones((512,), jnp.float32), b=jnp.zeros((512,), jnp.float32)),
        att_w1=_init_linear(ks[5], 512, 256),
        att_w2=_init_linear(ks[6], 256, 128),
        att_w3=_init_linear(ks[7], 128, 1),
        att_net=_init_linear(ks[8], 512, 512),
        lin1=_init_linear(ks[9], 512, 512),
        lin2=_init_linear(ks[10], 512, 256),
        lin3=_init_linear(ks[11], 256, num_classes),
    )


# ------------------------------ forward pass --------------------------------

def poolnet_forward(params, pos, edge_index, B, n0):
    # dense per-graph views; pad conv1's K=3 input to 8 once (MXU-friendly)
    x = pos.reshape(B, n0, 3).astype(jnp.float32)
    x = jnp.pad(x, ((0, 0), (0, 0), (0, 8 - x.shape[-1])))
    adj = build_adjacency(edge_index, B, n0)

    # conv1 + elu + norm1 + pool1 gate score (one fused kernel), then top-k glue
    x, score = gat_norm_pallas(x, adj, params["conv1"], params["norm1"]["w"],
                               params["norm1"]["b"], heads=2, out_ch=32,
                               concat=True, pool_w=params["pool1"]["w"])
    x, adj, _ = topk_pool_dense(x, adj, score, ratio=0.3)

    # conv2 + elu + norm2 + pool2 gate score
    x, score = gat_norm_pallas(x, adj, params["conv2"], params["norm2"]["w"],
                               params["norm2"]["b"], heads=2, out_ch=128,
                               concat=True, pool_w=params["pool2"]["w"])
    x, adj, _ = topk_pool_dense(x, adj, score, ratio=0.3)

    # conv3 + elu + norm3
    x, _ = gat_norm_pallas(x, adj, params["conv3"], params["norm3"]["w"],
                           params["norm3"]["b"], heads=2, out_ch=512, concat=False)

    # GlobalAttention pooling + lin1/lin2/lin3 + log_softmax (one fused kernel)
    return attention_head_pallas(x, params["att_w1"], params["att_w2"],
                                 params["att_w3"], params["att_net"],
                                 params["lin1"], params["lin2"], params["lin3"])


# ---------------------------------- main -------------------------------------

if __name__ == "__main__":
    key = jax.random.PRNGKey(0)
    kp, kx, ks, kd = jax.random.split(key, 4)

    num_classes = 10
    B, n0, e_per_graph = 2, 16, 48          # 2 graphs, 16 nodes each, 48 edges each

    params = init_params(kp, num_classes)
    pos = jax.random.normal(kx, (B * n0, 3), dtype=jnp.float32)      # data.pos
    src = jax.random.randint(ks, (B, e_per_graph), 0, n0) + jnp.arange(B)[:, None] * n0
    dst = jax.random.randint(kd, (B, e_per_graph), 0, n0) + jnp.arange(B)[:, None] * n0
    edge_index = jnp.stack([src.reshape(-1), dst.reshape(-1)]).astype(jnp.int32)

    fwd = jax.jit(poolnet_forward, static_argnums=(3, 4))
    out = fwd(params, pos, edge_index, B, n0)
    out = jax.block_until_ready(out)

    assert out.shape == (B, num_classes)
    assert bool(jnp.all(jnp.isfinite(out)))
    # rows of log_softmax should exp-sum to 1
    assert bool(jnp.all(jnp.abs(jnp.sum(jnp.exp(out), axis=1) - 1.0) < 1e-4))
    print("KERNEL_OK")
</pallas_src>

<mosaic_0001>
module attributes {stable_mosaic.version = 11 : i64} {
  func.func private @main(%arg0: i32) attributes {dimension_semantics = [#tpu.dimension_semantics<core_parallel>], iteration_bounds = array<i64: 2>, tpu.core_type = #tpu.core_type<sc_scalar_subcore>, window_params = []} {
    return
  }
}

module attributes {stable_mosaic.version = 11 : i64} {
  func.func private @main(%arg0: i32) attributes {dimension_semantics = [#tpu.dimension_semantics<core_parallel>], iteration_bounds = array<i64: 2>, tpu.core_type = #tpu.core_type<sc_scalar_subcore>, window_params = []} {
    return
  }
}

module attributes {stable_mosaic.version = 11 : i64} {
  func.func @_gat_norm_score_kernel(%arg0: i32, %arg1: memref<1x16x8xf32, #tpu.memory_space<vmem>>, %arg2: memref<1x16x16xbf16, #tpu.memory_space<vmem>>, %arg3: memref<8x64xbf16, #tpu.memory_space<vmem>>, %arg4: memref<2x32xf32, #tpu.memory_space<vmem>>, %arg5: memref<2x32xf32, #tpu.memory_space<vmem>>, %arg6: memref<1x64xf32, #tpu.memory_space<vmem>>, %arg7: memref<1x64xf32, #tpu.memory_space<vmem>>, %arg8: memref<1x64xf32, #tpu.memory_space<vmem>>, %arg9: memref<1x64xf32, #tpu.memory_space<vmem>>, %arg10: memref<1x16x64xf32, #tpu.memory_space<vmem>>, %arg11: memref<1x1x16xf32, #tpu.memory_space<vmem>>, %arg12: memref<16x64xf32, #tpu.memory_space<vmem>>) attributes {dimension_semantics = [#tpu.dimension_semantics<parallel>], iteration_bounds = array<i64: 2>, scalar_prefetch = 0 : i64, scratch_operands = 1 : i64, tpu.core_type = #tpu.core_type<tc>, window_params = [{transform_indices = @transform_0, window_bounds = array<i64: 1, 16, 8>}, {transform_indices = @transform_1, window_bounds = array<i64: 1, 16, 16>}, {pipeline_mode = #tpu.pipeline_mode<synchronous>, transform_indices = @transform_2, window_bounds = array<i64: 8, 64>}, {pipeline_mode = #tpu.pipeline_mode<synchronous>, transform_indices = @transform_3, window_bounds = array<i64: 2, 32>}, {pipeline_mode = #tpu.pipeline_mode<synchronous>, transform_indices = @transform_4, window_bounds = array<i64: 2, 32>}, {pipeline_mode = #tpu.pipeline_mode<synchronous>, transform_indices = @transform_5, window_bounds = array<i64: 1, 64>}, {pipeline_mode = #tpu.pipeline_mode<synchronous>, transform_indices = @transform_6, window_bounds = array<i64: 1, 64>}, {pipeline_mode = #tpu.pipeline_mode<synchronous>, transform_indices = @transform_7, window_bounds = array<i64: 1, 64>}, {pipeline_mode = #tpu.pipeline_mode<synchronous>, transform_indices = @transform_8, window_bounds = array<i64: 1, 64>}, {transform_indices = @transform_9, window_bounds = array<i64: 1, 16, 64>}, {transform_indices = @transform_10, window_bounds = array<i64: 1, 1, 16>}]} {
    %c0 = arith.constant 0 : index
    %c0_0 = arith.constant 0 : index
    %c0_1 = arith.constant 0 : index
    %0 = vector.load %arg1[%c0, %c0_0, %c0_1] : memref<1x16x8xf32, #tpu.memory_space<vmem>>, vector<1x16x8xf32>
    %1 = vector.shape_cast %0 : vector<1x16x8xf32> to vector<16x8xf32>
    %c0_2 = arith.constant 0 : index
    %c0_3 = arith.constant 0 : index
    %2 = vector.load %arg3[%c0_2, %c0_3] : memref<8x64xbf16, #tpu.memory_space<vmem>>, vector<8x64xbf16>
    %3 = arith.truncf %1 : vector<16x8xf32> to vector<16x8xbf16>
    %cst = arith.constant dense<0.000000e+00> : vector<16x64xf32>
    %4 = tpu.matmul %3, %2, %cst {dimension_numbers = #tpu.dot_dimension_numbers<[1], [0], [0], [1], [0, 0, 1, 1], [], []>} : vector<16x8xbf16>, vector<8x64xbf16>, vector<16x64xf32> -> vector<16x64xf32>
    %c0_4 = arith.constant 0 : index
    %c0_5 = arith.constant 0 : index
    %c0_6 = arith.constant 0 : index
    %5 = vector.load %arg2[%c0_4, %c0_5, %c0_6] : memref<1x16x16xbf16, #tpu.memory_space<vmem>>, vector<1x16x16xbf16>
    %6 = vector.shape_cast %5 : vector<1x16x16xbf16> to vector<16x16xbf16>
    %7 = arith.extf %6 : vector<16x16xbf16> to vector<16x16xf32>
    %8 = tpu.iota {dimensions = array<i32: 0>} : vector<16x16xi32>
    %9 = tpu.iota {dimensions = array<i32: 1>} : vector<16x16xi32>
    %10 = arith.cmpi eq, %8, %9 : vector<16x16xi32>
    %11 = arith.extui %10 : vector<16x16xi1> to vector<16x16xi32>
    %12 = arith.sitofp %11 : vector<16x16xi32> to vector<16x16xf32>
    %cst_7 = arith.constant 1.000000e+00 : f32
    %13 = vector.broadcast %cst_7 : f32 to vector<16x16xf32>
    %14 = arith.subf %13, %12 : vector<16x16xf32>
    %15 = arith.mulf %7, %14 : vector<16x16xf32>
    %16 = arith.addf %15, %12 : vector<16x16xf32>
    %c0_8 = arith.constant 0 : index
    %c0_9 = arith.constant 0 : index
    %17 = vector.load %arg4[%c0_8, %c0_9] : memref<2x32xf32, #tpu.memory_space<vmem>>, vector<2x32xf32>
    %c0_10 = arith.constant 0 : index
    %c0_11 = arith.constant 0 : index
    %18 = vector.load %arg5[%c0_10, %c0_11] : memref<2x32xf32, #tpu.memory_space<vmem>>, vector<2x32xf32>
    %19 = vector.extract_strided_slice %4 {offsets = [0, 0], sizes = [16, 32], strides = [1, 1]} : vector<16x64xf32> to vector<16x32xf32>
    %20 = vector.extract_strided_slice %17 {offsets = [0, 0], sizes = [1, 32], strides = [1, 1]} : vector<2x32xf32> to vector<1x32xf32>
    %21 = vector.broadcast %20 : vector<1x32xf32> to vector<16x32xf32>
    %22 = arith.mulf %19, %21 : vector<16x32xf32>
    %cst_12 = arith.constant dense<0.000000e+00> : vector<16xf32>
    %23 = vector.multi_reduction <add>, %22, %cst_12 [1] : vector<16x32xf32> to vector<16xf32>
    %24 = vector.shape_cast %23 : vector<16xf32> to vector<16x1xf32>
    %25 = vector.extract_strided_slice %18 {offsets = [0, 0], sizes = [1, 32], strides = [1, 1]} : vector<2x32xf32> to vector<1x32xf32>
    %26 = vector.broadcast %25 : vector<1x32xf32> to vector<16x32xf32>
    %27 = arith.mulf %19, %26 : vector<16x32xf32>
    %cst_13 = arith.constant dense<0.000000e+00> : vector<16xf32>
    %28 = vector.multi_reduction <add>, %27, %cst_13 [1] : vector<16x32xf32> to vector<16xf32>
    %29 = vector.shape_cast %28 : vector<16xf32> to vector<16x1xf32>
    %30 = tpu.transpose %24, [1, 0] : vector<16x1xf32> -> vector<1x16xf32>
    %31 = vector.broadcast %29 : vector<16x1xf32> to vector<16x16xf32>
    %32 = vector.broadcast %30 : vector<1x16xf32> to vector<16x16xf32>
    %33 = arith.addf %31, %32 : vector<16x16xf32>
    %cst_14 = arith.constant 0.000000e+00 : f32
    %34 = vector.broadcast %cst_14 : f32 to vector<16x16xf32>
    %35 = arith.cmpf oge, %33, %34 : vector<16x16xf32>
    %cst_15 = arith.constant 2.000000e-01 : f32
    %36 = vector.broadcast %cst_15 : f32 to vector<16x16xf32>
    %37 = arith.mulf %36, %33 : vector<16x16xf32>
    %38 = arith.select %35, %33, %37 : vector<16x16xi1>, vector<16x16xf32>
    %cst_16 = arith.constant 0.000000e+00 : f32
    %39 = vector.broadcast %cst_16 : f32 to vector<16x16xf32>
    %40 = arith.cmpf ogt, %16, %39 : vector<16x16xf32>
    %cst_17 = arith.constant -1.000000e+30 : f32
    %41 = vector.broadcast %cst_17 : f32 to vector<16x16xf32>
    %42 = arith.select %40, %38, %41 : vector<16x16xi1>, vector<16x16xf32>
    %cst_18 = arith.constant dense<0xFF800000> : vector<16xf32>
    %43 = vector.multi_reduction <maximumf>, %42, %cst_18 [1] : vector<16x16xf32> to vector<16xf32>
    %44 = vector.shape_cast %43 : vector<16xf32> to vector<16x1xf32>
    %45 = vector.broadcast %44 : vector<16x1xf32> to vector<16x16xf32>
    %46 = arith.subf %42, %45 : vector<16x16xf32>
    %47 = math.exp %46 : vector<16x16xf32>
    %48 = arith.mulf %47, %16 : vector<16x16xf32>
    %cst_19 = arith.constant dense<0.000000e+00> : vector<16xf32>
    %49 = vector.multi_reduction <add>, %48, %cst_19 [1] : vector<16x16xf32> to vector<16xf32>
    %50 = vector.shape_cast %49 : vector<16xf32> to vector<16x1xf32>
    %51 = tpu.reciprocal %50 {approx = true} : vector<16x1xf32> -> vector<16x1xf32>
    %52 = vector.broadcast %51 : vector<16x1xf32> to vector<16x16xf32>
    %53 = arith.mulf %48, %52 : vector<16x16xf32>
    %54 = arith.truncf %53 : vector<16x16xf32> to vector<16x16xbf16>
    %55 = arith.truncf %19 : vector<16x32xf32> to vector<16x32xbf16>
    %cst_20 = arith.constant dense<0.000000e+00> : vector<16x32xf32>
    %56 = tpu.matmul %54, %55, %cst_20 {dimension_numbers = #tpu.dot_dimension_numbers<[1], [0], [0], [1], [0, 0, 1, 1], [], []>} : vector<16x16xbf16>, vector<16x32xbf16>, vector<16x32xf32> -> vector<16x32xf32>
    %c0_21 = arith.constant 0 : index
    %c0_22 = arith.constant 0 : index
    %57 = vector.load %arg12[%c0_21, %c0_22] : memref<16x64xf32, #tpu.memory_space<vmem>>, vector<16x32xf32>
    tpu.vector_store %arg12[%c0_21, %c0_22], %56 {strides = array<i32>} : memref<16x64xf32, #tpu.memory_space<vmem>>, vector<16x32xf32>,
    %58 = vector.extract_strided_slice %4 {offsets = [0, 32], sizes = [16, 32], strides = [1, 1]} : vector<16x64xf32> to vector<16x32xf32>
    %59 = vector.extract_strided_slice %17 {offsets = [1, 0], sizes = [1, 32], strides = [1, 1]} : vector<2x32xf32> to vector<1x32xf32>
    %60 = vector.broadcast %59 : vector<1x32xf32> to vector<16x32xf32>
    %61 = arith.mulf %58, %60 : vector<16x32xf32>
    %cst_23 = arith.constant dense<0.000000e+00> : vector<16xf32>
    %62 = vector.multi_reduction <add>, %61, %cst_23 [1] : vector<16x32xf32> to vector<16xf32>
    %63 = vector.shape_cast %62 : vector<16xf32> to vector<16x1xf32>
    %64 = vector.extract_strided_slice %18 {offsets = [1, 0], sizes = [1, 32], strides = [1, 1]} : vector<2x32xf32> to vector<1x32xf32>
    %65 = vector.broadcast %64 : vector<1x32xf32> to vector<16x32xf32>
    %66 = arith.mulf %58, %65 : vector<16x32xf32>
    %cst_24 = arith.constant dense<0.000000e+00> : vector<16xf32>
    %67 = vector.multi_reduction <add>, %66, %cst_24 [1] : vector<16x32xf32> to vector<16xf32>
    %68 = vector.shape_cast %67 : vector<16xf32> to vector<16x1xf32>
    %69 = tpu.transpose %63, [1, 0] : vector<16x1xf32> -> vector<1x16xf32>
    %70 = vector.broadcast %68 : vector<16x1xf32> to vector<16x16xf32>
    %71 = vector.broadcast %69 : vector<1x16xf32> to vector<16x16xf32>
    %72 = arith.addf %70, %71 : vector<16x16xf32>
    %cst_25 = arith.constant 0.000000e+00 : f32
    %73 = vector.broadcast %cst_25 : f32 to vector<16x16xf32>
    %74 = arith.cmpf oge, %72, %73 : vector<16x16xf32>
    %cst_26 = arith.constant 2.000000e-01 : f32
    %75 = vector.broadcast %cst_26 : f32 to vector<16x16xf32>
    %76 = arith.mulf %75, %72 : vector<16x16xf32>
    %77 = arith.select %74, %72, %76 : vector<16x16xi1>, vector<16x16xf32>
    %cst_27 = arith.constant 0.000000e+00 : f32
    %78 = vector.broadcast %cst_27 : f32 to vector<16x16xf32>
    %79 = arith.cmpf ogt, %16, %78 : vector<16x16xf32>
    %cst_28 = arith.constant -1.000000e+30 : f32
    %80 = vector.broadcast %cst_28 : f32 to vector<16x16xf32>
    %81 = arith.select %79, %77, %80 : vector<16x16xi1>, vector<16x16xf32>
    %cst_29 = arith.constant dense<0xFF800000> : vector<16xf32>
    %82 = vector.multi_reduction <maximumf>, %81, %cst_29 [1] : vector<16x16xf32> to vector<16xf32>
    %83 = vector.shape_cast %82 : vector<16xf32> to vector<16x1xf32>
    %84 = vector.broadcast %83 : vector<16x1xf32> to vector<16x16xf32>
    %85 = arith.subf %81, %84 : vector<16x16xf32>
    %86 = math.exp %85 : vector<16x16xf32>
    %87 = arith.mulf %86, %16 : vector<16x16xf32>
    %cst_30 = arith.constant dense<0.000000e+00> : vector<16xf32>
    %88 = vector.multi_reduction <add>, %87, %cst_30 [1] : vector<16x16xf32> to vector<16xf32>
    %89 = vector.shape_cast %88 : vector<16xf32> to vector<16x1xf32>
    %90 = tpu.reciprocal %89 {approx = true} : vector<16x1xf32> -> vector<16x1xf32>
    %91 = vector.broadcast %90 : vector<16x1xf32> to vector<16x16xf32>
    %92 = arith.mulf %87, %91 : vector<16x16xf32>
    %93 = arith.truncf %92 : vector<16x16xf32> to vector<16x16xbf16>
    %94 = arith.truncf %58 : vector<16x32xf32> to vector<16x32xbf16>
    %cst_31 = arith.constant dense<0.000000e+00> : vector<16x32xf32>
    %95 = tpu.matmul %93, %94, %cst_31 {dimension_numbers = #tpu.dot_dimension_numbers<[1], [0], [0], [1], [0, 0, 1, 1], [], []>} : vector<16x16xbf16>, vector<16x32xbf16>, vector<16x32xf32> -> vector<16x32xf32>
    %c0_32 = arith.constant 0 : index
    %c32 = arith.constant 32 : index
    %96 = vector.load %arg12[%c0_32, %c32] : memref<16x64xf32, #tpu.memory_space<vmem>>, vector<16x32xf32>
    tpu.vector_store %arg12[%c0_32, %c32], %95 {strides = array<i32>} : memref<16x64xf32, #tpu.memory_space<vmem>>, vector<16x32xf32>,
    %c0_33 = arith.constant 0 : index
    %c0_34 = arith.constant 0 : index
    %97 = vector.load %arg12[%c0_33, %c0_34] : memref<16x64xf32, #tpu.memory_space<vmem>>, vector<16x64xf32>
    %c0_35 = arith.constant 0 : index
    %c0_36 = arith.constant 0 : index
    %98 = vector.load %arg6[%c0_35, %c0_36] : memref<1x64xf32, #tpu.memory_space<vmem>>, vector<1x64xf32>
    %99 = vector.broadcast %98 : vector<1x64xf32> to vector<16x64xf32>
    %100 = arith.addf %97, %99 : vector<16x64xf32>
    %cst_37 = arith.constant 0.000000e+00 : f32
    %101 = vector.broadcast %cst_37 : f32 to vector<16x64xf32>
    %102 = arith.cmpf ogt, %100, %101 : vector<16x64xf32>
    %cst_38 = arith.constant 0.000000e+00 : f32
    %103 = vector.broadcast %cst_38 : f32 to vector<16x64xf32>
    %104 = arith.minimumf %100, %103 : vector<16x64xf32>
    %105 = math.exp %104 : vector<16x64xf32>
    %cst_39 = arith.constant 1.000000e+00 : f32
    %106 = vector.broadcast %cst_39 : f32 to vector<16x64xf32>
    %107 = arith.subf %105, %106 : vector<16x64xf32>
    %108 = arith.select %102, %100, %107 : vector<16x64xi1>, vector<16x64xf32>
    %cst_40 = arith.constant dense<0.000000e+00> : vector<64xf32>
    %109 = vector.multi_reduction <add>, %108, %cst_40 [0] : vector<16x64xf32> to vector<64xf32>
    %110 = vector.shape_cast %109 : vector<64xf32> to vector<1x64xf32>
    %cst_41 = arith.constant 1.600000e+01 : f32
    %111 = vector.broadcast %cst_41 : f32 to vector<1x64xf32>
    %112 = arith.divf %110, %111 : vector<1x64xf32>
    %113 = vector.broadcast %112 : vector<1x64xf32> to vector<16x64xf32>
    %114 = arith.subf %108, %113 : vector<16x64xf32>
    %115 = arith.mulf %114, %114 : vector<16x64xf32>
    %cst_42 = arith.constant dense<0.000000e+00> : vector<64xf32>
    %116 = vector.multi_reduction <add>, %115, %cst_42 [0] : vector<16x64xf32> to vector<64xf32>
    %117 = vector.shape_cast %116 : vector<64xf32> to vector<1x64xf32>
    %cst_43 = arith.constant 1.600000e+01 : f32
    %118 = vector.broadcast %cst_43 : f32 to vector<1x64xf32>
    %119 = arith.divf %117, %118 : vector<1x64xf32>
    %cst_44 = arith.constant 9.99999974E-6 : f32
    %120 = vector.broadcast %cst_44 : f32 to vector<1x64xf32>
    %121 = arith.addf %119, %120 : vector<1x64xf32>
    %122 = math.rsqrt %121 : vector<1x64xf32>
    %123 = vector.broadcast %122 : vector<1x64xf32> to vector<16x64xf32>
    %124 = arith.mulf %114, %123 : vector<16x64xf32>
    %c0_45 = arith.constant 0 : index
    %c0_46 = arith.constant 0 : index
    %125 = vector.load %arg7[%c0_45, %c0_46] : memref<1x64xf32, #tpu.memory_space<vmem>>, vector<1x64xf32>
    %126 = vector.broadcast %125 : vector<1x64xf32> to vector<16x64xf32>
    %127 = arith.mulf %124, %126 : vector<16x64xf32>
    %c0_47 = arith.constant 0 : index
    %c0_48 = arith.constant 0 : index
    %128 = vector.load %arg8[%c0_47, %c0_48] : memref<1x64xf32, #tpu.memory_space<vmem>>, vector<1x64xf32>
    %129 = vector.broadcast %128 : vector<1x64xf32> to vector<16x64xf32>
    %130 = arith.addf %127, %129 : vector<16x64xf32>
    %c0_49 = arith.constant 0 : index
    %c0_50 = arith.constant 0 : index
    %c0_51 = arith.constant 0 : index
    %131 = vector.load %arg10[%c0_49, %c0_50, %c0_51] : memref<1x16x64xf32, #tpu.memory_space<vmem>>, vector<1x16x64xf32>
    %132 = vector.shape_cast %131 : vector<1x16x64xf32> to vector<16x64xf32>
    %133 = vector.shape_cast %130 : vector<16x64xf32> to vector<1x16x64xf32>
    tpu.vector_store %arg10[%c0_49, %c0_50, %c0_51], %133 {strides = array<i32>} : memref<1x16x64xf32, #tpu.memory_space<vmem>>, vector<1x16x64xf32>,
    %c0_52 = arith.constant 0 : index
    %c0_53 = arith.constant 0 : index
    %134 = vector.load %arg9[%c0_52, %c0_53] : memref<1x64xf32, #tpu.memory_space<vmem>>, vector<1x64xf32>
    %135 = vector.broadcast %134 : vector<1x64xf32> to vector<16x64xf32>
    %136 = arith.mulf %130, %135 : vector<16x64xf32>
    %cst_54 = arith.constant dense<0.000000e+00> : vector<16xf32>
    %137 = vector.multi_reduction <add>, %136, %cst_54 [1] : vector<16x64xf32> to vector<16xf32>
    %138 = vector.shape_cast %137 : vector<16xf32> to vector<16x1xf32>
    %139 = math.absf %138 : vector<16x1xf32>
    %cst_55 = arith.constant 0.000000e+00 : f32
    %140 = vector.broadcast %cst_55 : f32 to vector<16x1xf32>
    %141 = arith.subf %140, %139 : vector<16x1xf32>
    %142 = math.exp %141 : vector<16x1xf32>
    %cst_56 = arith.constant 0.000000e+00 : f32
    %143 = vector.broadcast %cst_56 : f32 to vector<16x1xf32>
    %144 = arith.cmpf oge, %138, %143 : vector<16x1xf32>
    %cst_57 = arith.constant 1.000000e+00 : f32
    %145 = vector.broadcast %cst_57 : f32 to vector<16x1xf32>
    %146 = arith.addf %145, %142 : vector<16x1xf32>
    %cst_58 = arith.constant 1.000000e+00 : f32
    %147 = vector.broadcast %cst_58 : f32 to vector<16x1xf32>
    %148 = arith.divf %147, %146 : vector<16x1xf32>
    %cst_59 = arith.constant 1.000000e+00 : f32
    %149 = vector.broadcast %cst_59 : f32 to vector<16x1xf32>
    %150 = arith.addf %149, %142 : vector<16x1xf32>
    %151 = arith.divf %142, %150 : vector<16x1xf32>
    %152 = arith.select %144, %148, %151 : vector<16x1xi1>, vector<16x1xf32>
    %153 = tpu.transpose %152, [1, 0] : vector<16x1xf32> -> vector<1x16xf32>
    %c0_60 = arith.constant 0 : index
    %c0_61 = arith.constant 0 : index
    %c0_62 = arith.constant 0 : index
    %154 = vector.load %arg11[%c0_60, %c0_61, %c0_62] : memref<1x1x16xf32, #tpu.memory_space<vmem>>, vector<1x1x16xf32>
    %155 = vector.shape_cast %154 : vector<1x1x16xf32> to vector<1x16xf32>
    %156 = vector.shape_cast %153 : vector<1x16xf32> to vector<1x1x16xf32>
    tpu.vector_store %arg11[%c0_60, %c0_61, %c0_62], %156 {strides = array<i32>} : memref<1x1x16xf32, #tpu.memory_space<vmem>>, vector<1x1x16xf32>,
    return
  }
  func.func @transform_0(%arg0: i32) -> (i32, i32, i32) {
    %c0_i32 = arith.constant 0 : i32
    %c0_i32_0 = arith.constant 0 : i32
    %c0_i32_1 = arith.constant 0 : i32
    return %arg0, %c0_i32, %c0_i32_0 : i32, i32, i32
  }
  func.func @transform_1(%arg0: i32) -> (i32, i32, i32) {
    %c0_i32 = arith.constant 0 : i32
    %c0_i32_0 = arith.constant 0 : i32
    %c0_i32_1 = arith.constant 0 : i32
    return %arg0, %c0_i32, %c0_i32_0 : i32, i32, i32
  }
  func.func @transform_2(%arg0: i32) -> (i32, i32) {
    %c0_i32 = arith.constant 0 : i32
    %c0_i32_0 = arith.constant 0 : i32
    %c0_i32_1 = arith.constant 0 : i32
    return %c0_i32, %c0_i32_0 : i32, i32
  }
  func.func @transform_3(%arg0: i32) -> (i32, i32) {
    %c0_i32 = arith.constant 0 : i32
    %c0_i32_0 = arith.constant 0 : i32
    %c0_i32_1 = arith.constant 0 : i32
    return %c0_i32, %c0_i32_0 : i32, i32
  }
  func.func @transform_4(%arg0: i32) -> (i32, i32) {
    %c0_i32 = arith.constant 0 : i32
    %c0_i32_0 = arith.constant 0 : i32
    %c0_i32_1 = arith.constant 0 : i32
    return %c0_i32, %c0_i32_0 : i32, i32
  }
  func.func @transform_5(%arg0: i32) -> (i32, i32) {
    %c0_i32 = arith.constant 0 : i32
    %c0_i32_0 = arith.constant 0 : i32
    %c0_i32_1 = arith.constant 0 : i32
    return %c0_i32, %c0_i32_0 : i32, i32
  }
  func.func @transform_6(%arg0: i32) -> (i32, i32) {
    %c0_i32 = arith.constant 0 : i32
    %c0_i32_0 = arith.constant 0 : i32
    %c0_i32_1 = arith.constant 0 : i32
    return %c0_i32, %c0_i32_0 : i32, i32
  }
  func.func @transform_7(%arg0: i32) -> (i32, i32) {
    %c0_i32 = arith.constant 0 : i32
    %c0_i32_0 = arith.constant 0 : i32
    %c0_i32_1 = arith.constant 0 : i32
    return %c0_i32, %c0_i32_0 : i32, i32
  }
  func.func @transform_8(%arg0: i32) -> (i32, i32) {
    %c0_i32 = arith.constant 0 : i32
    %c0_i32_0 = arith.constant 0 : i32
    %c0_i32_1 = arith.constant 0 : i32
    return %c0_i32, %c0_i32_0 : i32, i32
  }
  func.func @transform_9(%arg0: i32) -> (i32, i32, i32) {
    %c0_i32 = arith.constant 0 : i32
    %c0_i32_0 = arith.constant 0 : i32
    %c0_i32_1 = arith.constant 0 : i32
    return %arg0, %c0_i32, %c0_i32_0 : i32, i32, i32
  }
  func.func @transform_10(%arg0: i32) -> (i32, i32, i32) {
    %c0_i32 = arith.constant 0 : i32
    %c0_i32_0 = arith.constant 0 : i32
    %c0_i32_1 = arith.constant 0 : i32
    return %arg0, %c0_i32, %c0_i32_0 : i32, i32, i32
  }
}

module attributes {stable_mosaic.version = 11 : i64} {
  func.func @_gat_norm_score_kernel(%arg0: i32, %arg1: memref<1x5x64xf32, #tpu.memory_space<vmem>>, %arg2: memref<1x5x5xbf16, #tpu.memory_space<vmem>>, %arg3: memref<64x256xbf16, #tpu.memory_space<vmem>>, %arg4: memref<2x128xf32, #tpu.memory_space<vmem>>, %arg5: memref<2x128xf32, #tpu.memory_space<vmem>>, %arg6: memref<1x256xf32, #tpu.memory_space<vmem>>, %arg7: memref<1x256xf32, #tpu.memory_space<vmem>>, %arg8: memref<1x256xf32, #tpu.memory_space<vmem>>, %arg9: memref<1x256xf32, #tpu.memory_space<vmem>>, %arg10: memref<1x5x256xf32, #tpu.memory_space<vmem>>, %arg11: memref<1x1x5xf32, #tpu.memory_space<vmem>>, %arg12: memref<5x256xf32, #tpu.memory_space<vmem>>) attributes {dimension_semantics = [#tpu.dimension_semantics<parallel>], iteration_bounds = array<i64: 2>, scalar_prefetch = 0 : i64, scratch_operands = 1 : i64, tpu.core_type = #tpu.core_type<tc>, window_params = [{transform_indices = @transform_0, window_bounds = array<i64: 1, 5, 64>}, {transform_indices = @transform_1, window_bounds = array<i64: 1, 5, 5>}, {pipeline_mode = #tpu.pipeline_mode<synchronous>, transform_indices = @transform_2, window_bounds = array<i64: 64, 256>}, {pipeline_mode = #tpu.pipeline_mode<synchronous>, transform_indices = @transform_3, window_bounds = array<i64: 2, 128>}, {pipeline_mode = #tpu.pipeline_mode<synchronous>, transform_indices = @transform_4, window_bounds = array<i64: 2, 128>}, {pipeline_mode = #tpu.pipeline_mode<synchronous>, transform_indices = @transform_5, window_bounds = array<i64: 1, 256>}, {pipeline_mode = #tpu.pipeline_mode<synchronous>, transform_indices = @transform_6, window_bounds = array<i64: 1, 256>}, {pipeline_mode = #tpu.pipeline_mode<synchronous>, transform_indices = @transform_7, window_bounds = array<i64: 1, 256>}, {pipeline_mode = #tpu.pipeline_mode<synchronous>, transform_indices = @transform_8, window_bounds = array<i64: 1, 256>}, {transform_indices = @transform_9, window_bounds = array<i64: 1, 5, 256>}, {transform_indices = @transform_10, window_bounds = array<i64: 1, 1, 5>}]} {
    %c0 = arith.constant 0 : index
    %c0_0 = arith.constant 0 : index
    %c0_1 = arith.constant 0 : index
    %0 = vector.load %arg1[%c0, %c0_0, %c0_1] : memref<1x5x64xf32, #tpu.memory_space<vmem>>, vector<1x5x64xf32>
    %1 = vector.shape_cast %0 : vector<1x5x64xf32> to vector<5x64xf32>
    %c0_2 = arith.constant 0 : index
    %c0_3 = arith.constant 0 : index
    %2 = vector.load %arg3[%c0_2, %c0_3] : memref<64x256xbf16, #tpu.memory_space<vmem>>, vector<64x256xbf16>
    %3 = arith.truncf %1 : vector<5x64xf32> to vector<5x64xbf16>
    %cst = arith.constant dense<0.000000e+00> : vector<5x256xf32>
    %4 = tpu.matmul %3, %2, %cst {dimension_numbers = #tpu.dot_dimension_numbers<[1], [0], [0], [1], [0, 0, 1, 1], [], []>} : vector<5x64xbf16>, vector<64x256xbf16>, vector<5x256xf32> -> vector<5x256xf32>
    %c0_4 = arith.constant 0 : index
    %c0_5 = arith.constant 0 : index
    %c0_6 = arith.constant 0 : index
    %5 = vector.load %arg2[%c0_4, %c0_5, %c0_6] : memref<1x5x5xbf16, #tpu.memory_space<vmem>>, vector<1x5x5xbf16>
    %6 = vector.shape_cast %5 : vector<1x5x5xbf16> to vector<5x5xbf16>
    %7 = arith.extf %6 : vector<5x5xbf16> to vector<5x5xf32>
    %8 = tpu.iota {dimensions = array<i32: 0>} : vector<5x5xi32>
    %9 = tpu.iota {dimensions = array<i32: 1>} : vector<5x5xi32>
    %10 = arith.cmpi eq, %8, %9 : vector<5x5xi32>
    %11 = arith.extui %10 : vector<5x5xi1> to vector<5x5xi32>
    %12 = arith.sitofp %11 : vector<5x5xi32> to vector<5x5xf32>
    %cst_7 = arith.constant 1.000000e+00 : f32
    %13 = vector.broadcast %cst_7 : f32 to vector<5x5xf32>
    %14 = arith.subf %13, %12 : vector<5x5xf32>
    %15 = arith.mulf %7, %14 : vector<5x5xf32>
    %16 = arith.addf %15, %12 : vector<5x5xf32>
    %c0_8 = arith.constant 0 : index
    %c0_9 = arith.constant 0 : index
    %17 = vector.load %arg4[%c0_8, %c0_9] : memref<2x128xf32, #tpu.memory_space<vmem>>, vector<2x128xf32>
    %c0_10 = arith.constant 0 : index
    %c0_11 = arith.constant 0 : index
    %18 = vector.load %arg5[%c0_10, %c0_11] : memref<2x128xf32, #tpu.memory_space<vmem>>, vector<2x128xf32>
    %19 = vector.extract_strided_slice %4 {offsets = [0, 0], sizes = [5, 128], strides = [1, 1]} : vector<5x256xf32> to vector<5x128xf32>
    %20 = vector.extract_strided_slice %17 {offsets = [0, 0], sizes = [1, 128], strides = [1, 1]} : vector<2x128xf32> to vector<1x128xf32>
    %21 = vector.broadcast %20 : vector<1x128xf32> to vector<5x128xf32>
    %22 = arith.mulf %19, %21 : vector<5x128xf32>
    %cst_12 = arith.constant dense<0.000000e+00> : vector<5xf32>
    %23 = vector.multi_reduction <add>, %22, %cst_12 [1] : vector<5x128xf32> to vector<5xf32>
    %24 = vector.shape_cast %23 : vector<5xf32> to vector<5x1xf32>
    %25 = vector.extract_strided_slice %18 {offsets = [0, 0], sizes = [1, 128], strides = [1, 1]} : vector<2x128xf32> to vector<1x128xf32>
    %26 = vector.broadcast %25 : vector<1x128xf32> to vector<5x128xf32>
    %27 = arith.mulf %19, %26 : vector<5x128xf32>
    %cst_13 = arith.constant dense<0.000000e+00> : vector<5xf32>
    %28 = vector.multi_reduction <add>, %27, %cst_13 [1] : vector<5x128xf32> to vector<5xf32>
    %29 = vector.shape_cast %28 : vector<5xf32> to vector<5x1xf32>
    %30 = tpu.transpose %24, [1, 0] : vector<5x1xf32> -> vector<1x5xf32>
    %31 = vector.broadcast %29 : vector<5x1xf32> to vector<5x5xf32>
    %32 = vector.broadcast %30 : vector<1x5xf32> to vector<5x5xf32>
    %33 = arith.addf %31, %32 : vector<5x5xf32>
    %cst_14 = arith.constant 0.000000e+00 : f32
    %34 = vector.broadcast %cst_14 : f32 to vector<5x5xf32>
    %35 = arith.cmpf oge, %33, %34 : vector<5x5xf32>
    %cst_15 = arith.constant 2.000000e-01 : f32
    %36 = vector.broadcast %cst_15 : f32 to vector<5x5xf32>
    %37 = arith.mulf %36, %33 : vector<5x5xf32>
    %38 = arith.select %35, %33, %37 : vector<5x5xi1>, vector<5x5xf32>
    %cst_16 = arith.constant 0.000000e+00 : f32
    %39 = vector.broadcast %cst_16 : f32 to vector<5x5xf32>
    %40 = arith.cmpf ogt, %16, %39 : vector<5x5xf32>
    %cst_17 = arith.constant -1.000000e+30 : f32
    %41 = vector.broadcast %cst_17 : f32 to vector<5x5xf32>
    %42 = arith.select %40, %38, %41 : vector<5x5xi1>, vector<5x5xf32>
    %cst_18 = arith.constant dense<0xFF800000> : vector<5xf32>
    %43 = vector.multi_reduction <maximumf>, %42, %cst_18 [1] : vector<5x5xf32> to vector<5xf32>
    %44 = vector.shape_cast %43 : vector<5xf32> to vector<5x1xf32>
    %45 = vector.broadcast %44 : vector<5x1xf32> to vector<5x5xf32>
    %46 = arith.subf %42, %45 : vector<5x5xf32>
    %47 = math.exp %46 : vector<5x5xf32>
    %48 = arith.mulf %47, %16 : vector<5x5xf32>
    %cst_19 = arith.constant dense<0.000000e+00> : vector<5xf32>
    %49 = vector.multi_reduction <add>, %48, %cst_19 [1] : vector<5x5xf32> to vector<5xf32>
    %50 = vector.shape_cast %49 : vector<5xf32> to vector<5x1xf32>
    %51 = tpu.reciprocal %50 {approx = true} : vector<5x1xf32> -> vector<5x1xf32>
    %52 = vector.broadcast %51 : vector<5x1xf32> to vector<5x5xf32>
    %53 = arith.mulf %48, %52 : vector<5x5xf32>
    %54 = arith.truncf %53 : vector<5x5xf32> to vector<5x5xbf16>
    %55 = arith.truncf %19 : vector<5x128xf32> to vector<5x128xbf16>
    %cst_20 = arith.constant dense<0.000000e+00> : vector<5x128xf32>
    %56 = tpu.matmul %54, %55, %cst_20 {dimension_numbers = #tpu.dot_dimension_numbers<[1], [0], [0], [1], [0, 0, 1, 1], [], []>} : vector<5x5xbf16>, vector<5x128xbf16>, vector<5x128xf32> -> vector<5x128xf32>
    %c0_21 = arith.constant 0 : index
    %c0_22 = arith.constant 0 : index
    %57 = vector.load %arg12[%c0_21, %c0_22] : memref<5x256xf32, #tpu.memory_space<vmem>>, vector<5x128xf32>
    tpu.vector_store %arg12[%c0_21, %c0_22], %56 {strides = array<i32>} : memref<5x256xf32, #tpu.memory_space<vmem>>, vector<5x128xf32>,
    %58 = vector.extract_strided_slice %4 {offsets = [0, 128], sizes = [5, 128], strides = [1, 1]} : vector<5x256xf32> to vector<5x128xf32>
    %59 = vector.extract_strided_slice %17 {offsets = [1, 0], sizes = [1, 128], strides = [1, 1]} : vector<2x128xf32> to vector<1x128xf32>
    %60 = vector.broadcast %59 : vector<1x128xf32> to vector<5x128xf32>
    %61 = arith.mulf %58, %60 : vector<5x128xf32>
    %cst_23 = arith.constant dense<0.000000e+00> : vector<5xf32>
    %62 = vector.multi_reduction <add>, %61, %cst_23 [1] : vector<5x128xf32> to vector<5xf32>
    %63 = vector.shape_cast %62 : vector<5xf32> to vector<5x1xf32>
    %64 = vector.extract_strided_slice %18 {offsets = [1, 0], sizes = [1, 128], strides = [1, 1]} : vector<2x128xf32> to vector<1x128xf32>
    %65 = vector.broadcast %64 : vector<1x128xf32> to vector<5x128xf32>
    %66 = arith.mulf %58, %65 : vector<5x128xf32>
    %cst_24 = arith.constant dense<0.000000e+00> : vector<5xf32>
    %67 = vector.multi_reduction <add>, %66, %cst_24 [1] : vector<5x128xf32> to vector<5xf32>
    %68 = vector.shape_cast %67 : vector<5xf32> to vector<5x1xf32>
    %69 = tpu.transpose %63, [1, 0] : vector<5x1xf32> -> vector<1x5xf32>
    %70 = vector.broadcast %68 : vector<5x1xf32> to vector<5x5xf32>
    %71 = vector.broadcast %69 : vector<1x5xf32> to vector<5x5xf32>
    %72 = arith.addf %70, %71 : vector<5x5xf32>
    %cst_25 = arith.constant 0.000000e+00 : f32
    %73 = vector.broadcast %cst_25 : f32 to vector<5x5xf32>
    %74 = arith.cmpf oge, %72, %73 : vector<5x5xf32>
    %cst_26 = arith.constant 2.000000e-01 : f32
    %75 = vector.broadcast %cst_26 : f32 to vector<5x5xf32>
    %76 = arith.mulf %75, %72 : vector<5x5xf32>
    %77 = arith.select %74, %72, %76 : vector<5x5xi1>, vector<5x5xf32>
    %cst_27 = arith.constant 0.000000e+00 : f32
    %78 = vector.broadcast %cst_27 : f32 to vector<5x5xf32>
    %79 = arith.cmpf ogt, %16, %78 : vector<5x5xf32>
    %cst_28 = arith.constant -1.000000e+30 : f32
    %80 = vector.broadcast %cst_28 : f32 to vector<5x5xf32>
    %81 = arith.select %79, %77, %80 : vector<5x5xi1>, vector<5x5xf32>
    %cst_29 = arith.constant dense<0xFF800000> : vector<5xf32>
    %82 = vector.multi_reduction <maximumf>, %81, %cst_29 [1] : vector<5x5xf32> to vector<5xf32>
    %83 = vector.shape_cast %82 : vector<5xf32> to vector<5x1xf32>
    %84 = vector.broadcast %83 : vector<5x1xf32> to vector<5x5xf32>
    %85 = arith.subf %81, %84 : vector<5x5xf32>
    %86 = math.exp %85 : vector<5x5xf32>
    %87 = arith.mulf %86, %16 : vector<5x5xf32>
    %cst_30 = arith.constant dense<0.000000e+00> : vector<5xf32>
    %88 = vector.multi_reduction <add>, %87, %cst_30 [1] : vector<5x5xf32> to vector<5xf32>
    %89 = vector.shape_cast %88 : vector<5xf32> to vector<5x1xf32>
    %90 = tpu.reciprocal %89 {approx = true} : vector<5x1xf32> -> vector<5x1xf32>
    %91 = vector.broadcast %90 : vector<5x1xf32> to vector<5x5xf32>
    %92 = arith.mulf %87, %91 : vector<5x5xf32>
    %93 = arith.truncf %92 : vector<5x5xf32> to vector<5x5xbf16>
    %94 = arith.truncf %58 : vector<5x128xf32> to vector<5x128xbf16>
    %cst_31 = arith.constant dense<0.000000e+00> : vector<5x128xf32>
    %95 = tpu.matmul %93, %94, %cst_31 {dimension_numbers = #tpu.dot_dimension_numbers<[1], [0], [0], [1], [0, 0, 1, 1], [], []>} : vector<5x5xbf16>, vector<5x128xbf16>, vector<5x128xf32> -> vector<5x128xf32>
    %c0_32 = arith.constant 0 : index
    %c128 = arith.constant 128 : index
    %96 = vector.load %arg12[%c0_32, %c128] : memref<5x256xf32, #tpu.memory_space<vmem>>, vector<5x128xf32>
    tpu.vector_store %arg12[%c0_32, %c128], %95 {strides = array<i32>} : memref<5x256xf32, #tpu.memory_space<vmem>>, vector<5x128xf32>,
    %c0_33 = arith.constant 0 : index
    %c0_34 = arith.constant 0 : index
    %97 = vector.load %arg12[%c0_33, %c0_34] : memref<5x256xf32, #tpu.memory_space<vmem>>, vector<5x256xf32>
    %c0_35 = arith.constant 0 : index
    %c0_36 = arith.constant 0 : index
    %98 = vector.load %arg6[%c0_35, %c0_36] : memref<1x256xf32, #tpu.memory_space<vmem>>, vector<1x256xf32>
    %99 = vector.broadcast %98 : vector<1x256xf32> to vector<5x256xf32>
    %100 = arith.addf %97, %99 : vector<5x256xf32>
    %cst_37 = arith.constant 0.000000e+00 : f32
    %101 = vector.broadcast %cst_37 : f32 to vector<5x256xf32>
    %102 = arith.cmpf ogt, %100, %101 : vector<5x256xf32>
    %cst_38 = arith.constant 0.000000e+00 : f32
    %103 = vector.broadcast %cst_38 : f32 to vector<5x256xf32>
    %104 = arith.minimumf %100, %103 : vector<5x256xf32>
    %105 = math.exp %104 : vector<5x256xf32>
    %cst_39 = arith.constant 1.000000e+00 : f32
    %106 = vector.broadcast %cst_39 : f32 to vector<5x256xf32>
    %107 = arith.subf %105, %106 : vector<5x256xf32>
    %108 = arith.select %102, %100, %107 : vector<5x256xi1>, vector<5x256xf32>
    %cst_40 = arith.constant dense<0.000000e+00> : vector<256xf32>
    %109 = vector.multi_reduction <add>, %108, %cst_40 [0] : vector<5x256xf32> to vector<256xf32>
    %110 = vector.shape_cast %109 : vector<256xf32> to vector<1x256xf32>
    %cst_41 = arith.constant 5.000000e+00 : f32
    %111 = vector.broadcast %cst_41 : f32 to vector<1x256xf32>
    %112 = arith.divf %110, %111 : vector<1x256xf32>
    %113 = vector.broadcast %112 : vector<1x256xf32> to vector<5x256xf32>
    %114 = arith.subf %108, %113 : vector<5x256xf32>
    %115 = arith.mulf %114, %114 : vector<5x256xf32>
    %cst_42 = arith.constant dense<0.000000e+00> : vector<256xf32>
    %116 = vector.multi_reduction <add>, %115, %cst_42 [0] : vector<5x256xf32> to vector<256xf32>
    %117 = vector.shape_cast %116 : vector<256xf32> to vector<1x256xf32>
    %cst_43 = arith.constant 5.000000e+00 : f32
    %118 = vector.broadcast %cst_43 : f32 to vector<1x256xf32>
    %119 = arith.divf %117, %118 : vector<1x256xf32>
    %cst_44 = arith.constant 9.99999974E-6 : f32
    %120 = vector.broadcast %cst_44 : f32 to vector<1x256xf32>
    %121 = arith.addf %119, %120 : vector<1x256xf32>
    %122 = math.rsqrt %121 : vector<1x256xf32>
    %123 = vector.broadcast %122 : vector<1x256xf32> to vector<5x256xf32>
    %124 = arith.mulf %114, %123 : vector<5x256xf32>
    %c0_45 = arith.constant 0 : index
    %c0_46 = arith.constant 0 : index
    %125 = vector.load %arg7[%c0_45, %c0_46] : memref<1x256xf32, #tpu.memory_space<vmem>>, vector<1x256xf32>
    %126 = vector.broadcast %125 : vector<1x256xf32> to vector<5x256xf32>
    %127 = arith.mulf %124, %126 : vector<5x256xf32>
    %c0_47 = arith.constant 0 : index
    %c0_48 = arith.constant 0 : index
    %128 = vector.load %arg8[%c0_47, %c0_48] : memref<1x256xf32, #tpu.memory_space<vmem>>, vector<1x256xf32>
    %129 = vector.broadcast %128 : vector<1x256xf32> to vector<5x256xf32>
    %130 = arith.addf %127, %129 : vector<5x256xf32>
    %c0_49 = arith.constant 0 : index
    %c0_50 = arith.constant 0 : index
    %c0_51 = arith.constant 0 : index
    %131 = vector.load %arg10[%c0_49, %c0_50, %c0_51] : memref<1x5x256xf32, #tpu.memory_space<vmem>>, vector<1x5x256xf32>
    %132 = vector.shape_cast %131 : vector<1x5x256xf32> to vector<5x256xf32>
    %133 = vector.shape_cast %130 : vector<5x256xf32> to vector<1x5x256xf32>
    tpu.vector_store %arg10[%c0_49, %c0_50, %c0_51], %133 {strides = array<i32>} : memref<1x5x256xf32, #tpu.memory_space<vmem>>, vector<1x5x256xf32>,
    %c0_52 = arith.constant 0 : index
    %c0_53 = arith.constant 0 : index
    %134 = vector.load %arg9[%c0_52, %c0_53] : memref<1x256xf32, #tpu.memory_space<vmem>>, vector<1x256xf32>
    %135 = vector.broadcast %134 : vector<1x256xf32> to vector<5x256xf32>
    %136 = arith.mulf %130, %135 : vector<5x256xf32>
    %cst_54 = arith.constant dense<0.000000e+00> : vector<5xf32>
    %137 = vector.multi_reduction <add>, %136, %cst_54 [1] : vector<5x256xf32> to vector<5xf32>
    %138 = vector.shape_cast %137 : vector<5xf32> to vector<5x1xf32>
    %139 = math.absf %138 : vector<5x1xf32>
    %cst_55 = arith.constant 0.000000e+00 : f32
    %140 = vector.broadcast %cst_55 : f32 to vector<5x1xf32>
    %141 = arith.subf %140, %139 : vector<5x1xf32>
    %142 = math.exp %141 : vector<5x1xf32>
    %cst_56 = arith.constant 0.000000e+00 : f32
    %143 = vector.broadcast %cst_56 : f32 to vector<5x1xf32>
    %144 = arith.cmpf oge, %138, %143 : vector<5x1xf32>
    %cst_57 = arith.constant 1.000000e+00 : f32
    %145 = vector.broadcast %cst_57 : f32 to vector<5x1xf32>
    %146 = arith.addf %145, %142 : vector<5x1xf32>
    %cst_58 = arith.constant 1.000000e+00 : f32
    %147 = vector.broadcast %cst_58 : f32 to vector<5x1xf32>
    %148 = arith.divf %147, %146 : vector<5x1xf32>
    %cst_59 = arith.constant 1.000000e+00 : f32
    %149 = vector.broadcast %cst_59 : f32 to vector<5x1xf32>
    %150 = arith.addf %149, %142 : vector<5x1xf32>
    %151 = arith.divf %142, %150 : vector<5x1xf32>
    %152 = arith.select %144, %148, %151 : vector<5x1xi1>, vector<5x1xf32>
    %153 = tpu.transpose %152, [1, 0] : vector<5x1xf32> -> vector<1x5xf32>
    %c0_60 = arith.constant 0 : index
    %c0_61 = arith.constant 0 : index
    %c0_62 = arith.constant 0 : index
    %154 = vector.load %arg11[%c0_60, %c0_61, %c0_62] : memref<1x1x5xf32, #tpu.memory_space<vmem>>, vector<1x1x5xf32>
    %155 = vector.shape_cast %154 : vector<1x1x5xf32> to vector<1x5xf32>
    %156 = vector.shape_cast %153 : vector<1x5xf32> to vector<1x1x5xf32>
    tpu.vector_store %arg11[%c0_60, %c0_61, %c0_62], %156 {strides = array<i32>} : memref<1x1x5xf32, #tpu.memory_space<vmem>>, vector<1x1x5xf32>,
    return
  }
  func.func @transform_0(%arg0: i32) -> (i32, i32, i32) {
    %c0_i32 = arith.constant 0 : i32
    %c0_i32_0 = arith.constant 0 : i32
    %c0_i32_1 = arith.constant 0 : i32
    return %arg0, %c0_i32, %c0_i32_0 : i32, i32, i32
  }
  func.func @transform_1(%arg0: i32) -> (i32, i32, i32) {
    %c0_i32 = arith.constant 0 : i32
    %c0_i32_0 = arith.constant 0 : i32
    %c0_i32_1 = arith.constant 0 : i32
    return %arg0, %c0_i32, %c0_i32_0 : i32, i32, i32
  }
  func.func @transform_2(%arg0: i32) -> (i32, i32) {
    %c0_i32 = arith.constant 0 : i32
    %c0_i32_0 = arith.constant 0 : i32
    %c0_i32_1 = arith.constant 0 : i32
    return %c0_i32, %c0_i32_0 : i32, i32
  }
  func.func @transform_3(%arg0: i32) -> (i32, i32) {
    %c0_i32 = arith.constant 0 : i32
    %c0_i32_0 = arith.constant 0 : i32
    %c0_i32_1 = arith.constant 0 : i32
    return %c0_i32, %c0_i32_0 : i32, i32
  }
  func.func @transform_4(%arg0: i32) -> (i32, i32) {
    %c0_i32 = arith.constant 0 : i32
    %c0_i32_0 = arith.constant 0 : i32
    %c0_i32_1 = arith.constant 0 : i32
    return %c0_i32, %c0_i32_0 : i32, i32
  }
  func.func @transform_5(%arg0: i32) -> (i32, i32) {
    %c0_i32 = arith.constant 0 : i32
    %c0_i32_0 = arith.constant 0 : i32
    %c0_i32_1 = arith.constant 0 : i32
    return %c0_i32, %c0_i32_0 : i32, i32
  }
  func.func @transform_6(%arg0: i32) -> (i32, i32) {
    %c0_i32 = arith.constant 0 : i32
    %c0_i32_0 = arith.constant 0 : i32
    %c0_i32_1 = arith.constant 0 : i32
    return %c0_i32, %c0_i32_0 : i32, i32
  }
  func.func @transform_7(%arg0: i32) -> (i32, i32) {
    %c0_i32 = arith.constant 0 : i32
    %c0_i32_0 = arith.constant 0 : i32
    %c0_i32_1 = arith.constant 0 : i32
    return %c0_i32, %c0_i32_0 : i32, i32
  }
  func.func @transform_8(%arg0: i32) -> (i32, i32) {
    %c0_i32 = arith.constant 0 : i32
    %c0_i32_0 = arith.constant 0 : i32
    %c0_i32_1 = arith.constant 0 : i32
    return %c0_i32, %c0_i32_0 : i32, i32
  }
  func.func @transform_9(%arg0: i32) -> (i32, i32, i32) {
    %c0_i32 = arith.constant 0 : i32
    %c0_i32_0 = arith.constant 0 : i32
    %c0_i32_1 = arith.constant 0 : i32
    return %arg0, %c0_i32, %c0_i32_0 : i32, i32, i32
  }
  func.func @transform_10(%arg0: i32) -> (i32, i32, i32) {
    %c0_i32 = arith.constant 0 : i32
    %c0_i32_0 = arith.constant 0 : i32
    %c0_i32_1 = arith.constant 0 : i32
    return %arg0, %c0_i32, %c0_i32_0 : i32, i32, i32
  }
}

module attributes {stable_mosaic.version = 11 : i64} {
  func.func @_att_head_kernel(%arg0: i32, %arg1: memref<2x2x512xf32, #tpu.memory_space<vmem>>, %arg2: memref<512x256xbf16, #tpu.memory_space<vmem>>, %arg3: memref<1x256xf32, #tpu.memory_space<vmem>>, %arg4: memref<256x128xbf16, #tpu.memory_space<vmem>>, %arg5: memref<1x128xf32, #tpu.memory_space<vmem>>, %arg6: memref<1x128xf32, #tpu.memory_space<vmem>>, %arg7: memref<1x1xf32, #tpu.memory_space<vmem>>, %arg8: memref<512x512xbf16, #tpu.memory_space<vmem>>, %arg9: memref<1x512xf32, #tpu.memory_space<vmem>>, %arg10: memref<512x512xbf16, #tpu.memory_space<vmem>>, %arg11: memref<1x512xf32, #tpu.memory_space<vmem>>, %arg12: memref<512x256xbf16, #tpu.memory_space<vmem>>, %arg13: memref<1x256xf32, #tpu.memory_space<vmem>>, %arg14: memref<256x10xbf16, #tpu.memory_space<vmem>>, %arg15: memref<1x10xf32, #tpu.memory_space<vmem>>, %arg16: memref<2x10xf32, #tpu.memory_space<vmem>>, %arg17: memref<2x512xf32, #tpu.memory_space<vmem>>) attributes {dimension_semantics = [#tpu.dimension_semantics<arbitrary>], iteration_bounds = array<i64: 1>, scalar_prefetch = 0 : i64, scratch_operands = 1 : i64, tpu.core_type = #tpu.core_type<tc>, window_params = [{pipeline_mode = #tpu.pipeline_mode<synchronous>, transform_indices = @transform_0, window_bounds = array<i64: 2, 2, 512>}, {pipeline_mode = #tpu.pipeline_mode<synchronous>, transform_indices = @transform_1, window_bounds = array<i64: 512, 256>}, {pipeline_mode = #tpu.pipeline_mode<synchronous>, transform_indices = @transform_2, window_bounds = array<i64: 1, 256>}, {pipeline_mode = #tpu.pipeline_mode<synchronous>, transform_indices = @transform_3, window_bounds = array<i64: 256, 128>}, {pipeline_mode = #tpu.pipeline_mode<synchronous>, transform_indices = @transform_4, window_bounds = array<i64: 1, 128>}, {pipeline_mode = #tpu.pipeline_mode<synchronous>, transform_indices = @transform_5, window_bounds = array<i64: 1, 128>}, {pipeline_mode = #tpu.pipeline_mode<synchronous>, transform_indices = @transform_6, window_bounds = array<i64: 1, 1>}, {pipeline_mode = #tpu.pipeline_mode<synchronous>, transform_indices = @transform_7, window_bounds = array<i64: 512, 512>}, {pipeline_mode = #tpu.pipeline_mode<synchronous>, transform_indices = @transform_8, window_bounds = array<i64: 1, 512>}, {pipeline_mode = #tpu.pipeline_mode<synchronous>, transform_indices = @transform_9, window_bounds = array<i64: 512, 512>}, {pipeline_mode = #tpu.pipeline_mode<synchronous>, transform_indices = @transform_10, window_bounds = array<i64: 1, 512>}, {pipeline_mode = #tpu.pipeline_mode<synchronous>, transform_indices = @transform_11, window_bounds = array<i64: 512, 256>}, {pipeline_mode = #tpu.pipeline_mode<synchronous>, transform_indices = @transform_12, window_bounds = array<i64: 1, 256>}, {pipeline_mode = #tpu.pipeline_mode<synchronous>, transform_indices = @transform_13, window_bounds = array<i64: 256, 10>}, {pipeline_mode = #tpu.pipeline_mode<synchronous>, transform_indices = @transform_14, window_bounds = array<i64: 1, 10>}, {pipeline_mode = #tpu.pipeline_mode<synchronous>, transform_indices = @transform_15, window_bounds = array<i64: 2, 10>}]} {
    %c0 = arith.constant 0 : index
    %c0_0 = arith.constant 0 : index
    %c0_1 = arith.constant 0 : index
    %0 = vector.load %arg1[%c0, %c0_0, %c0_1] : memref<2x2x512xf32, #tpu.memory_space<vmem>>, vector<1x2x512xf32>
    %1 = vector.shape_cast %0 : vector<1x2x512xf32> to vector<2x512xf32>
    %c0_2 = arith.constant 0 : index
    %c0_3 = arith.constant 0 : index
    %2 = vector.load %arg2[%c0_2, %c0_3] : memref<512x256xbf16, #tpu.memory_space<vmem>>, vector<512x256xbf16>
    %3 = arith.truncf %1 : vector<2x512xf32> to vector<2x512xbf16>
    %cst = arith.constant dense<0.000000e+00> : vector<2x256xf32>
    %4 = tpu.matmul %3, %2, %cst {dimension_numbers = #tpu.dot_dimension_numbers<[1], [0], [0], [1], [0, 0, 1, 1], [], []>} : vector<2x512xbf16>, vector<512x256xbf16>, vector<2x256xf32> -> vector<2x256xf32>
    %c0_4 = arith.constant 0 : index
    %c0_5 = arith.constant 0 : index
    %5 = vector.load %arg3[%c0_4, %c0_5] : memref<1x256xf32, #tpu.memory_space<vmem>>, vector<1x256xf32>
    %6 = vector.broadcast %5 : vector<1x256xf32> to vector<2x256xf32>
    %7 = arith.addf %4, %6 : vector<2x256xf32>
    %cst_6 = arith.constant 0.000000e+00 : f32
    %8 = vector.broadcast %cst_6 : f32 to vector<2x256xf32>
    %9 = arith.cmpf ogt, %7, %8 : vector<2x256xf32>
    %cst_7 = arith.constant 0.000000e+00 : f32
    %10 = vector.broadcast %cst_7 : f32 to vector<2x256xf32>
    %11 = arith.minimumf %7, %10 : vector<2x256xf32>
    %12 = math.exp %11 : vector<2x256xf32>
    %cst_8 = arith.constant 1.000000e+00 : f32
    %13 = vector.broadcast %cst_8 : f32 to vector<2x256xf32>
    %14 = arith.subf %12, %13 : vector<2x256xf32>
    %15 = arith.select %9, %7, %14 : vector<2x256xi1>, vector<2x256xf32>
    %c0_9 = arith.constant 0 : index
    %c0_10 = arith.constant 0 : index
    %16 = vector.load %arg4[%c0_9, %c0_10] : memref<256x128xbf16, #tpu.memory_space<vmem>>, vector<256x128xbf16>
    %17 = arith.truncf %15 : vector<2x256xf32> to vector<2x256xbf16>
    %cst_11 = arith.constant dense<0.000000e+00> : vector<2x128xf32>
    %18 = tpu.matmul %17, %16, %cst_11 {dimension_numbers = #tpu.dot_dimension_numbers<[1], [0], [0], [1], [0, 0, 1, 1], [], []>} : vector<2x256xbf16>, vector<256x128xbf16>, vector<2x128xf32> -> vector<2x128xf32>
    %c0_12 = arith.constant 0 : index
    %c0_13 = arith.constant 0 : index
    %19 = vector.load %arg5[%c0_12, %c0_13] : memref<1x128xf32, #tpu.memory_space<vmem>>, vector<1x128xf32>
    %20 = vector.broadcast %19 : vector<1x128xf32> to vector<2x128xf32>
    %21 = arith.addf %18, %20 : vector<2x128xf32>
    %cst_14 = arith.constant 0.000000e+00 : f32
    %22 = vector.broadcast %cst_14 : f32 to vector<2x128xf32>
    %23 = arith.cmpf ogt, %21, %22 : vector<2x128xf32>
    %cst_15 = arith.constant 0.000000e+00 : f32
    %24 = vector.broadcast %cst_15 : f32 to vector<2x128xf32>
    %25 = arith.minimumf %21, %24 : vector<2x128xf32>
    %26 = math.exp %25 : vector<2x128xf32>
    %cst_16 = arith.constant 1.000000e+00 : f32
    %27 = vector.broadcast %cst_16 : f32 to vector<2x128xf32>
    %28 = arith.subf %26, %27 : vector<2x128xf32>
    %29 = arith.select %23, %21, %28 : vector<2x128xi1>, vector<2x128xf32>
    %c0_17 = arith.constant 0 : index
    %c0_18 = arith.constant 0 : index
    %30 = vector.load %arg6[%c0_17, %c0_18] : memref<1x128xf32, #tpu.memory_space<vmem>>, vector<1x128xf32>
    %31 = vector.broadcast %30 : vector<1x128xf32> to vector<2x128xf32>
    %32 = arith.mulf %29, %31 : vector<2x128xf32>
    %cst_19 = arith.constant dense<0.000000e+00> : vector<2xf32>
    %33 = vector.multi_reduction <add>, %32, %cst_19 [1] : vector<2x128xf32> to vector<2xf32>
    %34 = vector.shape_cast %33 : vector<2xf32> to vector<2x1xf32>
    %c0_20 = arith.constant 0 : index
    %c0_21 = arith.constant 0 : index
    %35 = vector.load %arg7[%c0_20, %c0_21] : memref<1x1xf32, #tpu.memory_space<vmem>>, vector<1x1xf32>
    %36 = vector.broadcast %35 : vector<1x1xf32> to vector<2x1xf32>
    %37 = arith.addf %34, %36 : vector<2x1xf32>
    %c0_22 = arith.constant 0 : index
    %c0_23 = arith.constant 0 : index
    %38 = vector.load %arg8[%c0_22, %c0_23] : memref<512x512xbf16, #tpu.memory_space<vmem>>, vector<512x512xbf16>
    %39 = arith.truncf %1 : vector<2x512xf32> to vector<2x512xbf16>
    %cst_24 = arith.constant dense<0.000000e+00> : vector<2x512xf32>
    %40 = tpu.matmul %39, %38, %cst_24 {dimension_numbers = #tpu.dot_dimension_numbers<[1], [0], [0], [1], [0, 0, 1, 1], [], []>} : vector<2x512xbf16>, vector<512x512xbf16>, vector<2x512xf32> -> vector<2x512xf32>
    %c0_25 = arith.constant 0 : index
    %c0_26 = arith.constant 0 : index
    %41 = vector.load %arg9[%c0_25, %c0_26] : memref<1x512xf32, #tpu.memory_space<vmem>>, vector<1x512xf32>
    %42 = vector.broadcast %41 : vector<1x512xf32> to vector<2x512xf32>
    %43 = arith.addf %40, %42 : vector<2x512xf32>
    %cst_27 = arith.constant 0.000000e+00 : f32
    %44 = vector.broadcast %cst_27 : f32 to vector<2x512xf32>
    %45 = arith.cmpf ogt, %43, %44 : vector<2x512xf32>
    %cst_28 = arith.constant 0.000000e+00 : f32
    %46 = vector.broadcast %cst_28 : f32 to vector<2x512xf32>
    %47 = arith.minimumf %43, %46 : vector<2x512xf32>
    %48 = math.exp %47 : vector<2x512xf32>
    %cst_29 = arith.constant 1.000000e+00 : f32
    %49 = vector.broadcast %cst_29 : f32 to vector<2x512xf32>
    %50 = arith.subf %48, %49 : vector<2x512xf32>
    %51 = arith.select %45, %43, %50 : vector<2x512xi1>, vector<2x512xf32>
    %cst_30 = arith.constant dense<0xFF800000> : vector<1xf32>
    %52 = vector.multi_reduction <maximumf>, %37, %cst_30 [0] : vector<2x1xf32> to vector<1xf32>
    %53 = vector.shape_cast %52 : vector<1xf32> to vector<1x1xf32>
    %54 = vector.broadcast %53 : vector<1x1xf32> to vector<2x1xf32>
    %55 = arith.subf %37, %54 : vector<2x1xf32>
    %56 = math.exp %55 : vector<2x1xf32>
    %cst_31 = arith.constant dense<0.000000e+00> : vector<1xf32>
    %57 = vector.multi_reduction <add>, %56, %cst_31 [0] : vector<2x1xf32> to vector<1xf32>
    %58 = vector.shape_cast %57 : vector<1xf32> to vector<1x1xf32>
    %59 = tpu.reciprocal %58 {approx = true} : vector<1x1xf32> -> vector<1x1xf32>
    %60 = vector.broadcast %59 : vector<1x1xf32> to vector<2x1xf32>
    %61 = arith.mulf %56, %60 : vector<2x1xf32>
    %62 = vector.broadcast %61 : vector<2x1xf32> to vector<2x512xf32>
    %63 = arith.mulf %62, %51 : vector<2x512xf32>
    %cst_32 = arith.constant dense<0.000000e+00> : vector<512xf32>
    %64 = vector.multi_reduction <add>, %63, %cst_32 [0] : vector<2x512xf32> to vector<512xf32>
    %65 = vector.shape_cast %64 : vector<512xf32> to vector<1x512xf32>
    %c0_33 = arith.constant 0 : index
    %c0_34 = arith.constant 0 : index
    %66 = vector.load %arg17[%c0_33, %c0_34] : memref<2x512xf32, #tpu.memory_space<vmem>>, vector<1x512xf32>
    tpu.vector_store %arg17[%c0_33, %c0_34], %65 {strides = array<i32>} : memref<2x512xf32, #tpu.memory_space<vmem>>, vector<1x512xf32>,
    %c1 = arith.constant 1 : index
    %c0_35 = arith.constant 0 : index
    %c0_36 = arith.constant 0 : index
    %67 = vector.load %arg1[%c1, %c0_35, %c0_36] : memref<2x2x512xf32, #tpu.memory_space<vmem>>, vector<1x2x512xf32>
    %68 = vector.shape_cast %67 : vector<1x2x512xf32> to vector<2x512xf32>
    %c0_37 = arith.constant 0 : index
    %c0_38 = arith.constant 0 : index
    %69 = vector.load %arg2[%c0_37, %c0_38] : memref<512x256xbf16, #tpu.memory_space<vmem>>, vector<512x256xbf16>
    %70 = arith.truncf %68 : vector<2x512xf32> to vector<2x512xbf16>
    %cst_39 = arith.constant dense<0.000000e+00> : vector<2x256xf32>
    %71 = tpu.matmul %70, %69, %cst_39 {dimension_numbers = #tpu.dot_dimension_numbers<[1], [0], [0], [1], [0, 0, 1, 1], [], []>} : vector<2x512xbf16>, vector<512x256xbf16>, vector<2x256xf32> -> vector<2x256xf32>
    %c0_40 = arith.constant 0 : index
    %c0_41 = arith.constant 0 : index
    %72 = vector.load %arg3[%c0_40, %c0_41] : memref<1x256xf32, #tpu.memory_space<vmem>>, vector<1x256xf32>
    %73 = vector.broadcast %72 : vector<1x256xf32> to vector<2x256xf32>
    %74 = arith.addf %71, %73 : vector<2x256xf32>
    %cst_42 = arith.constant 0.000000e+00 : f32
    %75 = vector.broadcast %cst_42 : f32 to vector<2x256xf32>
    %76 = arith.cmpf ogt, %74, %75 : vector<2x256xf32>
    %cst_43 = arith.constant 0.000000e+00 : f32
    %77 = vector.broadcast %cst_43 : f32 to vector<2x256xf32>
    %78 = arith.minimumf %74, %77 : vector<2x256xf32>
    %79 = math.exp %78 : vector<2x256xf32>
    %cst_44 = arith.constant 1.000000e+00 : f32
    %80 = vector.broadcast %cst_44 : f32 to vector<2x256xf32>
    %81 = arith.subf %79, %80 : vector<2x256xf32>
    %82 = arith.select %76, %74, %81 : vector<2x256xi1>, vector<2x256xf32>
    %c0_45 = arith.constant 0 : index
    %c0_46 = arith.constant 0 : index
    %83 = vector.load %arg4[%c0_45, %c0_46] : memref<256x128xbf16, #tpu.memory_space<vmem>>, vector<256x128xbf16>
    %84 = arith.truncf %82 : vector<2x256xf32> to vector<2x256xbf16>
    %cst_47 = arith.constant dense<0.000000e+00> : vector<2x128xf32>
    %85 = tpu.matmul %84, %83, %cst_47 {dimension_numbers = #tpu.dot_dimension_numbers<[1], [0], [0], [1], [0, 0, 1, 1], [], []>} : vector<2x256xbf16>, vector<256x128xbf16>, vector<2x128xf32> -> vector<2x128xf32>
    %c0_48 = arith.constant 0 : index
    %c0_49 = arith.constant 0 : index
    %86 = vector.load %arg5[%c0_48, %c0_49] : memref<1x128xf32, #tpu.memory_space<vmem>>, vector<1x128xf32>
    %87 = vector.broadcast %86 : vector<1x128xf32> to vector<2x128xf32>
    %88 = arith.addf %85, %87 : vector<2x128xf32>
    %cst_50 = arith.constant 0.000000e+00 : f32
    %89 = vector.broadcast %cst_50 : f32 to vector<2x128xf32>
    %90 = arith.cmpf ogt, %88, %89 : vector<2x128xf32>
    %cst_51 = arith.constant 0.000000e+00 : f32
    %91 = vector.broadcast %cst_51 : f32 to vector<2x128xf32>
    %92 = arith.minimumf %88, %91 : vector<2x128xf32>
    %93 = math.exp %92 : vector<2x128xf32>
    %cst_52 = arith.constant 1.000000e+00 : f32
    %94 = vector.broadcast %cst_52 : f32 to vector<2x128xf32>
    %95 = arith.subf %93, %94 : vector<2x128xf32>
    %96 = arith.select %90, %88, %95 : vector<2x128xi1>, vector<2x128xf32>
    %c0_53 = arith.constant 0 : index
    %c0_54 = arith.constant 0 : index
    %97 = vector.load %arg6[%c0_53, %c0_54] : memref<1x128xf32, #tpu.memory_space<vmem>>, vector<1x128xf32>
    %98 = vector.broadcast %97 : vector<1x128xf32> to vector<2x128xf32>
    %99 = arith.mulf %96, %98 : vector<2x128xf32>
    %cst_55 = arith.constant dense<0.000000e+00> : vector<2xf32>
    %100 = vector.multi_reduction <add>, %99, %cst_55 [1] : vector<2x128xf32> to vector<2xf32>
    %101 = vector.shape_cast %100 : vector<2xf32> to vector<2x1xf32>
    %c0_56 = arith.constant 0 : index
    %c0_57 = arith.constant 0 : index
    %102 = vector.load %arg7[%c0_56, %c0_57] : memref<1x1xf32, #tpu.memory_space<vmem>>, vector<1x1xf32>
    %103 = vector.broadcast %102 : vector<1x1xf32> to vector<2x1xf32>
    %104 = arith.addf %101, %103 : vector<2x1xf32>
    %c0_58 = arith.constant 0 : index
    %c0_59 = arith.constant 0 : index
    %105 = vector.load %arg8[%c0_58, %c0_59] : memref<512x512xbf16, #tpu.memory_space<vmem>>, vector<512x512xbf16>
    %106 = arith.truncf %68 : vector<2x512xf32> to vector<2x512xbf16>
    %cst_60 = arith.constant dense<0.000000e+00> : vector<2x512xf32>
    %107 = tpu.matmul %106, %105, %cst_60 {dimension_numbers = #tpu.dot_dimension_numbers<[1], [0], [0], [1], [0, 0, 1, 1], [], []>} : vector<2x512xbf16>, vector<512x512xbf16>, vector<2x512xf32> -> vector<2x512xf32>
    %c0_61 = arith.constant 0 : index
    %c0_62 = arith.constant 0 : index
    %108 = vector.load %arg9[%c0_61, %c0_62] : memref<1x512xf32, #tpu.memory_space<vmem>>, vector<1x512xf32>
    %109 = vector.broadcast %108 : vector<1x512xf32> to vector<2x512xf32>
    %110 = arith.addf %107, %109 : vector<2x512xf32>
    %cst_63 = arith.constant 0.000000e+00 : f32
    %111 = vector.broadcast %cst_63 : f32 to vector<2x512xf32>
    %112 = arith.cmpf ogt, %110, %111 : vector<2x512xf32>
    %cst_64 = arith.constant 0.000000e+00 : f32
    %113 = vector.broadcast %cst_64 : f32 to vector<2x512xf32>
    %114 = arith.minimumf %110, %113 : vector<2x512xf32>
    %115 = math.exp %114 : vector<2x512xf32>
    %cst_65 = arith.constant 1.000000e+00 : f32
    %116 = vector.broadcast %cst_65 : f32 to vector<2x512xf32>
    %117 = arith.subf %115, %116 : vector<2x512xf32>
    %118 = arith.select %112, %110, %117 : vector<2x512xi1>, vector<2x512xf32>
    %cst_66 = arith.constant dense<0xFF800000> : vector<1xf32>
    %119 = vector.multi_reduction <maximumf>, %104, %cst_66 [0] : vector<2x1xf32> to vector<1xf32>
    %120 = vector.shape_cast %119 : vector<1xf32> to vector<1x1xf32>
    %121 = vector.broadcast %120 : vector<1x1xf32> to vector<2x1xf32>
    %122 = arith.subf %104, %121 : vector<2x1xf32>
    %123 = math.exp %122 : vector<2x1xf32>
    %cst_67 = arith.constant dense<0.000000e+00> : vector<1xf32>
    %124 = vector.multi_reduction <add>, %123, %cst_67 [0] : vector<2x1xf32> to vector<1xf32>
    %125 = vector.shape_cast %124 : vector<1xf32> to vector<1x1xf32>
    %126 = tpu.reciprocal %125 {approx = true} : vector<1x1xf32> -> vector<1x1xf32>
    %127 = vector.broadcast %126 : vector<1x1xf32> to vector<2x1xf32>
    %128 = arith.mulf %123, %127 : vector<2x1xf32>
    %129 = vector.broadcast %128 : vector<2x1xf32> to vector<2x512xf32>
    %130 = arith.mulf %129, %118 : vector<2x512xf32>
    %cst_68 = arith.constant dense<0.000000e+00> : vector<512xf32>
    %131 = vector.multi_reduction <add>, %130, %cst_68 [0] : vector<2x512xf32> to vector<512xf32>
    %132 = vector.shape_cast %131 : vector<512xf32> to vector<1x512xf32>
    %c1_69 = arith.constant 1 : index
    %c0_70 = arith.constant 0 : index
    %133 = vector.load %arg17[%c1_69, %c0_70] : memref<2x512xf32, #tpu.memory_space<vmem>>, vector<1x512xf32>
    tpu.vector_store %arg17[%c1_69, %c0_70], %132 {strides = array<i32>} : memref<2x512xf32, #tpu.memory_space<vmem>>, vector<1x512xf32>,
    %c0_71 = arith.constant 0 : index
    %c0_72 = arith.constant 0 : index
    %134 = vector.load %arg17[%c0_71, %c0_72] : memref<2x512xf32, #tpu.memory_space<vmem>>, vector<2x512xf32>
    %c0_73 = arith.constant 0 : index
    %c0_74 = arith.constant 0 : index
    %135 = vector.load %arg10[%c0_73, %c0_74] : memref<512x512xbf16, #tpu.memory_space<vmem>>, vector<512x512xbf16>
    %136 = arith.truncf %134 : vector<2x512xf32> to vector<2x512xbf16>
    %cst_75 = arith.constant dense<0.000000e+00> : vector<2x512xf32>
    %137 = tpu.matmul %136, %135, %cst_75 {dimension_numbers = #tpu.dot_dimension_numbers<[1], [0], [0], [1], [0, 0, 1, 1], [], []>} : vector<2x512xbf16>, vector<512x512xbf16>, vector<2x512xf32> -> vector<2x512xf32>
    %c0_76 = arith.constant 0 : index
    %c0_77 = arith.constant 0 : index
    %138 = vector.load %arg11[%c0_76, %c0_77] : memref<1x512xf32, #tpu.memory_space<vmem>>, vector<1x512xf32>
    %139 = vector.broadcast %138 : vector<1x512xf32> to vector<2x512xf32>
    %140 = arith.addf %137, %139 : vector<2x512xf32>
    %cst_78 = arith.constant 0.000000e+00 : f32
    %141 = vector.broadcast %cst_78 : f32 to vector<2x512xf32>
    %142 = arith.cmpf ogt, %140, %141 : vector<2x512xf32>
    %cst_79 = arith.constant 0.000000e+00 : f32
    %143 = vector.broadcast %cst_79 : f32 to vector<2x512xf32>
    %144 = arith.minimumf %140, %143 : vector<2x512xf32>
    %145 = math.exp %144 : vector<2x512xf32>
    %cst_80 = arith.constant 1.000000e+00 : f32
    %146 = vector.broadcast %cst_80 : f32 to vector<2x512xf32>
    %147 = arith.subf %145, %146 : vector<2x512xf32>
    %148 = arith.select %142, %140, %147 : vector<2x512xi1>, vector<2x512xf32>
    %c0_81 = arith.constant 0 : index
    %c0_82 = arith.constant 0 : index
    %149 = vector.load %arg12[%c0_81, %c0_82] : memref<512x256xbf16, #tpu.memory_space<vmem>>, vector<512x256xbf16>
    %150 = arith.truncf %148 : vector<2x512xf32> to vector<2x512xbf16>
    %cst_83 = arith.constant dense<0.000000e+00> : vector<2x256xf32>
    %151 = tpu.matmul %150, %149, %cst_83 {dimension_numbers = #tpu.dot_dimension_numbers<[1], [0], [0], [1], [0, 0, 1, 1], [], []>} : vector<2x512xbf16>, vector<512x256xbf16>, vector<2x256xf32> -> vector<2x256xf32>
    %c0_84 = arith.constant 0 : index
    %c0_85 = arith.constant 0 : index
    %152 = vector.load %arg13[%c0_84, %c0_85] : memref<1x256xf32, #tpu.memory_space<vmem>>, vector<1x256xf32>
    %153 = vector.broadcast %152 : vector<1x256xf32> to vector<2x256xf32>
    %154 = arith.addf %151, %153 : vector<2x256xf32>
    %cst_86 = arith.constant 0.000000e+00 : f32
    %155 = vector.broadcast %cst_86 : f32 to vector<2x256xf32>
    %156 = arith.cmpf ogt, %154, %155 : vector<2x256xf32>
    %cst_87 = arith.constant 0.000000e+00 : f32
    %157 = vector.broadcast %cst_87 : f32 to vector<2x256xf32>
    %158 = arith.minimumf %154, %157 : vector<2x256xf32>
    %159 = math.exp %158 : vector<2x256xf32>
    %cst_88 = arith.constant 1.000000e+00 : f32
    %160 = vector.broadcast %cst_88 : f32 to vector<2x256xf32>
    %161 = arith.subf %159, %160 : vector<2x256xf32>
    %162 = arith.select %156, %154, %161 : vector<2x256xi1>, vector<2x256xf32>
    %c0_89 = arith.constant 0 : index
    %c0_90 = arith.constant 0 : index
    %163 = vector.load %arg14[%c0_89, %c0_90] : memref<256x10xbf16, #tpu.memory_space<vmem>>, vector<256x10xbf16>
    %164 = arith.truncf %162 : vector<2x256xf32> to vector<2x256xbf16>
    %cst_91 = arith.constant dense<0.000000e+00> : vector<2x10xf32>
    %165 = tpu.matmul %164, %163, %cst_91 {dimension_numbers = #tpu.dot_dimension_numbers<[1], [0], [0], [1], [0, 0, 1, 1], [], []>} : vector<2x256xbf16>, vector<256x10xbf16>, vector<2x10xf32> -> vector<2x10xf32>
    %c0_92 = arith.constant 0 : index
    %c0_93 = arith.constant 0 : index
    %166 = vector.load %arg15[%c0_92, %c0_93] : memref<1x10xf32, #tpu.memory_space<vmem>>, vector<1x10xf32>
    %167 = vector.broadcast %166 : vector<1x10xf32> to vector<2x10xf32>
    %168 = arith.addf %165, %167 : vector<2x10xf32>
    %cst_94 = arith.constant dense<0xFF800000> : vector<2xf32>
    %169 = vector.multi_reduction <maximumf>, %168, %cst_94 [1] : vector<2x10xf32> to vector<2xf32>
    %170 = vector.shape_cast %169 : vector<2xf32> to vector<2x1xf32>
    %171 = vector.broadcast %170 : vector<2x1xf32> to vector<2x10xf32>
    %172 = arith.subf %168, %171 : vector<2x10xf32>
    %173 = math.exp %172 : vector<2x10xf32>
    %cst_95 = arith.constant dense<0.000000e+00> : vector<2xf32>
    %174 = vector.multi_reduction <add>, %173, %cst_95 [1] : vector<2x10xf32> to vector<2xf32>
    %175 = vector.shape_cast %174 : vector<2xf32> to vector<2x1xf32>
    %176 = math.log %175 : vector<2x1xf32>
    %177 = vector.broadcast %176 : vector<2x1xf32> to vector<2x10xf32>
    %178 = arith.subf %172, %177 : vector<2x10xf32>
    %c0_96 = arith.constant 0 : index
    %c0_97 = arith.constant 0 : index
    %179 = vector.load %arg16[%c0_96, %c0_97] : memref<2x10xf32, #tpu.memory_space<vmem>>, vector<2x10xf32>
    tpu.vector_store %arg16[%c0_96, %c0_97], %178 {strides = array<i32>} : memref<2x10xf32, #tpu.memory_space<vmem>>, vector<2x10xf32>,
    return
  }
  func.func @transform_0(%arg0: i32) -> (i32, i32, i32) {
    %c0_i32 = arith.constant 0 : i32
    %c0_i32_0 = arith.constant 0 : i32
    %c0_i32_1 = arith.constant 0 : i32
    %c0_i32_2 = arith.constant 0 : i32
    return %c0_i32, %c0_i32_0, %c0_i32_1 : i32, i32, i32
  }
  func.func @transform_1(%arg0: i32) -> (i32, i32) {
    %c0_i32 = arith.constant 0 : i32
    %c0_i32_0 = arith.constant 0 : i32
    %c0_i32_1 = arith.constant 0 : i32
    return %c0_i32, %c0_i32_0 : i32, i32
  }
  func.func @transform_2(%arg0: i32) -> (i32, i32) {
    %c0_i32 = arith.constant 0 : i32
    %c0_i32_0 = arith.constant 0 : i32
    %c0_i32_1 = arith.constant 0 : i32
    return %c0_i32, %c0_i32_0 : i32, i32
  }
  func.func @transform_3(%arg0: i32) -> (i32, i32) {
    %c0_i32 = arith.constant 0 : i32
    %c0_i32_0 = arith.constant 0 : i32
    %c0_i32_1 = arith.constant 0 : i32
    return %c0_i32, %c0_i32_0 : i32, i32
  }
  func.func @transform_4(%arg0: i32) -> (i32, i32) {
    %c0_i32 = arith.constant 0 : i32
    %c0_i32_0 = arith.constant 0 : i32
    %c0_i32_1 = arith.constant 0 : i32
    return %c0_i32, %c0_i32_0 : i32, i32
  }
  func.func @transform_5(%arg0: i32) -> (i32, i32) {
    %c0_i32 = arith.constant 0 : i32
    %c0_i32_0 = arith.constant 0 : i32
    %c0_i32_1 = arith.constant 0 : i32
    return %c0_i32, %c0_i32_0 : i32, i32
  }
  func.func @transform_6(%arg0: i32) -> (i32, i32) {
    %c0_i32 = arith.constant 0 : i32
    %c0_i32_0 = arith.constant 0 : i32
    %c0_i32_1 = arith.constant 0 : i32
    return %c0_i32, %c0_i32_0 : i32, i32
  }
  func.func @transform_7(%arg0: i32) -> (i32, i32) {
    %c0_i32 = arith.constant 0 : i32
    %c0_i32_0 = arith.constant 0 : i32
    %c0_i32_1 = arith.constant 0 : i32
    return %c0_i32, %c0_i32_0 : i32, i32
  }
  func.func @transform_8(%arg0: i32) -> (i32, i32) {
    %c0_i32 = arith.constant 0 : i32
    %c0_i32_0 = arith.constant 0 : i32
    %c0_i32_1 = arith.constant 0 : i32
    return %c0_i32, %c0_i32_0 : i32, i32
  }
  func.func @transform_9(%arg0: i32) -> (i32, i32) {
    %c0_i32 = arith.constant 0 : i32
    %c0_i32_0 = arith.constant 0 : i32
    %c0_i32_1 = arith.constant 0 : i32
    return %c0_i32, %c0_i32_0 : i32, i32
  }
  func.func @transform_10(%arg0: i32) -> (i32, i32) {
    %c0_i32 = arith.constant 0 : i32
    %c0_i32_0 = arith.constant 0 : i32
    %c0_i32_1 = arith.constant 0 : i32
    return %c0_i32, %c0_i32_0 : i32, i32
  }
  func.func @transform_11(%arg0: i32) -> (i32, i32) {
    %c0_i32 = arith.constant 0 : i32
    %c0_i32_0 = arith.constant 0 : i32
    %c0_i32_1 = arith.constant 0 : i32
    return %c0_i32, %c0_i32_0 : i32, i32
  }
  func.func @transform_12(%arg0: i32) -> (i32, i32) {
    %c0_i32 = arith.constant 0 : i32
    %c0_i32_0 = arith.constant 0 : i32
    %c0_i32_1 = arith.constant 0 : i32
    return %c0_i32, %c0_i32_0 : i32, i32
  }
  func.func @transform_13(%arg0: i32) -> (i32, i32) {
    %c0_i32 = arith.constant 0 : i32
    %c0_i32_0 = arith.constant 0 : i32
    %c0_i32_1 = arith.constant 0 : i32
    return %c0_i32, %c0_i32_0 : i32, i32
  }
  func.func @transform_14(%arg0: i32) -> (i32, i32) {
    %c0_i32 = arith.constant 0 : i32
    %c0_i32_0 = arith.constant 0 : i32
    %c0_i32_1 = arith.constant 0 : i32
    return %c0_i32, %c0_i32_0 : i32, i32
  }
  func.func @transform_15(%arg0: i32) -> (i32, i32) {
    %c0_i32 = arith.constant 0 : i32
    %c0_i32_0 = arith.constant 0 : i32
    %c0_i32_1 = arith.constant 0 : i32
    return %c0_i32, %c0_i32_0 : i32, i32
  }
}

module attributes {stable_mosaic.version = 11 : i64} {
  func.func @_gat_norm_kernel(%arg0: i32, %arg1: memref<1x2x256xf32, #tpu.memory_space<vmem>>, %arg2: memref<1x2x2xbf16, #tpu.memory_space<vmem>>, %arg3: memref<256x1024xbf16, #tpu.memory_space<vmem>>, %arg4: memref<2x512xf32, #tpu.memory_space<vmem>>, %arg5: memref<2x512xf32, #tpu.memory_space<vmem>>, %arg6: memref<1x512xf32, #tpu.memory_space<vmem>>, %arg7: memref<1x512xf32, #tpu.memory_space<vmem>>, %arg8: memref<1x512xf32, #tpu.memory_space<vmem>>, %arg9: memref<1x2x512xf32, #tpu.memory_space<vmem>>, %arg10: memref<2x512xf32, #tpu.memory_space<vmem>>) attributes {dimension_semantics = [#tpu.dimension_semantics<parallel>], iteration_bounds = array<i64: 2>, scalar_prefetch = 0 : i64, scratch_operands = 1 : i64, tpu.core_type = #tpu.core_type<tc>, window_params = [{transform_indices = @transform_0, window_bounds = array<i64: 1, 2, 256>}, {transform_indices = @transform_1, window_bounds = array<i64: 1, 2, 2>}, {pipeline_mode = #tpu.pipeline_mode<synchronous>, transform_indices = @transform_2, window_bounds = array<i64: 256, 1024>}, {pipeline_mode = #tpu.pipeline_mode<synchronous>, transform_indices = @transform_3, window_bounds = array<i64: 2, 512>}, {pipeline_mode = #tpu.pipeline_mode<synchronous>, transform_indices = @transform_4, window_bounds = array<i64: 2, 512>}, {pipeline_mode = #tpu.pipeline_mode<synchronous>, transform_indices = @transform_5, window_bounds = array<i64: 1, 512>}, {pipeline_mode = #tpu.pipeline_mode<synchronous>, transform_indices = @transform_6, window_bounds = array<i64: 1, 512>}, {pipeline_mode = #tpu.pipeline_mode<synchronous>, transform_indices = @transform_7, window_bounds = array<i64: 1, 512>}, {transform_indices = @transform_8, window_bounds = array<i64: 1, 2, 512>}]} {
    %c0 = arith.constant 0 : index
    %c0_0 = arith.constant 0 : index
    %c0_1 = arith.constant 0 : index
    %0 = vector.load %arg1[%c0, %c0_0, %c0_1] : memref<1x2x256xf32, #tpu.memory_space<vmem>>, vector<1x2x256xf32>
    %1 = vector.shape_cast %0 : vector<1x2x256xf32> to vector<2x256xf32>
    %c0_2 = arith.constant 0 : index
    %c0_3 = arith.constant 0 : index
    %2 = vector.load %arg3[%c0_2, %c0_3] : memref<256x1024xbf16, #tpu.memory_space<vmem>>, vector<256x1024xbf16>
    %3 = arith.truncf %1 : vector<2x256xf32> to vector<2x256xbf16>
    %cst = arith.constant dense<0.000000e+00> : vector<2x1024xf32>
    %4 = tpu.matmul %3, %2, %cst {dimension_numbers = #tpu.dot_dimension_numbers<[1], [0], [0], [1], [0, 0, 1, 1], [], []>} : vector<2x256xbf16>, vector<256x1024xbf16>, vector<2x1024xf32> -> vector<2x1024xf32>
    %c0_4 = arith.constant 0 : index
    %c0_5 = arith.constant 0 : index
    %c0_6 = arith.constant 0 : index
    %5 = vector.load %arg2[%c0_4, %c0_5, %c0_6] : memref<1x2x2xbf16, #tpu.memory_space<vmem>>, vector<1x2x2xbf16>
    %6 = vector.shape_cast %5 : vector<1x2x2xbf16> to vector<2x2xbf16>
    %7 = arith.extf %6 : vector<2x2xbf16> to vector<2x2xf32>
    %8 = tpu.iota {dimensions = array<i32: 0>} : vector<2x2xi32>
    %9 = tpu.iota {dimensions = array<i32: 1>} : vector<2x2xi32>
    %10 = arith.cmpi eq, %8, %9 : vector<2x2xi32>
    %11 = arith.extui %10 : vector<2x2xi1> to vector<2x2xi32>
    %12 = arith.sitofp %11 : vector<2x2xi32> to vector<2x2xf32>
    %cst_7 = arith.constant 1.000000e+00 : f32
    %13 = vector.broadcast %cst_7 : f32 to vector<2x2xf32>
    %14 = arith.subf %13, %12 : vector<2x2xf32>
    %15 = arith.mulf %7, %14 : vector<2x2xf32>
    %16 = arith.addf %15, %12 : vector<2x2xf32>
    %c0_8 = arith.constant 0 : index
    %c0_9 = arith.constant 0 : index
    %17 = vector.load %arg4[%c0_8, %c0_9] : memref<2x512xf32, #tpu.memory_space<vmem>>, vector<2x512xf32>
    %c0_10 = arith.constant 0 : index
    %c0_11 = arith.constant 0 : index
    %18 = vector.load %arg5[%c0_10, %c0_11] : memref<2x512xf32, #tpu.memory_space<vmem>>, vector<2x512xf32>
    %19 = vector.extract_strided_slice %4 {offsets = [0, 0], sizes = [2, 512], strides = [1, 1]} : vector<2x1024xf32> to vector<2x512xf32>
    %20 = vector.extract_strided_slice %17 {offsets = [0, 0], sizes = [1, 512], strides = [1, 1]} : vector<2x512xf32> to vector<1x512xf32>
    %21 = vector.broadcast %20 : vector<1x512xf32> to vector<2x512xf32>
    %22 = arith.mulf %19, %21 : vector<2x512xf32>
    %cst_12 = arith.constant dense<0.000000e+00> : vector<2xf32>
    %23 = vector.multi_reduction <add>, %22, %cst_12 [1] : vector<2x512xf32> to vector<2xf32>
    %24 = vector.shape_cast %23 : vector<2xf32> to vector<2x1xf32>
    %25 = vector.extract_strided_slice %18 {offsets = [0, 0], sizes = [1, 512], strides = [1, 1]} : vector<2x512xf32> to vector<1x512xf32>
    %26 = vector.broadcast %25 : vector<1x512xf32> to vector<2x512xf32>
    %27 = arith.mulf %19, %26 : vector<2x512xf32>
    %cst_13 = arith.constant dense<0.000000e+00> : vector<2xf32>
    %28 = vector.multi_reduction <add>, %27, %cst_13 [1] : vector<2x512xf32> to vector<2xf32>
    %29 = vector.shape_cast %28 : vector<2xf32> to vector<2x1xf32>
    %30 = tpu.transpose %24, [1, 0] : vector<2x1xf32> -> vector<1x2xf32>
    %31 = vector.broadcast %29 : vector<2x1xf32> to vector<2x2xf32>
    %32 = vector.broadcast %30 : vector<1x2xf32> to vector<2x2xf32>
    %33 = arith.addf %31, %32 : vector<2x2xf32>
    %cst_14 = arith.constant 0.000000e+00 : f32
    %34 = vector.broadcast %cst_14 : f32 to vector<2x2xf32>
    %35 = arith.cmpf oge, %33, %34 : vector<2x2xf32>
    %cst_15 = arith.constant 2.000000e-01 : f32
    %36 = vector.broadcast %cst_15 : f32 to vector<2x2xf32>
    %37 = arith.mulf %36, %33 : vector<2x2xf32>
    %38 = arith.select %35, %33, %37 : vector<2x2xi1>, vector<2x2xf32>
    %cst_16 = arith.constant 0.000000e+00 : f32
    %39 = vector.broadcast %cst_16 : f32 to vector<2x2xf32>
    %40 = arith.cmpf ogt, %16, %39 : vector<2x2xf32>
    %cst_17 = arith.constant -1.000000e+30 : f32
    %41 = vector.broadcast %cst_17 : f32 to vector<2x2xf32>
    %42 = arith.select %40, %38, %41 : vector<2x2xi1>, vector<2x2xf32>
    %cst_18 = arith.constant dense<0xFF800000> : vector<2xf32>
    %43 = vector.multi_reduction <maximumf>, %42, %cst_18 [1] : vector<2x2xf32> to vector<2xf32>
    %44 = vector.shape_cast %43 : vector<2xf32> to vector<2x1xf32>
    %45 = vector.broadcast %44 : vector<2x1xf32> to vector<2x2xf32>
    %46 = arith.subf %42, %45 : vector<2x2xf32>
    %47 = math.exp %46 : vector<2x2xf32>
    %48 = arith.mulf %47, %16 : vector<2x2xf32>
    %cst_19 = arith.constant dense<0.000000e+00> : vector<2xf32>
    %49 = vector.multi_reduction <add>, %48, %cst_19 [1] : vector<2x2xf32> to vector<2xf32>
    %50 = vector.shape_cast %49 : vector<2xf32> to vector<2x1xf32>
    %51 = tpu.reciprocal %50 {approx = true} : vector<2x1xf32> -> vector<2x1xf32>
    %52 = vector.broadcast %51 : vector<2x1xf32> to vector<2x2xf32>
    %53 = arith.mulf %48, %52 : vector<2x2xf32>
    %54 = arith.truncf %53 : vector<2x2xf32> to vector<2x2xbf16>
    %55 = arith.truncf %19 : vector<2x512xf32> to vector<2x512xbf16>
    %cst_20 = arith.constant dense<0.000000e+00> : vector<2x512xf32>
    %56 = tpu.matmul %54, %55, %cst_20 {dimension_numbers = #tpu.dot_dimension_numbers<[1], [0], [0], [1], [0, 0, 1, 1], [], []>} : vector<2x2xbf16>, vector<2x512xbf16>, vector<2x512xf32> -> vector<2x512xf32>
    %c0_21 = arith.constant 0 : index
    %c0_22 = arith.constant 0 : index
    %57 = vector.load %arg10[%c0_21, %c0_22] : memref<2x512xf32, #tpu.memory_space<vmem>>, vector<2x512xf32>
    tpu.vector_store %arg10[%c0_21, %c0_22], %56 {strides = array<i32>} : memref<2x512xf32, #tpu.memory_space<vmem>>, vector<2x512xf32>,
    %58 = vector.extract_strided_slice %4 {offsets = [0, 512], sizes = [2, 512], strides = [1, 1]} : vector<2x1024xf32> to vector<2x512xf32>
    %59 = vector.extract_strided_slice %17 {offsets = [1, 0], sizes = [1, 512], strides = [1, 1]} : vector<2x512xf32> to vector<1x512xf32>
    %60 = vector.broadcast %59 : vector<1x512xf32> to vector<2x512xf32>
    %61 = arith.mulf %58, %60 : vector<2x512xf32>
    %cst_23 = arith.constant dense<0.000000e+00> : vector<2xf32>
    %62 = vector.multi_reduction <add>, %61, %cst_23 [1] : vector<2x512xf32> to vector<2xf32>
    %63 = vector.shape_cast %62 : vector<2xf32> to vector<2x1xf32>
    %64 = vector.extract_strided_slice %18 {offsets = [1, 0], sizes = [1, 512], strides = [1, 1]} : vector<2x512xf32> to vector<1x512xf32>
    %65 = vector.broadcast %64 : vector<1x512xf32> to vector<2x512xf32>
    %66 = arith.mulf %58, %65 : vector<2x512xf32>
    %cst_24 = arith.constant dense<0.000000e+00> : vector<2xf32>
    %67 = vector.multi_reduction <add>, %66, %cst_24 [1] : vector<2x512xf32> to vector<2xf32>
    %68 = vector.shape_cast %67 : vector<2xf32> to vector<2x1xf32>
    %69 = tpu.transpose %63, [1, 0] : vector<2x1xf32> -> vector<1x2xf32>
    %70 = vector.broadcast %68 : vector<2x1xf32> to vector<2x2xf32>
    %71 = vector.broadcast %69 : vector<1x2xf32> to vector<2x2xf32>
    %72 = arith.addf %70, %71 : vector<2x2xf32>
    %cst_25 = arith.constant 0.000000e+00 : f32
    %73 = vector.broadcast %cst_25 : f32 to vector<2x2xf32>
    %74 = arith.cmpf oge, %72, %73 : vector<2x2xf32>
    %cst_26 = arith.constant 2.000000e-01 : f32
    %75 = vector.broadcast %cst_26 : f32 to vector<2x2xf32>
    %76 = arith.mulf %75, %72 : vector<2x2xf32>
    %77 = arith.select %74, %72, %76 : vector<2x2xi1>, vector<2x2xf32>
    %cst_27 = arith.constant 0.000000e+00 : f32
    %78 = vector.broadcast %cst_27 : f32 to vector<2x2xf32>
    %79 = arith.cmpf ogt, %16, %78 : vector<2x2xf32>
    %cst_28 = arith.constant -1.000000e+30 : f32
    %80 = vector.broadcast %cst_28 : f32 to vector<2x2xf32>
    %81 = arith.select %79, %77, %80 : vector<2x2xi1>, vector<2x2xf32>
    %cst_29 = arith.constant dense<0xFF800000> : vector<2xf32>
    %82 = vector.multi_reduction <maximumf>, %81, %cst_29 [1] : vector<2x2xf32> to vector<2xf32>
    %83 = vector.shape_cast %82 : vector<2xf32> to vector<2x1xf32>
    %84 = vector.broadcast %83 : vector<2x1xf32> to vector<2x2xf32>
    %85 = arith.subf %81, %84 : vector<2x2xf32>
    %86 = math.exp %85 : vector<2x2xf32>
    %87 = arith.mulf %86, %16 : vector<2x2xf32>
    %cst_30 = arith.constant dense<0.000000e+00> : vector<2xf32>
    %88 = vector.multi_reduction <add>, %87, %cst_30 [1] : vector<2x2xf32> to vector<2xf32>
    %89 = vector.shape_cast %88 : vector<2xf32> to vector<2x1xf32>
    %90 = tpu.reciprocal %89 {approx = true} : vector<2x1xf32> -> vector<2x1xf32>
    %91 = vector.broadcast %90 : vector<2x1xf32> to vector<2x2xf32>
    %92 = arith.mulf %87, %91 : vector<2x2xf32>
    %93 = arith.truncf %92 : vector<2x2xf32> to vector<2x2xbf16>
    %94 = arith.truncf %58 : vector<2x512xf32> to vector<2x512xbf16>
    %cst_31 = arith.constant dense<0.000000e+00> : vector<2x512xf32>
    %95 = tpu.matmul %93, %94, %cst_31 {dimension_numbers = #tpu.dot_dimension_numbers<[1], [0], [0], [1], [0, 0, 1, 1], [], []>} : vector<2x2xbf16>, vector<2x512xbf16>, vector<2x512xf32> -> vector<2x512xf32>
    %c0_32 = arith.constant 0 : index
    %c0_33 = arith.constant 0 : index
    %96 = vector.load %arg10[%c0_32, %c0_33] : memref<2x512xf32, #tpu.memory_space<vmem>>, vector<2x512xf32>
    %97 = arith.addf %96, %95 : vector<2x512xf32>
    %c0_34 = arith.constant 0 : index
    %c0_35 = arith.constant 0 : index
    %98 = vector.load %arg10[%c0_34, %c0_35] : memref<2x512xf32, #tpu.memory_space<vmem>>, vector<2x512xf32>
    tpu.vector_store %arg10[%c0_34, %c0_35], %97 {strides = array<i32>} : memref<2x512xf32, #tpu.memory_space<vmem>>, vector<2x512xf32>,
    %c0_36 = arith.constant 0 : index
    %c0_37 = arith.constant 0 : index
    %99 = vector.load %arg10[%c0_36, %c0_37] : memref<2x512xf32, #tpu.memory_space<vmem>>, vector<2x512xf32>
    %cst_38 = arith.constant 5.000000e-01 : f32
    %100 = vector.broadcast %cst_38 : f32 to vector<2x512xf32>
    %101 = arith.mulf %99, %100 : vector<2x512xf32>
    %c0_39 = arith.constant 0 : index
    %c0_40 = arith.constant 0 : index
    %102 = vector.load %arg6[%c0_39, %c0_40] : memref<1x512xf32, #tpu.memory_space<vmem>>, vector<1x512xf32>
    %103 = vector.broadcast %102 : vector<1x512xf32> to vector<2x512xf32>
    %104 = arith.addf %101, %103 : vector<2x512xf32>
    %cst_41 = arith.constant 0.000000e+00 : f32
    %105 = vector.broadcast %cst_41 : f32 to vector<2x512xf32>
    %106 = arith.cmpf ogt, %104, %105 : vector<2x512xf32>
    %cst_42 = arith.constant 0.000000e+00 : f32
    %107 = vector.broadcast %cst_42 : f32 to vector<2x512xf32>
    %108 = arith.minimumf %104, %107 : vector<2x512xf32>
    %109 = math.exp %108 : vector<2x512xf32>
    %cst_43 = arith.constant 1.000000e+00 : f32
    %110 = vector.broadcast %cst_43 : f32 to vector<2x512xf32>
    %111 = arith.subf %109, %110 : vector<2x512xf32>
    %112 = arith.select %106, %104, %111 : vector<2x512xi1>, vector<2x512xf32>
    %cst_44 = arith.constant dense<0.000000e+00> : vector<512xf32>
    %113 = vector.multi_reduction <add>, %112, %cst_44 [0] : vector<2x512xf32> to vector<512xf32>
    %114 = vector.shape_cast %113 : vector<512xf32> to vector<1x512xf32>
    %cst_45 = arith.constant 2.000000e+00 : f32
    %115 = vector.broadcast %cst_45 : f32 to vector<1x512xf32>
    %116 = arith.divf %114, %115 : vector<1x512xf32>
    %117 = vector.broadcast %116 : vector<1x512xf32> to vector<2x512xf32>
    %118 = arith.subf %112, %117 : vector<2x512xf32>
    %119 = arith.mulf %118, %118 : vector<2x512xf32>
    %cst_46 = arith.constant dense<0.000000e+00> : vector<512xf32>
    %120 = vector.multi_reduction <add>, %119, %cst_46 [0] : vector<2x512xf32> to vector<512xf32>
    %121 = vector.shape_cast %120 : vector<512xf32> to vector<1x512xf32>
    %cst_47 = arith.constant 2.000000e+00 : f32
    %122 = vector.broadcast %cst_47 : f32 to vector<1x512xf32>
    %123 = arith.divf %121, %122 : vector<1x512xf32>
    %cst_48 = arith.constant 9.99999974E-6 : f32
    %124 = vector.broadcast %cst_48 : f32 to vector<1x512xf32>
    %125 = arith.addf %123, %124 : vector<1x512xf32>
    %126 = math.rsqrt %125 : vector<1x512xf32>
    %127 = vector.broadcast %126 : vector<1x512xf32> to vector<2x512xf32>
    %128 = arith.mulf %118, %127 : vector<2x512xf32>
    %c0_49 = arith.constant 0 : index
    %c0_50 = arith.constant 0 : index
    %129 = vector.load %arg7[%c0_49, %c0_50] : memref<1x512xf32, #tpu.memory_space<vmem>>, vector<1x512xf32>
    %130 = vector.broadcast %129 : vector<1x512xf32> to vector<2x512xf32>
    %131 = arith.mulf %128, %130 : vector<2x512xf32>
    %c0_51 = arith.constant 0 : index
    %c0_52 = arith.constant 0 : index
    %132 = vector.load %arg8[%c0_51, %c0_52] : memref<1x512xf32, #tpu.memory_space<vmem>>, vector<1x512xf32>
    %133 = vector.broadcast %132 : vector<1x512xf32> to vector<2x512xf32>
    %134 = arith.addf %131, %133 : vector<2x512xf32>
    %c0_53 = arith.constant 0 : index
    %c0_54 = arith.constant 0 : index
    %c0_55 = arith.constant 0 : index
    %135 = vector.load %arg9[%c0_53, %c0_54, %c0_55] : memref<1x2x512xf32, #tpu.memory_space<vmem>>, vector<1x2x512xf32>
    %136 = vector.shape_cast %135 : vector<1x2x512xf32> to vector<2x512xf32>
    %137 = vector.shape_cast %134 : vector<2x512xf32> to vector<1x2x512xf32>
    tpu.vector_store %arg9[%c0_53, %c0_54, %c0_55], %137 {strides = array<i32>} : memref<1x2x512xf32, #tpu.memory_space<vmem>>, vector<1x2x512xf32>,
    return
  }
  func.func @transform_0(%arg0: i32) -> (i32, i32, i32) {
    %c0_i32 = arith.constant 0 : i32
    %c0_i32_0 = arith.constant 0 : i32
    %c0_i32_1 = arith.constant 0 : i32
    return %arg0, %c0_i32, %c0_i32_0 : i32, i32, i32
  }
  func.func @transform_1(%arg0: i32) -> (i32, i32, i32) {
    %c0_i32 = arith.constant 0 : i32
    %c0_i32_0 = arith.constant 0 : i32
    %c0_i32_1 = arith.constant 0 : i32
    return %arg0, %c0_i32, %c0_i32_0 : i32, i32, i32
  }
  func.func @transform_2(%arg0: i32) -> (i32, i32) {
    %c0_i32 = arith.constant 0 : i32
    %c0_i32_0 = arith.constant 0 : i32
    %c0_i32_1 = arith.constant 0 : i32
    return %c0_i32, %c0_i32_0 : i32, i32
  }
  func.func @transform_3(%arg0: i32) -> (i32, i32) {
    %c0_i32 = arith.constant 0 : i32
    %c0_i32_0 = arith.constant 0 : i32
    %c0_i32_1 = arith.constant 0 : i32
    return %c0_i32, %c0_i32_0 : i32, i32
  }
  func.func @transform_4(%arg0: i32) -> (i32, i32) {
    %c0_i32 = arith.constant 0 : i32
    %c0_i32_0 = arith.constant 0 : i32
    %c0_i32_1 = arith.constant 0 : i32
    return %c0_i32, %c0_i32_0 : i32, i32
  }
  func.func @transform_5(%arg0: i32) -> (i32, i32) {
    %c0_i32 = arith.constant 0 : i32
    %c0_i32_0 = arith.constant 0 : i32
    %c0_i32_1 = arith.constant 0 : i32
    return %c0_i32, %c0_i32_0 : i32, i32
  }
  func.func @transform_6(%arg0: i32) -> (i32, i32) {
    %c0_i32 = arith.constant 0 : i32
    %c0_i32_0 = arith.constant 0 : i32
    %c0_i32_1 = arith.constant 0 : i32
    return %c0_i32, %c0_i32_0 : i32, i32
  }
  func.func @transform_7(%arg0: i32) -> (i32, i32) {
    %c0_i32 = arith.constant 0 : i32
    %c0_i32_0 = arith.constant 0 : i32
    %c0_i32_1 = arith.constant 0 : i32
    return %c0_i32, %c0_i32_0 : i32, i32
  }
  func.func @transform_8(%arg0: i32) -> (i32, i32, i32) {
    %c0_i32 = arith.constant 0 : i32
    %c0_i32_0 = arith.constant 0 : i32
    %c0_i32_1 = arith.constant 0 : i32
    return %arg0, %c0_i32, %c0_i32_0 : i32, i32, i32
  }
}

</mosaic_0001>

<llo_original>
// kernel: poolnet_forward.4
$region0: #{poolnet_forward.4}
  #allocation0 [shape = 'u32[]', space=smem, size = 0x4, offset = 0x4, fixed_abs, tag = 'smem constant byte address 0x4 - core index']
  #allocation1 [shape = 'u32[144,128]{1,0:T(1,128)}', space=vmem, size = 0x12000, scoped, tag = 'internal scratch']
  #allocation2 [shape = 'f32[16,64]{1,0:T(8,128)}', space=vmem, size = 0x2000, scoped, tag = 'scratch operand']
  %s0 = inlined_call_operand.vmem [shape: f32[2,16,8], index: 0, kind: input, shape index: {}]
  %s1 = inlined_call_operand.vmem [shape: bf16[2,16,16], index: 1, kind: input, shape index: {}]
  %s2 = inlined_call_operand.vmem [shape: bf16[8,64], index: 2, kind: input, shape index: {}]
  %s3 = inlined_call_operand.vmem [shape: f32[2,32], index: 3, kind: input, shape index: {}]
  %s4 = inlined_call_operand.vmem [shape: f32[2,32], index: 4, kind: input, shape index: {}]
  %s5 = inlined_call_operand.vmem [shape: f32[1,64], index: 5, kind: input, shape index: {}]
  %s6 = inlined_call_operand.vmem [shape: f32[1,64], index: 6, kind: input, shape index: {}]
  %s7 = inlined_call_operand.vmem [shape: f32[1,64], index: 7, kind: input, shape index: {}]
  %s8 = inlined_call_operand.vmem [shape: f32[1,64], index: 8, kind: input, shape index: {}]
  %s9 = inlined_call_operand.vmem [shape: f32[2,16,64], index: 9, kind: output, shape index: {0}]
  %s10 = inlined_call_operand.vmem [shape: f32[2,1,16], index: 10, kind: output, shape index: {1}]
  %11 = xla_tuple %s9, %s10
  %s12 = sld [smem:[#allocation0]]
  $region77: #{poolnet_forward.4} parent=0
    _
  %s14 = ssub.s32 1, %s12
  %s15 = scalar_select 0, %s14, %s12
  loop: start=0, step=1, limit=4
  $region2: #{poolnet_forward.4} parent=0 // loop_pre_header
    _
  $region3: #{poolnet_forward.4} parent=0 // loop_header
    %s17 = sphi 0, %s21
    %p18 = scmp.ge.s32.totalorder %s17, 4
    %s27 = sphi 0, %s29
    %s30 = sphi 0, %s27
    %s31 = sphi 0, %s30
    %s47 = sphi 0, %s31
    %s53 = sphi 0, %s55
    %s56 = sphi 0, %s53
    %s57 = sphi 0, %s56
    %s73 = sphi 0, %s57
    %s77 = sphi 0, %s77
    %s79 = sphi 0, %s77
    %s80 = sphi 0, %s79
    %s94 = sphi 0, %s80
    %s98 = sphi 0, %s98
    %s100 = sphi 0, %s98
    %s101 = sphi 0, %s100
    %s115 = sphi 0, %s101
    %s119 = sphi 0, %s119
    %s121 = sphi 0, %s119
    %s122 = sphi 0, %s121
    %s136 = sphi 0, %s122
    %s140 = sphi 0, %s140
    %s142 = sphi 0, %s140
    %s143 = sphi 0, %s142
    %s157 = sphi 0, %s143
    %s161 = sphi 0, %s161
    %s163 = sphi 0, %s161
    %s164 = sphi 0, %s163
    %s178 = sphi 0, %s164
    %s182 = sphi 0, %s182
    %s184 = sphi 0, %s182
    %s185 = sphi 0, %s184
    %s199 = sphi 0, %s185
    %s203 = sphi 0, %s203
    %s205 = sphi 0, %s203
    %s206 = sphi 0, %s205
    %s220 = sphi 0, %s206
    %s226 = sphi 0, %s228
    %s229 = sphi 0, %s226
    %s230 = sphi 0, %s229
    %s246 = sphi 0, %s230
    %s252 = sphi 0, %s254
    %s255 = sphi 0, %s252
    %s256 = sphi 0, %s255
    %s272 = sphi 0, %s256
  $region4: #{poolnet_forward.4} parent=0 // loop_header_branch
    %20 = sbr.rel (%p18) target = $region8
  $region5: #{poolnet_forward.4} parent=0 // loop_body
    %s22 = ssub.s32 %s17, 1
    %s23 = ssub.s32 %s17, 2
    %s24 = sadd.s32 %s17, 1
    %s25 = ssub.s32 %s17, %s24
    %p26 = scmp.eq.s32.totalorder %s25, 0
    %s28 = sadd.s32 %s27, 1
    %s29 = scalar_select %p26, %s27, %s28
    %p32 = pneg %p26
    %p33 = scmp.eq.s32.totalorder %s17, 1
    %p34 = por %p32, %p33
    %p35 = scmp.ne.s32.totalorder %s27, %s30
    %p36 = scmp.eq.s32.totalorder %s17, 0
    %p37 = por %p35, %p36
    %p38 = scmp.ne.s32.totalorder %s27, %s30
    %p39 = scmp.eq.s32.totalorder %s22, 1
    %p40 = por %p38, %p39
    %p41 = scmp.ne.s32.totalorder %s30, %s31
    %p42 = scmp.eq.s32.totalorder %s22, 0
    %p43 = por %p41, %p42
    %p44 = scmp.ne.s32.totalorder %s30, %s31
    %p45 = scmp.eq.s32.totalorder %s23, 1
    %p46 = por %p44, %p45
    %p48 = scmp.ne.s32.totalorder %s31, %s47
    %p49 = scmp.eq.s32.totalorder %s23, 0
    %p50 = por %p48, %p49
    %s51 = ssub.s32 %s17, %s24
    %p52 = scmp.eq.s32.totalorder %s51, 0
    %s54 = sadd.s32 %s53, 1
    %s55 = scalar_select %p52, %s53, %s54
    %p58 = pneg %p52
    %p59 = scmp.eq.s32.totalorder %s17, 1
    %p60 = por %p58, %p59
    %p61 = scmp.ne.s32.totalorder %s53, %s56
    %p62 = scmp.eq.s32.totalorder %s17, 0
    %p63 = por %p61, %p62
    %p64 = scmp.ne.s32.totalorder %s53, %s56
    %p65 = scmp.eq.s32.totalorder %s22, 1
    %p66 = por %p64, %p65
    %p67 = scmp.ne.s32.totalorder %s56, %s57
    %p68 = scmp.eq.s32.totalorder %s22, 0
    %p69 = por %p67, %p68
    %p70 = scmp.ne.s32.totalorder %s56, %s57
    %p71 = scmp.eq.s32.totalorder %s23, 1
    %p72 = por %p70, %p71
    %p74 = scmp.ne.s32.totalorder %s57, %s73
    %p75 = scmp.eq.s32.totalorder %s23, 0
    %p76 = por %p74, %p75
    %s78 = sadd.s32 %s77, 1
    %p81 = scmp.eq.s32.totalorder %s17, 1
    %p82 = scmp.ne.s32.totalorder %s77, %s79
    %p83 = scmp.eq.s32.totalorder %s17, 0
    %p84 = por %p82, %p83
    %p85 = scmp.ne.s32.totalorder %s77, %s79
    %p86 = scmp.eq.s32.totalorder %s22, 1
    %p87 = por %p85, %p86
    %p88 = scmp.ne.s32.totalorder %s79, %s80
    %p89 = scmp.eq.s32.totalorder %s22, 0
    %p90 = por %p88, %p89
    %p91 = scmp.ne.s32.totalorder %s79, %s80
    %p92 = scmp.eq.s32.totalorder %s23, 1
    %p93 = por %p91, %p92
    %p95 = scmp.ne.s32.totalorder %s80, %s94
    %p96 = scmp.eq.s32.totalorder %s23, 0
    %p97 = por %p95, %p96
    %s99 = sadd.s32 %s98, 1
    %p102 = scmp.eq.s32.totalorder %s17, 1
    %p103 = scmp.ne.s32.totalorder %s98, %s100
    %p104 = scmp.eq.s32.totalorder %s17, 0
    %p105 = por %p103, %p104
    %p106 = scmp.ne.s32.totalorder %s98, %s100
    %p107 = scmp.eq.s32.totalorder %s22, 1
    %p108 = por %p106, %p107
    %p109 = scmp.ne.s32.totalorder %s100, %s101
    %p110 = scmp.eq.s32.totalorder %s22, 0
    %p111 = por %p109, %p110
    %p112 = scmp.ne.s32.totalorder %s100, %s101
    %p113 = scmp.eq.s32.totalorder %s23, 1
    %p114 = por %p112, %p113
    %p116 = scmp.ne.s32.totalorder %s101, %s115
    %p117 = scmp.eq.s32.totalorder %s23, 0
    %p118 = por %p116, %p117
    %s120 = sadd.s32 %s119, 1
    %p123 = scmp.eq.s32.totalorder %s17, 1
    %p124 = scmp.ne.s32.totalorder %s119, %s121
    %p125 = scmp.eq.s32.totalorder %s17, 0
    %p126 = por %p124, %p125
    %p127 = scmp.ne.s32.totalorder %s119, %s121
    %p128 = scmp.eq.s32.totalorder %s22, 1
    %p129 = por %p127, %p128
    %p130 = scmp.ne.s32.totalorder %s121, %s122
    %p131 = scmp.eq.s32.totalorder %s22, 0
    %p132 = por %p130, %p131
    %p133 = scmp.ne.s32.totalorder %s121, %s122
    %p134 = scmp.eq.s32.totalorder %s23, 1
    %p135 = por %p133, %p134
    %p137 = scmp.ne.s32.totalorder %s122, %s136
    %p138 = scmp.eq.s32.totalorder %s23, 0
    %p139 = por %p137, %p138
    %s141 = sadd.s32 %s140, 1
    %p144 = scmp.eq.s32.totalorder %s17, 1
    %p145 = scmp.ne.s32.totalorder %s140, %s142
    %p146 = scmp.eq.s32.totalorder %s17, 0
    %p147 = por %p145, %p146
    %p148 = scmp.ne.s32.totalorder %s140, %s142
    %p149 = scmp.eq.s32.totalorder %s22, 1
    %p150 = por %p148, %p149
    %p151 = scmp.ne.s32.totalorder %s142, %s143
    %p152 = scmp.eq.s32.totalorder %s22, 0
    %p153 = por %p151, %p152
    %p154 = scmp.ne.s32.totalorder %s142, %s143
    %p155 = scmp.eq.s32.totalorder %s23, 1
    %p156 = por %p154, %p155
    %p158 = scmp.ne.s32.totalorder %s143, %s157
    %p159 = scmp.eq.s32.totalorder %s23, 0
    %p160 = por %p158, %p159
    %s162 = sadd.s32 %s161, 1
    %p165 = scmp.eq.s32.totalorder %s17, 1
    %p166 = scmp.ne.s32.totalorder %s161, %s163
    %p167 = scmp.eq.s32.totalorder %s17, 0
    %p168 = por %p166, %p167
    %p169 = scmp.ne.s32.totalorder %s161, %s163
    %p170 = scmp.eq.s32.totalorder %s22, 1
    %p171 = por %p169, %p170
    %p172 = scmp.ne.s32.totalorder %s163, %s164
    %p173 = scmp.eq.s32.totalorder %s22, 0
    %p174 = por %p172, %p173
    %p175 = scmp.ne.s32.totalorder %s163, %s164
    %p176 = scmp.eq.s32.totalorder %s23, 1
    %p177 = por %p175, %p176
    %p179 = scmp.ne.s32.totalorder %s164, %s178
    %p180 = scmp.eq.s32.totalorder %s23, 0
    %p181 = por %p179, %p180
    %s183 = sadd.s32 %s182, 1
    %p186 = scmp.eq.s32.totalorder %s17, 1
    %p187 = scmp.ne.s32.totalorder %s182, %s184
    %p188 = scmp.eq.s32.totalorder %s17, 0
    %p189 = por %p187, %p188
    %p190 = scmp.ne.s32.totalorder %s182, %s184
    %p191 = scmp.eq.s32.totalorder %s22, 1
    %p192 = por %p190, %p191
    %p193 = scmp.ne.s32.totalorder %s184, %s185
    %p194 = scmp.eq.s32.totalorder %s22, 0
    %p195 = por %p193, %p194
    %p196 = scmp.ne.s32.totalorder %s184, %s185
    %p197 = scmp.eq.s32.totalorder %s23, 1
    %p198 = por %p196, %p197
    %p200 = scmp.ne.s32.totalorder %s185, %s199
    %p201 = scmp.eq.s32.totalorder %s23, 0
    %p202 = por %p200, %p201
    %s204 = sadd.s32 %s203, 1
    %p207 = scmp.eq.s32.totalorder %s17, 1
    %p208 = scmp.ne.s32.totalorder %s203, %s205
    %p209 = scmp.eq.s32.totalorder %s17, 0
    %p210 = por %p208, %p209
    %p211 = scmp.ne.s32.totalorder %s203, %s205
    %p212 = scmp.eq.s32.totalorder %s22, 1
    %p213 = por %p211, %p212
    %p214 = scmp.ne.s32.totalorder %s205, %s206
    %p215 = scmp.eq.s32.totalorder %s22, 0
    %p216 = por %p214, %p215
    %p217 = scmp.ne.s32.totalorder %s205, %s206
    %p218 = scmp.eq.s32.totalorder %s23, 1
    %p219 = por %p217, %p218
    %p221 = scmp.ne.s32.totalorder %s206, %s220
    %p222 = scmp.eq.s32.totalorder %s23, 0
    %p223 = por %p221, %p222
    %s224 = ssub.s32 %s17, %s24
    %p225 = scmp.eq.s32.totalorder %s224, 0
    %s227 = sadd.s32 %s226, 1
    %s228 = scalar_select %p225, %s226, %s227
    %p231 = pneg %p225
    %p232 = scmp.eq.s32.totalorder %s17, 1
    %p233 = por %p231, %p232
    %p234 = scmp.ne.s32.totalorder %s226, %s229
    %p235 = scmp.eq.s32.totalorder %s17, 0
    %p236 = por %p234, %p235
    %p237 = scmp.ne.s32.totalorder %s226, %s229
    %p238 = scmp.eq.s32.totalorder %s22, 1
    %p239 = por %p237, %p238
    %p240 = scmp.ne.s32.totalorder %s229, %s230
    %p241 = scmp.eq.s32.totalorder %s22, 0
    %p242 = por %p240, %p241
    %p243 = scmp.ne.s32.totalorder %s229, %s230
    %p244 = scmp.eq.s32.totalorder %s23, 1
    %p245 = por %p243, %p244
    %p247 = scmp.ne.s32.totalorder %s230, %s246
    %p248 = scmp.eq.s32.totalorder %s23, 0
    %p249 = por %p247, %p248
    %s250 = ssub.s32 %s17, %s24
    %p251 = scmp.eq.s32.totalorder %s250, 0
    %s253 = sadd.s32 %s252, 1
    %s254 = scalar_select %p251, %s252, %s253
    %p257 = pneg %p251
    %p258 = scmp.eq.s32.totalorder %s17, 1
    %p259 = por %p257, %p258
    %p260 = scmp.ne.s32.totalorder %s252, %s255
    %p261 = scmp.eq.s32.totalorder %s17, 0
    %p262 = por %p260, %p261
    %p263 = scmp.ne.s32.totalorder %s252, %s255
    %p264 = scmp.eq.s32.totalorder %s22, 1
    %p265 = por %p263, %p264
    %p266 = scmp.ne.s32.totalorder %s255, %s256
    %p267 = scmp.eq.s32.totalorder %s22, 0
    %p268 = por %p266, %p267
    %p269 = scmp.ne.s32.totalorder %s255, %s256
    %p270 = scmp.eq.s32.totalorder %s23, 1
    %p271 = por %p269, %p270
    %p273 = scmp.ne.s32.totalorder %s256, %s272
    %p274 = scmp.eq.s32.totalorder %s23, 0
    %p275 = por %p273, %p274
    %p276 = scmp.le.s32.totalorder 1, %s17
    %p277 = scmp.lt.s32.totalorder %s17, 3
    %p278 = pnand %p276, %p277
    %p279 = pneg %p278
    // Predicated region
    $region9: #{poolnet_forward.4} parent=5 // pred_check
      _
    $region10: #{poolnet_forward.4} parent=5 // pred_check_branch
      %281 = sbr.rel (%p278) target = $region12
    $region11: #{poolnet_forward.4} parent=5 // pred_region
      %s282 = ssub.s32 %s17, 1
      // Predicated region
      $region13: #{poolnet_forward.4} parent=11 // pred_check
        %p283 = pneg %p90
      $region14: #{poolnet_forward.4} parent=11 // pred_check_branch
        %285 = sbr.rel (%p283) target = $region16
      $region15: #{poolnet_forward.4} parent=11 // pred_region
        _
      $region16: #{poolnet_forward.4} parent=11 // pred_fallthru
        _
      // Predicated region
      $region17: #{poolnet_forward.4} parent=11 // pred_check
        %p286 = pneg %p111
      $region18: #{poolnet_forward.4} parent=11 // pred_check_branch
        %288 = sbr.rel (%p286) target = $region20
      $region19: #{poolnet_forward.4} parent=11 // pred_region
        _
      $region20: #{poolnet_forward.4} parent=11 // pred_fallthru
        _
      // Predicated region
      $region21: #{poolnet_forward.4} parent=11 // pred_check
        %p289 = pneg %p132
      $region22: #{poolnet_forward.4} parent=11 // pred_check_branch
        %291 = sbr.rel (%p289) target = $region24
      $region23: #{poolnet_forward.4} parent=11 // pred_region
        _
      $region24: #{poolnet_forward.4} parent=11 // pred_fallthru
        _
      // Predicated region
      $region25: #{poolnet_forward.4} parent=11 // pred_check
        %p292 = pneg %p153
      $region26: #{poolnet_forward.4} parent=11 // pred_check_branch
        %294 = sbr.rel (%p292) target = $region28
      $region27: #{poolnet_forward.4} parent=11 // pred_region
        _
      $region28: #{poolnet_forward.4} parent=11 // pred_fallthru
        _
      // Predicated region
      $region29: #{poolnet_forward.4} parent=11 // pred_check
        %p295 = pneg %p174
      $region30: #{poolnet_forward.4} parent=11 // pred_check_branch
        %297 = sbr.rel (%p295) target = $region32
      $region31: #{poolnet_forward.4} parent=11 // pred_region
        _
      $region32: #{poolnet_forward.4} parent=11 // pred_fallthru
        _
      // Predicated region
      $region33: #{poolnet_forward.4} parent=11 // pred_check
        %p298 = pneg %p195
      $region34: #{poolnet_forward.4} parent=11 // pred_check_branch
        %300 = sbr.rel (%p298) target = $region36
      $region35: #{poolnet_forward.4} parent=11 // pred_region
        _
      $region36: #{poolnet_forward.4} parent=11 // pred_fallthru
        _
      // Predicated region
      $region37: #{poolnet_forward.4} parent=11 // pred_check
        %p301 = pneg %p216
      $region38: #{poolnet_forward.4} parent=11 // pred_check_branch
        %303 = sbr.rel (%p301) target = $region40
      $region39: #{poolnet_forward.4} parent=11 // pred_region
        _
      $region40: #{poolnet_forward.4} parent=11 // pred_fallthru
        _
    $region12: #{poolnet_forward.4} parent=5 // pred_fallthru
      _
    %p304 = scmp.lt.s32.totalorder %s17, 2
    // Predicated region
    $region41: #{poolnet_forward.4} parent=5 // pred_check
      %p305 = pneg %p304
    $region42: #{poolnet_forward.4} parent=5 // pred_check_branch
      %307 = sbr.rel (%p305) target = $region44
    $region43: #{poolnet_forward.4} parent=5 // pred_region
      // Predicated region
      $region45: #{poolnet_forward.4} parent=43 // pred_check
        %p308 = pneg %p37
      $region46: #{poolnet_forward.4} parent=43 // pred_check_branch
        %310 = sbr.rel (%p308) target = $region48
      $region47: #{poolnet_forward.4} parent=43 // pred_region
        %p311 = scmp.lt.s32.totalorder %s17, 1
        %s312 = scalar_select %p311, %s17, 1
        %s313 = smul.addr %s312, 2
        %s314 = smul.addr %s313, 8
        %s315 = scalar_lea.vmem %s0, %s314
      $region48: #{poolnet_forward.4} parent=43 // pred_fallthru
        _
      // Predicated region
      $region49: #{poolnet_forward.4} parent=43 // pred_check
        %p316 = pneg %p63
      $region50: #{poolnet_forward.4} parent=43 // pred_check_branch
        %318 = sbr.rel (%p316) target = $region52
      $region51: #{poolnet_forward.4} parent=43 // pred_region
        %p319 = scmp.lt.s32.totalorder %s17, 1
        %s320 = scalar_select %p319, %s17, 1
        %s321 = smul.addr %s320, 2
        %s322 = smul.addr %s321, 4
        %s323 = scalar_lea.vmem %s1, %s322
      $region52: #{poolnet_forward.4} parent=43 // pred_fallthru
        _
    $region44: #{poolnet_forward.4} parent=5 // pred_fallthru
      _
    %p324 = scmp.le.s32.totalorder 1, %s17
    %p325 = scmp.lt.s32.totalorder %s17, 3
    %p326 = pnand %p324, %p325
    %p327 = pneg %p326
    // Predicated region
    $region53: #{poolnet_forward.4} parent=5 // pred_check
      _
    $region54: #{poolnet_forward.4} parent=5 // pred_check_branch
      %329 = sbr.rel (%p326) target = $region56
    $region55: #{poolnet_forward.4} parent=5 // pred_region
      %s330 = ssub.s32 %s17, 1
      %p331 = scmp.lt.s32.totalorder %s22, 1
      %s332 = scalar_select %p331, %s22, 1
      %s333 = smul.addr %s332, 2
      %s334 = smul.addr %s333, 8
      %s335 = scalar_lea.vmem %s0, %s334
      %p336 = pneg %p43
      %p337 = pneg %p40
      %p338 = scmp.lt.s32.totalorder %s22, 1
      %s339 = scalar_select %p338, %s22, 1
      %s340 = smul.addr %s339, 2
      %s341 = smul.addr %s340, 4
      %s342 = scalar_lea.vmem %s1, %s341
      %p343 = pneg %p69
      %p344 = pneg %p66
      %p345 = pneg %p90
      %p346 = pneg %p87
      %p347 = pneg %p111
      %p348 = pneg %p108
      %p349 = pneg %p132
      %p350 = pneg %p129
      %p351 = pneg %p153
      %p352 = pneg %p150
      %p353 = pneg %p174
      %p354 = pneg %p171
      %p355 = pneg %p195
      %p356 = pneg %p192
      %p357 = pneg %p216
      %p358 = pneg %p213
      %p359 = pneg %p242
      %p360 = pneg %p239
      %p361 = scmp.lt.s32.totalorder %s22, 1
      %s362 = scalar_select %p361, %s22, 1
      %s363 = smul.addr %s362, 2
      %s364 = smul.addr %s363, 8
      %s365 = scalar_lea.vmem %s9, %s364
      %p366 = pneg %p268
      %p367 = pneg %p265
      %p368 = scmp.lt.s32.totalorder %s22, 1
      %s369 = scalar_select %p368, %s22, 1
      %s370 = scalar_lea.vmem %s10, %s369
      %p371 = scmp.lt.s32.totalorder %s22, 1
      %s372 = scalar_select %p371, %s22, 1
      %s373 = smul.addr %s372, 2
      %s374 = smul.addr %s373, 8
      %s375 = scalar_lea.vmem %s0, %s374
      %p376 = scmp.lt.s32.totalorder %s22, 1
      %s377 = scalar_select %p376, %s22, 1
      %s378 = smul.addr %s377, 2
      %s379 = smul.addr %s378, 4
      %s380 = scalar_lea.vmem %s1, %s379
      %p381 = scmp.lt.s32.totalorder %s22, 1
      %s382 = scalar_select %p381, %s22, 1
      %s383 = smul.addr %s382, 2
      %s384 = smul.addr %s383, 8
      %s385 = scalar_lea.vmem %s9, %s384
      %p386 = scmp.lt.s32.totalorder %s22, 1
      %s387 = scalar_select %p386, %s22, 1
      %s388 = scalar_lea.vmem %s10, %s387
      %v390 = vld [vmem:[%s375] sm:$0xff]
      %v391 = vld [vmem:[%s375 + $0x8] sm:$0xff]
      %v392 = vld [vmem:[%s2] sm:$0xf]
      %v393 = vpack.c.bf16 %v391, %v390
      %vm394 = vcmask 64512
      %v396 = vsel %vm394, %v393, 0
      %vm398 = vcmask 1043456
      %v400 = vsel %vm398, %v392, 0
      %402 = vmatprep.subr.bf16.mxu0 0
      %403 = vmatpush1.bf16.msra.mxu0 %v400
      %404 = vmatprep.subr.bf16.mxu0 0
      %405 = vmatpush1.bf16.msra.mxu0 0
      %406 = vmatprep.subr.bf16.mxu0 0
      %407 = vmatpush1.bf16.msra.mxu0 0
      %408 = vmatprep.subr.bf16.mxu0 0
      %409 = vmatpush1.bf16.msra.mxu0 0
      %410 = vmatprep.subr.bf16.mxu0 0
      %411 = vmatpush1.bf16.msra.mxu0 0
      %412 = vmatprep.subr.bf16.mxu0 0
      %413 = vmatpush1.bf16.msra.mxu0 0
      %414 = vmatprep.subr.bf16.mxu0 0
      %415 = vmatpush1.bf16.msra.mxu0 0
      %416 = vmatprep.subr.bf16.mxu0 0
      %417 = vmatpush1.bf16.msra.mxu0 0
      %418 = vmatprep.subr.bf16.mxu0 0
      %419 = vmatpush1.bf16.msra.mxu0 0
      %420 = vmatprep.subr.bf16.mxu0 0
      %421 = vmatpush1.bf16.msra.mxu0 0
      %422 = vmatprep.subr.bf16.mxu0 0
      %423 = vmatpush1.bf16.msra.mxu0 0
      %424 = vmatprep.subr.bf16.mxu0 0
      %425 = vmatpush1.bf16.msra.mxu0 0
      %426 = vmatprep.subr.bf16.mxu0 0
      %427 = vmatpush1.bf16.msra.mxu0 0
      %428 = vmatprep.subr.bf16.mxu0 0
      %429 = vmatpush1.bf16.msra.mxu0 0
      %430 = vmatprep.subr.bf16.mxu0 0
      %431 = vmatpush1.bf16.msra.mxu0 0
      %432 = vmatprep.subr.bf16.mxu0 0
      %433 = vmatpush1.bf16.msra.mxu0 0
      %434 = vmatprep.mubr.bf16.mxu0 0
      %435 = vmatmul.mubr.bf16.gmra.mrb[0].mxu0 %v396
      %v436 = vpop.f32.mrb[0].mxu0
      %v437 = vadd.f32 0.0, %v436
      %v438 = vpop.f32.mrb[0].mxu0
      %v439 = vpop.f32.mrb[0].mxu0
      %v440 = vadd.f32 0.0, %v439
      %v441 = vpop.f32.mrb[0].mxu0
      %442 = vdwg.mxu0
      %v443 = vld [vmem:[%s380] sm:$0xf]
      %v444 = vld [vmem:[%s380 + $0x4] sm:$0xf]
      %v445 = vunpack.c.l.bf16 %v443
      %v446 = vunpack.c.l.bf16 %v444
      %v447 = vlaneseq
      %v448 = vshrl.u32 %v447, 7
      %v449 = vadd.s32 %v448, 8
      %v450 = vlaneseq
      %v451 = vand.u32 %v450, 127
      %vm452 = vcmp.eq.s32.totalorder %v448, %v451
      %vm453 = vcmp.eq.s32.totalorder %v449, %v451
      %v454 = vsel %vm452, 1, 0
      %v455 = vsel %vm453, 1, 0
      %v456 = vcvt.s32.f32 %v454
      %v457 = vcvt.s32.f32 %v455
      %v458 = vsub.f32 1.0, %v456
      %v459 = vsub.f32 1.0, %v457
      %v460 = vmul.f32 %v445, %v458
      %v461 = vmul.f32 %v446, %v459
      %v462 = vadd.f32 %v460, %v456
      %v463 = vadd.f32 %v461, %v457
      %v464 = vld [vmem:[%s3] sm:$0x3]
      %v465 = vld [vmem:[%s4] sm:$0x3]
      %v466 = vlaneseq
      %v467 = vshrl.u32 %v466, 7
      %v468 = vsub.s32 0, %v467
      %v469 = vrot.slane %v464, %v468
      %v470 = vmul.f32 %v437, %v469
      %v471 = vmul.f32 %v440, %v469
      %vm472 = vcmask 261120
      %v473 = vsel %vm472, %v470, 0.0
      %474 = vadd.xlane.f32.xlu0 %v473
      %v475 = vpop.xlane.xlu0 %474
      %v476 = vsel %vm472, %v471, 0.0
      %477 = vadd.xlane.f32.xlu0 %v476
      %v478 = vpop.xlane.xlu0 %477
      %v479 = vlaneseq
      %v480 = vshrl.u32 %v479, 7
      %v481 = vsub.s32 0, %v480
      %v482 = vrot.slane %v465, %v481
      %v483 = vmul.f32 %v437, %v482
      %v484 = vmul.f32 %v440, %v482
      %v485 = vsel %vm472, %v483, 0.0
      %486 = vadd.xlane.f32.xlu0 %v485
      %v487 = vpop.xlane.xlu0 %486
      %v488 = vsel %vm472, %v484, 0.0
      %489 = vadd.xlane.f32.xlu0 %v488
      %v490 = vpop.xlane.xlu0 %489
      %491 = vxpose.xlu0.b32.start [1/16] %v475, 128
      %492 = vxpose.xlu0.b32.cont [2/16] %v478, 128
      %493 = vxpose.xlu0.b32.cont [3/16] 0.0, 128
      %494 = vxpose.xlu0.b32.cont [4/16] 0.0, 128
      %495 = vxpose.xlu0.b32.cont [5/16] 0.0, 128
      %496 = vxpose.xlu0.b32.cont [6/16] 0.0, 128
      %497 = vxpose.xlu0.b32.cont [7/16] 0.0, 128
      %498 = vxpose.xlu0.b32.cont [8/16] 0.0, 128
      %499 = vxpose.xlu0.b32.cont [9/16] 0.0, 128
      %500 = vxpose.xlu0.b32.cont [10/16] 0.0, 128
      %501 = vxpose.xlu0.b32.cont [11/16] 0.0, 128
      %502 = vxpose.xlu0.b32.cont [12/16] 0.0, 128
      %503 = vxpose.xlu0.b32.cont [13/16] 0.0, 128
      %504 = vxpose.xlu0.b32.cont [14/16] 0.0, 128
      %505 = vxpose.xlu0.b32.cont [15/16] 0.0, 128
      %506 = vxpose.xlu0.b32.end [16/16] 0.0, 128
      %v507 = vpop.trf.xlu0
      %v508 = vpop.trf.xlu0
      %v509 = vpop.trf.xlu0
      %v510 = vpop.trf.xlu0
      %v511 = vpop.trf.xlu0
      %v512 = vpop.trf.xlu0
      %v513 = vpop.trf.xlu0
      %v514 = vpop.trf.xlu0
      %v515 = vpop.trf.xlu0
      %v516 = vpop.trf.xlu0
      %v517 = vpop.trf.xlu0
      %v518 = vpop.trf.xlu0
      %v519 = vpop.trf.xlu0
      %v520 = vpop.trf.xlu0
      %v521 = vpop.trf.xlu0
      %v522 = vpop.trf.xlu0
      %v523 = vlaneseq
      %v524 = vshrl.u32 %v523, 7
      %v525 = vsub.s32 0, %v524
      %v526 = vrot.slane %v507, %v525
      %v527 = vadd.f32 %v487, %v526
      %v528 = vadd.f32 %v490, %v526
      %vm529 = vcmp.ge.f32.partialorder %v527, 0.0
      %vm530 = vcmp.ge.f32.partialorder %v528, 0.0
      %v531 = vmul.f32 %v527, 0.2
      %v532 = vmul.f32 %v528, 0.2
      %v533 = vsel %vm529, %v527, %v531
      %v534 = vsel %vm530, %v528, %v532
      %vm535 = vcmp.gt.f32.partialorder %v462, 0.0
      %vm536 = vcmp.gt.f32.partialorder %v463, 0.0
      %v537 = vsel %vm535, %v533, -1e+30
      %v538 = vsel %vm536, %v534, -1e+30
      %vm539 = vcmask 130048
      %v540 = vsel %vm539, %v537, -inf
      %541 = vmax.xlane.f32.xlu0 %v540
      %v542 = vpop.xlane.xlu0 %541
      %v543 = vsel %vm539, %v538, -inf
      %544 = vmax.xlane.f32.xlu0 %v543
      %v545 = vpop.xlane.xlu0 %544
      %v546 = vsub.f32 %v537, %v542
      %v547 = vsub.f32 %v538, %v545
      %v548 = vmul.f32 %v546, 1.442695
      %v549 = vpow.pop %v548
      %v550 = vmul.f32 %v547, 1.442695
      %v551 = vpow.pop %v550
      %v552 = vmul.f32 %v549, %v462
      %v553 = vmul.f32 %v551, %v463
      %v554 = vsel %vm539, %v552, 0.0
      %555 = vadd.xlane.f32.xlu0 %v554
      %v556 = vpop.xlane.xlu0 %555
      %v557 = vsel %vm539, %v553, 0.0
      %558 = vadd.xlane.f32.xlu0 %v557
      %v559 = vpop.xlane.xlu0 %558
      %v560 = vrcp.pop %v556
      %v561 = vrcp.pop %v559
      %v562 = vmul.f32 %v552, %v560
      %v563 = vmul.f32 %v553, %v561
      %v564 = vpack.c.bf16 %v563, %v562
      %v565 = vpack.c.bf16 %v440, %v437
      %v567 = vsel %vm539, %v564, 0
      %569 = vmatprep.subr.bf16.mxu0 0
      %570 = vmatpush1.bf16.msra.mxu0 %v565
      %571 = vmatprep.subr.bf16.mxu0 0
      %572 = vmatpush1.bf16.msra.mxu0 0
      %573 = vmatprep.subr.bf16.mxu0 0
      %574 = vmatpush1.bf16.msra.mxu0 0
      %575 = vmatprep.subr.bf16.mxu0 0
      %576 = vmatpush1.bf16.msra.mxu0 0
      %577 = vmatprep.subr.bf16.mxu0 0
      %578 = vmatpush1.bf16.msra.mxu0 0
      %579 = vmatprep.subr.bf16.mxu0 0
      %580 = vmatpush1.bf16.msra.mxu0 0
      %581 = vmatprep.subr.bf16.mxu0 0
      %582 = vmatpush1.bf16.msra.mxu0 0
      %583 = vmatprep.subr.bf16.mxu0 0
      %584 = vmatpush1.bf16.msra.mxu0 0
      %585 = vmatprep.subr.bf16.mxu0 0
      %586 = vmatpush1.bf16.msra.mxu0 0
      %587 = vmatprep.subr.bf16.mxu0 0
      %588 = vmatpush1.bf16.msra.mxu0 0
      %589 = vmatprep.subr.bf16.mxu0 0
      %590 = vmatpush1.bf16.msra.mxu0 0
      %591 = vmatprep.subr.bf16.mxu0 0
      %592 = vmatpush1.bf16.msra.mxu0 0
      %593 = vmatprep.subr.bf16.mxu0 0
      %594 = vmatpush1.bf16.msra.mxu0 0
      %595 = vmatprep.subr.bf16.mxu0 0
      %596 = vmatpush1.bf16.msra.mxu0 0
      %597 = vmatprep.subr.bf16.mxu0 0
      %598 = vmatpush1.bf16.msra.mxu0 0
      %599 = vmatprep.subr.bf16.mxu0 0
      %600 = vmatpush1.bf16.msra.mxu0 0
      %601 = vmatprep.mubr.bf16.mxu0 0
      %602 = vmatmul.mubr.bf16.gmra.mrb[0].mxu0 %v567
      %v603 = vpop.f32.mrb[0].mxu0
      %v604 = vadd.f32 0.0, %v603
      %v605 = vpop.f32.mrb[0].mxu0
      %v606 = vpop.f32.mrb[0].mxu0
      %v607 = vadd.f32 0.0, %v606
      %v608 = vpop.f32.mrb[0].mxu0
      %609 = vdwg.mxu0
      %610 = vst.msk [vmem:[#allocation2] sm:$0xff] %vm472, %v604
      %611 = vst.msk [vmem:[#allocation2 + $0x8] sm:$0xff] %vm472, %v607
      %v612 = vlaneseq
      %v613 = vshrl.u32 %v612, 7
      %v614 = vsub.s32 1, %v613
      %v615 = vrot.slane %v464, %v614
      %617 = vrot.lane.b32.xlu0 %v615, 32
      %v618 = vpop.permute.xlu0 %617
      %v620 = vmul.f32 %v437, %v618
      %v621 = vmul.f32 %v440, %v618
      %624 = vrot.lane.b32.xlu0 %v620, 96
      %v625 = vpop.permute.xlu0 %624
      %626 = vrot.lane.b32.xlu0 %v621, 96
      %v627 = vpop.permute.xlu0 %626
      %v630 = vsel %vm472, %v625, 0.0
      %631 = vadd.xlane.f32.xlu0 %v630
      %v632 = vpop.xlane.xlu0 %631
      %v633 = vsel %vm472, %v627, 0.0
      %634 = vadd.xlane.f32.xlu0 %v633
      %v635 = vpop.xlane.xlu0 %634
      %v636 = vlaneseq
      %v637 = vshrl.u32 %v636, 7
      %v638 = vsub.s32 1, %v637
      %v639 = vrot.slane %v465, %v638
      %641 = vrot.lane.b32.xlu0 %v639, 32
      %v642 = vpop.permute.xlu0 %641
      %v644 = vmul.f32 %v437, %v642
      %v645 = vmul.f32 %v440, %v642
      %648 = vrot.lane.b32.xlu0 %v644, 96
      %v649 = vpop.permute.xlu0 %648
      %650 = vrot.lane.b32.xlu0 %v645, 96
      %v651 = vpop.permute.xlu0 %650
      %v654 = vsel %vm472, %v649, 0.0
      %655 = vadd.xlane.f32.xlu0 %v654
      %v656 = vpop.xlane.xlu0 %655
      %v657 = vsel %vm472, %v651, 0.0
      %658 = vadd.xlane.f32.xlu0 %v657
      %v659 = vpop.xlane.xlu0 %658
      %660 = vxpose.xlu0.b32.start [1/16] %v632, 128
      %661 = vxpose.xlu0.b32.cont [2/16] %v635, 128
      %662 = vxpose.xlu0.b32.cont [3/16] 0.0, 128
      %663 = vxpose.xlu0.b32.cont [4/16] 0.0, 128
      %664 = vxpose.xlu0.b32.cont [5/16] 0.0, 128
      %665 = vxpose.xlu0.b32.cont [6/16] 0.0, 128
      %666 = vxpose.xlu0.b32.cont [7/16] 0.0, 128
      %667 = vxpose.xlu0.b32.cont [8/16] 0.0, 128
      %668 = vxpose.xlu0.b32.cont [9/16] 0.0, 128
      %669 = vxpose.xlu0.b32.cont [10/16] 0.0, 128
      %670 = vxpose.xlu0.b32.cont [11/16] 0.0, 128
      %671 = vxpose.xlu0.b32.cont [12/16] 0.0, 128
      %672 = vxpose.xlu0.b32.cont [13/16] 0.0, 128
      %673 = vxpose.xlu0.b32.cont [14/16] 0.0, 128
      %674 = vxpose.xlu0.b32.cont [15/16] 0.0, 128
      %675 = vxpose.xlu0.b32.end [16/16] 0.0, 128
      %v676 = vpop.trf.xlu0
      %v677 = vpop.trf.xlu0
      %v678 = vpop.trf.xlu0
      %v679 = vpop.trf.xlu0
      %v680 = vpop.trf.xlu0
      %v681 = vpop.trf.xlu0
      %v682 = vpop.trf.xlu0
      %v683 = vpop.trf.xlu0
      %v684 = vpop.trf.xlu0
      %v685 = vpop.trf.xlu0
      %v686 = vpop.trf.xlu0
      %v687 = vpop.trf.xlu0
      %v688 = vpop.trf.xlu0
      %v689 = vpop.trf.xlu0
      %v690 = vpop.trf.xlu0
      %v691 = vpop.trf.xlu0
      %v692 = vlaneseq
      %v693 = vshrl.u32 %v692, 7
      %v694 = vsub.s32 0, %v693
      %v695 = vrot.slane %v676, %v694
      %v696 = vadd.f32 %v656, %v695
      %v697 = vadd.f32 %v659, %v695
      %vm698 = vcmp.ge.f32.partialorder %v696, 0.0
      %vm699 = vcmp.ge.f32.partialorder %v697, 0.0
      %v700 = vmul.f32 %v696, 0.2
      %v701 = vmul.f32 %v697, 0.2
      %v702 = vsel %vm698, %v696, %v700
      %v703 = vsel %vm699, %v697, %v701
      %v704 = vsel %vm535, %v702, -1e+30
      %v705 = vsel %vm536, %v703, -1e+30
      %v706 = vsel %vm539, %v704, -inf
      %707 = vmax.xlane.f32.xlu0 %v706
      %v708 = vpop.xlane.xlu0 %707
      %v709 = vsel %vm539, %v705, -inf
      %710 = vmax.xlane.f32.xlu0 %v709
      %v711 = vpop.xlane.xlu0 %710
      %v712 = vsub.f32 %v704, %v708
      %v713 = vsub.f32 %v705, %v711
      %v714 = vmul.f32 %v712, 1.442695
      %v715 = vpow.pop %v714
      %v716 = vmul.f32 %v713, 1.442695
      %v717 = vpow.pop %v716
      %v718 = vmul.f32 %v715, %v462
      %v719 = vmul.f32 %v717, %v463
      %v720 = vsel %vm539, %v718, 0.0
      %721 = vadd.xlane.f32.xlu0 %v720
      %v722 = vpop.xlane.xlu0 %721
      %v723 = vsel %vm539, %v719, 0.0
      %724 = vadd.xlane.f32.xlu0 %v723
      %v725 = vpop.xlane.xlu0 %724
      %v726 = vrcp.pop %v722
      %v727 = vrcp.pop %v725
      %v728 = vmul.f32 %v718, %v726
      %v729 = vmul.f32 %v719, %v727
      %v730 = vpack.c.bf16 %v729, %v728
      %732 = vrot.lane.b32.xlu0 %v565, 96
      %v733 = vpop.permute.xlu0 %732
      %v736 = vsel %vm539, %v730, 0
      %738 = vmatprep.subr.bf16.mxu0 0
      %739 = vmatpush1.bf16.msra.mxu0 %v733
      %740 = vmatprep.subr.bf16.mxu0 0
      %741 = vmatpush1.bf16.msra.mxu0 0
      %742 = vmatprep.subr.bf16.mxu0 0
      %743 = vmatpush1.bf16.msra.mxu0 0
      %744 = vmatprep.subr.bf16.mxu0 0
      %745 = vmatpush1.bf16.msra.mxu0 0
      %746 = vmatprep.subr.bf16.mxu0 0
      %747 = vmatpush1.bf16.msra.mxu0 0
      %748 = vmatprep.subr.bf16.mxu0 0
      %749 = vmatpush1.bf16.msra.mxu0 0
      %750 = vmatprep.subr.bf16.mxu0 0
      %751 = vmatpush1.bf16.msra.mxu0 0
      %752 = vmatprep.subr.bf16.mxu0 0
      %753 = vmatpush1.bf16.msra.mxu0 0
      %754 = vmatprep.subr.bf16.mxu0 0
      %755 = vmatpush1.bf16.msra.mxu0 0
      %756 = vmatprep.subr.bf16.mxu0 0
      %757 = vmatpush1.bf16.msra.mxu0 0
      %758 = vmatprep.subr.bf16.mxu0 0
      %759 = vmatpush1.bf16.msra.mxu0 0
      %760 = vmatprep.subr.bf16.mxu0 0
      %761 = vmatpush1.bf16.msra.mxu0 0
      %762 = vmatprep.subr.bf16.mxu0 0
      %763 = vmatpush1.bf16.msra.mxu0 0
      %764 = vmatprep.subr.bf16.mxu0 0
      %765 = vmatpush1.bf16.msra.mxu0 0
      %766 = vmatprep.subr.bf16.mxu0 0
      %767 = vmatpush1.bf16.msra.mxu0 0
      %768 = vmatprep.subr.bf16.mxu0 0
      %769 = vmatpush1.bf16.msra.mxu0 0
      %770 = vmatprep.mubr.bf16.mxu0 0
      %771 = vmatmul.mubr.bf16.gmra.mrb[0].mxu0 %v736
      %v772 = vpop.f32.mrb[0].mxu0
      %v773 = vadd.f32 0.0, %v772
      %v774 = vpop.f32.mrb[0].mxu0
      %v775 = vpop.f32.mrb[0].mxu0
      %v776 = vadd.f32 0.0, %v775
      %v777 = vpop.f32.mrb[0].mxu0
      %778 = vdwg.mxu0
      %781 = vrot.lane.b32.xlu0 %v773, 32
      %v782 = vpop.permute.xlu0 %781
      %783 = vrot.lane.b32.xlu0 %v776, 32
      %v784 = vpop.permute.xlu0 %783
      %vm787 = vcmask 523520
      %788 = vst.msk [vmem:[#allocation2] sm:$0xff] %vm787, %v782
      %789 = vst.msk [vmem:[#allocation2 + $0x8] sm:$0xff] %vm787, %v784
      %v790 = vld [vmem:[#allocation2] sm:$0xff]
      %v791 = vld [vmem:[#allocation2 + $0x8] sm:$0xff]
      %v792 = vld [vmem:[%s5] sm:$0x1]
      %v794 = vlaneseq
      %v795 = vshrl.u32 %v794, 7
      %v796 = vsub.s32 0, %v795
      %v797 = vrot.slane %v792, %v796
      %v799 = vadd.f32 %v790, %v797
      %v800 = vadd.f32 %v791, %v797
      %vm801 = vcmp.gt.f32.partialorder %v799, 0.0
      %vm802 = vcmp.gt.f32.partialorder %v800, 0.0
      %v803 = vmin.f32 %v799, 0.0
      %v804 = vmin.f32 %v800, 0.0
      %v805 = vmul.f32 %v803, 1.442695
      %v806 = vpow.pop %v805
      %v807 = vmul.f32 %v804, 1.442695
      %v808 = vpow.pop %v807
      %v809 = vsub.f32 %v806, 1.0
      %v810 = vsub.f32 %v808, 1.0
      %v811 = vsel %vm801, %v799, %v809
      %v812 = vsel %vm802, %v800, %v810
      %vm813 = vcmask 523264
      %v814 = vsel %vm813, %v811, 0.0
      %v815 = vsel %vm813, %v812, 0.0
      %v816 = vadd.f32 %v814, %v815
      %v817 = vrot.slane %v816, 4
      %v818 = vadd.f32 %v816, %v817
      %v819 = vrot.slane %v818, 2
      %v820 = vadd.f32 %v818, %v819
      %v821 = vrot.slane %v820, 1
      %v822 = vadd.f32 %v820, %v821
      %v823 = vrcp.pop 16.0
      %v824 = vmul.f32 %v822, %v823
      %v825 = vsub.f32 %v811, %v824
      %v826 = vsub.f32 %v812, %v824
      %v827 = vmul.f32 %v825, %v825
      %v828 = vmul.f32 %v826, %v826
      %v829 = vsel %vm813, %v827, 0.0
      %v830 = vsel %vm813, %v828, 0.0
      %v831 = vadd.f32 %v829, %v830
      %v832 = vrot.slane %v831, 4
      %v833 = vadd.f32 %v831, %v832
      %v834 = vrot.slane %v833, 2
      %v835 = vadd.f32 %v833, %v834
      %v836 = vrot.slane %v835, 1
      %v837 = vadd.f32 %v835, %v836
      %v838 = vmul.f32 %v837, %v823
      %v839 = vadd.f32 %v838, 1e-05
      %v840 = vrsqrt.pop %v839
      %v841 = vmul.f32 %v825, %v840
      %v842 = vmul.f32 %v826, %v840
      %v843 = vld [vmem:[%s6] sm:$0x1]
      %v845 = vlaneseq
      %v846 = vshrl.u32 %v845, 7
      %v847 = vsub.s32 0, %v846
      %v848 = vrot.slane %v843, %v847
      %v850 = vmul.f32 %v841, %v848
      %v851 = vmul.f32 %v842, %v848
      %v852 = vld [vmem:[%s7] sm:$0x1]
      %v854 = vlaneseq
      %v855 = vshrl.u32 %v854, 7
      %v856 = vsub.s32 0, %v855
      %v857 = vrot.slane %v852, %v856
      %v859 = vadd.f32 %v850, %v857
      %v860 = vadd.f32 %v851, %v857
      %861 = vst.msk [vmem:[%s385] sm:$0xff] %vm813, %v859
      %862 = vst.msk [vmem:[%s385 + $0x8] sm:$0xff] %vm813, %v860
      %v863 = vld [vmem:[%s8] sm:$0x1]
      %v865 = vlaneseq
      %v866 = vshrl.u32 %v865, 7
      %v867 = vsub.s32 0, %v866
      %v868 = vrot.slane %v863, %v867
      %v870 = vmul.f32 %v859, %v868
      %v871 = vmul.f32 %v860, %v868
      %v872 = vsel %vm813, %v870, 0.0
      %873 = vadd.xlane.f32.xlu0 %v872
      %v874 = vpop.xlane.xlu0 %873
      %v875 = vsel %vm813, %v871, 0.0
      %876 = vadd.xlane.f32.xlu0 %v875
      %v877 = vpop.xlane.xlu0 %876
      %v878 = vand.u32 2147483647, %v874
      %v879 = vand.u32 2147483647, %v877
      %v880 = vsub.f32 0.0, %v878
      %v881 = vsub.f32 0.0, %v879
      %v882 = vmul.f32 %v880, 1.442695
      %v883 = vpow.pop %v882
      %v884 = vmul.f32 %v881, 1.442695
      %v885 = vpow.pop %v884
      %vm886 = vcmp.ge.f32.partialorder %v874, 0.0
      %vm887 = vcmp.ge.f32.partialorder %v877, 0.0
      %v888 = vadd.f32 %v883, 1.0
      %v889 = vadd.f32 %v885, 1.0
      %v890 = vrcp.pop %v888
      %v891 = vmul.f32 1.0, %v890
      %v892 = vrcp.pop %v889
      %v893 = vmul.f32 1.0, %v892
      %v894 = vmul.f32 %v883, %v890
      %v895 = vmul.f32 %v885, %v892
      %v896 = vsel %vm886, %v891, %v894
      %v897 = vsel %vm887, %v893, %v895
      %898 = vxpose.xlu0.b32.start [1/16] %v896, 128
      %899 = vxpose.xlu0.b32.cont [2/16] %v897, 128
      %900 = vxpose.xlu0.b32.cont [3/16] 0.0, 128
      %901 = vxpose.xlu0.b32.cont [4/16] 0.0, 128
      %902 = vxpose.xlu0.b32.cont [5/16] 0.0, 128
      %903 = vxpose.xlu0.b32.cont [6/16] 0.0, 128
      %904 = vxpose.xlu0.b32.cont [7/16] 0.0, 128
      %905 = vxpose.xlu0.b32.cont [8/16] 0.0, 128
      %906 = vxpose.xlu0.b32.cont [9/16] 0.0, 128
      %907 = vxpose.xlu0.b32.cont [10/16] 0.0, 128
      %908 = vxpose.xlu0.b32.cont [11/16] 0.0, 128
      %909 = vxpose.xlu0.b32.cont [12/16] 0.0, 128
      %910 = vxpose.xlu0.b32.cont [13/16] 0.0, 128
      %911 = vxpose.xlu0.b32.cont [14/16] 0.0, 128
      %912 = vxpose.xlu0.b32.cont [15/16] 0.0, 128
      %913 = vxpose.xlu0.b32.end [16/16] 0.0, 128
      %v914 = vpop.trf.xlu0
      %v915 = vpop.trf.xlu0
      %v916 = vpop.trf.xlu0
      %v917 = vpop.trf.xlu0
      %v918 = vpop.trf.xlu0
      %v919 = vpop.trf.xlu0
      %v920 = vpop.trf.xlu0
      %v921 = vpop.trf.xlu0
      %v922 = vpop.trf.xlu0
      %v923 = vpop.trf.xlu0
      %v924 = vpop.trf.xlu0
      %v925 = vpop.trf.xlu0
      %v926 = vpop.trf.xlu0
      %v927 = vpop.trf.xlu0
      %v928 = vpop.trf.xlu0
      %v929 = vpop.trf.xlu0
      %vm930 = vcmask 122880
      %931 = vst.msk [vmem:[%s388] sm:$0x1] %vm930, %v914
      %p932 = scmp.lt.s32.totalorder %s22, 1
      %s933 = scalar_select %p932, %s22, 1
      %s934 = smul.addr %s933, 2
      %s935 = smul.addr %s934, 8
      %s936 = scalar_lea.vmem %s9, %s935
      %p937 = scmp.lt.s32.totalorder %s22, 1
      %s938 = scalar_select %p937, %s22, 1
      %s939 = scalar_lea.vmem %s10, %s938
      // Predicated region
      $region57: #{poolnet_forward.4} parent=55 // pred_check
        %p940 = pneg %p239
      $region58: #{poolnet_forward.4} parent=55 // pred_check_branch
        %942 = sbr.rel (%p940) target = $region60
      $region59: #{poolnet_forward.4} parent=55 // pred_region
        _
      $region60: #{poolnet_forward.4} parent=55 // pred_fallthru
        _
      // Predicated region
      $region61: #{poolnet_forward.4} parent=55 // pred_check
        %p943 = pneg %p265
      $region62: #{poolnet_forward.4} parent=55 // pred_check_branch
        %945 = sbr.rel (%p943) target = $region64
      $region63: #{poolnet_forward.4} parent=55 // pred_region
        _
      $region64: #{poolnet_forward.4} parent=55 // pred_fallthru
        _
    $region56: #{poolnet_forward.4} parent=5 // pred_fallthru
      _
    %p946 = scmp.le.s32.totalorder 2, %s17
    // Predicated region
    $region65: #{poolnet_forward.4} parent=5 // pred_check
      %p947 = pneg %p946
    $region66: #{poolnet_forward.4} parent=5 // pred_check_branch
      %949 = sbr.rel (%p947) target = $region68
    $region67: #{poolnet_forward.4} parent=5 // pred_region
      %s950 = ssub.s32 %s17, 2
      // Predicated region
      $region69: #{poolnet_forward.4} parent=67 // pred_check
        %p951 = pneg %p245
      $region70: #{poolnet_forward.4} parent=67 // pred_check_branch
        %953 = sbr.rel (%p951) target = $region72
      $region71: #{poolnet_forward.4} parent=67 // pred_region
        %p954 = scmp.lt.s32.totalorder %s23, 1
        %s955 = scalar_select %p954, %s23, 1
        %s956 = smul.addr %s955, 2
        %s957 = smul.addr %s956, 8
        %s958 = scalar_lea.vmem %s9, %s957
      $region72: #{poolnet_forward.4} parent=67 // pred_fallthru
        _
      // Predicated region
      $region73: #{poolnet_forward.4} parent=67 // pred_check
        %p959 = pneg %p271
      $region74: #{poolnet_forward.4} parent=67 // pred_check_branch
        %961 = sbr.rel (%p959) target = $region76
      $region75: #{poolnet_forward.4} parent=67 // pred_region
        %p962 = scmp.lt.s32.totalorder %s23, 1
        %s963 = scalar_select %p962, %s23, 1
        %s964 = scalar_lea.vmem %s10, %s963
      $region76: #{poolnet_forward.4} parent=67 // pred_fallthru
        _
    $region68: #{poolnet_forward.4} parent=5 // pred_fallthru
      _
  $region6: #{poolnet_forward.4} parent=0 // loop_footer
    %s21 = sadd.s32 1, %s17
  $region7: #{poolnet_forward.4} parent=0 // loop_footer_branch
    %16 = sbr.rel target = $region3
  $region8: #{poolnet_forward.4} parent=0 // loop_exit
    _

// kernel: poolnet_forward.5
$region0: #{poolnet_forward.5}
  #allocation0 [shape = 'u32[]', space=smem, size = 0x4, offset = 0x4, fixed_abs, tag = 'smem constant byte address 0x4 - core index']
  #allocation1 [shape = 'u32[144,128]{1,0:T(1,128)}', space=vmem, size = 0x12000, scoped, tag = 'internal scratch']
  #allocation2 [shape = 'f32[5,256]{1,0:T(8,128)}', space=vmem, size = 0x2000, scoped, tag = 'scratch operand']
  %s0 = inlined_call_operand.vmem [shape: f32[2,5,64], index: 0, kind: input, shape index: {}]
  %s1 = inlined_call_operand.vmem [shape: bf16[2,5,5], index: 1, kind: input, shape index: {}]
  %s2 = inlined_call_operand.vmem [shape: bf16[64,256], index: 2, kind: input, shape index: {}]
  %s3 = inlined_call_operand.vmem [shape: f32[2,128], index: 3, kind: input, shape index: {}]
  %s4 = inlined_call_operand.vmem [shape: f32[2,128], index: 4, kind: input, shape index: {}]
  %s5 = inlined_call_operand.vmem [shape: f32[1,256], index: 5, kind: input, shape index: {}]
  %s6 = inlined_call_operand.vmem [shape: f32[1,256], index: 6, kind: input, shape index: {}]
  %s7 = inlined_call_operand.vmem [shape: f32[1,256], index: 7, kind: input, shape index: {}]
  %s8 = inlined_call_operand.vmem [shape: f32[1,256], index: 8, kind: input, shape index: {}]
  %s9 = inlined_call_operand.vmem [shape: f32[2,5,256], index: 9, kind: output, shape index: {0}]
  %s10 = inlined_call_operand.vmem [shape: f32[2,1,5], index: 10, kind: output, shape index: {1}]
  %11 = xla_tuple %s9, %s10
  %s12 = sld [smem:[#allocation0]]
  $region77: #{poolnet_forward.5} parent=0
    _
  %s14 = ssub.s32 1, %s12
  %s15 = scalar_select 0, %s14, %s12
  loop: start=0, step=1, limit=4
  $region2: #{poolnet_forward.5} parent=0 // loop_pre_header
    _
  $region3: #{poolnet_forward.5} parent=0 // loop_header
    %s17 = sphi 0, %s21
    %p18 = scmp.ge.s32.totalorder %s17, 4
    %s27 = sphi 0, %s29
    %s30 = sphi 0, %s27
    %s31 = sphi 0, %s30
    %s47 = sphi 0, %s31
    %s53 = sphi 0, %s55
    %s56 = sphi 0, %s53
    %s57 = sphi 0, %s56
    %s73 = sphi 0, %s57
    %s77 = sphi 0, %s77
    %s79 = sphi 0, %s77
    %s80 = sphi 0, %s79
    %s94 = sphi 0, %s80
    %s98 = sphi 0, %s98
    %s100 = sphi 0, %s98
    %s101 = sphi 0, %s100
    %s115 = sphi 0, %s101
    %s119 = sphi 0, %s119
    %s121 = sphi 0, %s119
    %s122 = sphi 0, %s121
    %s136 = sphi 0, %s122
    %s140 = sphi 0, %s140
    %s142 = sphi 0, %s140
    %s143 = sphi 0, %s142
    %s157 = sphi 0, %s143
    %s161 = sphi 0, %s161
    %s163 = sphi 0, %s161
    %s164 = sphi 0, %s163
    %s178 = sphi 0, %s164
    %s182 = sphi 0, %s182
    %s184 = sphi 0, %s182
    %s185 = sphi 0, %s184
    %s199 = sphi 0, %s185
    %s203 = sphi 0, %s203
    %s205 = sphi 0, %s203
    %s206 = sphi 0, %s205
    %s220 = sphi 0, %s206
    %s226 = sphi 0, %s228
    %s229 = sphi 0, %s226
    %s230 = sphi 0, %s229
    %s246 = sphi 0, %s230
    %s252 = sphi 0, %s254
    %s255 = sphi 0, %s252
    %s256 = sphi 0, %s255
    %s272 = sphi 0, %s256
  $region4: #{poolnet_forward.5} parent=0 // loop_header_branch
    %20 = sbr.rel (%p18) target = $region8
  $region5: #{poolnet_forward.5} parent=0 // loop_body
    %s22 = ssub.s32 %s17, 1
    %s23 = ssub.s32 %s17, 2
    %s24 = sadd.s32 %s17, 1
    %s25 = ssub.s32 %s17, %s24
    %p26 = scmp.eq.s32.totalorder %s25, 0
    %s28 = sadd.s32 %s27, 1
    %s29 = scalar_select %p26, %s27, %s28
    %p32 = pneg %p26
    %p33 = scmp.eq.s32.totalorder %s17, 1
    %p34 = por %p32, %p33
    %p35 = scmp.ne.s32.totalorder %s27, %s30
    %p36 = scmp.eq.s32.totalorder %s17, 0
    %p37 = por %p35, %p36
    %p38 = scmp.ne.s32.totalorder %s27, %s30
    %p39 = scmp.eq.s32.totalorder %s22, 1
    %p40 = por %p38, %p39
    %p41 = scmp.ne.s32.totalorder %s30, %s31
    %p42 = scmp.eq.s32.totalorder %s22, 0
    %p43 = por %p41, %p42
    %p44 = scmp.ne.s32.totalorder %s30, %s31
    %p45 = scmp.eq.s32.totalorder %s23, 1
    %p46 = por %p44, %p45
    %p48 = scmp.ne.s32.totalorder %s31, %s47
    %p49 = scmp.eq.s32.totalorder %s23, 0
    %p50 = por %p48, %p49
    %s51 = ssub.s32 %s17, %s24
    %p52 = scmp.eq.s32.totalorder %s51, 0
    %s54 = sadd.s32 %s53, 1
    %s55 = scalar_select %p52, %s53, %s54
    %p58 = pneg %p52
    %p59 = scmp.eq.s32.totalorder %s17, 1
    %p60 = por %p58, %p59
    %p61 = scmp.ne.s32.totalorder %s53, %s56
    %p62 = scmp.eq.s32.totalorder %s17, 0
    %p63 = por %p61, %p62
    %p64 = scmp.ne.s32.totalorder %s53, %s56
    %p65 = scmp.eq.s32.totalorder %s22, 1
    %p66 = por %p64, %p65
    %p67 = scmp.ne.s32.totalorder %s56, %s57
    %p68 = scmp.eq.s32.totalorder %s22, 0
    %p69 = por %p67, %p68
    %p70 = scmp.ne.s32.totalorder %s56, %s57
    %p71 = scmp.eq.s32.totalorder %s23, 1
    %p72 = por %p70, %p71
    %p74 = scmp.ne.s32.totalorder %s57, %s73
    %p75 = scmp.eq.s32.totalorder %s23, 0
    %p76 = por %p74, %p75
    %s78 = sadd.s32 %s77, 1
    %p81 = scmp.eq.s32.totalorder %s17, 1
    %p82 = scmp.ne.s32.totalorder %s77, %s79
    %p83 = scmp.eq.s32.totalorder %s17, 0
    %p84 = por %p82, %p83
    %p85 = scmp.ne.s32.totalorder %s77, %s79
    %p86 = scmp.eq.s32.totalorder %s22, 1
    %p87 = por %p85, %p86
    %p88 = scmp.ne.s32.totalorder %s79, %s80
    %p89 = scmp.eq.s32.totalorder %s22, 0
    %p90 = por %p88, %p89
    %p91 = scmp.ne.s32.totalorder %s79, %s80
    %p92 = scmp.eq.s32.totalorder %s23, 1
    %p93 = por %p91, %p92
    %p95 = scmp.ne.s32.totalorder %s80, %s94
    %p96 = scmp.eq.s32.totalorder %s23, 0
    %p97 = por %p95, %p96
    %s99 = sadd.s32 %s98, 1
    %p102 = scmp.eq.s32.totalorder %s17, 1
    %p103 = scmp.ne.s32.totalorder %s98, %s100
    %p104 = scmp.eq.s32.totalorder %s17, 0
    %p105 = por %p103, %p104
    %p106 = scmp.ne.s32.totalorder %s98, %s100
    %p107 = scmp.eq.s32.totalorder %s22, 1
    %p108 = por %p106, %p107
    %p109 = scmp.ne.s32.totalorder %s100, %s101
    %p110 = scmp.eq.s32.totalorder %s22, 0
    %p111 = por %p109, %p110
    %p112 = scmp.ne.s32.totalorder %s100, %s101
    %p113 = scmp.eq.s32.totalorder %s23, 1
    %p114 = por %p112, %p113
    %p116 = scmp.ne.s32.totalorder %s101, %s115
    %p117 = scmp.eq.s32.totalorder %s23, 0
    %p118 = por %p116, %p117
    %s120 = sadd.s32 %s119, 1
    %p123 = scmp.eq.s32.totalorder %s17, 1
    %p124 = scmp.ne.s32.totalorder %s119, %s121
    %p125 = scmp.eq.s32.totalorder %s17, 0
    %p126 = por %p124, %p125
    %p127 = scmp.ne.s32.totalorder %s119, %s121
    %p128 = scmp.eq.s32.totalorder %s22, 1
    %p129 = por %p127, %p128
    %p130 = scmp.ne.s32.totalorder %s121, %s122
    %p131 = scmp.eq.s32.totalorder %s22, 0
    %p132 = por %p130, %p131
    %p133 = scmp.ne.s32.totalorder %s121, %s122
    %p134 = scmp.eq.s32.totalorder %s23, 1
    %p135 = por %p133, %p134
    %p137 = scmp.ne.s32.totalorder %s122, %s136
    %p138 = scmp.eq.s32.totalorder %s23, 0
    %p139 = por %p137, %p138
    %s141 = sadd.s32 %s140, 1
    %p144 = scmp.eq.s32.totalorder %s17, 1
    %p145 = scmp.ne.s32.totalorder %s140, %s142
    %p146 = scmp.eq.s32.totalorder %s17, 0
    %p147 = por %p145, %p146
    %p148 = scmp.ne.s32.totalorder %s140, %s142
    %p149 = scmp.eq.s32.totalorder %s22, 1
    %p150 = por %p148, %p149
    %p151 = scmp.ne.s32.totalorder %s142, %s143
    %p152 = scmp.eq.s32.totalorder %s22, 0
    %p153 = por %p151, %p152
    %p154 = scmp.ne.s32.totalorder %s142, %s143
    %p155 = scmp.eq.s32.totalorder %s23, 1
    %p156 = por %p154, %p155
    %p158 = scmp.ne.s32.totalorder %s143, %s157
    %p159 = scmp.eq.s32.totalorder %s23, 0
    %p160 = por %p158, %p159
    %s162 = sadd.s32 %s161, 1
    %p165 = scmp.eq.s32.totalorder %s17, 1
    %p166 = scmp.ne.s32.totalorder %s161, %s163
    %p167 = scmp.eq.s32.totalorder %s17, 0
    %p168 = por %p166, %p167
    %p169 = scmp.ne.s32.totalorder %s161, %s163
    %p170 = scmp.eq.s32.totalorder %s22, 1
    %p171 = por %p169, %p170
    %p172 = scmp.ne.s32.totalorder %s163, %s164
    %p173 = scmp.eq.s32.totalorder %s22, 0
    %p174 = por %p172, %p173
    %p175 = scmp.ne.s32.totalorder %s163, %s164
    %p176 = scmp.eq.s32.totalorder %s23, 1
    %p177 = por %p175, %p176
    %p179 = scmp.ne.s32.totalorder %s164, %s178
    %p180 = scmp.eq.s32.totalorder %s23, 0
    %p181 = por %p179, %p180
    %s183 = sadd.s32 %s182, 1
    %p186 = scmp.eq.s32.totalorder %s17, 1
    %p187 = scmp.ne.s32.totalorder %s182, %s184
    %p188 = scmp.eq.s32.totalorder %s17, 0
    %p189 = por %p187, %p188
    %p190 = scmp.ne.s32.totalorder %s182, %s184
    %p191 = scmp.eq.s32.totalorder %s22, 1
    %p192 = por %p190, %p191
    %p193 = scmp.ne.s32.totalorder %s184, %s185
    %p194 = scmp.eq.s32.totalorder %s22, 0
    %p195 = por %p193, %p194
    %p196 = scmp.ne.s32.totalorder %s184, %s185
    %p197 = scmp.eq.s32.totalorder %s23, 1
    %p198 = por %p196, %p197
    %p200 = scmp.ne.s32.totalorder %s185, %s199
    %p201 = scmp.eq.s32.totalorder %s23, 0
    %p202 = por %p200, %p201
    %s204 = sadd.s32 %s203, 1
    %p207 = scmp.eq.s32.totalorder %s17, 1
    %p208 = scmp.ne.s32.totalorder %s203, %s205
    %p209 = scmp.eq.s32.totalorder %s17, 0
    %p210 = por %p208, %p209
    %p211 = scmp.ne.s32.totalorder %s203, %s205
    %p212 = scmp.eq.s32.totalorder %s22, 1
    %p213 = por %p211, %p212
    %p214 = scmp.ne.s32.totalorder %s205, %s206
    %p215 = scmp.eq.s32.totalorder %s22, 0
    %p216 = por %p214, %p215
    %p217 = scmp.ne.s32.totalorder %s205, %s206
    %p218 = scmp.eq.s32.totalorder %s23, 1
    %p219 = por %p217, %p218
    %p221 = scmp.ne.s32.totalorder %s206, %s220
    %p222 = scmp.eq.s32.totalorder %s23, 0
    %p223 = por %p221, %p222
    %s224 = ssub.s32 %s17, %s24
    %p225 = scmp.eq.s32.totalorder %s224, 0
    %s227 = sadd.s32 %s226, 1
    %s228 = scalar_select %p225, %s226, %s227
    %p231 = pneg %p225
    %p232 = scmp.eq.s32.totalorder %s17, 1
    %p233 = por %p231, %p232
    %p234 = scmp.ne.s32.totalorder %s226, %s229
    %p235 = scmp.eq.s32.totalorder %s17, 0
    %p236 = por %p234, %p235
    %p237 = scmp.ne.s32.totalorder %s226, %s229
    %p238 = scmp.eq.s32.totalorder %s22, 1
    %p239 = por %p237, %p238
    %p240 = scmp.ne.s32.totalorder %s229, %s230
    %p241 = scmp.eq.s32.totalorder %s22, 0
    %p242 = por %p240, %p241
    %p243 = scmp.ne.s32.totalorder %s229, %s230
    %p244 = scmp.eq.s32.totalorder %s23, 1
    %p245 = por %p243, %p244
    %p247 = scmp.ne.s32.totalorder %s230, %s246
    %p248 = scmp.eq.s32.totalorder %s23, 0
    %p249 = por %p247, %p248
    %s250 = ssub.s32 %s17, %s24
    %p251 = scmp.eq.s32.totalorder %s250, 0
    %s253 = sadd.s32 %s252, 1
    %s254 = scalar_select %p251, %s252, %s253
    %p257 = pneg %p251
    %p258 = scmp.eq.s32.totalorder %s17, 1
    %p259 = por %p257, %p258
    %p260 = scmp.ne.s32.totalorder %s252, %s255
    %p261 = scmp.eq.s32.totalorder %s17, 0
    %p262 = por %p260, %p261
    %p263 = scmp.ne.s32.totalorder %s252, %s255
    %p264 = scmp.eq.s32.totalorder %s22, 1
    %p265 = por %p263, %p264
    %p266 = scmp.ne.s32.totalorder %s255, %s256
    %p267 = scmp.eq.s32.totalorder %s22, 0
    %p268 = por %p266, %p267
    %p269 = scmp.ne.s32.totalorder %s255, %s256
    %p270 = scmp.eq.s32.totalorder %s23, 1
    %p271 = por %p269, %p270
    %p273 = scmp.ne.s32.totalorder %s256, %s272
    %p274 = scmp.eq.s32.totalorder %s23, 0
    %p275 = por %p273, %p274
    %p276 = scmp.le.s32.totalorder 1, %s17
    %p277 = scmp.lt.s32.totalorder %s17, 3
    %p278 = pnand %p276, %p277
    %p279 = pneg %p278
    // Predicated region
    $region9: #{poolnet_forward.5} parent=5 // pred_check
      _
    $region10: #{poolnet_forward.5} parent=5 // pred_check_branch
      %281 = sbr.rel (%p278) target = $region12
    $region11: #{poolnet_forward.5} parent=5 // pred_region
      %s282 = ssub.s32 %s17, 1
      // Predicated region
      $region13: #{poolnet_forward.5} parent=11 // pred_check
        %p283 = pneg %p90
      $region14: #{poolnet_forward.5} parent=11 // pred_check_branch
        %285 = sbr.rel (%p283) target = $region16
      $region15: #{poolnet_forward.5} parent=11 // pred_region
        _
      $region16: #{poolnet_forward.5} parent=11 // pred_fallthru
        _
      // Predicated region
      $region17: #{poolnet_forward.5} parent=11 // pred_check
        %p286 = pneg %p111
      $region18: #{poolnet_forward.5} parent=11 // pred_check_branch
        %288 = sbr.rel (%p286) target = $region20
      $region19: #{poolnet_forward.5} parent=11 // pred_region
        _
      $region20: #{poolnet_forward.5} parent=11 // pred_fallthru
        _
      // Predicated region
      $region21: #{poolnet_forward.5} parent=11 // pred_check
        %p289 = pneg %p132
      $region22: #{poolnet_forward.5} parent=11 // pred_check_branch
        %291 = sbr.rel (%p289) target = $region24
      $region23: #{poolnet_forward.5} parent=11 // pred_region
        _
      $region24: #{poolnet_forward.5} parent=11 // pred_fallthru
        _
      // Predicated region
      $region25: #{poolnet_forward.5} parent=11 // pred_check
        %p292 = pneg %p153
      $region26: #{poolnet_forward.5} parent=11 // pred_check_branch
        %294 = sbr.rel (%p292) target = $region28
      $region27: #{poolnet_forward.5} parent=11 // pred_region
        _
      $region28: #{poolnet_forward.5} parent=11 // pred_fallthru
        _
      // Predicated region
      $region29: #{poolnet_forward.5} parent=11 // pred_check
        %p295 = pneg %p174
      $region30: #{poolnet_forward.5} parent=11 // pred_check_branch
        %297 = sbr.rel (%p295) target = $region32
      $region31: #{poolnet_forward.5} parent=11 // pred_region
        _
      $region32: #{poolnet_forward.5} parent=11 // pred_fallthru
        _
      // Predicated region
      $region33: #{poolnet_forward.5} parent=11 // pred_check
        %p298 = pneg %p195
      $region34: #{poolnet_forward.5} parent=11 // pred_check_branch
        %300 = sbr.rel (%p298) target = $region36
      $region35: #{poolnet_forward.5} parent=11 // pred_region
        _
      $region36: #{poolnet_forward.5} parent=11 // pred_fallthru
        _
      // Predicated region
      $region37: #{poolnet_forward.5} parent=11 // pred_check
        %p301 = pneg %p216
      $region38: #{poolnet_forward.5} parent=11 // pred_check_branch
        %303 = sbr.rel (%p301) target = $region40
      $region39: #{poolnet_forward.5} parent=11 // pred_region
        _
      $region40: #{poolnet_forward.5} parent=11 // pred_fallthru
        _
    $region12: #{poolnet_forward.5} parent=5 // pred_fallthru
      _
    %p304 = scmp.lt.s32.totalorder %s17, 2
    // Predicated region
    $region41: #{poolnet_forward.5} parent=5 // pred_check
      %p305 = pneg %p304
    $region42: #{poolnet_forward.5} parent=5 // pred_check_branch
      %307 = sbr.rel (%p305) target = $region44
    $region43: #{poolnet_forward.5} parent=5 // pred_region
      // Predicated region
      $region45: #{poolnet_forward.5} parent=43 // pred_check
        %p308 = pneg %p37
      $region46: #{poolnet_forward.5} parent=43 // pred_check_branch
        %310 = sbr.rel (%p308) target = $region48
      $region47: #{poolnet_forward.5} parent=43 // pred_region
        %p311 = scmp.lt.s32.totalorder %s17, 1
        %s312 = scalar_select %p311, %s17, 1
        %s313 = smul.addr %s312, 8
        %s314 = scalar_lea.vmem %s0, %s313
      $region48: #{poolnet_forward.5} parent=43 // pred_fallthru
        _
      // Predicated region
      $region49: #{poolnet_forward.5} parent=43 // pred_check
        %p315 = pneg %p63
      $region50: #{poolnet_forward.5} parent=43 // pred_check_branch
        %317 = sbr.rel (%p315) target = $region52
      $region51: #{poolnet_forward.5} parent=43 // pred_region
        %p318 = scmp.lt.s32.totalorder %s17, 1
        %s319 = scalar_select %p318, %s17, 1
        %s320 = smul.addr %s319, 4
        %s321 = scalar_lea.vmem %s1, %s320
      $region52: #{poolnet_forward.5} parent=43 // pred_fallthru
        _
    $region44: #{poolnet_forward.5} parent=5 // pred_fallthru
      _
    %p322 = scmp.le.s32.totalorder 1, %s17
    %p323 = scmp.lt.s32.totalorder %s17, 3
    %p324 = pnand %p322, %p323
    %p325 = pneg %p324
    // Predicated region
    $region53: #{poolnet_forward.5} parent=5 // pred_check
      _
    $region54: #{poolnet_forward.5} parent=5 // pred_check_branch
      %327 = sbr.rel (%p324) target = $region56
    $region55: #{poolnet_forward.5} parent=5 // pred_region
      %s328 = ssub.s32 %s17, 1
      %p329 = scmp.lt.s32.totalorder %s22, 1
      %s330 = scalar_select %p329, %s22, 1
      %s331 = smul.addr %s330, 8
      %s332 = scalar_lea.vmem %s0, %s331
      %p333 = pneg %p43
      %p334 = pneg %p40
      %p335 = scmp.lt.s32.totalorder %s22, 1
      %s336 = scalar_select %p335, %s22, 1
      %s337 = smul.addr %s336, 4
      %s338 = scalar_lea.vmem %s1, %s337
      %p339 = pneg %p69
      %p340 = pneg %p66
      %p341 = pneg %p90
      %p342 = pneg %p87
      %p343 = pneg %p111
      %p344 = pneg %p108
      %p345 = pneg %p132
      %p346 = pneg %p129
      %p347 = pneg %p153
      %p348 = pneg %p150
      %p349 = pneg %p174
      %p350 = pneg %p171
      %p351 = pneg %p195
      %p352 = pneg %p192
      %p353 = pneg %p216
      %p354 = pneg %p213
      %p355 = pneg %p242
      %p356 = pneg %p239
      %p357 = scmp.lt.s32.totalorder %s22, 1
      %s358 = scalar_select %p357, %s22, 1
      %s359 = smul.addr %s358, 2
      %s360 = smul.addr %s359, 8
      %s361 = scalar_lea.vmem %s9, %s360
      %p362 = pneg %p268
      %p363 = pneg %p265
      %p364 = scmp.lt.s32.totalorder %s22, 1
      %s365 = scalar_select %p364, %s22, 1
      %s366 = scalar_lea.vmem %s10, %s365
      %p367 = scmp.lt.s32.totalorder %s22, 1
      %s368 = scalar_select %p367, %s22, 1
      %s369 = smul.addr %s368, 8
      %s370 = scalar_lea.vmem %s0, %s369
      %p371 = scmp.lt.s32.totalorder %s22, 1
      %s372 = scalar_select %p371, %s22, 1
      %s373 = smul.addr %s372, 4
      %s374 = scalar_lea.vmem %s1, %s373
      %p375 = scmp.lt.s32.totalorder %s22, 1
      %s376 = scalar_select %p375, %s22, 1
      %s377 = smul.addr %s376, 2
      %s378 = smul.addr %s377, 8
      %s379 = scalar_lea.vmem %s9, %s378
      %p380 = scmp.lt.s32.totalorder %s22, 1
      %s381 = scalar_select %p380, %s22, 1
      %s382 = scalar_lea.vmem %s10, %s381
      %v384 = vld [vmem:[%s370] sm:$0x1f]
      %v385 = vld [vmem:[%s2] sm:$0xff]
      %v386 = vld [vmem:[%s2 + $0x8] sm:$0xff]
      %v387 = vld [vmem:[%s2 + $0x10] sm:$0xff]
      %v388 = vld [vmem:[%s2 + $0x18] sm:$0xff]
      %v389 = vld [vmem:[%s2 + $0x20] sm:$0xff]
      %v390 = vld [vmem:[%s2 + $0x28] sm:$0xff]
      %v391 = vld [vmem:[%s2 + $0x30] sm:$0xff]
      %v392 = vld [vmem:[%s2 + $0x38] sm:$0xff]
      %v393 = vpack.c.bf16 %v384, %v384
      %v402 = vunpack.c.l.b16 %v385
      %v403 = vunpack.c.h.b16 %v385
      %v404 = vunpack.c.l.b16 %v386
      %v405 = vunpack.c.h.b16 %v386
      %v406 = vunpack.c.l.b16 %v387
      %v407 = vunpack.c.h.b16 %v387
      %v408 = vunpack.c.l.b16 %v388
      %v409 = vunpack.c.h.b16 %v388
      %v410 = vunpack.c.l.b16 %v389
      %v411 = vunpack.c.h.b16 %v389
      %v412 = vunpack.c.l.b16 %v390
      %v413 = vunpack.c.h.b16 %v390
      %v414 = vunpack.c.l.b16 %v391
      %v415 = vunpack.c.h.b16 %v391
      %v416 = vunpack.c.l.b16 %v392
      %v417 = vunpack.c.h.b16 %v392
      %v418 = vpack.c.b16 %v404, %v402
      %v419 = vpack.c.b16 %v405, %v403
      %v420 = vpack.c.b16 %v408, %v406
      %v421 = vpack.c.b16 %v409, %v407
      %v422 = vpack.c.b16 %v412, %v410
      %v423 = vpack.c.b16 %v413, %v411
      %v424 = vpack.c.b16 %v416, %v414
      %v425 = vpack.c.b16 %v417, %v415
      %vm434 = vcmask 523264
      %v436 = vsel %vm434, %v393, 0
      %438 = vmatprep.subr.bf16.mxu0 %v419
      %439 = vmatpush1.bf16.msra.mxu0 %v418
      %440 = vmatprep.subr.bf16.mxu0 %v421
      %441 = vmatpush1.bf16.msra.mxu0 %v420
      %442 = vmatprep.subr.bf16.mxu0 %v423
      %443 = vmatpush1.bf16.msra.mxu0 %v422
      %444 = vmatprep.subr.bf16.mxu0 %v425
      %445 = vmatpush1.bf16.msra.mxu0 %v424
      %446 = vmatprep.subr.bf16.mxu0 0
      %447 = vmatpush1.bf16.msra.mxu0 0
      %448 = vmatprep.subr.bf16.mxu0 0
      %449 = vmatpush1.bf16.msra.mxu0 0
      %450 = vmatprep.subr.bf16.mxu0 0
      %451 = vmatpush1.bf16.msra.mxu0 0
      %452 = vmatprep.subr.bf16.mxu0 0
      %453 = vmatpush1.bf16.msra.mxu0 0
      %454 = vmatprep.subr.bf16.mxu0 0
      %455 = vmatpush1.bf16.msra.mxu0 0
      %456 = vmatprep.subr.bf16.mxu0 0
      %457 = vmatpush1.bf16.msra.mxu0 0
      %458 = vmatprep.subr.bf16.mxu0 0
      %459 = vmatpush1.bf16.msra.mxu0 0
      %460 = vmatprep.subr.bf16.mxu0 0
      %461 = vmatpush1.bf16.msra.mxu0 0
      %462 = vmatprep.subr.bf16.mxu0 0
      %463 = vmatpush1.bf16.msra.mxu0 0
      %464 = vmatprep.subr.bf16.mxu0 0
      %465 = vmatpush1.bf16.msra.mxu0 0
      %466 = vmatprep.subr.bf16.mxu0 0
      %467 = vmatpush1.bf16.msra.mxu0 0
      %468 = vmatprep.subr.bf16.mxu0 0
      %469 = vmatpush1.bf16.msra.mxu0 0
      %470 = vmatprep.mubr.bf16.mxu0 0
      %471 = vmatmul.mubr.bf16.gmra.mrb[0].mxu0 %v436
      %v472 = vpop.f32.mrb[0].mxu0
      %v473 = vadd.f32 0.0, %v472
      %v474 = vpop.f32.mrb[0].mxu0
      %v475 = vadd.f32 0.0, %v474
      %v476 = vpop.f32.mrb[0].mxu0
      %v477 = vpop.f32.mrb[0].mxu0
      %478 = vdwg.mxu0
      %v479 = vld [vmem:[%s374] sm:$0x7]
      %v480 = vunpack.c.l.bf16 %v479
      %v481 = vlaneseq
      %v482 = vshrl.u32 %v481, 7
      %v483 = vlaneseq
      %v484 = vand.u32 %v483, 127
      %vm485 = vcmp.eq.s32.totalorder %v482, %v484
      %v486 = vsel %vm485, 1, 0
      %v487 = vcvt.s32.f32 %v486
      %v488 = vsub.f32 1.0, %v487
      %v489 = vmul.f32 %v480, %v488
      %v490 = vadd.f32 %v489, %v487
      %v491 = vld [vmem:[%s3] sm:$0x3]
      %v492 = vld [vmem:[%s4] sm:$0x3]
      %v493 = vlaneseq
      %v494 = vshrl.u32 %v493, 7
      %v495 = vsub.s32 0, %v494
      %v496 = vrot.slane %v491, %v495
      %v497 = vmul.f32 %v473, %v496
      %vm498 = vcmask 1044480
      %v499 = vsel %vm498, %v497, 0.0
      %500 = vadd.xlane.f32.xlu0 %v499
      %v501 = vpop.xlane.xlu0 %500
      %v502 = vlaneseq
      %v503 = vshrl.u32 %v502, 7
      %v504 = vsub.s32 0, %v503
      %v505 = vrot.slane %v492, %v504
      %v506 = vmul.f32 %v473, %v505
      %v507 = vsel %vm498, %v506, 0.0
      %508 = vadd.xlane.f32.xlu0 %v507
      %v509 = vpop.xlane.xlu0 %508
      %510 = vxpose.xlu0.b32.start [1/16] %v501, 128
      %511 = vxpose.xlu0.b32.cont [2/16] 0.0, 128
      %512 = vxpose.xlu0.b32.cont [3/16] 0.0, 128
      %513 = vxpose.xlu0.b32.cont [4/16] 0.0, 128
      %514 = vxpose.xlu0.b32.cont [5/16] 0.0, 128
      %515 = vxpose.xlu0.b32.cont [6/16] 0.0, 128
      %516 = vxpose.xlu0.b32.cont [7/16] 0.0, 128
      %517 = vxpose.xlu0.b32.cont [8/16] 0.0, 128
      %518 = vxpose.xlu0.b32.cont [9/16] 0.0, 128
      %519 = vxpose.xlu0.b32.cont [10/16] 0.0, 128
      %520 = vxpose.xlu0.b32.cont [11/16] 0.0, 128
      %521 = vxpose.xlu0.b32.cont [12/16] 0.0, 128
      %522 = vxpose.xlu0.b32.cont [13/16] 0.0, 128
      %523 = vxpose.xlu0.b32.cont [14/16] 0.0, 128
      %524 = vxpose.xlu0.b32.cont [15/16] 0.0, 128
      %525 = vxpose.xlu0.b32.end [16/16] 0.0, 128
      %v526 = vpop.trf.xlu0
      %v527 = vpop.trf.xlu0
      %v528 = vpop.trf.xlu0
      %v529 = vpop.trf.xlu0
      %v530 = vpop.trf.xlu0
      %v531 = vpop.trf.xlu0
      %v532 = vpop.trf.xlu0
      %v533 = vpop.trf.xlu0
      %v534 = vpop.trf.xlu0
      %v535 = vpop.trf.xlu0
      %v536 = vpop.trf.xlu0
      %v537 = vpop.trf.xlu0
      %v538 = vpop.trf.xlu0
      %v539 = vpop.trf.xlu0
      %v540 = vpop.trf.xlu0
      %v541 = vpop.trf.xlu0
      %v542 = vlaneseq
      %v543 = vshrl.u32 %v542, 7
      %v544 = vsub.s32 0, %v543
      %v545 = vrot.slane %v526, %v544
      %v546 = vadd.f32 %v509, %v545
      %vm547 = vcmp.ge.f32.partialorder %v546, 0.0
      %v548 = vmul.f32 %v546, 0.2
      %v549 = vsel %vm547, %v546, %v548
      %vm550 = vcmp.gt.f32.partialorder %v490, 0.0
      %v551 = vsel %vm550, %v549, -1e+30
      %vm552 = vcmask 36864
      %v553 = vsel %vm552, %v551, -inf
      %554 = vmax.xlane.f32.xlu0 %v553
      %v555 = vpop.xlane.xlu0 %554
      %v556 = vsub.f32 %v551, %v555
      %v557 = vmul.f32 %v556, 1.442695
      %v558 = vpow.pop %v557
      %v559 = vmul.f32 %v558, %v490
      %v560 = vsel %vm552, %v559, 0.0
      %561 = vadd.xlane.f32.xlu0 %v560
      %v562 = vpop.xlane.xlu0 %561
      %v563 = vrcp.pop %v562
      %v564 = vmul.f32 %v559, %v563
      %v565 = vpack.c.bf16 %v564, %v564
      %v566 = vpack.c.bf16 %v473, %v473
      %vm567 = vcmask 39936
      %v569 = vsel %vm567, %v565, 0
      %vm571 = vcmask 1041408
      %vm572 = vcmask 1042432
      %v573 = vsel %vm571, 4294967295, 65535
      %v574 = vsel %vm572, %v573, 0
      %v576 = vand.u32 %v566, %v574
      %578 = vmatprep.subr.bf16.mxu0 0
      %579 = vmatpush1.bf16.msra.mxu0 %v576
      %580 = vmatprep.subr.bf16.mxu0 0
      %581 = vmatpush1.bf16.msra.mxu0 0
      %582 = vmatprep.subr.bf16.mxu0 0
      %583 = vmatpush1.bf16.msra.mxu0 0
      %584 = vmatprep.subr.bf16.mxu0 0
      %585 = vmatpush1.bf16.msra.mxu0 0
      %586 = vmatprep.subr.bf16.mxu0 0
      %587 = vmatpush1.bf16.msra.mxu0 0
      %588 = vmatprep.subr.bf16.mxu0 0
      %589 = vmatpush1.bf16.msra.mxu0 0
      %590 = vmatprep.subr.bf16.mxu0 0
      %591 = vmatpush1.bf16.msra.mxu0 0
      %592 = vmatprep.subr.bf16.mxu0 0
      %593 = vmatpush1.bf16.msra.mxu0 0
      %594 = vmatprep.subr.bf16.mxu0 0
      %595 = vmatpush1.bf16.msra.mxu0 0
      %596 = vmatprep.subr.bf16.mxu0 0
      %597 = vmatpush1.bf16.msra.mxu0 0
      %598 = vmatprep.subr.bf16.mxu0 0
      %599 = vmatpush1.bf16.msra.mxu0 0
      %600 = vmatprep.subr.bf16.mxu0 0
      %601 = vmatpush1.bf16.msra.mxu0 0
      %602 = vmatprep.subr.bf16.mxu0 0
      %603 = vmatpush1.bf16.msra.mxu0 0
      %604 = vmatprep.subr.bf16.mxu0 0
      %605 = vmatpush1.bf16.msra.mxu0 0
      %606 = vmatprep.subr.bf16.mxu0 0
      %607 = vmatpush1.bf16.msra.mxu0 0
      %608 = vmatprep.subr.bf16.mxu0 0
      %609 = vmatpush1.bf16.msra.mxu0 0
      %610 = vmatprep.mubr.bf16.mxu0 0
      %611 = vmatmul.mubr.bf16.gmra.mrb[0].mxu0 %v569
      %v612 = vpop.f32.mrb[0].mxu0
      %v613 = vadd.f32 0.0, %v612
      %v614 = vpop.f32.mrb[0].mxu0
      %v615 = vpop.f32.mrb[0].mxu0
      %v616 = vpop.f32.mrb[0].mxu0
      %617 = vdwg.mxu0
      %618 = vst [vmem:[#allocation2] sm:$0x1f] %v613
      %v619 = vlaneseq
      %v620 = vshrl.u32 %v619, 7
      %v621 = vsub.s32 1, %v620
      %v622 = vrot.slane %v491, %v621
      %v623 = vmul.f32 %v475, %v622
      %v624 = vsel %vm498, %v623, 0.0
      %625 = vadd.xlane.f32.xlu0 %v624
      %v626 = vpop.xlane.xlu0 %625
      %v627 = vlaneseq
      %v628 = vshrl.u32 %v627, 7
      %v629 = vsub.s32 1, %v628
      %v630 = vrot.slane %v492, %v629
      %v631 = vmul.f32 %v475, %v630
      %v632 = vsel %vm498, %v631, 0.0
      %633 = vadd.xlane.f32.xlu0 %v632
      %v634 = vpop.xlane.xlu0 %633
      %635 = vxpose.xlu0.b32.start [1/16] %v626, 128
      %636 = vxpose.xlu0.b32.cont [2/16] 0.0, 128
      %637 = vxpose.xlu0.b32.cont [3/16] 0.0, 128
      %638 = vxpose.xlu0.b32.cont [4/16] 0.0, 128
      %639 = vxpose.xlu0.b32.cont [5/16] 0.0, 128
      %640 = vxpose.xlu0.b32.cont [6/16] 0.0, 128
      %641 = vxpose.xlu0.b32.cont [7/16] 0.0, 128
      %642 = vxpose.xlu0.b32.cont [8/16] 0.0, 128
      %643 = vxpose.xlu0.b32.cont [9/16] 0.0, 128
      %644 = vxpose.xlu0.b32.cont [10/16] 0.0, 128
      %645 = vxpose.xlu0.b32.cont [11/16] 0.0, 128
      %646 = vxpose.xlu0.b32.cont [12/16] 0.0, 128
      %647 = vxpose.xlu0.b32.cont [13/16] 0.0, 128
      %648 = vxpose.xlu0.b32.cont [14/16] 0.0, 128
      %649 = vxpose.xlu0.b32.cont [15/16] 0.0, 128
      %650 = vxpose.xlu0.b32.end [16/16] 0.0, 128
      %v651 = vpop.trf.xlu0
      %v652 = vpop.trf.xlu0
      %v653 = vpop.trf.xlu0
      %v654 = vpop.trf.xlu0
      %v655 = vpop.trf.xlu0
      %v656 = vpop.trf.xlu0
      %v657 = vpop.trf.xlu0
      %v658 = vpop.trf.xlu0
      %v659 = vpop.trf.xlu0
      %v660 = vpop.trf.xlu0
      %v661 = vpop.trf.xlu0
      %v662 = vpop.trf.xlu0
      %v663 = vpop.trf.xlu0
      %v664 = vpop.trf.xlu0
      %v665 = vpop.trf.xlu0
      %v666 = vpop.trf.xlu0
      %v667 = vlaneseq
      %v668 = vshrl.u32 %v667, 7
      %v669 = vsub.s32 0, %v668
      %v670 = vrot.slane %v651, %v669
      %v671 = vadd.f32 %v634, %v670
      %vm672 = vcmp.ge.f32.partialorder %v671, 0.0
      %v673 = vmul.f32 %v671, 0.2
      %v674 = vsel %vm672, %v671, %v673
      %v675 = vsel %vm550, %v674, -1e+30
      %v676 = vsel %vm552, %v675, -inf
      %677 = vmax.xlane.f32.xlu0 %v676
      %v678 = vpop.xlane.xlu0 %677
      %v679 = vsub.f32 %v675, %v678
      %v680 = vmul.f32 %v679, 1.442695
      %v681 = vpow.pop %v680
      %v682 = vmul.f32 %v681, %v490
      %v683 = vsel %vm552, %v682, 0.0
      %684 = vadd.xlane.f32.xlu0 %v683
      %v685 = vpop.xlane.xlu0 %684
      %v686 = vrcp.pop %v685
      %v687 = vmul.f32 %v682, %v686
      %v688 = vpack.c.bf16 %v687, %v687
      %v689 = vpack.c.bf16 %v475, %v475
      %v691 = vsel %vm567, %v688, 0
      %v694 = vand.u32 %v689, %v574
      %696 = vmatprep.subr.bf16.mxu0 0
      %697 = vmatpush1.bf16.msra.mxu0 %v694
      %698 = vmatprep.subr.bf16.mxu0 0
      %699 = vmatpush1.bf16.msra.mxu0 0
      %700 = vmatprep.subr.bf16.mxu0 0
      %701 = vmatpush1.bf16.msra.mxu0 0
      %702 = vmatprep.subr.bf16.mxu0 0
      %703 = vmatpush1.bf16.msra.mxu0 0
      %704 = vmatprep.subr.bf16.mxu0 0
      %705 = vmatpush1.bf16.msra.mxu0 0
      %706 = vmatprep.subr.bf16.mxu0 0
      %707 = vmatpush1.bf16.msra.mxu0 0
      %708 = vmatprep.subr.bf16.mxu0 0
      %709 = vmatpush1.bf16.msra.mxu0 0
      %710 = vmatprep.subr.bf16.mxu0 0
      %711 = vmatpush1.bf16.msra.mxu0 0
      %712 = vmatprep.subr.bf16.mxu0 0
      %713 = vmatpush1.bf16.msra.mxu0 0
      %714 = vmatprep.subr.bf16.mxu0 0
      %715 = vmatpush1.bf16.msra.mxu0 0
      %716 = vmatprep.subr.bf16.mxu0 0
      %717 = vmatpush1.bf16.msra.mxu0 0
      %718 = vmatprep.subr.bf16.mxu0 0
      %719 = vmatpush1.bf16.msra.mxu0 0
      %720 = vmatprep.subr.bf16.mxu0 0
      %721 = vmatpush1.bf16.msra.mxu0 0
      %722 = vmatprep.subr.bf16.mxu0 0
      %723 = vmatpush1.bf16.msra.mxu0 0
      %724 = vmatprep.subr.bf16.mxu0 0
      %725 = vmatpush1.bf16.msra.mxu0 0
      %726 = vmatprep.subr.bf16.mxu0 0
      %727 = vmatpush1.bf16.msra.mxu0 0
      %728 = vmatprep.mubr.bf16.mxu0 0
      %729 = vmatmul.mubr.bf16.gmra.mrb[0].mxu0 %v691
      %v730 = vpop.f32.mrb[0].mxu0
      %v731 = vadd.f32 0.0, %v730
      %v732 = vpop.f32.mrb[0].mxu0
      %v733 = vpop.f32.mrb[0].mxu0
      %v734 = vpop.f32.mrb[0].mxu0
      %735 = vdwg.mxu0
      %736 = vst [vmem:[#allocation2 + $0x8] sm:$0x1f] %v731
      %v737 = vld [vmem:[#allocation2] sm:$0x1f]
      %v738 = vld [vmem:[#allocation2 + $0x8] sm:$0x1f]
      %v739 = vld [vmem:[%s5] sm:$0x3]
      %v741 = vlaneseq
      %v742 = vshrl.u32 %v741, 7
      %v743 = vsub.s32 0, %v742
      %v744 = vrot.slane %v739, %v743
      %v745 = vlaneseq
      %v746 = vshrl.u32 %v745, 7
      %v747 = vsub.s32 1, %v746
      %v748 = vrot.slane %v739, %v747
      %v751 = vadd.f32 %v737, %v744
      %v752 = vadd.f32 %v738, %v748
      %vm753 = vcmp.gt.f32.partialorder %v751, 0.0
      %vm754 = vcmp.gt.f32.partialorder %v752, 0.0
      %v755 = vmin.f32 %v751, 0.0
      %v756 = vmin.f32 %v752, 0.0
      %v757 = vmul.f32 %v755, 1.442695
      %v758 = vpow.pop %v757
      %v759 = vmul.f32 %v756, 1.442695
      %v760 = vpow.pop %v759
      %v761 = vsub.f32 %v758, 1.0
      %v762 = vsub.f32 %v760, 1.0
      %v763 = vsel %vm753, %v751, %v761
      %v764 = vsel %vm754, %v752, %v762
      %v765 = vsel %vm498, %v763, 0.0
      %v766 = vrot.slane %v765, 4
      %v767 = vadd.f32 %v765, %v766
      %v768 = vrot.slane %v767, 2
      %v769 = vadd.f32 %v767, %v768
      %v770 = vrot.slane %v769, 1
      %v771 = vadd.f32 %v769, %v770
      %v772 = vsel %vm498, %v764, 0.0
      %v773 = vrot.slane %v772, 4
      %v774 = vadd.f32 %v772, %v773
      %v775 = vrot.slane %v774, 2
      %v776 = vadd.f32 %v774, %v775
      %v777 = vrot.slane %v776, 1
      %v778 = vadd.f32 %v776, %v777
      %v779 = vrcp.pop 5.0
      %v780 = vmul.f32 %v771, %v779
      %v781 = vmul.f32 %v778, %v779
      %v782 = vsub.f32 %v763, %v780
      %v783 = vsub.f32 %v764, %v781
      %v784 = vmul.f32 %v782, %v782
      %v785 = vmul.f32 %v783, %v783
      %v786 = vsel %vm498, %v784, 0.0
      %v787 = vrot.slane %v786, 4
      %v788 = vadd.f32 %v786, %v787
      %v789 = vrot.slane %v788, 2
      %v790 = vadd.f32 %v788, %v789
      %v791 = vrot.slane %v790, 1
      %v792 = vadd.f32 %v790, %v791
      %v793 = vsel %vm498, %v785, 0.0
      %v794 = vrot.slane %v793, 4
      %v795 = vadd.f32 %v793, %v794
      %v796 = vrot.slane %v795, 2
      %v797 = vadd.f32 %v795, %v796
      %v798 = vrot.slane %v797, 1
      %v799 = vadd.f32 %v797, %v798
      %v800 = vmul.f32 %v792, %v779
      %v801 = vmul.f32 %v799, %v779
      %v802 = vadd.f32 %v800, 1e-05
      %v803 = vadd.f32 %v801, 1e-05
      %v804 = vrsqrt.pop %v802
      %v805 = vrsqrt.pop %v803
      %v806 = vmul.f32 %v782, %v804
      %v807 = vmul.f32 %v783, %v805
      %v808 = vld [vmem:[%s6] sm:$0x3]
      %v810 = vlaneseq
      %v811 = vshrl.u32 %v810, 7
      %v812 = vsub.s32 0, %v811
      %v813 = vrot.slane %v808, %v812
      %v814 = vlaneseq
      %v815 = vshrl.u32 %v814, 7
      %v816 = vsub.s32 1, %v815
      %v817 = vrot.slane %v808, %v816
      %v820 = vmul.f32 %v806, %v813
      %v821 = vmul.f32 %v807, %v817
      %v822 = vld [vmem:[%s7] sm:$0x3]
      %v824 = vlaneseq
      %v825 = vshrl.u32 %v824, 7
      %v826 = vsub.s32 0, %v825
      %v827 = vrot.slane %v822, %v826
      %v828 = vlaneseq
      %v829 = vshrl.u32 %v828, 7
      %v830 = vsub.s32 1, %v829
      %v831 = vrot.slane %v822, %v830
      %v834 = vadd.f32 %v820, %v827
      %v835 = vadd.f32 %v821, %v831
      %836 = vst [vmem:[%s379] sm:$0x1f] %v834
      %837 = vst [vmem:[%s379 + $0x8] sm:$0x1f] %v835
      %v838 = vld [vmem:[%s8] sm:$0x3]
      %v840 = vlaneseq
      %v841 = vshrl.u32 %v840, 7
      %v842 = vsub.s32 0, %v841
      %v843 = vrot.slane %v838, %v842
      %v844 = vlaneseq
      %v845 = vshrl.u32 %v844, 7
      %v846 = vsub.s32 1, %v845
      %v847 = vrot.slane %v838, %v846
      %v850 = vmul.f32 %v834, %v843
      %v851 = vmul.f32 %v835, %v847
      %v852 = vsel %vm498, %v850, 0.0
      %v853 = vsel %vm498, %v851, 0.0
      %v854 = vadd.f32 %v852, %v853
      %855 = vadd.xlane.f32.xlu0 %v854
      %v856 = vpop.xlane.xlu0 %855
      %v857 = vand.u32 2147483647, %v856
      %v858 = vsub.f32 0.0, %v857
      %v859 = vmul.f32 %v858, 1.442695
      %v860 = vpow.pop %v859
      %vm861 = vcmp.ge.f32.partialorder %v856, 0.0
      %v862 = vadd.f32 %v860, 1.0
      %v863 = vrcp.pop %v862
      %v864 = vmul.f32 1.0, %v863
      %v865 = vmul.f32 %v860, %v863
      %v866 = vsel %vm861, %v864, %v865
      %867 = vxpose.xlu0.b32.start [1/16] %v866, 128
      %868 = vxpose.xlu0.b32.cont [2/16] 0.0, 128
      %869 = vxpose.xlu0.b32.cont [3/16] 0.0, 128
      %870 = vxpose.xlu0.b32.cont [4/16] 0.0, 128
      %871 = vxpose.xlu0.b32.cont [5/16] 0.0, 128
      %872 = vxpose.xlu0.b32.cont [6/16] 0.0, 128
      %873 = vxpose.xlu0.b32.cont [7/16] 0.0, 128
      %874 = vxpose.xlu0.b32.cont [8/16] 0.0, 128
      %875 = vxpose.xlu0.b32.cont [9/16] 0.0, 128
      %876 = vxpose.xlu0.b32.cont [10/16] 0.0, 128
      %877 = vxpose.xlu0.b32.cont [11/16] 0.0, 128
      %878 = vxpose.xlu0.b32.cont [12/16] 0.0, 128
      %879 = vxpose.xlu0.b32.cont [13/16] 0.0, 128
      %880 = vxpose.xlu0.b32.cont [14/16] 0.0, 128
      %881 = vxpose.xlu0.b32.cont [15/16] 0.0, 128
      %882 = vxpose.xlu0.b32.end [16/16] 0.0, 128
      %v883 = vpop.trf.xlu0
      %v884 = vpop.trf.xlu0
      %v885 = vpop.trf.xlu0
      %v886 = vpop.trf.xlu0
      %v887 = vpop.trf.xlu0
      %v888 = vpop.trf.xlu0
      %v889 = vpop.trf.xlu0
      %v890 = vpop.trf.xlu0
      %v891 = vpop.trf.xlu0
      %v892 = vpop.trf.xlu0
      %v893 = vpop.trf.xlu0
      %v894 = vpop.trf.xlu0
      %v895 = vpop.trf.xlu0
      %v896 = vpop.trf.xlu0
      %v897 = vpop.trf.xlu0
      %v898 = vpop.trf.xlu0
      %vm899 = vcmask 32768
      %900 = vst.msk [vmem:[%s382] sm:$0x1] %vm899, %v883
      %p901 = scmp.lt.s32.totalorder %s22, 1
      %s902 = scalar_select %p901, %s22, 1
      %s903 = smul.addr %s902, 2
      %s904 = smul.addr %s903, 8
      %s905 = scalar_lea.vmem %s9, %s904
      %p906 = scmp.lt.s32.totalorder %s22, 1
      %s907 = scalar_select %p906, %s22, 1
      %s908 = scalar_lea.vmem %s10, %s907
      // Predicated region
      $region57: #{poolnet_forward.5} parent=55 // pred_check
        %p909 = pneg %p239
      $region58: #{poolnet_forward.5} parent=55 // pred_check_branch
        %911 = sbr.rel (%p909) target = $region60
      $region59: #{poolnet_forward.5} parent=55 // pred_region
        _
      $region60: #{poolnet_forward.5} parent=55 // pred_fallthru
        _
      // Predicated region
      $region61: #{poolnet_forward.5} parent=55 // pred_check
        %p912 = pneg %p265
      $region62: #{poolnet_forward.5} parent=55 // pred_check_branch
        %914 = sbr.rel (%p912) target = $region64
      $region63: #{poolnet_forward.5} parent=55 // pred_region
        _
      $region64: #{poolnet_forward.5} parent=55 // pred_fallthru
        _
    $region56: #{poolnet_forward.5} parent=5 // pred_fallthru
      _
    %p915 = scmp.le.s32.totalorder 2, %s17
    // Predicated region
    $region65: #{poolnet_forward.5} parent=5 // pred_check
      %p916 = pneg %p915
    $region66: #{poolnet_forward.5} parent=5 // pred_check_branch
      %918 = sbr.rel (%p916) target = $region68
    $region67: #{poolnet_forward.5} parent=5 // pred_region
      %s919 = ssub.s32 %s17, 2
      // Predicated region
      $region69: #{poolnet_forward.5} parent=67 // pred_check
        %p920 = pneg %p245
      $region70: #{poolnet_forward.5} parent=67 // pred_check_branch
        %922 = sbr.rel (%p920) target = $region72
      $region71: #{poolnet_forward.5} parent=67 // pred_region
        %p923 = scmp.lt.s32.totalorder %s23, 1
        %s924 = scalar_select %p923, %s23, 1
        %s925 = smul.addr %s924, 2
        %s926 = smul.addr %s925, 8
        %s927 = scalar_lea.vmem %s9, %s926
      $region72: #{poolnet_forward.5} parent=67 // pred_fallthru
        _
      // Predicated region
      $region73: #{poolnet_forward.5} parent=67 // pred_check
        %p928 = pneg %p271
      $region74: #{poolnet_forward.5} parent=67 // pred_check_branch
        %930 = sbr.rel (%p928) target = $region76
      $region75: #{poolnet_forward.5} parent=67 // pred_region
        %p931 = scmp.lt.s32.totalorder %s23, 1
        %s932 = scalar_select %p931, %s23, 1
        %s933 = scalar_lea.vmem %s10, %s932
      $region76: #{poolnet_forward.5} parent=67 // pred_fallthru
        _
    $region68: #{poolnet_forward.5} parent=5 // pred_fallthru
      _
  $region6: #{poolnet_forward.5} parent=0 // loop_footer
    %s21 = sadd.s32 1, %s17
  $region7: #{poolnet_forward.5} parent=0 // loop_footer_branch
    %16 = sbr.rel target = $region3
  $region8: #{poolnet_forward.5} parent=0 // loop_exit
    _

// kernel: poolnet_forward.6
$region0: #{poolnet_forward.6}
  #allocation0 [shape = 'u32[]', space=smem, size = 0x4, offset = 0x4, fixed_abs, tag = 'smem constant byte address 0x4 - core index']
  #allocation1 [shape = 'u32[144,128]{1,0:T(1,128)}', space=vmem, size = 0x12000, scoped, tag = 'internal scratch']
  #allocation2 [shape = 'f32[2,512]{1,0:T(2,128)}', space=vmem, size = 0x1000, scoped, tag = 'scratch operand']
  %s0 = inlined_call_operand.vmem [shape: f32[2,2,256], index: 0, kind: input, shape index: {}]
  %s1 = inlined_call_operand.vmem [shape: bf16[2,2,2], index: 1, kind: input, shape index: {}]
  %s2 = inlined_call_operand.vmem [shape: bf16[256,1024], index: 2, kind: input, shape index: {}]
  %s3 = inlined_call_operand.vmem [shape: f32[2,512], index: 3, kind: input, shape index: {}]
  %s4 = inlined_call_operand.vmem [shape: f32[2,512], index: 4, kind: input, shape index: {}]
  %s5 = inlined_call_operand.vmem [shape: f32[1,512], index: 5, kind: input, shape index: {}]
  %s6 = inlined_call_operand.vmem [shape: f32[1,512], index: 6, kind: input, shape index: {}]
  %s7 = inlined_call_operand.vmem [shape: f32[1,512], index: 7, kind: input, shape index: {}]
  %s8 = inlined_call_operand.vmem [shape: f32[2,2,512], index: 8, kind: output, shape index: {}]
  %s9 = sld [smem:[#allocation0]]
  $region65: #{poolnet_forward.6} parent=0
    _
  %s11 = ssub.s32 1, %s9
  %s12 = scalar_select 0, %s11, %s9
  loop: start=0, step=1, limit=4
  $region2: #{poolnet_forward.6} parent=0 // loop_pre_header
    _
  $region3: #{poolnet_forward.6} parent=0 // loop_header
    %s14 = sphi 0, %s18
    %p15 = scmp.ge.s32.totalorder %s14, 4
    %s24 = sphi 0, %s26
    %s27 = sphi 0, %s24
    %s28 = sphi 0, %s27
    %s44 = sphi 0, %s28
    %s50 = sphi 0, %s52
    %s53 = sphi 0, %s50
    %s54 = sphi 0, %s53
    %s70 = sphi 0, %s54
    %s74 = sphi 0, %s74
    %s76 = sphi 0, %s74
    %s77 = sphi 0, %s76
    %s91 = sphi 0, %s77
    %s95 = sphi 0, %s95
    %s97 = sphi 0, %s95
    %s98 = sphi 0, %s97
    %s112 = sphi 0, %s98
    %s116 = sphi 0, %s116
    %s118 = sphi 0, %s116
    %s119 = sphi 0, %s118
    %s133 = sphi 0, %s119
    %s137 = sphi 0, %s137
    %s139 = sphi 0, %s137
    %s140 = sphi 0, %s139
    %s154 = sphi 0, %s140
    %s158 = sphi 0, %s158
    %s160 = sphi 0, %s158
    %s161 = sphi 0, %s160
    %s175 = sphi 0, %s161
    %s179 = sphi 0, %s179
    %s181 = sphi 0, %s179
    %s182 = sphi 0, %s181
    %s196 = sphi 0, %s182
    %s202 = sphi 0, %s204
    %s205 = sphi 0, %s202
    %s206 = sphi 0, %s205
    %s222 = sphi 0, %s206
  $region4: #{poolnet_forward.6} parent=0 // loop_header_branch
    %17 = sbr.rel (%p15) target = $region8
  $region5: #{poolnet_forward.6} parent=0 // loop_body
    %s19 = ssub.s32 %s14, 1
    %s20 = ssub.s32 %s14, 2
    %s21 = sadd.s32 %s14, 1
    %s22 = ssub.s32 %s14, %s21
    %p23 = scmp.eq.s32.totalorder %s22, 0
    %s25 = sadd.s32 %s24, 1
    %s26 = scalar_select %p23, %s24, %s25
    %p29 = pneg %p23
    %p30 = scmp.eq.s32.totalorder %s14, 1
    %p31 = por %p29, %p30
    %p32 = scmp.ne.s32.totalorder %s24, %s27
    %p33 = scmp.eq.s32.totalorder %s14, 0
    %p34 = por %p32, %p33
    %p35 = scmp.ne.s32.totalorder %s24, %s27
    %p36 = scmp.eq.s32.totalorder %s19, 1
    %p37 = por %p35, %p36
    %p38 = scmp.ne.s32.totalorder %s27, %s28
    %p39 = scmp.eq.s32.totalorder %s19, 0
    %p40 = por %p38, %p39
    %p41 = scmp.ne.s32.totalorder %s27, %s28
    %p42 = scmp.eq.s32.totalorder %s20, 1
    %p43 = por %p41, %p42
    %p45 = scmp.ne.s32.totalorder %s28, %s44
    %p46 = scmp.eq.s32.totalorder %s20, 0
    %p47 = por %p45, %p46
    %s48 = ssub.s32 %s14, %s21
    %p49 = scmp.eq.s32.totalorder %s48, 0
    %s51 = sadd.s32 %s50, 1
    %s52 = scalar_select %p49, %s50, %s51
    %p55 = pneg %p49
    %p56 = scmp.eq.s32.totalorder %s14, 1
    %p57 = por %p55, %p56
    %p58 = scmp.ne.s32.totalorder %s50, %s53
    %p59 = scmp.eq.s32.totalorder %s14, 0
    %p60 = por %p58, %p59
    %p61 = scmp.ne.s32.totalorder %s50, %s53
    %p62 = scmp.eq.s32.totalorder %s19, 1
    %p63 = por %p61, %p62
    %p64 = scmp.ne.s32.totalorder %s53, %s54
    %p65 = scmp.eq.s32.totalorder %s19, 0
    %p66 = por %p64, %p65
    %p67 = scmp.ne.s32.totalorder %s53, %s54
    %p68 = scmp.eq.s32.totalorder %s20, 1
    %p69 = por %p67, %p68
    %p71 = scmp.ne.s32.totalorder %s54, %s70
    %p72 = scmp.eq.s32.totalorder %s20, 0
    %p73 = por %p71, %p72
    %s75 = sadd.s32 %s74, 1
    %p78 = scmp.eq.s32.totalorder %s14, 1
    %p79 = scmp.ne.s32.totalorder %s74, %s76
    %p80 = scmp.eq.s32.totalorder %s14, 0
    %p81 = por %p79, %p80
    %p82 = scmp.ne.s32.totalorder %s74, %s76
    %p83 = scmp.eq.s32.totalorder %s19, 1
    %p84 = por %p82, %p83
    %p85 = scmp.ne.s32.totalorder %s76, %s77
    %p86 = scmp.eq.s32.totalorder %s19, 0
    %p87 = por %p85, %p86
    %p88 = scmp.ne.s32.totalorder %s76, %s77
    %p89 = scmp.eq.s32.totalorder %s20, 1
    %p90 = por %p88, %p89
    %p92 = scmp.ne.s32.totalorder %s77, %s91
    %p93 = scmp.eq.s32.totalorder %s20, 0
    %p94 = por %p92, %p93
    %s96 = sadd.s32 %s95, 1
    %p99 = scmp.eq.s32.totalorder %s14, 1
    %p100 = scmp.ne.s32.totalorder %s95, %s97
    %p101 = scmp.eq.s32.totalorder %s14, 0
    %p102 = por %p100, %p101
    %p103 = scmp.ne.s32.totalorder %s95, %s97
    %p104 = scmp.eq.s32.totalorder %s19, 1
    %p105 = por %p103, %p104
    %p106 = scmp.ne.s32.totalorder %s97, %s98
    %p107 = scmp.eq.s32.totalorder %s19, 0
    %p108 = por %p106, %p107
    %p109 = scmp.ne.s32.totalorder %s97, %s98
    %p110 = scmp.eq.s32.totalorder %s20, 1
    %p111 = por %p109, %p110
    %p113 = scmp.ne.s32.totalorder %s98, %s112
    %p114 = scmp.eq.s32.totalorder %s20, 0
    %p115 = por %p113, %p114
    %s117 = sadd.s32 %s116, 1
    %p120 = scmp.eq.s32.totalorder %s14, 1
    %p121 = scmp.ne.s32.totalorder %s116, %s118
    %p122 = scmp.eq.s32.totalorder %s14, 0
    %p123 = por %p121, %p122
    %p124 = scmp.ne.s32.totalorder %s116, %s118
    %p125 = scmp.eq.s32.totalorder %s19, 1
    %p126 = por %p124, %p125
    %p127 = scmp.ne.s32.totalorder %s118, %s119
    %p128 = scmp.eq.s32.totalorder %s19, 0
    %p129 = por %p127, %p128
    %p130 = scmp.ne.s32.totalorder %s118, %s119
    %p131 = scmp.eq.s32.totalorder %s20, 1
    %p132 = por %p130, %p131
    %p134 = scmp.ne.s32.totalorder %s119, %s133
    %p135 = scmp.eq.s32.totalorder %s20, 0
    %p136 = por %p134, %p135
    %s138 = sadd.s32 %s137, 1
    %p141 = scmp.eq.s32.totalorder %s14, 1
    %p142 = scmp.ne.s32.totalorder %s137, %s139
    %p143 = scmp.eq.s32.totalorder %s14, 0
    %p144 = por %p142, %p143
    %p145 = scmp.ne.s32.totalorder %s137, %s139
    %p146 = scmp.eq.s32.totalorder %s19, 1
    %p147 = por %p145, %p146
    %p148 = scmp.ne.s32.totalorder %s139, %s140
    %p149 = scmp.eq.s32.totalorder %s19, 0
    %p150 = por %p148, %p149
    %p151 = scmp.ne.s32.totalorder %s139, %s140
    %p152 = scmp.eq.s32.totalorder %s20, 1
    %p153 = por %p151, %p152
    %p155 = scmp.ne.s32.totalorder %s140, %s154
    %p156 = scmp.eq.s32.totalorder %s20, 0
    %p157 = por %p155, %p156
    %s159 = sadd.s32 %s158, 1
    %p162 = scmp.eq.s32.totalorder %s14, 1
    %p163 = scmp.ne.s32.totalorder %s158, %s160
    %p164 = scmp.eq.s32.totalorder %s14, 0
    %p165 = por %p163, %p164
    %p166 = scmp.ne.s32.totalorder %s158, %s160
    %p167 = scmp.eq.s32.totalorder %s19, 1
    %p168 = por %p166, %p167
    %p169 = scmp.ne.s32.totalorder %s160, %s161
    %p170 = scmp.eq.s32.totalorder %s19, 0
    %p171 = por %p169, %p170
    %p172 = scmp.ne.s32.totalorder %s160, %s161
    %p173 = scmp.eq.s32.totalorder %s20, 1
    %p174 = por %p172, %p173
    %p176 = scmp.ne.s32.totalorder %s161, %s175
    %p177 = scmp.eq.s32.totalorder %s20, 0
    %p178 = por %p176, %p177
    %s180 = sadd.s32 %s179, 1
    %p183 = scmp.eq.s32.totalorder %s14, 1
    %p184 = scmp.ne.s32.totalorder %s179, %s181
    %p185 = scmp.eq.s32.totalorder %s14, 0
    %p186 = por %p184, %p185
    %p187 = scmp.ne.s32.totalorder %s179, %s181
    %p188 = scmp.eq.s32.totalorder %s19, 1
    %p189 = por %p187, %p188
    %p190 = scmp.ne.s32.totalorder %s181, %s182
    %p191 = scmp.eq.s32.totalorder %s19, 0
    %p192 = por %p190, %p191
    %p193 = scmp.ne.s32.totalorder %s181, %s182
    %p194 = scmp.eq.s32.totalorder %s20, 1
    %p195 = por %p193, %p194
    %p197 = scmp.ne.s32.totalorder %s182, %s196
    %p198 = scmp.eq.s32.totalorder %s20, 0
    %p199 = por %p197, %p198
    %s200 = ssub.s32 %s14, %s21
    %p201 = scmp.eq.s32.totalorder %s200, 0
    %s203 = sadd.s32 %s202, 1
    %s204 = scalar_select %p201, %s202, %s203
    %p207 = pneg %p201
    %p208 = scmp.eq.s32.totalorder %s14, 1
    %p209 = por %p207, %p208
    %p210 = scmp.ne.s32.totalorder %s202, %s205
    %p211 = scmp.eq.s32.totalorder %s14, 0
    %p212 = por %p210, %p211
    %p213 = scmp.ne.s32.totalorder %s202, %s205
    %p214 = scmp.eq.s32.totalorder %s19, 1
    %p215 = por %p213, %p214
    %p216 = scmp.ne.s32.totalorder %s205, %s206
    %p217 = scmp.eq.s32.totalorder %s19, 0
    %p218 = por %p216, %p217
    %p219 = scmp.ne.s32.totalorder %s205, %s206
    %p220 = scmp.eq.s32.totalorder %s20, 1
    %p221 = por %p219, %p220
    %p223 = scmp.ne.s32.totalorder %s206, %s222
    %p224 = scmp.eq.s32.totalorder %s20, 0
    %p225 = por %p223, %p224
    %p226 = scmp.le.s32.totalorder 1, %s14
    %p227 = scmp.lt.s32.totalorder %s14, 3
    %p228 = pnand %p226, %p227
    %p229 = pneg %p228
    // Predicated region
    $region9: #{poolnet_forward.6} parent=5 // pred_check
      _
    $region10: #{poolnet_forward.6} parent=5 // pred_check_branch
      %231 = sbr.rel (%p228) target = $region12
    $region11: #{poolnet_forward.6} parent=5 // pred_region
      %s232 = ssub.s32 %s14, 1
      // Predicated region
      $region13: #{poolnet_forward.6} parent=11 // pred_check
        %p233 = pneg %p87
      $region14: #{poolnet_forward.6} parent=11 // pred_check_branch
        %235 = sbr.rel (%p233) target = $region16
      $region15: #{poolnet_forward.6} parent=11 // pred_region
        _
      $region16: #{poolnet_forward.6} parent=11 // pred_fallthru
        _
      // Predicated region
      $region17: #{poolnet_forward.6} parent=11 // pred_check
        %p236 = pneg %p108
      $region18: #{poolnet_forward.6} parent=11 // pred_check_branch
        %238 = sbr.rel (%p236) target = $region20
      $region19: #{poolnet_forward.6} parent=11 // pred_region
        _
      $region20: #{poolnet_forward.6} parent=11 // pred_fallthru
        _
      // Predicated region
      $region21: #{poolnet_forward.6} parent=11 // pred_check
        %p239 = pneg %p129
      $region22: #{poolnet_forward.6} parent=11 // pred_check_branch
        %241 = sbr.rel (%p239) target = $region24
      $region23: #{poolnet_forward.6} parent=11 // pred_region
        _
      $region24: #{poolnet_forward.6} parent=11 // pred_fallthru
        _
      // Predicated region
      $region25: #{poolnet_forward.6} parent=11 // pred_check
        %p242 = pneg %p150
      $region26: #{poolnet_forward.6} parent=11 // pred_check_branch
        %244 = sbr.rel (%p242) target = $region28
      $region27: #{poolnet_forward.6} parent=11 // pred_region
        _
      $region28: #{poolnet_forward.6} parent=11 // pred_fallthru
        _
      // Predicated region
      $region29: #{poolnet_forward.6} parent=11 // pred_check
        %p245 = pneg %p171
      $region30: #{poolnet_forward.6} parent=11 // pred_check_branch
        %247 = sbr.rel (%p245) target = $region32
      $region31: #{poolnet_forward.6} parent=11 // pred_region
        _
      $region32: #{poolnet_forward.6} parent=11 // pred_fallthru
        _
      // Predicated region
      $region33: #{poolnet_forward.6} parent=11 // pred_check
        %p248 = pneg %p192
      $region34: #{poolnet_forward.6} parent=11 // pred_check_branch
        %250 = sbr.rel (%p248) target = $region36
      $region35: #{poolnet_forward.6} parent=11 // pred_region
        _
      $region36: #{poolnet_forward.6} parent=11 // pred_fallthru
        _
    $region12: #{poolnet_forward.6} parent=5 // pred_fallthru
      _
    %p251 = scmp.lt.s32.totalorder %s14, 2
    // Predicated region
    $region37: #{poolnet_forward.6} parent=5 // pred_check
      %p252 = pneg %p251
    $region38: #{poolnet_forward.6} parent=5 // pred_check_branch
      %254 = sbr.rel (%p252) target = $region40
    $region39: #{poolnet_forward.6} parent=5 // pred_region
      // Predicated region
      $region41: #{poolnet_forward.6} parent=39 // pred_check
        %p255 = pneg %p34
      $region42: #{poolnet_forward.6} parent=39 // pred_check_branch
        %257 = sbr.rel (%p255) target = $region44
      $region43: #{poolnet_forward.6} parent=39 // pred_region
        %p258 = scmp.lt.s32.totalorder %s14, 1
        %s259 = scalar_select %p258, %s14, 1
        %s260 = smul.addr %s259, 2
        %s261 = smul.addr %s260, 2
        %s262 = scalar_lea.vmem %s0, %s261
      $region44: #{poolnet_forward.6} parent=39 // pred_fallthru
        _
      // Predicated region
      $region45: #{poolnet_forward.6} parent=39 // pred_check
        %p263 = pneg %p60
      $region46: #{poolnet_forward.6} parent=39 // pred_check_branch
        %265 = sbr.rel (%p263) target = $region48
      $region47: #{poolnet_forward.6} parent=39 // pred_region
        %p266 = scmp.lt.s32.totalorder %s14, 1
        %s267 = scalar_select %p266, %s14, 1
        %s268 = scalar_lea.vmem %s1, %s267
      $region48: #{poolnet_forward.6} parent=39 // pred_fallthru
        _
    $region40: #{poolnet_forward.6} parent=5 // pred_fallthru
      _
    %p269 = scmp.le.s32.totalorder 1, %s14
    %p270 = scmp.lt.s32.totalorder %s14, 3
    %p271 = pnand %p269, %p270
    %p272 = pneg %p271
    // Predicated region
    $region49: #{poolnet_forward.6} parent=5 // pred_check
      _
    $region50: #{poolnet_forward.6} parent=5 // pred_check_branch
      %274 = sbr.rel (%p271) target = $region52
    $region51: #{poolnet_forward.6} parent=5 // pred_region
      %s275 = ssub.s32 %s14, 1
      %p276 = scmp.lt.s32.totalorder %s19, 1
      %s277 = scalar_select %p276, %s19, 1
      %s278 = smul.addr %s277, 2
      %s279 = smul.addr %s278, 2
      %s280 = scalar_lea.vmem %s0, %s279
      %p281 = pneg %p40
      %p282 = pneg %p37
      %p283 = scmp.lt.s32.totalorder %s19, 1
      %s284 = scalar_select %p283, %s19, 1
      %s285 = scalar_lea.vmem %s1, %s284
      %p286 = pneg %p66
      %p287 = pneg %p63
      %p288 = pneg %p87
      %p289 = pneg %p84
      %p290 = pneg %p108
      %p291 = pneg %p105
      %p292 = pneg %p129
      %p293 = pneg %p126
      %p294 = pneg %p150
      %p295 = pneg %p147
      %p296 = pneg %p171
      %p297 = pneg %p168
      %p298 = pneg %p192
      %p299 = pneg %p189
      %p300 = pneg %p218
      %p301 = pneg %p215
      %p302 = scmp.lt.s32.totalorder %s19, 1
      %s303 = scalar_select %p302, %s19, 1
      %s304 = smul.addr %s303, 4
      %s305 = smul.addr %s304, 2
      %s306 = scalar_lea.vmem %s8, %s305
      %p307 = scmp.lt.s32.totalorder %s19, 1
      %s308 = scalar_select %p307, %s19, 1
      %s309 = smul.addr %s308, 2
      %s310 = smul.addr %s309, 2
      %s311 = scalar_lea.vmem %s0, %s310
      %p312 = scmp.lt.s32.totalorder %s19, 1
      %s313 = scalar_select %p312, %s19, 1
      %s314 = scalar_lea.vmem %s1, %s313
      %p315 = scmp.lt.s32.totalorder %s19, 1
      %s316 = scalar_select %p315, %s19, 1
      %s317 = smul.addr %s316, 4
      %s318 = smul.addr %s317, 2
      %s319 = scalar_lea.vmem %s8, %s318
      %v321 = vld [vmem:[%s311] sm:$0xf]
      %v322 = vld [vmem:[%s2] sm:$0xff]
      %v323 = vld [vmem:[%s2 + $0x8] sm:$0xff]
      %v324 = vld [vmem:[%s2 + $0x10] sm:$0xff]
      %v325 = vld [vmem:[%s2 + $0x18] sm:$0xff]
      %v326 = vld [vmem:[%s2 + $0x20] sm:$0xff]
      %v327 = vld [vmem:[%s2 + $0x28] sm:$0xff]
      %v328 = vld [vmem:[%s2 + $0x30] sm:$0xff]
      %v329 = vld [vmem:[%s2 + $0x38] sm:$0xff]
      %v330 = vld [vmem:[%s2 + $0x40] sm:$0xff]
      %v331 = vld [vmem:[%s2 + $0x48] sm:$0xff]
      %v332 = vld [vmem:[%s2 + $0x50] sm:$0xff]
      %v333 = vld [vmem:[%s2 + $0x58] sm:$0xff]
      %v334 = vld [vmem:[%s2 + $0x60] sm:$0xff]
      %v335 = vld [vmem:[%s2 + $0x68] sm:$0xff]
      %v336 = vld [vmem:[%s2 + $0x70] sm:$0xff]
      %v337 = vld [vmem:[%s2 + $0x78] sm:$0xff]
      %v338 = vld [vmem:[%s2 + $0x80] sm:$0xff]
      %v339 = vld [vmem:[%s2 + $0x88] sm:$0xff]
      %v340 = vld [vmem:[%s2 + $0x90] sm:$0xff]
      %v341 = vld [vmem:[%s2 + $0x98] sm:$0xff]
      %v342 = vld [vmem:[%s2 + $0xa0] sm:$0xff]
      %v343 = vld [vmem:[%s2 + $0xa8] sm:$0xff]
      %v344 = vld [vmem:[%s2 + $0xb0] sm:$0xff]
      %v345 = vld [vmem:[%s2 + $0xb8] sm:$0xff]
      %v346 = vld [vmem:[%s2 + $0xc0] sm:$0xff]
      %v347 = vld [vmem:[%s2 + $0xc8] sm:$0xff]
      %v348 = vld [vmem:[%s2 + $0xd0] sm:$0xff]
      %v349 = vld [vmem:[%s2 + $0xd8] sm:$0xff]
      %v350 = vld [vmem:[%s2 + $0xe0] sm:$0xff]
      %v351 = vld [vmem:[%s2 + $0xe8] sm:$0xff]
      %v352 = vld [vmem:[%s2 + $0xf0] sm:$0xff]
      %v353 = vld [vmem:[%s2 + $0xf8] sm:$0xff]
      %v354 = vld [vmem:[%s2 + $0x100] sm:$0xff]
      %v355 = vld [vmem:[%s2 + $0x108] sm:$0xff]
      %v356 = vld [vmem:[%s2 + $0x110] sm:$0xff]
      %v357 = vld [vmem:[%s2 + $0x118] sm:$0xff]
      %v358 = vld [vmem:[%s2 + $0x120] sm:$0xff]
      %v359 = vld [vmem:[%s2 + $0x128] sm:$0xff]
      %v360 = vld [vmem:[%s2 + $0x130] sm:$0xff]
      %v361 = vld [vmem:[%s2 + $0x138] sm:$0xff]
      %v362 = vld [vmem:[%s2 + $0x140] sm:$0xff]
      %v363 = vld [vmem:[%s2 + $0x148] sm:$0xff]
      %v364 = vld [vmem:[%s2 + $0x150] sm:$0xff]
      %v365 = vld [vmem:[%s2 + $0x158] sm:$0xff]
      %v366 = vld [vmem:[%s2 + $0x160] sm:$0xff]
      %v367 = vld [vmem:[%s2 + $0x168] sm:$0xff]
      %v368 = vld [vmem:[%s2 + $0x170] sm:$0xff]
      %v369 = vld [vmem:[%s2 + $0x178] sm:$0xff]
      %v370 = vld [vmem:[%s2 + $0x180] sm:$0xff]
      %v371 = vld [vmem:[%s2 + $0x188] sm:$0xff]
      %v372 = vld [vmem:[%s2 + $0x190] sm:$0xff]
      %v373 = vld [vmem:[%s2 + $0x198] sm:$0xff]
      %v374 = vld [vmem:[%s2 + $0x1a0] sm:$0xff]
      %v375 = vld [vmem:[%s2 + $0x1a8] sm:$0xff]
      %v376 = vld [vmem:[%s2 + $0x1b0] sm:$0xff]
      %v377 = vld [vmem:[%s2 + $0x1b8] sm:$0xff]
      %v378 = vld [vmem:[%s2 + $0x1c0] sm:$0xff]
      %v379 = vld [vmem:[%s2 + $0x1c8] sm:$0xff]
      %v380 = vld [vmem:[%s2 + $0x1d0] sm:$0xff]
      %v381 = vld [vmem:[%s2 + $0x1d8] sm:$0xff]
      %v382 = vld [vmem:[%s2 + $0x1e0] sm:$0xff]
      %v383 = vld [vmem:[%s2 + $0x1e8] sm:$0xff]
      %v384 = vld [vmem:[%s2 + $0x1f0] sm:$0xff]
      %v385 = vld [vmem:[%s2 + $0x1f8] sm:$0xff]
      %v386 = vld [vmem:[%s2 + $0x200] sm:$0xff]
      %v387 = vld [vmem:[%s2 + $0x208] sm:$0xff]
      %v388 = vld [vmem:[%s2 + $0x210] sm:$0xff]
      %v389 = vld [vmem:[%s2 + $0x218] sm:$0xff]
      %v390 = vld [vmem:[%s2 + $0x220] sm:$0xff]
      %v391 = vld [vmem:[%s2 + $0x228] sm:$0xff]
      %v392 = vld [vmem:[%s2 + $0x230] sm:$0xff]
      %v393 = vld [vmem:[%s2 + $0x238] sm:$0xff]
      %v394 = vld [vmem:[%s2 + $0x240] sm:$0xff]
      %v395 = vld [vmem:[%s2 + $0x248] sm:$0xff]
      %v396 = vld [vmem:[%s2 + $0x250] sm:$0xff]
      %v397 = vld [vmem:[%s2 + $0x258] sm:$0xff]
      %v398 = vld [vmem:[%s2 + $0x260] sm:$0xff]
      %v399 = vld [vmem:[%s2 + $0x268] sm:$0xff]
      %v400 = vld [vmem:[%s2 + $0x270] sm:$0xff]
      %v401 = vld [vmem:[%s2 + $0x278] sm:$0xff]
      %v402 = vld [vmem:[%s2 + $0x280] sm:$0xff]
      %v403 = vld [vmem:[%s2 + $0x288] sm:$0xff]
      %v404 = vld [vmem:[%s2 + $0x290] sm:$0xff]
      %v405 = vld [vmem:[%s2 + $0x298] sm:$0xff]
      %v406 = vld [vmem:[%s2 + $0x2a0] sm:$0xff]
      %v407 = vld [vmem:[%s2 + $0x2a8] sm:$0xff]
      %v408 = vld [vmem:[%s2 + $0x2b0] sm:$0xff]
      %v409 = vld [vmem:[%s2 + $0x2b8] sm:$0xff]
      %v410 = vld [vmem:[%s2 + $0x2c0] sm:$0xff]
      %v411 = vld [vmem:[%s2 + $0x2c8] sm:$0xff]
      %v412 = vld [vmem:[%s2 + $0x2d0] sm:$0xff]
      %v413 = vld [vmem:[%s2 + $0x2d8] sm:$0xff]
      %v414 = vld [vmem:[%s2 + $0x2e0] sm:$0xff]
      %v415 = vld [vmem:[%s2 + $0x2e8] sm:$0xff]
      %v416 = vld [vmem:[%s2 + $0x2f0] sm:$0xff]
      %v417 = vld [vmem:[%s2 + $0x2f8] sm:$0xff]
      %v418 = vld [vmem:[%s2 + $0x300] sm:$0xff]
      %v419 = vld [vmem:[%s2 + $0x308] sm:$0xff]
      %v420 = vld [vmem:[%s2 + $0x310] sm:$0xff]
      %v421 = vld [vmem:[%s2 + $0x318] sm:$0xff]
      %v422 = vld [vmem:[%s2 + $0x320] sm:$0xff]
      %v423 = vld [vmem:[%s2 + $0x328] sm:$0xff]
      %v424 = vld [vmem:[%s2 + $0x330] sm:$0xff]
      %v425 = vld [vmem:[%s2 + $0x338] sm:$0xff]
      %v426 = vld [vmem:[%s2 + $0x340] sm:$0xff]
      %v427 = vld [vmem:[%s2 + $0x348] sm:$0xff]
      %v428 = vld [vmem:[%s2 + $0x350] sm:$0xff]
      %v429 = vld [vmem:[%s2 + $0x358] sm:$0xff]
      %v430 = vld [vmem:[%s2 + $0x360] sm:$0xff]
      %v431 = vld [vmem:[%s2 + $0x368] sm:$0xff]
      %v432 = vld [vmem:[%s2 + $0x370] sm:$0xff]
      %v433 = vld [vmem:[%s2 + $0x378] sm:$0xff]
      %v434 = vld [vmem:[%s2 + $0x380] sm:$0xff]
      %v435 = vld [vmem:[%s2 + $0x388] sm:$0xff]
      %v436 = vld [vmem:[%s2 + $0x390] sm:$0xff]
      %v437 = vld [vmem:[%s2 + $0x398] sm:$0xff]
      %v438 = vld [vmem:[%s2 + $0x3a0] sm:$0xff]
      %v439 = vld [vmem:[%s2 + $0x3a8] sm:$0xff]
      %v440 = vld [vmem:[%s2 + $0x3b0] sm:$0xff]
      %v441 = vld [vmem:[%s2 + $0x3b8] sm:$0xff]
      %v442 = vld [vmem:[%s2 + $0x3c0] sm:$0xff]
      %v443 = vld [vmem:[%s2 + $0x3c8] sm:$0xff]
      %v444 = vld [vmem:[%s2 + $0x3d0] sm:$0xff]
      %v445 = vld [vmem:[%s2 + $0x3d8] sm:$0xff]
      %v446 = vld [vmem:[%s2 + $0x3e0] sm:$0xff]
      %v447 = vld [vmem:[%s2 + $0x3e8] sm:$0xff]
      %v448 = vld [vmem:[%s2 + $0x3f0] sm:$0xff]
      %v449 = vld [vmem:[%s2 + $0x3f8] sm:$0xff]
      %v452 = vunpack.c.l.s4 1983009808
      %v453 = vunpack.c.0.s8 %v452
      %v454 = vlaneseq
      %v455 = vshrl.u32 %v454, 7
      %v456 = vsub.s32 %v453, %v455
      %v457 = vrot.slane %v321, %v456
      %v458 = vcombine.high %v457, %v457
      %v461 = vpack.c.bf16 %v457, %v457
      %v462 = vpack.c.bf16 %v458, %v458
      %v591 = vunpack.c.l.b16 %v322
      %v592 = vunpack.c.h.b16 %v322
      %v593 = vunpack.c.l.b16 %v323
      %v594 = vunpack.c.h.b16 %v323
      %v595 = vunpack.c.l.b16 %v324
      %v596 = vunpack.c.h.b16 %v324
      %v597 = vunpack.c.l.b16 %v325
      %v598 = vunpack.c.h.b16 %v325
      %v599 = vunpack.c.l.b16 %v326
      %v600 = vunpack.c.h.b16 %v326
      %v601 = vunpack.c.l.b16 %v327
      %v602 = vunpack.c.h.b16 %v327
      %v603 = vunpack.c.l.b16 %v328
      %v604 = vunpack.c.h.b16 %v328
      %v605 = vunpack.c.l.b16 %v329
      %v606 = vunpack.c.h.b16 %v329
      %v607 = vunpack.c.l.b16 %v330
      %v608 = vunpack.c.h.b16 %v330
      %v609 = vunpack.c.l.b16 %v331
      %v610 = vunpack.c.h.b16 %v331
      %v611 = vunpack.c.l.b16 %v332
      %v612 = vunpack.c.h.b16 %v332
      %v613 = vunpack.c.l.b16 %v333
      %v614 = vunpack.c.h.b16 %v333
      %v615 = vunpack.c.l.b16 %v334
      %v616 = vunpack.c.h.b16 %v334
      %v617 = vunpack.c.l.b16 %v335
      %v618 = vunpack.c.h.b16 %v335
      %v619 = vunpack.c.l.b16 %v336
      %v620 = vunpack.c.h.b16 %v336
      %v621 = vunpack.c.l.b16 %v337
      %v622 = vunpack.c.h.b16 %v337
      %v623 = vunpack.c.l.b16 %v338
      %v624 = vunpack.c.h.b16 %v338
      %v625 = vunpack.c.l.b16 %v339
      %v626 = vunpack.c.h.b16 %v339
      %v627 = vunpack.c.l.b16 %v340
      %v628 = vunpack.c.h.b16 %v340
      %v629 = vunpack.c.l.b16 %v341
      %v630 = vunpack.c.h.b16 %v341
      %v631 = vunpack.c.l.b16 %v342
      %v632 = vunpack.c.h.b16 %v342
      %v633 = vunpack.c.l.b16 %v343
      %v634 = vunpack.c.h.b16 %v343
      %v635 = vunpack.c.l.b16 %v344
      %v636 = vunpack.c.h.b16 %v344
      %v637 = vunpack.c.l.b16 %v345
      %v638 = vunpack.c.h.b16 %v345
      %v639 = vunpack.c.l.b16 %v346
      %v640 = vunpack.c.h.b16 %v346
      %v641 = vunpack.c.l.b16 %v347
      %v642 = vunpack.c.h.b16 %v347
      %v643 = vunpack.c.l.b16 %v348
      %v644 = vunpack.c.h.b16 %v348
      %v645 = vunpack.c.l.b16 %v349
      %v646 = vunpack.c.h.b16 %v349
      %v647 = vunpack.c.l.b16 %v350
      %v648 = vunpack.c.h.b16 %v350
      %v649 = vunpack.c.l.b16 %v351
      %v650 = vunpack.c.h.b16 %v351
      %v651 = vunpack.c.l.b16 %v352
      %v652 = vunpack.c.h.b16 %v352
      %v653 = vunpack.c.l.b16 %v353
      %v654 = vunpack.c.h.b16 %v353
      %v655 = vunpack.c.l.b16 %v354
      %v656 = vunpack.c.h.b16 %v354
      %v657 = vunpack.c.l.b16 %v355
      %v658 = vunpack.c.h.b16 %v355
      %v659 = vunpack.c.l.b16 %v356
      %v660 = vunpack.c.h.b16 %v356
      %v661 = vunpack.c.l.b16 %v357
      %v662 = vunpack.c.h.b16 %v357
      %v663 = vunpack.c.l.b16 %v358
      %v664 = vunpack.c.h.b16 %v358
      %v665 = vunpack.c.l.b16 %v359
      %v666 = vunpack.c.h.b16 %v359
      %v667 = vunpack.c.l.b16 %v360
      %v668 = vunpack.c.h.b16 %v360
      %v669 = vunpack.c.l.b16 %v361
      %v670 = vunpack.c.h.b16 %v361
      %v671 = vunpack.c.l.b16 %v362
      %v672 = vunpack.c.h.b16 %v362
      %v673 = vunpack.c.l.b16 %v363
      %v674 = vunpack.c.h.b16 %v363
      %v675 = vunpack.c.l.b16 %v364
      %v676 = vunpack.c.h.b16 %v364
      %v677 = vunpack.c.l.b16 %v365
      %v678 = vunpack.c.h.b16 %v365
      %v679 = vunpack.c.l.b16 %v366
      %v680 = vunpack.c.h.b16 %v366
      %v681 = vunpack.c.l.b16 %v367
      %v682 = vunpack.c.h.b16 %v367
      %v683 = vunpack.c.l.b16 %v368
      %v684 = vunpack.c.h.b16 %v368
      %v685 = vunpack.c.l.b16 %v369
      %v686 = vunpack.c.h.b16 %v369
      %v687 = vunpack.c.l.b16 %v370
      %v688 = vunpack.c.h.b16 %v370
      %v689 = vunpack.c.l.b16 %v371
      %v690 = vunpack.c.h.b16 %v371
      %v691 = vunpack.c.l.b16 %v372
      %v692 = vunpack.c.h.b16 %v372
      %v693 = vunpack.c.l.b16 %v373
      %v694 = vunpack.c.h.b16 %v373
      %v695 = vunpack.c.l.b16 %v374
      %v696 = vunpack.c.h.b16 %v374
      %v697 = vunpack.c.l.b16 %v375
      %v698 = vunpack.c.h.b16 %v375
      %v699 = vunpack.c.l.b16 %v376
      %v700 = vunpack.c.h.b16 %v376
      %v701 = vunpack.c.l.b16 %v377
      %v702 = vunpack.c.h.b16 %v377
      %v703 = vunpack.c.l.b16 %v378
      %v704 = vunpack.c.h.b16 %v378
      %v705 = vunpack.c.l.b16 %v379
      %v706 = vunpack.c.h.b16 %v379
      %v707 = vunpack.c.l.b16 %v380
      %v708 = vunpack.c.h.b16 %v380
      %v709 = vunpack.c.l.b16 %v381
      %v710 = vunpack.c.h.b16 %v381
      %v711 = vunpack.c.l.b16 %v382
      %v712 = vunpack.c.h.b16 %v382
      %v713 = vunpack.c.l.b16 %v383
      %v714 = vunpack.c.h.b16 %v383
      %v715 = vunpack.c.l.b16 %v384
      %v716 = vunpack.c.h.b16 %v384
      %v717 = vunpack.c.l.b16 %v385
      %v718 = vunpack.c.h.b16 %v385
      %v719 = vunpack.c.l.b16 %v386
      %v720 = vunpack.c.h.b16 %v386
      %v721 = vunpack.c.l.b16 %v387
      %v722 = vunpack.c.h.b16 %v387
      %v723 = vunpack.c.l.b16 %v388
      %v724 = vunpack.c.h.b16 %v388
      %v725 = vunpack.c.l.b16 %v389
      %v726 = vunpack.c.h.b16 %v389
      %v727 = vunpack.c.l.b16 %v390
      %v728 = vunpack.c.h.b16 %v390
      %v729 = vunpack.c.l.b16 %v391
      %v730 = vunpack.c.h.b16 %v391
      %v731 = vunpack.c.l.b16 %v392
      %v732 = vunpack.c.h.b16 %v392
      %v733 = vunpack.c.l.b16 %v393
      %v734 = vunpack.c.h.b16 %v393
      %v735 = vunpack.c.l.b16 %v394
      %v736 = vunpack.c.h.b16 %v394
      %v737 = vunpack.c.l.b16 %v395
      %v738 = vunpack.c.h.b16 %v395
      %v739 = vunpack.c.l.b16 %v396
      %v740 = vunpack.c.h.b16 %v396
      %v741 = vunpack.c.l.b16 %v397
      %v742 = vunpack.c.h.b16 %v397
      %v743 = vunpack.c.l.b16 %v398
      %v744 = vunpack.c.h.b16 %v398
      %v745 = vunpack.c.l.b16 %v399
      %v746 = vunpack.c.h.b16 %v399
      %v747 = vunpack.c.l.b16 %v400
      %v748 = vunpack.c.h.b16 %v400
      %v749 = vunpack.c.l.b16 %v401
      %v750 = vunpack.c.h.b16 %v401
      %v751 = vunpack.c.l.b16 %v402
      %v752 = vunpack.c.h.b16 %v402
      %v753 = vunpack.c.l.b16 %v403
      %v754 = vunpack.c.h.b16 %v403
      %v755 = vunpack.c.l.b16 %v404
      %v756 = vunpack.c.h.b16 %v404
      %v757 = vunpack.c.l.b16 %v405
      %v758 = vunpack.c.h.b16 %v405
      %v759 = vunpack.c.l.b16 %v406
      %v760 = vunpack.c.h.b16 %v406
      %v761 = vunpack.c.l.b16 %v407
      %v762 = vunpack.c.h.b16 %v407
      %v763 = vunpack.c.l.b16 %v408
      %v764 = vunpack.c.h.b16 %v408
      %v765 = vunpack.c.l.b16 %v409
      %v766 = vunpack.c.h.b16 %v409
      %v767 = vunpack.c.l.b16 %v410
      %v768 = vunpack.c.h.b16 %v410
      %v769 = vunpack.c.l.b16 %v411
      %v770 = vunpack.c.h.b16 %v411
      %v771 = vunpack.c.l.b16 %v412
      %v772 = vunpack.c.h.b16 %v412
      %v773 = vunpack.c.l.b16 %v413
      %v774 = vunpack.c.h.b16 %v413
      %v775 = vunpack.c.l.b16 %v414
      %v776 = vunpack.c.h.b16 %v414
      %v777 = vunpack.c.l.b16 %v415
      %v778 = vunpack.c.h.b16 %v415
      %v779 = vunpack.c.l.b16 %v416
      %v780 = vunpack.c.h.b16 %v416
      %v781 = vunpack.c.l.b16 %v417
      %v782 = vunpack.c.h.b16 %v417
      %v783 = vunpack.c.l.b16 %v418
      %v784 = vunpack.c.h.b16 %v418
      %v785 = vunpack.c.l.b16 %v419
      %v786 = vunpack.c.h.b16 %v419
      %v787 = vunpack.c.l.b16 %v420
      %v788 = vunpack.c.h.b16 %v420
      %v789 = vunpack.c.l.b16 %v421
      %v790 = vunpack.c.h.b16 %v421
      %v791 = vunpack.c.l.b16 %v422
      %v792 = vunpack.c.h.b16 %v422
      %v793 = vunpack.c.l.b16 %v423
      %v794 = vunpack.c.h.b16 %v423
      %v795 = vunpack.c.l.b16 %v424
      %v796 = vunpack.c.h.b16 %v424
      %v797 = vunpack.c.l.b16 %v425
      %v798 = vunpack.c.h.b16 %v425
      %v799 = vunpack.c.l.b16 %v426
      %v800 = vunpack.c.h.b16 %v426
      %v801 = vunpack.c.l.b16 %v427
      %v802 = vunpack.c.h.b16 %v427
      %v803 = vunpack.c.l.b16 %v428
      %v804 = vunpack.c.h.b16 %v428
      %v805 = vunpack.c.l.b16 %v429
      %v806 = vunpack.c.h.b16 %v429
      %v807 = vunpack.c.l.b16 %v430
      %v808 = vunpack.c.h.b16 %v430
      %v809 = vunpack.c.l.b16 %v431
      %v810 = vunpack.c.h.b16 %v431
      %v811 = vunpack.c.l.b16 %v432
      %v812 = vunpack.c.h.b16 %v432
      %v813 = vunpack.c.l.b16 %v433
      %v814 = vunpack.c.h.b16 %v433
      %v815 = vunpack.c.l.b16 %v434
      %v816 = vunpack.c.h.b16 %v434
      %v817 = vunpack.c.l.b16 %v435
      %v818 = vunpack.c.h.b16 %v435
      %v819 = vunpack.c.l.b16 %v436
      %v820 = vunpack.c.h.b16 %v436
      %v821 = vunpack.c.l.b16 %v437
      %v822 = vunpack.c.h.b16 %v437
      %v823 = vunpack.c.l.b16 %v438
      %v824 = vunpack.c.h.b16 %v438
      %v825 = vunpack.c.l.b16 %v439
      %v826 = vunpack.c.h.b16 %v439
      %v827 = vunpack.c.l.b16 %v440
      %v828 = vunpack.c.h.b16 %v440
      %v829 = vunpack.c.l.b16 %v441
      %v830 = vunpack.c.h.b16 %v441
      %v831 = vunpack.c.l.b16 %v442
      %v832 = vunpack.c.h.b16 %v442
      %v833 = vunpack.c.l.b16 %v443
      %v834 = vunpack.c.h.b16 %v443
      %v835 = vunpack.c.l.b16 %v444
      %v836 = vunpack.c.h.b16 %v444
      %v837 = vunpack.c.l.b16 %v445
      %v838 = vunpack.c.h.b16 %v445
      %v839 = vunpack.c.l.b16 %v446
      %v840 = vunpack.c.h.b16 %v446
      %v841 = vunpack.c.l.b16 %v447
      %v842 = vunpack.c.h.b16 %v447
      %v843 = vunpack.c.l.b16 %v448
      %v844 = vunpack.c.h.b16 %v448
      %v845 = vunpack.c.l.b16 %v449
      %v846 = vunpack.c.h.b16 %v449
      %v847 = vpack.c.b16 %v599, %v591
      %v848 = vpack.c.b16 %v600, %v592
      %v849 = vpack.c.b16 %v601, %v593
      %v850 = vpack.c.b16 %v602, %v594
      %v851 = vpack.c.b16 %v603, %v595
      %v852 = vpack.c.b16 %v604, %v596
      %v853 = vpack.c.b16 %v605, %v597
      %v854 = vpack.c.b16 %v606, %v598
      %v855 = vpack.c.b16 %v615, %v607
      %v856 = vpack.c.b16 %v616, %v608
      %v857 = vpack.c.b16 %v617, %v609
      %v858 = vpack.c.b16 %v618, %v610
      %v859 = vpack.c.b16 %v619, %v611
      %v860 = vpack.c.b16 %v620, %v612
      %v861 = vpack.c.b16 %v621, %v613
      %v862 = vpack.c.b16 %v622, %v614
      %v863 = vpack.c.b16 %v631, %v623
      %v864 = vpack.c.b16 %v632, %v624
      %v865 = vpack.c.b16 %v633, %v625
      %v866 = vpack.c.b16 %v634, %v626
      %v867 = vpack.c.b16 %v635, %v627
      %v868 = vpack.c.b16 %v636, %v628
      %v869 = vpack.c.b16 %v637, %v629
      %v870 = vpack.c.b16 %v638, %v630
      %v871 = vpack.c.b16 %v647, %v639
      %v872 = vpack.c.b16 %v648, %v640
      %v873 = vpack.c.b16 %v649, %v641
      %v874 = vpack.c.b16 %v650, %v642
      %v875 = vpack.c.b16 %v651, %v643
      %v876 = vpack.c.b16 %v652, %v644
      %v877 = vpack.c.b16 %v653, %v645
      %v878 = vpack.c.b16 %v654, %v646
      %v879 = vpack.c.b16 %v663, %v655
      %v880 = vpack.c.b16 %v664, %v656
      %v881 = vpack.c.b16 %v665, %v657
      %v882 = vpack.c.b16 %v666, %v658
      %v883 = vpack.c.b16 %v667, %v659
      %v884 = vpack.c.b16 %v668, %v660
      %v885 = vpack.c.b16 %v669, %v661
      %v886 = vpack.c.b16 %v670, %v662
      %v887 = vpack.c.b16 %v679, %v671
      %v888 = vpack.c.b16 %v680, %v672
      %v889 = vpack.c.b16 %v681, %v673
      %v890 = vpack.c.b16 %v682, %v674
      %v891 = vpack.c.b16 %v683, %v675
      %v892 = vpack.c.b16 %v684, %v676
      %v893 = vpack.c.b16 %v685, %v677
      %v894 = vpack.c.b16 %v686, %v678
      %v895 = vpack.c.b16 %v695, %v687
      %v896 = vpack.c.b16 %v696, %v688
      %v897 = vpack.c.b16 %v697, %v689
      %v898 = vpack.c.b16 %v698, %v690
      %v899 = vpack.c.b16 %v699, %v691
      %v900 = vpack.c.b16 %v700, %v692
      %v901 = vpack.c.b16 %v701, %v693
      %v902 = vpack.c.b16 %v702, %v694
      %v903 = vpack.c.b16 %v711, %v703
      %v904 = vpack.c.b16 %v712, %v704
      %v905 = vpack.c.b16 %v713, %v705
      %v906 = vpack.c.b16 %v714, %v706
      %v907 = vpack.c.b16 %v715, %v707
      %v908 = vpack.c.b16 %v716, %v708
      %v909 = vpack.c.b16 %v717, %v709
      %v910 = vpack.c.b16 %v718, %v710
      %v911 = vpack.c.b16 %v727, %v719
      %v912 = vpack.c.b16 %v728, %v720
      %v913 = vpack.c.b16 %v729, %v721
      %v914 = vpack.c.b16 %v730, %v722
      %v915 = vpack.c.b16 %v731, %v723
      %v916 = vpack.c.b16 %v732, %v724
      %v917 = vpack.c.b16 %v733, %v725
      %v918 = vpack.c.b16 %v734, %v726
      %v919 = vpack.c.b16 %v743, %v735
      %v920 = vpack.c.b16 %v744, %v736
      %v921 = vpack.c.b16 %v745, %v737
      %v922 = vpack.c.b16 %v746, %v738
      %v923 = vpack.c.b16 %v747, %v739
      %v924 = vpack.c.b16 %v748, %v740
      %v925 = vpack.c.b16 %v749, %v741
      %v926 = vpack.c.b16 %v750, %v742
      %v927 = vpack.c.b16 %v759, %v751
      %v928 = vpack.c.b16 %v760, %v752
      %v929 = vpack.c.b16 %v761, %v753
      %v930 = vpack.c.b16 %v762, %v754
      %v931 = vpack.c.b16 %v763, %v755
      %v932 = vpack.c.b16 %v764, %v756
      %v933 = vpack.c.b16 %v765, %v757
      %v934 = vpack.c.b16 %v766, %v758
      %v935 = vpack.c.b16 %v775, %v767
      %v936 = vpack.c.b16 %v776, %v768
      %v937 = vpack.c.b16 %v777, %v769
      %v938 = vpack.c.b16 %v778, %v770
      %v939 = vpack.c.b16 %v779, %v771
      %v940 = vpack.c.b16 %v780, %v772
      %v941 = vpack.c.b16 %v781, %v773
      %v942 = vpack.c.b16 %v782, %v774
      %v943 = vpack.c.b16 %v791, %v783
      %v944 = vpack.c.b16 %v792, %v784
      %v945 = vpack.c.b16 %v793, %v785
      %v946 = vpack.c.b16 %v794, %v786
      %v947 = vpack.c.b16 %v795, %v787
      %v948 = vpack.c.b16 %v796, %v788
      %v949 = vpack.c.b16 %v797, %v789
      %v950 = vpack.c.b16 %v798, %v790
      %v951 = vpack.c.b16 %v807, %v799
      %v952 = vpack.c.b16 %v808, %v800
      %v953 = vpack.c.b16 %v809, %v801
      %v954 = vpack.c.b16 %v810, %v802
      %v955 = vpack.c.b16 %v811, %v803
      %v956 = vpack.c.b16 %v812, %v804
      %v957 = vpack.c.b16 %v813, %v805
      %v958 = vpack.c.b16 %v814, %v806
      %v959 = vpack.c.b16 %v823, %v815
      %v960 = vpack.c.b16 %v824, %v816
      %v961 = vpack.c.b16 %v825, %v817
      %v962 = vpack.c.b16 %v826, %v818
      %v963 = vpack.c.b16 %v827, %v819
      %v964 = vpack.c.b16 %v828, %v820
      %v965 = vpack.c.b16 %v829, %v821
      %v966 = vpack.c.b16 %v830, %v822
      %v967 = vpack.c.b16 %v839, %v831
      %v968 = vpack.c.b16 %v840, %v832
      %v969 = vpack.c.b16 %v841, %v833
      %v970 = vpack.c.b16 %v842, %v834
      %v971 = vpack.c.b16 %v843, %v835
      %v972 = vpack.c.b16 %v844, %v836
      %v973 = vpack.c.b16 %v845, %v837
      %v974 = vpack.c.b16 %v846, %v838
      %1103 = vmatprep.subr.bf16.mxu0 %v848
      %1104 = vmatpush1.bf16.msra.mxu0 %v847
      %1105 = vmatprep.subr.bf16.mxu0 %v856
      %1106 = vmatpush1.bf16.msra.mxu0 %v855
      %1107 = vmatprep.subr.bf16.mxu0 %v864
      %1108 = vmatpush1.bf16.msra.mxu0 %v863
      %1109 = vmatprep.subr.bf16.mxu0 %v872
      %1110 = vmatpush1.bf16.msra.mxu0 %v871
      %1111 = vmatprep.subr.bf16.mxu0 %v880
      %1112 = vmatpush1.bf16.msra.mxu0 %v879
      %1113 = vmatprep.subr.bf16.mxu0 %v888
      %1114 = vmatpush1.bf16.msra.mxu0 %v887
      %1115 = vmatprep.subr.bf16.mxu0 %v896
      %1116 = vmatpush1.bf16.msra.mxu0 %v895
      %1117 = vmatprep.subr.bf16.mxu0 %v904
      %1118 = vmatpush1.bf16.msra.mxu0 %v903
      %1119 = vmatprep.subr.bf16.mxu0 %v912
      %1120 = vmatpush1.bf16.msra.mxu0 %v911
      %1121 = vmatprep.subr.bf16.mxu0 %v920
      %1122 = vmatpush1.bf16.msra.mxu0 %v919
      %1123 = vmatprep.subr.bf16.mxu0 %v928
      %1124 = vmatpush1.bf16.msra.mxu0 %v927
      %1125 = vmatprep.subr.bf16.mxu0 %v936
      %1126 = vmatpush1.bf16.msra.mxu0 %v935
      %1127 = vmatprep.subr.bf16.mxu0 %v944
      %1128 = vmatpush1.bf16.msra.mxu0 %v943
      %1129 = vmatprep.subr.bf16.mxu0 %v952
      %1130 = vmatpush1.bf16.msra.mxu0 %v951
      %1131 = vmatprep.subr.bf16.mxu0 %v960
      %1132 = vmatpush1.bf16.msra.mxu0 %v959
      %1133 = vmatprep.subr.bf16.mxu0 %v968
      %1134 = vmatpush1.bf16.msra.mxu0 %v967
      %1135 = vmatprep.mubr.bf16.mxu0 %v462
      %1136 = vmatmul.mubr.bf16.gmra.mrb[0].mxu0 %v461
      %v1137 = vpop.f32.mrb[0].mxu0
      %v1138 = vadd.f32 0.0, %v1137
      %v1139 = vpop.f32.mrb[0].mxu0
      %v1140 = vadd.f32 0.0, %v1139
      %v1141 = vpop.f32.mrb[0].mxu0
      %v1142 = vpop.f32.mrb[0].mxu0
      %1143 = vdwg.mxu0
      %1144 = vmatprep.subr.bf16.mxu0 %v850
      %1145 = vmatpush1.bf16.msra.mxu0 %v849
      %1146 = vmatprep.subr.bf16.mxu0 %v858
      %1147 = vmatpush1.bf16.msra.mxu0 %v857
      %1148 = vmatprep.subr.bf16.mxu0 %v866
      %1149 = vmatpush1.bf16.msra.mxu0 %v865
      %1150 = vmatprep.subr.bf16.mxu0 %v874
      %1151 = vmatpush1.bf16.msra.mxu0 %v873
      %1152 = vmatprep.subr.bf16.mxu0 %v882
      %1153 = vmatpush1.bf16.msra.mxu0 %v881
      %1154 = vmatprep.subr.bf16.mxu0 %v890
      %1155 = vmatpush1.bf16.msra.mxu0 %v889
      %1156 = vmatprep.subr.bf16.mxu0 %v898
      %1157 = vmatpush1.bf16.msra.mxu0 %v897
      %1158 = vmatprep.subr.bf16.mxu0 %v906
      %1159 = vmatpush1.bf16.msra.mxu0 %v905
      %1160 = vmatprep.subr.bf16.mxu0 %v914
      %1161 = vmatpush1.bf16.msra.mxu0 %v913
      %1162 = vmatprep.subr.bf16.mxu0 %v922
      %1163 = vmatpush1.bf16.msra.mxu0 %v921
      %1164 = vmatprep.subr.bf16.mxu0 %v930
      %1165 = vmatpush1.bf16.msra.mxu0 %v929
      %1166 = vmatprep.subr.bf16.mxu0 %v938
      %1167 = vmatpush1.bf16.msra.mxu0 %v937
      %1168 = vmatprep.subr.bf16.mxu0 %v946
      %1169 = vmatpush1.bf16.msra.mxu0 %v945
      %1170 = vmatprep.subr.bf16.mxu0 %v954
      %1171 = vmatpush1.bf16.msra.mxu0 %v953
      %1172 = vmatprep.subr.bf16.mxu0 %v962
      %1173 = vmatpush1.bf16.msra.mxu0 %v961
      %1174 = vmatprep.subr.bf16.mxu0 %v970
      %1175 = vmatpush1.bf16.msra.mxu0 %v969
      %1176 = vmatprep.mubr.bf16.mxu0 %v462
      %1177 = vmatmul.mubr.bf16.gmra.mrb[0].mxu0 %v461
      %v1178 = vpop.f32.mrb[0].mxu0
      %v1179 = vadd.f32 0.0, %v1178
      %v1180 = vpop.f32.mrb[0].mxu0
      %v1181 = vadd.f32 0.0, %v1180
      %v1182 = vpop.f32.mrb[0].mxu0
      %v1183 = vpop.f32.mrb[0].mxu0
      %1184 = vdwg.mxu0
      %1185 = vmatprep.subr.bf16.mxu0 %v852
      %1186 = vmatpush1.bf16.msra.mxu0 %v851
      %1187 = vmatprep.subr.bf16.mxu0 %v860
      %1188 = vmatpush1.bf16.msra.mxu0 %v859
      %1189 = vmatprep.subr.bf16.mxu0 %v868
      %1190 = vmatpush1.bf16.msra.mxu0 %v867
      %1191 = vmatprep.subr.bf16.mxu0 %v876
      %1192 = vmatpush1.bf16.msra.mxu0 %v875
      %1193 = vmatprep.subr.bf16.mxu0 %v884
      %1194 = vmatpush1.bf16.msra.mxu0 %v883
      %1195 = vmatprep.subr.bf16.mxu0 %v892
      %1196 = vmatpush1.bf16.msra.mxu0 %v891
      %1197 = vmatprep.subr.bf16.mxu0 %v900
      %1198 = vmatpush1.bf16.msra.mxu0 %v899
      %1199 = vmatprep.subr.bf16.mxu0 %v908
      %1200 = vmatpush1.bf16.msra.mxu0 %v907
      %1201 = vmatprep.subr.bf16.mxu0 %v916
      %1202 = vmatpush1.bf16.msra.mxu0 %v915
      %1203 = vmatprep.subr.bf16.mxu0 %v924
      %1204 = vmatpush1.bf16.msra.mxu0 %v923
      %1205 = vmatprep.subr.bf16.mxu0 %v932
      %1206 = vmatpush1.bf16.msra.mxu0 %v931
      %1207 = vmatprep.subr.bf16.mxu0 %v940
      %1208 = vmatpush1.bf16.msra.mxu0 %v939
      %1209 = vmatprep.subr.bf16.mxu0 %v948
      %1210 = vmatpush1.bf16.msra.mxu0 %v947
      %1211 = vmatprep.subr.bf16.mxu0 %v956
      %1212 = vmatpush1.bf16.msra.mxu0 %v955
      %1213 = vmatprep.subr.bf16.mxu0 %v964
      %1214 = vmatpush1.bf16.msra.mxu0 %v963
      %1215 = vmatprep.subr.bf16.mxu0 %v972
      %1216 = vmatpush1.bf16.msra.mxu0 %v971
      %1217 = vmatprep.mubr.bf16.mxu0 %v462
      %1218 = vmatmul.mubr.bf16.gmra.mrb[0].mxu0 %v461
      %v1219 = vpop.f32.mrb[0].mxu0
      %v1220 = vadd.f32 0.0, %v1219
      %v1221 = vpop.f32.mrb[0].mxu0
      %v1222 = vadd.f32 0.0, %v1221
      %v1223 = vpop.f32.mrb[0].mxu0
      %v1224 = vpop.f32.mrb[0].mxu0
      %1225 = vdwg.mxu0
      %1226 = vmatprep.subr.bf16.mxu0 %v854
      %1227 = vmatpush1.bf16.msra.mxu0 %v853
      %1228 = vmatprep.subr.bf16.mxu0 %v862
      %1229 = vmatpush1.bf16.msra.mxu0 %v861
      %1230 = vmatprep.subr.bf16.mxu0 %v870
      %1231 = vmatpush1.bf16.msra.mxu0 %v869
      %1232 = vmatprep.subr.bf16.mxu0 %v878
      %1233 = vmatpush1.bf16.msra.mxu0 %v877
      %1234 = vmatprep.subr.bf16.mxu0 %v886
      %1235 = vmatpush1.bf16.msra.mxu0 %v885
      %1236 = vmatprep.subr.bf16.mxu0 %v894
      %1237 = vmatpush1.bf16.msra.mxu0 %v893
      %1238 = vmatprep.subr.bf16.mxu0 %v902
      %1239 = vmatpush1.bf16.msra.mxu0 %v901
      %1240 = vmatprep.subr.bf16.mxu0 %v910
      %1241 = vmatpush1.bf16.msra.mxu0 %v909
      %1242 = vmatprep.subr.bf16.mxu0 %v918
      %1243 = vmatpush1.bf16.msra.mxu0 %v917
      %1244 = vmatprep.subr.bf16.mxu0 %v926
      %1245 = vmatpush1.bf16.msra.mxu0 %v925
      %1246 = vmatprep.subr.bf16.mxu0 %v934
      %1247 = vmatpush1.bf16.msra.mxu0 %v933
      %1248 = vmatprep.subr.bf16.mxu0 %v942
      %1249 = vmatpush1.bf16.msra.mxu0 %v941
      %1250 = vmatprep.subr.bf16.mxu0 %v950
      %1251 = vmatpush1.bf16.msra.mxu0 %v949
      %1252 = vmatprep.subr.bf16.mxu0 %v958
      %1253 = vmatpush1.bf16.msra.mxu0 %v957
      %1254 = vmatprep.subr.bf16.mxu0 %v966
      %1255 = vmatpush1.bf16.msra.mxu0 %v965
      %1256 = vmatprep.subr.bf16.mxu0 %v974
      %1257 = vmatpush1.bf16.msra.mxu0 %v973
      %1258 = vmatprep.mubr.bf16.mxu0 %v462
      %1259 = vmatmul.mubr.bf16.gmra.mrb[0].mxu0 %v461
      %v1260 = vpop.f32.mrb[0].mxu0
      %v1261 = vadd.f32 0.0, %v1260
      %v1262 = vpop.f32.mrb[0].mxu0
      %v1263 = vadd.f32 0.0, %v1262
      %v1264 = vpop.f32.mrb[0].mxu0
      %v1265 = vpop.f32.mrb[0].mxu0
      %1266 = vdwg.mxu0
      %v1267 = vld [vmem:[%s314] sm:$0x1]
      %v1268 = vunpack.c.l.bf16 %v1267
      %v1269 = vlaneseq
      %v1270 = vshrl.u32 %v1269, 7
      %v1271 = vlaneseq
      %v1272 = vand.u32 %v1271, 127
      %vm1273 = vcmp.eq.s32.totalorder %v1270, %v1272
      %v1274 = vsel %vm1273, 1, 0
      %v1275 = vcvt.s32.f32 %v1274
      %v1276 = vsub.f32 1.0, %v1275
      %v1277 = vmul.f32 %v1268, %v1276
      %v1278 = vadd.f32 %v1277, %v1275
      %v1279 = vld [vmem:[%s3] sm:$0xff]
      %v1280 = vld [vmem:[%s4] sm:$0xff]
      %v1282 = vlaneseq
      %v1283 = vshrl.u32 %v1282, 7
      %v1284 = vsub.s32 0, %v1283
      %v1285 = vrot.slane %v1279, %v1284
      %v1286 = vlaneseq
      %v1287 = vshrl.u32 %v1286, 7
      %v1288 = vsub.s32 2, %v1287
      %v1289 = vrot.slane %v1279, %v1288
      %v1290 = vlaneseq
      %v1291 = vshrl.u32 %v1290, 7
      %v1292 = vsub.s32 4, %v1291
      %v1293 = vrot.slane %v1279, %v1292
      %v1294 = vlaneseq
      %v1295 = vshrl.u32 %v1294, 7
      %v1296 = vsub.s32 6, %v1295
      %v1297 = vrot.slane %v1279, %v1296
      %v1302 = vlaneseq
      %v1303 = vshrl.u32 %v1302, 7
      %v1304 = vsub.s32 0, %v1303
      %v1305 = vrot.slane %v1285, %v1304
      %v1306 = vlaneseq
      %v1307 = vshrl.u32 %v1306, 7
      %v1308 = vsub.s32 0, %v1307
      %v1309 = vrot.slane %v1289, %v1308
      %v1310 = vlaneseq
      %v1311 = vshrl.u32 %v1310, 7
      %v1312 = vsub.s32 0, %v1311
      %v1313 = vrot.slane %v1293, %v1312
      %v1314 = vlaneseq
      %v1315 = vshrl.u32 %v1314, 7
      %v1316 = vsub.s32 0, %v1315
      %v1317 = vrot.slane %v1297, %v1316
      %v1318 = vmul.f32 %v1138, %v1305
      %v1319 = vmul.f32 %v1140, %v1309
      %v1320 = vmul.f32 %v1179, %v1313
      %v1321 = vmul.f32 %v1181, %v1317
      %vm1322 = vcmask 1041408
      %v1323 = vsel %vm1322, %v1318, 0.0
      %v1324 = vsel %vm1322, %v1319, 0.0
      %v1325 = vadd.f32 %v1323, %v1324
      %v1326 = vsel %vm1322, %v1320, 0.0
      %v1327 = vadd.f32 %v1325, %v1326
      %v1328 = vsel %vm1322, %v1321, 0.0
      %v1329 = vadd.f32 %v1327, %v1328
      %1330 = vadd.xlane.f32.xlu0 %v1329
      %v1331 = vpop.xlane.xlu0 %1330
      %v1333 = vlaneseq
      %v1334 = vshrl.u32 %v1333, 7
      %v1335 = vsub.s32 0, %v1334
      %v1336 = vrot.slane %v1280, %v1335
      %v1337 = vlaneseq
      %v1338 = vshrl.u32 %v1337, 7
      %v1339 = vsub.s32 2, %v1338
      %v1340 = vrot.slane %v1280, %v1339
      %v1341 = vlaneseq
      %v1342 = vshrl.u32 %v1341, 7
      %v1343 = vsub.s32 4, %v1342
      %v1344 = vrot.slane %v1280, %v1343
      %v1345 = vlaneseq
      %v1346 = vshrl.u32 %v1345, 7
      %v1347 = vsub.s32 6, %v1346
      %v1348 = vrot.slane %v1280, %v1347
      %v1353 = vlaneseq
      %v1354 = vshrl.u32 %v1353, 7
      %v1355 = vsub.s32 0, %v1354
      %v1356 = vrot.slane %v1336, %v1355
      %v1357 = vlaneseq
      %v1358 = vshrl.u32 %v1357, 7
      %v1359 = vsub.s32 0, %v1358
      %v1360 = vrot.slane %v1340, %v1359
      %v1361 = vlaneseq
      %v1362 = vshrl.u32 %v1361, 7
      %v1363 = vsub.s32 0, %v1362
      %v1364 = vrot.slane %v1344, %v1363
      %v1365 = vlaneseq
      %v1366 = vshrl.u32 %v1365, 7
      %v1367 = vsub.s32 0, %v1366
      %v1368 = vrot.slane %v1348, %v1367
      %v1369 = vmul.f32 %v1138, %v1356
      %v1370 = vmul.f32 %v1140, %v1360
      %v1371 = vmul.f32 %v1179, %v1364
      %v1372 = vmul.f32 %v1181, %v1368
      %v1373 = vsel %vm1322, %v1369, 0.0
      %v1374 = vsel %vm1322, %v1370, 0.0
      %v1375 = vadd.f32 %v1373, %v1374
      %v1376 = vsel %vm1322, %v1371, 0.0
      %v1377 = vadd.f32 %v1375, %v1376
      %v1378 = vsel %vm1322, %v1372, 0.0
      %v1379 = vadd.f32 %v1377, %v1378
      %1380 = vadd.xlane.f32.xlu0 %v1379
      %v1381 = vpop.xlane.xlu0 %1380
      %1382 = vxpose.xlu0.b32.start [1/16] %v1331, 128
      %1383 = vxpose.xlu0.b32.cont [2/16] 0.0, 128
      %1384 = vxpose.xlu0.b32.cont [3/16] 0.0, 128
      %1385 = vxpose.xlu0.b32.cont [4/16] 0.0, 128
      %1386 = vxpose.xlu0.b32.cont [5/16] 0.0, 128
      %1387 = vxpose.xlu0.b32.cont [6/16] 0.0, 128
      %1388 = vxpose.xlu0.b32.cont [7/16] 0.0, 128
      %1389 = vxpose.xlu0.b32.cont [8/16] 0.0, 128
      %1390 = vxpose.xlu0.b32.cont [9/16] 0.0, 128
      %1391 = vxpose.xlu0.b32.cont [10/16] 0.0, 128
      %1392 = vxpose.xlu0.b32.cont [11/16] 0.0, 128
      %1393 = vxpose.xlu0.b32.cont [12/16] 0.0, 128
      %1394 = vxpose.xlu0.b32.cont [13/16] 0.0, 128
      %1395 = vxpose.xlu0.b32.cont [14/16] 0.0, 128
      %1396 = vxpose.xlu0.b32.cont [15/16] 0.0, 128
      %1397 = vxpose.xlu0.b32.end [16/16] 0.0, 128
      %v1398 = vpop.trf.xlu0
      %v1399 = vpop.trf.xlu0
      %v1400 = vpop.trf.xlu0
      %v1401 = vpop.trf.xlu0
      %v1402 = vpop.trf.xlu0
      %v1403 = vpop.trf.xlu0
      %v1404 = vpop.trf.xlu0
      %v1405 = vpop.trf.xlu0
      %v1406 = vpop.trf.xlu0
      %v1407 = vpop.trf.xlu0
      %v1408 = vpop.trf.xlu0
      %v1409 = vpop.trf.xlu0
      %v1410 = vpop.trf.xlu0
      %v1411 = vpop.trf.xlu0
      %v1412 = vpop.trf.xlu0
      %v1413 = vpop.trf.xlu0
      %v1414 = vlaneseq
      %v1415 = vshrl.u32 %v1414, 7
      %v1416 = vsub.s32 0, %v1415
      %v1417 = vrot.slane %v1398, %v1416
      %v1418 = vadd.f32 %v1381, %v1417
      %vm1419 = vcmp.ge.f32.partialorder %v1418, 0.0
      %v1420 = vmul.f32 %v1418, 0.2
      %v1421 = vsel %vm1419, %v1418, %v1420
      %vm1422 = vcmp.gt.f32.partialorder %v1278, 0.0
      %v1423 = vsel %vm1422, %v1421, -1e+30
      %vm1424 = vcmask 9216
      %v1425 = vsel %vm1424, %v1423, -inf
      %1426 = vmax.xlane.f32.xlu0 %v1425
      %v1427 = vpop.xlane.xlu0 %1426
      %v1428 = vsub.f32 %v1423, %v1427
      %v1429 = vmul.f32 %v1428, 1.442695
      %v1430 = vpow.pop %v1429
      %v1431 = vmul.f32 %v1430, %v1278
      %v1432 = vsel %vm1424, %v1431, 0.0
      %1433 = vadd.xlane.f32.xlu0 %v1432
      %v1434 = vpop.xlane.xlu0 %1433
      %v1435 = vrcp.pop %v1434
      %v1436 = vmul.f32 %v1431, %v1435
      %v1437 = vpack.c.bf16 %v1436, %v1436
      %v1438 = vpack.c.bf16 %v1138, %v1138
      %v1439 = vpack.c.bf16 %v1140, %v1140
      %v1440 = vpack.c.bf16 %v1179, %v1179
      %v1441 = vpack.c.bf16 %v1181, %v1181
      %vm1442 = vcmask 15360
      %v1444 = vsel %vm1442, %v1437, 0
      %vm1446 = vcmask 1040384
      %v1448 = vsel %vm1446, %v1438, 0
      %v1451 = vsel %vm1446, %v1439, 0
      %v1454 = vsel %vm1446, %v1440, 0
      %v1457 = vsel %vm1446, %v1441, 0
      %1459 = vmatprep.subr.bf16.mxu0 %v1451
      %1460 = vmatpush1.bf16.msra.mxu0 %v1448
      %1461 = vmatprep.subr.bf16.mxu0 0
      %1462 = vmatpush1.bf16.msra.mxu0 0
      %1463 = vmatprep.subr.bf16.mxu0 0
      %1464 = vmatpush1.bf16.msra.mxu0 0
      %1465 = vmatprep.subr.bf16.mxu0 0
      %1466 = vmatpush1.bf16.msra.mxu0 0
      %1467 = vmatprep.subr.bf16.mxu0 0
      %1468 = vmatpush1.bf16.msra.mxu0 0
      %1469 = vmatprep.subr.bf16.mxu0 0
      %1470 = vmatpush1.bf16.msra.mxu0 0
      %1471 = vmatprep.subr.bf16.mxu0 0
      %1472 = vmatpush1.bf16.msra.mxu0 0
      %1473 = vmatprep.subr.bf16.mxu0 0
      %1474 = vmatpush1.bf16.msra.mxu0 0
      %1475 = vmatprep.subr.bf16.mxu0 0
      %1476 = vmatpush1.bf16.msra.mxu0 0
      %1477 = vmatprep.subr.bf16.mxu0 0
      %1478 = vmatpush1.bf16.msra.mxu0 0
      %1479 = vmatprep.subr.bf16.mxu0 0
      %1480 = vmatpush1.bf16.msra.mxu0 0
      %1481 = vmatprep.subr.bf16.mxu0 0
      %1482 = vmatpush1.bf16.msra.mxu0 0
      %1483 = vmatprep.subr.bf16.mxu0 0
      %1484 = vmatpush1.bf16.msra.mxu0 0
      %1485 = vmatprep.subr.bf16.mxu0 0
      %1486 = vmatpush1.bf16.msra.mxu0 0
      %1487 = vmatprep.subr.bf16.mxu0 0
      %1488 = vmatpush1.bf16.msra.mxu0 0
      %1489 = vmatprep.subr.bf16.mxu0 0
      %1490 = vmatpush1.bf16.msra.mxu0 0
      %1491 = vmatprep.mubr.bf16.mxu0 0
      %1492 = vmatmul.mubr.bf16.gmra.mrb[0].mxu0 %v1444
      %v1493 = vpop.f32.mrb[0].mxu0
      %v1494 = vadd.f32 0.0, %v1493
      %v1495 = vpop.f32.mrb[0].mxu0
      %v1496 = vadd.f32 0.0, %v1495
      %v1497 = vpop.f32.mrb[0].mxu0
      %v1498 = vpop.f32.mrb[0].mxu0
      %1499 = vdwg.mxu0
      %1500 = vmatprep.subr.bf16.mxu0 %v1457
      %1501 = vmatpush1.bf16.msra.mxu0 %v1454
      %1502 = vmatprep.subr.bf16.mxu0 0
      %1503 = vmatpush1.bf16.msra.mxu0 0
      %1504 = vmatprep.subr.bf16.mxu0 0
      %1505 = vmatpush1.bf16.msra.mxu0 0
      %1506 = vmatprep.subr.bf16.mxu0 0
      %1507 = vmatpush1.bf16.msra.mxu0 0
      %1508 = vmatprep.subr.bf16.mxu0 0
      %1509 = vmatpush1.bf16.msra.mxu0 0
      %1510 = vmatprep.subr.bf16.mxu0 0
      %1511 = vmatpush1.bf16.msra.mxu0 0
      %1512 = vmatprep.subr.bf16.mxu0 0
      %1513 = vmatpush1.bf16.msra.mxu0 0
      %1514 = vmatprep.subr.bf16.mxu0 0
      %1515 = vmatpush1.bf16.msra.mxu0 0
      %1516 = vmatprep.subr.bf16.mxu0 0
      %1517 = vmatpush1.bf16.msra.mxu0 0
      %1518 = vmatprep.subr.bf16.mxu0 0
      %1519 = vmatpush1.bf16.msra.mxu0 0
      %1520 = vmatprep.subr.bf16.mxu0 0
      %1521 = vmatpush1.bf16.msra.mxu0 0
      %1522 = vmatprep.subr.bf16.mxu0 0
      %1523 = vmatpush1.bf16.msra.mxu0 0
      %1524 = vmatprep.subr.bf16.mxu0 0
      %1525 = vmatpush1.bf16.msra.mxu0 0
      %1526 = vmatprep.subr.bf16.mxu0 0
      %1527 = vmatpush1.bf16.msra.mxu0 0
      %1528 = vmatprep.subr.bf16.mxu0 0
      %1529 = vmatpush1.bf16.msra.mxu0 0
      %1530 = vmatprep.subr.bf16.mxu0 0
      %1531 = vmatpush1.bf16.msra.mxu0 0
      %1532 = vmatprep.mubr.bf16.mxu0 0
      %1533 = vmatmul.mubr.bf16.gmra.mrb[0].mxu0 %v1444
      %v1534 = vpop.f32.mrb[0].mxu0
      %v1535 = vadd.f32 0.0, %v1534
      %v1536 = vpop.f32.mrb[0].mxu0
      %v1537 = vadd.f32 0.0, %v1536
      %v1538 = vpop.f32.mrb[0].mxu0
      %v1539 = vpop.f32.mrb[0].mxu0
      %1540 = vdwg.mxu0
      %v1545 = vcombine.low %v1494, %v1496
      %v1546 = vcombine.low %v1535, %v1537
      %v1548 = vunpack.c.l.s4 1983009808
      %v1549 = vunpack.c.0.s8 %v1548
      %v1550 = vlaneseq
      %v1551 = vshrl.u32 %v1550, 7
      %v1552 = vsub.s32 %v1549, %v1551
      %v1553 = vrot.slane %v1545, %v1552
      %v1555 = vunpack.c.l.s4 1983009808
      %v1556 = vunpack.c.0.s8 %v1555
      %v1557 = vlaneseq
      %v1558 = vshrl.u32 %v1557, 7
      %v1559 = vsub.s32 %v1556, %v1558
      %v1560 = vrot.slane %v1546, %v1559
      %v1561 = vcombine.low %v1553, %v1560
      %1563 = vst [vmem:[#allocation2] sm:$0xff] %v1561
      %v1564 = vlaneseq
      %v1565 = vshrl.u32 %v1564, 7
      %v1566 = vsub.s32 1, %v1565
      %v1567 = vrot.slane %v1279, %v1566
      %v1568 = vlaneseq
      %v1569 = vshrl.u32 %v1568, 7
      %v1570 = vsub.s32 3, %v1569
      %v1571 = vrot.slane %v1279, %v1570
      %v1572 = vlaneseq
      %v1573 = vshrl.u32 %v1572, 7
      %v1574 = vsub.s32 5, %v1573
      %v1575 = vrot.slane %v1279, %v1574
      %v1576 = vlaneseq
      %v1577 = vshrl.u32 %v1576, 7
      %v1578 = vsub.s32 7, %v1577
      %v1579 = vrot.slane %v1279, %v1578
      %v1584 = vlaneseq
      %v1585 = vshrl.u32 %v1584, 7
      %v1586 = vsub.s32 1, %v1585
      %v1587 = vrot.slane %v1567, %v1586
      %v1588 = vlaneseq
      %v1589 = vshrl.u32 %v1588, 7
      %v1590 = vsub.s32 1, %v1589
      %v1591 = vrot.slane %v1571, %v1590
      %v1592 = vlaneseq
      %v1593 = vshrl.u32 %v1592, 7
      %v1594 = vsub.s32 1, %v1593
      %v1595 = vrot.slane %v1575, %v1594
      %v1596 = vlaneseq
      %v1597 = vshrl.u32 %v1596, 7
      %v1598 = vsub.s32 1, %v1597
      %v1599 = vrot.slane %v1579, %v1598
      %v1600 = vmul.f32 %v1220, %v1587
      %v1601 = vmul.f32 %v1222, %v1591
      %v1602 = vmul.f32 %v1261, %v1595
      %v1603 = vmul.f32 %v1263, %v1599
      %v1604 = vsel %vm1322, %v1600, 0.0
      %v1605 = vsel %vm1322, %v1601, 0.0
      %v1606 = vadd.f32 %v1604, %v1605
      %v1607 = vsel %vm1322, %v1602, 0.0
      %v1608 = vadd.f32 %v1606, %v1607
      %v1609 = vsel %vm1322, %v1603, 0.0
      %v1610 = vadd.f32 %v1608, %v1609
      %1611 = vadd.xlane.f32.xlu0 %v1610
      %v1612 = vpop.xlane.xlu0 %1611
      %v1613 = vlaneseq
      %v1614 = vshrl.u32 %v1613, 7
      %v1615 = vsub.s32 1, %v1614
      %v1616 = vrot.slane %v1280, %v1615
      %v1617 = vlaneseq
      %v1618 = vshrl.u32 %v1617, 7
      %v1619 = vsub.s32 3, %v1618
      %v1620 = vrot.slane %v1280, %v1619
      %v1621 = vlaneseq
      %v1622 = vshrl.u32 %v1621, 7
      %v1623 = vsub.s32 5, %v1622
      %v1624 = vrot.slane %v1280, %v1623
      %v1625 = vlaneseq
      %v1626 = vshrl.u32 %v1625, 7
      %v1627 = vsub.s32 7, %v1626
      %v1628 = vrot.slane %v1280, %v1627
      %v1633 = vlaneseq
      %v1634 = vshrl.u32 %v1633, 7
      %v1635 = vsub.s32 1, %v1634
      %v1636 = vrot.slane %v1616, %v1635
      %v1637 = vlaneseq
      %v1638 = vshrl.u32 %v1637, 7
      %v1639 = vsub.s32 1, %v1638
      %v1640 = vrot.slane %v1620, %v1639
      %v1641 = vlaneseq
      %v1642 = vshrl.u32 %v1641, 7
      %v1643 = vsub.s32 1, %v1642
      %v1644 = vrot.slane %v1624, %v1643
      %v1645 = vlaneseq
      %v1646 = vshrl.u32 %v1645, 7
      %v1647 = vsub.s32 1, %v1646
      %v1648 = vrot.slane %v1628, %v1647
      %v1649 = vmul.f32 %v1220, %v1636
      %v1650 = vmul.f32 %v1222, %v1640
      %v1651 = vmul.f32 %v1261, %v1644
      %v1652 = vmul.f32 %v1263, %v1648
      %v1653 = vsel %vm1322, %v1649, 0.0
      %v1654 = vsel %vm1322, %v1650, 0.0
      %v1655 = vadd.f32 %v1653, %v1654
      %v1656 = vsel %vm1322, %v1651, 0.0
      %v1657 = vadd.f32 %v1655, %v1656
      %v1658 = vsel %vm1322, %v1652, 0.0
      %v1659 = vadd.f32 %v1657, %v1658
      %1660 = vadd.xlane.f32.xlu0 %v1659
      %v1661 = vpop.xlane.xlu0 %1660
      %1662 = vxpose.xlu0.b32.start [1/16] %v1612, 128
      %1663 = vxpose.xlu0.b32.cont [2/16] 0.0, 128
      %1664 = vxpose.xlu0.b32.cont [3/16] 0.0, 128
      %1665 = vxpose.xlu0.b32.cont [4/16] 0.0, 128
      %1666 = vxpose.xlu0.b32.cont [5/16] 0.0, 128
      %1667 = vxpose.xlu0.b32.cont [6/16] 0.0, 128
      %1668 = vxpose.xlu0.b32.cont [7/16] 0.0, 128
      %1669 = vxpose.xlu0.b32.cont [8/16] 0.0, 128
      %1670 = vxpose.xlu0.b32.cont [9/16] 0.0, 128
      %1671 = vxpose.xlu0.b32.cont [10/16] 0.0, 128
      %1672 = vxpose.xlu0.b32.cont [11/16] 0.0, 128
      %1673 = vxpose.xlu0.b32.cont [12/16] 0.0, 128
      %1674 = vxpose.xlu0.b32.cont [13/16] 0.0, 128
      %1675 = vxpose.xlu0.b32.cont [14/16] 0.0, 128
      %1676 = vxpose.xlu0.b32.cont [15/16] 0.0, 128
      %1677 = vxpose.xlu0.b32.end [16/16] 0.0, 128
      %v1678 = vpop.trf.xlu0
      %v1679 = vpop.trf.xlu0
      %v1680 = vpop.trf.xlu0
      %v1681 = vpop.trf.xlu0
      %v1682 = vpop.trf.xlu0
      %v1683 = vpop.trf.xlu0
      %v1684 = vpop.trf.xlu0
      %v1685 = vpop.trf.xlu0
      %v1686 = vpop.trf.xlu0
      %v1687 = vpop.trf.xlu0
      %v1688 = vpop.trf.xlu0
      %v1689 = vpop.trf.xlu0
      %v1690 = vpop.trf.xlu0
      %v1691 = vpop.trf.xlu0
      %v1692 = vpop.trf.xlu0
      %v1693 = vpop.trf.xlu0
      %v1694 = vlaneseq
      %v1695 = vshrl.u32 %v1694, 7
      %v1696 = vsub.s32 0, %v1695
      %v1697 = vrot.slane %v1678, %v1696
      %v1698 = vadd.f32 %v1661, %v1697
      %vm1699 = vcmp.ge.f32.partialorder %v1698, 0.0
      %v1700 = vmul.f32 %v1698, 0.2
      %v1701 = vsel %vm1699, %v1698, %v1700
      %v1702 = vsel %vm1422, %v1701, -1e+30
      %v1703 = vsel %vm1424, %v1702, -inf
      %1704 = vmax.xlane.f32.xlu0 %v1703
      %v1705 = vpop.xlane.xlu0 %1704
      %v1706 = vsub.f32 %v1702, %v1705
      %v1707 = vmul.f32 %v1706, 1.442695
      %v1708 = vpow.pop %v1707
      %v1709 = vmul.f32 %v1708, %v1278
      %v1710 = vsel %vm1424, %v1709, 0.0
      %1711 = vadd.xlane.f32.xlu0 %v1710
      %v1712 = vpop.xlane.xlu0 %1711
      %v1713 = vrcp.pop %v1712
      %v1714 = vmul.f32 %v1709, %v1713
      %v1715 = vpack.c.bf16 %v1714, %v1714
      %v1716 = vpack.c.bf16 %v1220, %v1220
      %v1717 = vpack.c.bf16 %v1222, %v1222
      %v1718 = vpack.c.bf16 %v1261, %v1261
      %v1719 = vpack.c.bf16 %v1263, %v1263
      %v1721 = vsel %vm1442, %v1715, 0
      %v1724 = vsel %vm1446, %v1716, 0
      %v1727 = vsel %vm1446, %v1717, 0
      %v1730 = vsel %vm1446, %v1718, 0
      %v1733 = vsel %vm1446, %v1719, 0
      %1735 = vmatprep.subr.bf16.mxu0 %v1727
      %1736 = vmatpush1.bf16.msra.mxu0 %v1724
      %1737 = vmatprep.subr.bf16.mxu0 0
      %1738 = vmatpush1.bf16.msra.mxu0 0
      %1739 = vmatprep.subr.bf16.mxu0 0
      %1740 = vmatpush1.bf16.msra.mxu0 0
      %1741 = vmatprep.subr.bf16.mxu0 0
      %1742 = vmatpush1.bf16.msra.mxu0 0
      %1743 = vmatprep.subr.bf16.mxu0 0
      %1744 = vmatpush1.bf16.msra.mxu0 0
      %1745 = vmatprep.subr.bf16.mxu0 0
      %1746 = vmatpush1.bf16.msra.mxu0 0
      %1747 = vmatprep.subr.bf16.mxu0 0
      %1748 = vmatpush1.bf16.msra.mxu0 0
      %1749 = vmatprep.subr.bf16.mxu0 0
      %1750 = vmatpush1.bf16.msra.mxu0 0
      %1751 = vmatprep.subr.bf16.mxu0 0
      %1752 = vmatpush1.bf16.msra.mxu0 0
      %1753 = vmatprep.subr.bf16.mxu0 0
      %1754 = vmatpush1.bf16.msra.mxu0 0
      %1755 = vmatprep.subr.bf16.mxu0 0
      %1756 = vmatpush1.bf16.msra.mxu0 0
      %1757 = vmatprep.subr.bf16.mxu0 0
      %1758 = vmatpush1.bf16.msra.mxu0 0
      %1759 = vmatprep.subr.bf16.mxu0 0
      %1760 = vmatpush1.bf16.msra.mxu0 0
      %1761 = vmatprep.subr.bf16.mxu0 0
      %1762 = vmatpush1.bf16.msra.mxu0 0
      %1763 = vmatprep.subr.bf16.mxu0 0
      %1764 = vmatpush1.bf16.msra.mxu0 0
      %1765 = vmatprep.subr.bf16.mxu0 0
      %1766 = vmatpush1.bf16.msra.mxu0 0
      %1767 = vmatprep.mubr.bf16.mxu0 0
      %1768 = vmatmul.mubr.bf16.gmra.mrb[0].mxu0 %v1721
      %v1769 = vpop.f32.mrb[0].mxu0
      %v1770 = vadd.f32 0.0, %v1769
      %v1771 = vpop.f32.mrb[0].mxu0
      %v1772 = vadd.f32 0.0, %v1771
      %v1773 = vpop.f32.mrb[0].mxu0
      %v1774 = vpop.f32.mrb[0].mxu0
      %1775 = vdwg.mxu0
      %1776 = vmatprep.subr.bf16.mxu0 %v1733
      %1777 = vmatpush1.bf16.msra.mxu0 %v1730
      %1778 = vmatprep.subr.bf16.mxu0 0
      %1779 = vmatpush1.bf16.msra.mxu0 0
      %1780 = vmatprep.subr.bf16.mxu0 0
      %1781 = vmatpush1.bf16.msra.mxu0 0
      %1782 = vmatprep.subr.bf16.mxu0 0
      %1783 = vmatpush1.bf16.msra.mxu0 0
      %1784 = vmatprep.subr.bf16.mxu0 0
      %1785 = vmatpush1.bf16.msra.mxu0 0
      %1786 = vmatprep.subr.bf16.mxu0 0
      %1787 = vmatpush1.bf16.msra.mxu0 0
      %1788 = vmatprep.subr.bf16.mxu0 0
      %1789 = vmatpush1.bf16.msra.mxu0 0
      %1790 = vmatprep.subr.bf16.mxu0 0
      %1791 = vmatpush1.bf16.msra.mxu0 0
      %1792 = vmatprep.subr.bf16.mxu0 0
      %1793 = vmatpush1.bf16.msra.mxu0 0
      %1794 = vmatprep.subr.bf16.mxu0 0
      %1795 = vmatpush1.bf16.msra.mxu0 0
      %1796 = vmatprep.subr.bf16.mxu0 0
      %1797 = vmatpush1.bf16.msra.mxu0 0
      %1798 = vmatprep.subr.bf16.mxu0 0
      %1799 = vmatpush1.bf16.msra.mxu0 0
      %1800 = vmatprep.subr.bf16.mxu0 0
      %1801 = vmatpush1.bf16.msra.mxu0 0
      %1802 = vmatprep.subr.bf16.mxu0 0
      %1803 = vmatpush1.bf16.msra.mxu0 0
      %1804 = vmatprep.subr.bf16.mxu0 0
      %1805 = vmatpush1.bf16.msra.mxu0 0
      %1806 = vmatprep.subr.bf16.mxu0 0
      %1807 = vmatpush1.bf16.msra.mxu0 0
      %1808 = vmatprep.mubr.bf16.mxu0 0
      %1809 = vmatmul.mubr.bf16.gmra.mrb[0].mxu0 %v1721
      %v1810 = vpop.f32.mrb[0].mxu0
      %v1811 = vadd.f32 0.0, %v1810
      %v1812 = vpop.f32.mrb[0].mxu0
      %v1813 = vadd.f32 0.0, %v1812
      %v1814 = vpop.f32.mrb[0].mxu0
      %v1815 = vpop.f32.mrb[0].mxu0
      %1816 = vdwg.mxu0
      %v1817 = vld [vmem:[#allocation2] sm:$0xff]
      %v1822 = vcombine.low %v1770, %v1772
      %v1823 = vcombine.low %v1811, %v1813
      %v1825 = vunpack.c.l.s4 1983009808
      %v1826 = vunpack.c.0.s8 %v1825
      %v1827 = vlaneseq
      %v1828 = vshrl.u32 %v1827, 7
      %v1829 = vsub.s32 %v1826, %v1828
      %v1830 = vrot.slane %v1822, %v1829
      %v1832 = vunpack.c.l.s4 1983009808
      %v1833 = vunpack.c.0.s8 %v1832
      %v1834 = vlaneseq
      %v1835 = vshrl.u32 %v1834, 7
      %v1836 = vsub.s32 %v1833, %v1835
      %v1837 = vrot.slane %v1823, %v1836
      %v1838 = vcombine.low %v1830, %v1837
      %v1840 = vadd.f32 %v1817, %v1838
      %1841 = vst [vmem:[#allocation2] sm:$0xff] %v1840
      %v1842 = vld [vmem:[#allocation2] sm:$0xff]
      %v1843 = vmul.f32 %v1842, 0.5
      %v1844 = vld [vmem:[%s5] sm:$0xf]
      %v1846 = vlaneseq
      %v1847 = vshrl.u32 %v1846, 7
      %v1848 = vsub.s32 0, %v1847
      %v1849 = vrot.slane %v1844, %v1848
      %v1850 = vlaneseq
      %v1851 = vshrl.u32 %v1850, 7
      %v1852 = vsub.s32 1, %v1851
      %v1853 = vrot.slane %v1844, %v1852
      %v1854 = vlaneseq
      %v1855 = vshrl.u32 %v1854, 7
      %v1856 = vsub.s32 2, %v1855
      %v1857 = vrot.slane %v1844, %v1856
      %v1858 = vlaneseq
      %v1859 = vshrl.u32 %v1858, 7
      %v1860 = vsub.s32 3, %v1859
      %v1861 = vrot.slane %v1844, %v1860
      %v1862 = vcombine.low %v1849, %v1853
      %v1863 = vcombine.low %v1857, %v1861
      %v1865 = vunpack.c.l.s4 1983009808
      %v1866 = vunpack.c.0.s8 %v1865
      %v1867 = vlaneseq
      %v1868 = vshrl.u32 %v1867, 7
      %v1869 = vsub.s32 %v1866, %v1868
      %v1870 = vrot.slane %v1862, %v1869
      %v1872 = vunpack.c.l.s4 1983009808
      %v1873 = vunpack.c.0.s8 %v1872
      %v1874 = vlaneseq
      %v1875 = vshrl.u32 %v1874, 7
      %v1876 = vsub.s32 %v1873, %v1875
      %v1877 = vrot.slane %v1863, %v1876
      %v1878 = vcombine.low %v1870, %v1877
      %v1880 = vadd.f32 %v1843, %v1878
      %vm1881 = vcmp.gt.f32.partialorder %v1880, 0.0
      %v1882 = vmin.f32 %v1880, 0.0
      %v1883 = vmul.f32 %v1882, 1.442695
      %v1884 = vpow.pop %v1883
      %v1885 = vsub.f32 %v1884, 1.0
      %v1886 = vsel %vm1881, %v1880, %v1885
      %v1888 = vcombine.high %v1886, %v1886
      %v1890 = vunpack.c.l.s4 1983009808
      %v1891 = vunpack.c.0.s8 %v1890
      %v1892 = vlaneseq
      %v1893 = vshrl.u32 %v1892, 7
      %v1894 = vsub.s32 %v1891, %v1893
      %v1895 = vrot.slane %v1886, %v1894
      %v1897 = vunpack.c.l.s4 1983009808
      %v1898 = vunpack.c.0.s8 %v1897
      %v1899 = vlaneseq
      %v1900 = vshrl.u32 %v1899, 7
      %v1901 = vsub.s32 %v1898, %v1900
      %v1902 = vrot.slane %v1888, %v1901
      %v1903 = vcombine.high %v1895, %v1895
      %v1904 = vcombine.high %v1902, %v1902
      %v1909 = vsel %vm1322, %v1895, 0.0
      %v1910 = vrot.slane %v1909, 4
      %v1911 = vadd.f32 %v1909, %v1910
      %v1912 = vrot.slane %v1911, 2
      %v1913 = vadd.f32 %v1911, %v1912
      %v1914 = vrot.slane %v1913, 1
      %v1915 = vadd.f32 %v1913, %v1914
      %v1916 = vsel %vm1322, %v1903, 0.0
      %v1917 = vrot.slane %v1916, 4
      %v1918 = vadd.f32 %v1916, %v1917
      %v1919 = vrot.slane %v1918, 2
      %v1920 = vadd.f32 %v1918, %v1919
      %v1921 = vrot.slane %v1920, 1
      %v1922 = vadd.f32 %v1920, %v1921
      %v1923 = vsel %vm1322, %v1902, 0.0
      %v1924 = vrot.slane %v1923, 4
      %v1925 = vadd.f32 %v1923, %v1924
      %v1926 = vrot.slane %v1925, 2
      %v1927 = vadd.f32 %v1925, %v1926
      %v1928 = vrot.slane %v1927, 1
      %v1929 = vadd.f32 %v1927, %v1928
      %v1930 = vsel %vm1322, %v1904, 0.0
      %v1931 = vrot.slane %v1930, 4
      %v1932 = vadd.f32 %v1930, %v1931
      %v1933 = vrot.slane %v1932, 2
      %v1934 = vadd.f32 %v1932, %v1933
      %v1935 = vrot.slane %v1934, 1
      %v1936 = vadd.f32 %v1934, %v1935
      %v1937 = vrcp.pop 2.0
      %v1938 = vmul.f32 %v1915, %v1937
      %v1939 = vmul.f32 %v1922, %v1937
      %v1940 = vmul.f32 %v1929, %v1937
      %v1941 = vmul.f32 %v1936, %v1937
      %v1946 = vcombine.low %v1938, %v1939
      %v1947 = vcombine.low %v1940, %v1941
      %v1949 = vunpack.c.l.s4 1983009808
      %v1950 = vunpack.c.0.s8 %v1949
      %v1951 = vlaneseq
      %v1952 = vshrl.u32 %v1951, 7
      %v1953 = vsub.s32 %v1950, %v1952
      %v1954 = vrot.slane %v1946, %v1953
      %v1956 = vunpack.c.l.s4 1983009808
      %v1957 = vunpack.c.0.s8 %v1956
      %v1958 = vlaneseq
      %v1959 = vshrl.u32 %v1958, 7
      %v1960 = vsub.s32 %v1957, %v1959
      %v1961 = vrot.slane %v1947, %v1960
      %v1962 = vcombine.low %v1954, %v1961
      %v1964 = vsub.f32 %v1886, %v1962
      %v1965 = vmul.f32 %v1964, %v1964
      %v1967 = vcombine.high %v1965, %v1965
      %v1969 = vunpack.c.l.s4 1983009808
      %v1970 = vunpack.c.0.s8 %v1969
      %v1971 = vlaneseq
      %v1972 = vshrl.u32 %v1971, 7
      %v1973 = vsub.s32 %v1970, %v1972
      %v1974 = vrot.slane %v1965, %v1973
      %v1976 = vunpack.c.l.s4 1983009808
      %v1977 = vunpack.c.0.s8 %v1976
      %v1978 = vlaneseq
      %v1979 = vshrl.u32 %v1978, 7
      %v1980 = vsub.s32 %v1977, %v1979
      %v1981 = vrot.slane %v1967, %v1980
      %v1982 = vcombine.high %v1974, %v1974
      %v1983 = vcombine.high %v1981, %v1981
      %v1988 = vsel %vm1322, %v1974, 0.0
      %v1989 = vrot.slane %v1988, 4
      %v1990 = vadd.f32 %v1988, %v1989
      %v1991 = vrot.slane %v1990, 2
      %v1992 = vadd.f32 %v1990, %v1991
      %v1993 = vrot.slane %v1992, 1
      %v1994 = vadd.f32 %v1992, %v1993
      %v1995 = vsel %vm1322, %v1982, 0.0
      %v1996 = vrot.slane %v1995, 4
      %v1997 = vadd.f32 %v1995, %v1996
      %v1998 = vrot.slane %v1997, 2
      %v1999 = vadd.f32 %v1997, %v1998
      %v2000 = vrot.slane %v1999, 1
      %v2001 = vadd.f32 %v1999, %v2000
      %v2002 = vsel %vm1322, %v1981, 0.0
      %v2003 = vrot.slane %v2002, 4
      %v2004 = vadd.f32 %v2002, %v2003
      %v2005 = vrot.slane %v2004, 2
      %v2006 = vadd.f32 %v2004, %v2005
      %v2007 = vrot.slane %v2006, 1
      %v2008 = vadd.f32 %v2006, %v2007
      %v2009 = vsel %vm1322, %v1983, 0.0
      %v2010 = vrot.slane %v2009, 4
      %v2011 = vadd.f32 %v2009, %v2010
      %v2012 = vrot.slane %v2011, 2
      %v2013 = vadd.f32 %v2011, %v2012
      %v2014 = vrot.slane %v2013, 1
      %v2015 = vadd.f32 %v2013, %v2014
      %v2016 = vmul.f32 %v1994, %v1937
      %v2017 = vmul.f32 %v2001, %v1937
      %v2018 = vmul.f32 %v2008, %v1937
      %v2019 = vmul.f32 %v2015, %v1937
      %v2020 = vadd.f32 %v2016, 1e-05
      %v2021 = vadd.f32 %v2017, 1e-05
      %v2022 = vadd.f32 %v2018, 1e-05
      %v2023 = vadd.f32 %v2019, 1e-05
      %v2024 = vrsqrt.pop %v2020
      %v2025 = vrsqrt.pop %v2021
      %v2026 = vrsqrt.pop %v2022
      %v2027 = vrsqrt.pop %v2023
      %v2032 = vcombine.low %v2024, %v2025
      %v2033 = vcombine.low %v2026, %v2027
      %v2035 = vunpack.c.l.s4 1983009808
      %v2036 = vunpack.c.0.s8 %v2035
      %v2037 = vlaneseq
      %v2038 = vshrl.u32 %v2037, 7
      %v2039 = vsub.s32 %v2036, %v2038
      %v2040 = vrot.slane %v2032, %v2039
      %v2042 = vunpack.c.l.s4 1983009808
      %v2043 = vunpack.c.0.s8 %v2042
      %v2044 = vlaneseq
      %v2045 = vshrl.u32 %v2044, 7
      %v2046 = vsub.s32 %v2043, %v2045
      %v2047 = vrot.slane %v2033, %v2046
      %v2048 = vcombine.low %v2040, %v2047
      %v2050 = vmul.f32 %v1964, %v2048
      %v2051 = vld [vmem:[%s6] sm:$0xf]
      %v2053 = vlaneseq
      %v2054 = vshrl.u32 %v2053, 7
      %v2055 = vsub.s32 0, %v2054
      %v2056 = vrot.slane %v2051, %v2055
      %v2057 = vlaneseq
      %v2058 = vshrl.u32 %v2057, 7
      %v2059 = vsub.s32 1, %v2058
      %v2060 = vrot.slane %v2051, %v2059
      %v2061 = vlaneseq
      %v2062 = vshrl.u32 %v2061, 7
      %v2063 = vsub.s32 2, %v2062
      %v2064 = vrot.slane %v2051, %v2063
      %v2065 = vlaneseq
      %v2066 = vshrl.u32 %v2065, 7
      %v2067 = vsub.s32 3, %v2066
      %v2068 = vrot.slane %v2051, %v2067
      %v2069 = vcombine.low %v2056, %v2060
      %v2070 = vcombine.low %v2064, %v2068
      %v2072 = vunpack.c.l.s4 1983009808
      %v2073 = vunpack.c.0.s8 %v2072
      %v2074 = vlaneseq
      %v2075 = vshrl.u32 %v2074, 7
      %v2076 = vsub.s32 %v2073, %v2075
      %v2077 = vrot.slane %v2069, %v2076
      %v2079 = vunpack.c.l.s4 1983009808
      %v2080 = vunpack.c.0.s8 %v2079
      %v2081 = vlaneseq
      %v2082 = vshrl.u32 %v2081, 7
      %v2083 = vsub.s32 %v2080, %v2082
      %v2084 = vrot.slane %v2070, %v2083
      %v2085 = vcombine.low %v2077, %v2084
      %v2087 = vmul.f32 %v2050, %v2085
      %v2088 = vld [vmem:[%s7] sm:$0xf]
      %v2090 = vlaneseq
      %v2091 = vshrl.u32 %v2090, 7
      %v2092 = vsub.s32 0, %v2091
      %v2093 = vrot.slane %v2088, %v2092
      %v2094 = vlaneseq
      %v2095 = vshrl.u32 %v2094, 7
      %v2096 = vsub.s32 1, %v2095
      %v2097 = vrot.slane %v2088, %v2096
      %v2098 = vlaneseq
      %v2099 = vshrl.u32 %v2098, 7
      %v2100 = vsub.s32 2, %v2099
      %v2101 = vrot.slane %v2088, %v2100
      %v2102 = vlaneseq
      %v2103 = vshrl.u32 %v2102, 7
      %v2104 = vsub.s32 3, %v2103
      %v2105 = vrot.slane %v2088, %v2104
      %v2106 = vcombine.low %v2093, %v2097
      %v2107 = vcombine.low %v2101, %v2105
      %v2109 = vunpack.c.l.s4 1983009808
      %v2110 = vunpack.c.0.s8 %v2109
      %v2111 = vlaneseq
      %v2112 = vshrl.u32 %v2111, 7
      %v2113 = vsub.s32 %v2110, %v2112
      %v2114 = vrot.slane %v2106, %v2113
      %v2116 = vunpack.c.l.s4 1983009808
      %v2117 = vunpack.c.0.s8 %v2116
      %v2118 = vlaneseq
      %v2119 = vshrl.u32 %v2118, 7
      %v2120 = vsub.s32 %v2117, %v2119
      %v2121 = vrot.slane %v2107, %v2120
      %v2122 = vcombine.low %v2114, %v2121
      %v2124 = vadd.f32 %v2087, %v2122
      %2125 = vst [vmem:[%s319] sm:$0xff] %v2124
      %p2126 = scmp.lt.s32.totalorder %s19, 1
      %s2127 = scalar_select %p2126, %s19, 1
      %s2128 = smul.addr %s2127, 4
      %s2129 = smul.addr %s2128, 2
      %s2130 = scalar_lea.vmem %s8, %s2129
      // Predicated region
      $region53: #{poolnet_forward.6} parent=51 // pred_check
        %p2131 = pneg %p215
      $region54: #{poolnet_forward.6} parent=51 // pred_check_branch
        %2133 = sbr.rel (%p2131) target = $region56
      $region55: #{poolnet_forward.6} parent=51 // pred_region
        _
      $region56: #{poolnet_forward.6} parent=51 // pred_fallthru
        _
    $region52: #{poolnet_forward.6} parent=5 // pred_fallthru
      _
    %p2134 = scmp.le.s32.totalorder 2, %s14
    // Predicated region
    $region57: #{poolnet_forward.6} parent=5 // pred_check
      %p2135 = pneg %p2134
    $region58: #{poolnet_forward.6} parent=5 // pred_check_branch
      %2137 = sbr.rel (%p2135) target = $region60
    $region59: #{poolnet_forward.6} parent=5 // pred_region
      %s2138 = ssub.s32 %s14, 2
      // Predicated region
      $region61: #{poolnet_forward.6} parent=59 // pred_check
        %p2139 = pneg %p221
      $region62: #{poolnet_forward.6} parent=59 // pred_check_branch
        %2141 = sbr.rel (%p2139) target = $region64
      $region63: #{poolnet_forward.6} parent=59 // pred_region
        %p2142 = scmp.lt.s32.totalorder %s20, 1
        %s2143 = scalar_select %p2142, %s20, 1
        %s2144 = smul.addr %s2143, 4
        %s2145 = smul.addr %s2144, 2
        %s2146 = scalar_lea.vmem %s8, %s2145
      $region64: #{poolnet_forward.6} parent=59 // pred_fallthru
        _
    $region60: #{poolnet_forward.6} parent=5 // pred_fallthru
      _
  $region6: #{poolnet_forward.6} parent=0 // loop_footer
    %s18 = sadd.s32 1, %s14
  $region7: #{poolnet_forward.6} parent=0 // loop_footer_branch
    %13 = sbr.rel target = $region3
  $region8: #{poolnet_forward.6} parent=0 // loop_exit
    _

// kernel: poolnet_forward.7
$region0: #{poolnet_forward.7}
  #allocation0 [shape = 'u32[]', space=smem, size = 0x4, offset = 0x4, fixed_abs, tag = 'smem constant byte address 0x4 - core index']
  #allocation1 [shape = 'u32[144,128]{1,0:T(1,128)}', space=vmem, size = 0x12000, scoped, tag = 'internal scratch']
  #allocation2 [shape = 'f32[2,512]{1,0:T(2,128)}', space=vmem, size = 0x1000, scoped, tag = 'scratch operand']
  #allocation3 [shape = 'f32[1,1]{1,0:T(1,128)S(1)}', space=vmem, size = 0x200, scoped, tag = 'scoped memory for poolnet_forward.7']
  %s0 = inlined_call_operand.vmem [shape: f32[2,2,512], index: 0, kind: input, shape index: {}]
  %s1 = inlined_call_operand.vmem [shape: bf16[512,256], index: 1, kind: input, shape index: {}]
  %s2 = inlined_call_operand.vmem [shape: f32[1,256], index: 2, kind: input, shape index: {}]
  %s3 = inlined_call_operand.vmem [shape: bf16[256,128], index: 3, kind: input, shape index: {}]
  %s4 = inlined_call_operand.vmem [shape: f32[1,128], index: 4, kind: input, shape index: {}]
  %s5 = inlined_call_operand.vmem [shape: f32[1,128], index: 5, kind: input, shape index: {}]
  %s6 = inlined_call_operand.<no memory space> [shape: f32[1,1], index: 6, kind: input, shape index: {}]
  %s7 = inlined_call_operand.vmem [shape: bf16[512,512], index: 7, kind: input, shape index: {}]
  %s8 = inlined_call_operand.vmem [shape: f32[1,512], index: 8, kind: input, shape index: {}]
  %s9 = inlined_call_operand.vmem [shape: bf16[512,512], index: 9, kind: input, shape index: {}]
  %s10 = inlined_call_operand.vmem [shape: f32[1,512], index: 10, kind: input, shape index: {}]
  %s11 = inlined_call_operand.vmem [shape: bf16[512,256], index: 11, kind: input, shape index: {}]
  %s12 = inlined_call_operand.vmem [shape: f32[1,256], index: 12, kind: input, shape index: {}]
  %s13 = inlined_call_operand.vmem [shape: bf16[256,10], index: 13, kind: input, shape index: {}]
  %s14 = inlined_call_operand.vmem [shape: f32[1,10], index: 14, kind: input, shape index: {}]
  %s15 = inlined_call_operand.hbm [shape: f32[2,10], index: 15, kind: output, shape index: {}]
  %s16 = sld [smem:[#allocation0]]
  $region70: #{poolnet_forward.7} parent=0
    _
  %s18 = ssub.s32 1, %s16
  %s19 = scalar_select 0, %s18, %s16
  %v20 = vstv %s6
  %21 = vst [vmem:[#allocation3] sm:$0x1] %v20
  $region1: #{poolnet_forward.7} parent=0
    #allocation4 [shape = 'u8[1024]{0}', space=vmem, size = 0x400, scoped, tag = 'output window, operand 0, single buffered']
    #allocation5 [shape = 's32[1]{0}', space=sflag, size = 0x4, scoped, tag = 'scoped memory for poolnet_forward.7']
    %22 = vsyncpa [#allocation5], 0
    // Predicated region
    $region2: #{poolnet_forward.7} parent=1 // pred_check
      _
    $region3: #{poolnet_forward.7} parent=1 // pred_check_branch
      %24 = sbr.rel (0) target = $region5
    $region4: #{poolnet_forward.7} parent=1 // pred_region
      _
    $region5: #{poolnet_forward.7} parent=1 // pred_fallthru
      _
    // Predicated region
    $region6: #{poolnet_forward.7} parent=1 // pred_check
      _
    $region7: #{poolnet_forward.7} parent=1 // pred_check_branch
      %26 = sbr.rel (0) target = $region9
    $region8: #{poolnet_forward.7} parent=1 // pred_region
      _
    $region9: #{poolnet_forward.7} parent=1 // pred_fallthru
      _
    // Predicated region
    $region10: #{poolnet_forward.7} parent=1 // pred_check
      _
    $region11: #{poolnet_forward.7} parent=1 // pred_check_branch
      %28 = sbr.rel (0) target = $region13
    $region12: #{poolnet_forward.7} parent=1 // pred_region
      _
    $region13: #{poolnet_forward.7} parent=1 // pred_fallthru
      _
    // Predicated region
    $region14: #{poolnet_forward.7} parent=1 // pred_check
      _
    $region15: #{poolnet_forward.7} parent=1 // pred_check_branch
      %30 = sbr.rel (0) target = $region17
    $region16: #{poolnet_forward.7} parent=1 // pred_region
      _
    $region17: #{poolnet_forward.7} parent=1 // pred_fallthru
      _
    // Predicated region
    $region18: #{poolnet_forward.7} parent=1 // pred_check
      _
    $region19: #{poolnet_forward.7} parent=1 // pred_check_branch
      %32 = sbr.rel (0) target = $region21
    $region20: #{poolnet_forward.7} parent=1 // pred_region
      _
    $region21: #{poolnet_forward.7} parent=1 // pred_fallthru
      _
    // Predicated region
    $region22: #{poolnet_forward.7} parent=1 // pred_check
      _
    $region23: #{poolnet_forward.7} parent=1 // pred_check_branch
      %34 = sbr.rel (0) target = $region25
    $region24: #{poolnet_forward.7} parent=1 // pred_region
      _
    $region25: #{poolnet_forward.7} parent=1 // pred_fallthru
      _
    // Predicated region
    $region26: #{poolnet_forward.7} parent=1 // pred_check
      _
    $region27: #{poolnet_forward.7} parent=1 // pred_check_branch
      %36 = sbr.rel (0) target = $region29
    $region28: #{poolnet_forward.7} parent=1 // pred_region
      _
    $region29: #{poolnet_forward.7} parent=1 // pred_fallthru
      _
    // Predicated region
    $region30: #{poolnet_forward.7} parent=1 // pred_check
      _
    $region31: #{poolnet_forward.7} parent=1 // pred_check_branch
      %38 = sbr.rel (0) target = $region33
    $region32: #{poolnet_forward.7} parent=1 // pred_region
      _
    $region33: #{poolnet_forward.7} parent=1 // pred_fallthru
      _
    // Predicated region
    $region34: #{poolnet_forward.7} parent=1 // pred_check
      _
    $region35: #{poolnet_forward.7} parent=1 // pred_check_branch
      %40 = sbr.rel (0) target = $region37
    $region36: #{poolnet_forward.7} parent=1 // pred_region
      _
    $region37: #{poolnet_forward.7} parent=1 // pred_fallthru
      _
    // Predicated region
    $region38: #{poolnet_forward.7} parent=1 // pred_check
      _
    $region39: #{poolnet_forward.7} parent=1 // pred_check_branch
      %42 = sbr.rel (0) target = $region41
    $region40: #{poolnet_forward.7} parent=1 // pred_region
      _
    $region41: #{poolnet_forward.7} parent=1 // pred_fallthru
      _
    // Predicated region
    $region42: #{poolnet_forward.7} parent=1 // pred_check
      _
    $region43: #{poolnet_forward.7} parent=1 // pred_check_branch
      %44 = sbr.rel (0) target = $region45
    $region44: #{poolnet_forward.7} parent=1 // pred_region
      _
    $region45: #{poolnet_forward.7} parent=1 // pred_fallthru
      _
    // Predicated region
    $region46: #{poolnet_forward.7} parent=1 // pred_check
      _
    $region47: #{poolnet_forward.7} parent=1 // pred_check_branch
      %46 = sbr.rel (0) target = $region49
    $region48: #{poolnet_forward.7} parent=1 // pred_region
      _
    $region49: #{poolnet_forward.7} parent=1 // pred_fallthru
      _
    // Predicated region
    $region50: #{poolnet_forward.7} parent=1 // pred_check
      _
    $region51: #{poolnet_forward.7} parent=1 // pred_check_branch
      %48 = sbr.rel (0) target = $region53
    $region52: #{poolnet_forward.7} parent=1 // pred_region
      _
    $region53: #{poolnet_forward.7} parent=1 // pred_fallthru
      _
    // Predicated region
    $region54: #{poolnet_forward.7} parent=1 // pred_check
      _
    $region55: #{poolnet_forward.7} parent=1 // pred_check_branch
      %50 = sbr.rel (0) target = $region57
    $region56: #{poolnet_forward.7} parent=1 // pred_region
      _
    $region57: #{poolnet_forward.7} parent=1 // pred_fallthru
      _
    // Predicated region
    $region58: #{poolnet_forward.7} parent=1 // pred_check
      _
    $region59: #{poolnet_forward.7} parent=1 // pred_check_branch
      %52 = sbr.rel (0) target = $region61
    $region60: #{poolnet_forward.7} parent=1 // pred_region
      _
    $region61: #{poolnet_forward.7} parent=1 // pred_fallthru
      _
    %v54 = vld [vmem:[%s0] sm:$0xff]
    %v55 = vld [vmem:[%s1] sm:$0xff]
    %v56 = vld [vmem:[%s1 + $0x8] sm:$0xff]
    %v57 = vld [vmem:[%s1 + $0x10] sm:$0xff]
    %v58 = vld [vmem:[%s1 + $0x18] sm:$0xff]
    %v59 = vld [vmem:[%s1 + $0x20] sm:$0xff]
    %v60 = vld [vmem:[%s1 + $0x28] sm:$0xff]
    %v61 = vld [vmem:[%s1 + $0x30] sm:$0xff]
    %v62 = vld [vmem:[%s1 + $0x38] sm:$0xff]
    %v63 = vld [vmem:[%s1 + $0x40] sm:$0xff]
    %v64 = vld [vmem:[%s1 + $0x48] sm:$0xff]
    %v65 = vld [vmem:[%s1 + $0x50] sm:$0xff]
    %v66 = vld [vmem:[%s1 + $0x58] sm:$0xff]
    %v67 = vld [vmem:[%s1 + $0x60] sm:$0xff]
    %v68 = vld [vmem:[%s1 + $0x68] sm:$0xff]
    %v69 = vld [vmem:[%s1 + $0x70] sm:$0xff]
    %v70 = vld [vmem:[%s1 + $0x78] sm:$0xff]
    %v71 = vld [vmem:[%s1 + $0x80] sm:$0xff]
    %v72 = vld [vmem:[%s1 + $0x88] sm:$0xff]
    %v73 = vld [vmem:[%s1 + $0x90] sm:$0xff]
    %v74 = vld [vmem:[%s1 + $0x98] sm:$0xff]
    %v75 = vld [vmem:[%s1 + $0xa0] sm:$0xff]
    %v76 = vld [vmem:[%s1 + $0xa8] sm:$0xff]
    %v77 = vld [vmem:[%s1 + $0xb0] sm:$0xff]
    %v78 = vld [vmem:[%s1 + $0xb8] sm:$0xff]
    %v79 = vld [vmem:[%s1 + $0xc0] sm:$0xff]
    %v80 = vld [vmem:[%s1 + $0xc8] sm:$0xff]
    %v81 = vld [vmem:[%s1 + $0xd0] sm:$0xff]
    %v82 = vld [vmem:[%s1 + $0xd8] sm:$0xff]
    %v83 = vld [vmem:[%s1 + $0xe0] sm:$0xff]
    %v84 = vld [vmem:[%s1 + $0xe8] sm:$0xff]
    %v85 = vld [vmem:[%s1 + $0xf0] sm:$0xff]
    %v86 = vld [vmem:[%s1 + $0xf8] sm:$0xff]
    %v87 = vld [vmem:[%s1 + $0x100] sm:$0xff]
    %v88 = vld [vmem:[%s1 + $0x108] sm:$0xff]
    %v89 = vld [vmem:[%s1 + $0x110] sm:$0xff]
    %v90 = vld [vmem:[%s1 + $0x118] sm:$0xff]
    %v91 = vld [vmem:[%s1 + $0x120] sm:$0xff]
    %v92 = vld [vmem:[%s1 + $0x128] sm:$0xff]
    %v93 = vld [vmem:[%s1 + $0x130] sm:$0xff]
    %v94 = vld [vmem:[%s1 + $0x138] sm:$0xff]
    %v95 = vld [vmem:[%s1 + $0x140] sm:$0xff]
    %v96 = vld [vmem:[%s1 + $0x148] sm:$0xff]
    %v97 = vld [vmem:[%s1 + $0x150] sm:$0xff]
    %v98 = vld [vmem:[%s1 + $0x158] sm:$0xff]
    %v99 = vld [vmem:[%s1 + $0x160] sm:$0xff]
    %v100 = vld [vmem:[%s1 + $0x168] sm:$0xff]
    %v101 = vld [vmem:[%s1 + $0x170] sm:$0xff]
    %v102 = vld [vmem:[%s1 + $0x178] sm:$0xff]
    %v103 = vld [vmem:[%s1 + $0x180] sm:$0xff]
    %v104 = vld [vmem:[%s1 + $0x188] sm:$0xff]
    %v105 = vld [vmem:[%s1 + $0x190] sm:$0xff]
    %v106 = vld [vmem:[%s1 + $0x198] sm:$0xff]
    %v107 = vld [vmem:[%s1 + $0x1a0] sm:$0xff]
    %v108 = vld [vmem:[%s1 + $0x1a8] sm:$0xff]
    %v109 = vld [vmem:[%s1 + $0x1b0] sm:$0xff]
    %v110 = vld [vmem:[%s1 + $0x1b8] sm:$0xff]
    %v111 = vld [vmem:[%s1 + $0x1c0] sm:$0xff]
    %v112 = vld [vmem:[%s1 + $0x1c8] sm:$0xff]
    %v113 = vld [vmem:[%s1 + $0x1d0] sm:$0xff]
    %v114 = vld [vmem:[%s1 + $0x1d8] sm:$0xff]
    %v115 = vld [vmem:[%s1 + $0x1e0] sm:$0xff]
    %v116 = vld [vmem:[%s1 + $0x1e8] sm:$0xff]
    %v117 = vld [vmem:[%s1 + $0x1f0] sm:$0xff]
    %v118 = vld [vmem:[%s1 + $0x1f8] sm:$0xff]
    %v120 = vcombine.high %v54, %v54
    %v122 = vunpack.c.l.s4 1983009808
    %v123 = vunpack.c.0.s8 %v122
    %v124 = vlaneseq
    %v125 = vshrl.u32 %v124, 7
    %v126 = vsub.s32 %v123, %v125
    %v127 = vrot.slane %v54, %v126
    %v129 = vunpack.c.l.s4 1983009808
    %v130 = vunpack.c.0.s8 %v129
    %v131 = vlaneseq
    %v132 = vshrl.u32 %v131, 7
    %v133 = vsub.s32 %v130, %v132
    %v134 = vrot.slane %v120, %v133
    %v135 = vcombine.high %v127, %v127
    %v136 = vcombine.high %v134, %v134
    %v141 = vpack.c.bf16 %v127, %v127
    %v142 = vpack.c.bf16 %v135, %v135
    %v143 = vpack.c.bf16 %v134, %v134
    %v144 = vpack.c.bf16 %v136, %v136
    %v145 = vld [vmem:[%s2] sm:$0x3]
    %v147 = vlaneseq
    %v148 = vshrl.u32 %v147, 7
    %v149 = vsub.s32 0, %v148
    %v150 = vrot.slane %v145, %v149
    %v151 = vlaneseq
    %v152 = vshrl.u32 %v151, 7
    %v153 = vsub.s32 1, %v152
    %v154 = vrot.slane %v145, %v153
    %v221 = vunpack.c.l.b16 %v55
    %v222 = vunpack.c.h.b16 %v55
    %v223 = vunpack.c.l.b16 %v56
    %v224 = vunpack.c.h.b16 %v56
    %v225 = vunpack.c.l.b16 %v57
    %v226 = vunpack.c.h.b16 %v57
    %v227 = vunpack.c.l.b16 %v58
    %v228 = vunpack.c.h.b16 %v58
    %v229 = vunpack.c.l.b16 %v59
    %v230 = vunpack.c.h.b16 %v59
    %v231 = vunpack.c.l.b16 %v60
    %v232 = vunpack.c.h.b16 %v60
    %v233 = vunpack.c.l.b16 %v61
    %v234 = vunpack.c.h.b16 %v61
    %v235 = vunpack.c.l.b16 %v62
    %v236 = vunpack.c.h.b16 %v62
    %v237 = vunpack.c.l.b16 %v63
    %v238 = vunpack.c.h.b16 %v63
    %v239 = vunpack.c.l.b16 %v64
    %v240 = vunpack.c.h.b16 %v64
    %v241 = vunpack.c.l.b16 %v65
    %v242 = vunpack.c.h.b16 %v65
    %v243 = vunpack.c.l.b16 %v66
    %v244 = vunpack.c.h.b16 %v66
    %v245 = vunpack.c.l.b16 %v67
    %v246 = vunpack.c.h.b16 %v67
    %v247 = vunpack.c.l.b16 %v68
    %v248 = vunpack.c.h.b16 %v68
    %v249 = vunpack.c.l.b16 %v69
    %v250 = vunpack.c.h.b16 %v69
    %v251 = vunpack.c.l.b16 %v70
    %v252 = vunpack.c.h.b16 %v70
    %v253 = vunpack.c.l.b16 %v71
    %v254 = vunpack.c.h.b16 %v71
    %v255 = vunpack.c.l.b16 %v72
    %v256 = vunpack.c.h.b16 %v72
    %v257 = vunpack.c.l.b16 %v73
    %v258 = vunpack.c.h.b16 %v73
    %v259 = vunpack.c.l.b16 %v74
    %v260 = vunpack.c.h.b16 %v74
    %v261 = vunpack.c.l.b16 %v75
    %v262 = vunpack.c.h.b16 %v75
    %v263 = vunpack.c.l.b16 %v76
    %v264 = vunpack.c.h.b16 %v76
    %v265 = vunpack.c.l.b16 %v77
    %v266 = vunpack.c.h.b16 %v77
    %v267 = vunpack.c.l.b16 %v78
    %v268 = vunpack.c.h.b16 %v78
    %v269 = vunpack.c.l.b16 %v79
    %v270 = vunpack.c.h.b16 %v79
    %v271 = vunpack.c.l.b16 %v80
    %v272 = vunpack.c.h.b16 %v80
    %v273 = vunpack.c.l.b16 %v81
    %v274 = vunpack.c.h.b16 %v81
    %v275 = vunpack.c.l.b16 %v82
    %v276 = vunpack.c.h.b16 %v82
    %v277 = vunpack.c.l.b16 %v83
    %v278 = vunpack.c.h.b16 %v83
    %v279 = vunpack.c.l.b16 %v84
    %v280 = vunpack.c.h.b16 %v84
    %v281 = vunpack.c.l.b16 %v85
    %v282 = vunpack.c.h.b16 %v85
    %v283 = vunpack.c.l.b16 %v86
    %v284 = vunpack.c.h.b16 %v86
    %v285 = vunpack.c.l.b16 %v87
    %v286 = vunpack.c.h.b16 %v87
    %v287 = vunpack.c.l.b16 %v88
    %v288 = vunpack.c.h.b16 %v88
    %v289 = vunpack.c.l.b16 %v89
    %v290 = vunpack.c.h.b16 %v89
    %v291 = vunpack.c.l.b16 %v90
    %v292 = vunpack.c.h.b16 %v90
    %v293 = vunpack.c.l.b16 %v91
    %v294 = vunpack.c.h.b16 %v91
    %v295 = vunpack.c.l.b16 %v92
    %v296 = vunpack.c.h.b16 %v92
    %v297 = vunpack.c.l.b16 %v93
    %v298 = vunpack.c.h.b16 %v93
    %v299 = vunpack.c.l.b16 %v94
    %v300 = vunpack.c.h.b16 %v94
    %v301 = vunpack.c.l.b16 %v95
    %v302 = vunpack.c.h.b16 %v95
    %v303 = vunpack.c.l.b16 %v96
    %v304 = vunpack.c.h.b16 %v96
    %v305 = vunpack.c.l.b16 %v97
    %v306 = vunpack.c.h.b16 %v97
    %v307 = vunpack.c.l.b16 %v98
    %v308 = vunpack.c.h.b16 %v98
    %v309 = vunpack.c.l.b16 %v99
    %v310 = vunpack.c.h.b16 %v99
    %v311 = vunpack.c.l.b16 %v100
    %v312 = vunpack.c.h.b16 %v100
    %v313 = vunpack.c.l.b16 %v101
    %v314 = vunpack.c.h.b16 %v101
    %v315 = vunpack.c.l.b16 %v102
    %v316 = vunpack.c.h.b16 %v102
    %v317 = vunpack.c.l.b16 %v103
    %v318 = vunpack.c.h.b16 %v103
    %v319 = vunpack.c.l.b16 %v104
    %v320 = vunpack.c.h.b16 %v104
    %v321 = vunpack.c.l.b16 %v105
    %v322 = vunpack.c.h.b16 %v105
    %v323 = vunpack.c.l.b16 %v106
    %v324 = vunpack.c.h.b16 %v106
    %v325 = vunpack.c.l.b16 %v107
    %v326 = vunpack.c.h.b16 %v107
    %v327 = vunpack.c.l.b16 %v108
    %v328 = vunpack.c.h.b16 %v108
    %v329 = vunpack.c.l.b16 %v109
    %v330 = vunpack.c.h.b16 %v109
    %v331 = vunpack.c.l.b16 %v110
    %v332 = vunpack.c.h.b16 %v110
    %v333 = vunpack.c.l.b16 %v111
    %v334 = vunpack.c.h.b16 %v111
    %v335 = vunpack.c.l.b16 %v112
    %v336 = vunpack.c.h.b16 %v112
    %v337 = vunpack.c.l.b16 %v113
    %v338 = vunpack.c.h.b16 %v113
    %v339 = vunpack.c.l.b16 %v114
    %v340 = vunpack.c.h.b16 %v114
    %v341 = vunpack.c.l.b16 %v115
    %v342 = vunpack.c.h.b16 %v115
    %v343 = vunpack.c.l.b16 %v116
    %v344 = vunpack.c.h.b16 %v116
    %v345 = vunpack.c.l.b16 %v117
    %v346 = vunpack.c.h.b16 %v117
    %v347 = vunpack.c.l.b16 %v118
    %v348 = vunpack.c.h.b16 %v118
    %v349 = vpack.c.b16 %v223, %v221
    %v350 = vpack.c.b16 %v224, %v222
    %v351 = vpack.c.b16 %v227, %v225
    %v352 = vpack.c.b16 %v228, %v226
    %v353 = vpack.c.b16 %v231, %v229
    %v354 = vpack.c.b16 %v232, %v230
    %v355 = vpack.c.b16 %v235, %v233
    %v356 = vpack.c.b16 %v236, %v234
    %v357 = vpack.c.b16 %v239, %v237
    %v358 = vpack.c.b16 %v240, %v238
    %v359 = vpack.c.b16 %v243, %v241
    %v360 = vpack.c.b16 %v244, %v242
    %v361 = vpack.c.b16 %v247, %v245
    %v362 = vpack.c.b16 %v248, %v246
    %v363 = vpack.c.b16 %v251, %v249
    %v364 = vpack.c.b16 %v252, %v250
    %v365 = vpack.c.b16 %v255, %v253
    %v366 = vpack.c.b16 %v256, %v254
    %v367 = vpack.c.b16 %v259, %v257
    %v368 = vpack.c.b16 %v260, %v258
    %v369 = vpack.c.b16 %v263, %v261
    %v370 = vpack.c.b16 %v264, %v262
    %v371 = vpack.c.b16 %v267, %v265
    %v372 = vpack.c.b16 %v268, %v266
    %v373 = vpack.c.b16 %v271, %v269
    %v374 = vpack.c.b16 %v272, %v270
    %v375 = vpack.c.b16 %v275, %v273
    %v376 = vpack.c.b16 %v276, %v274
    %v377 = vpack.c.b16 %v279, %v277
    %v378 = vpack.c.b16 %v280, %v278
    %v379 = vpack.c.b16 %v283, %v281
    %v380 = vpack.c.b16 %v284, %v282
    %v381 = vpack.c.b16 %v287, %v285
    %v382 = vpack.c.b16 %v288, %v286
    %v383 = vpack.c.b16 %v291, %v289
    %v384 = vpack.c.b16 %v292, %v290
    %v385 = vpack.c.b16 %v295, %v293
    %v386 = vpack.c.b16 %v296, %v294
    %v387 = vpack.c.b16 %v299, %v297
    %v388 = vpack.c.b16 %v300, %v298
    %v389 = vpack.c.b16 %v303, %v301
    %v390 = vpack.c.b16 %v304, %v302
    %v391 = vpack.c.b16 %v307, %v305
    %v392 = vpack.c.b16 %v308, %v306
    %v393 = vpack.c.b16 %v311, %v309
    %v394 = vpack.c.b16 %v312, %v310
    %v395 = vpack.c.b16 %v315, %v313
    %v396 = vpack.c.b16 %v316, %v314
    %v397 = vpack.c.b16 %v319, %v317
    %v398 = vpack.c.b16 %v320, %v318
    %v399 = vpack.c.b16 %v323, %v321
    %v400 = vpack.c.b16 %v324, %v322
    %v401 = vpack.c.b16 %v327, %v325
    %v402 = vpack.c.b16 %v328, %v326
    %v403 = vpack.c.b16 %v331, %v329
    %v404 = vpack.c.b16 %v332, %v330
    %v405 = vpack.c.b16 %v335, %v333
    %v406 = vpack.c.b16 %v336, %v334
    %v407 = vpack.c.b16 %v339, %v337
    %v408 = vpack.c.b16 %v340, %v338
    %v409 = vpack.c.b16 %v343, %v341
    %v410 = vpack.c.b16 %v344, %v342
    %v411 = vpack.c.b16 %v347, %v345
    %v412 = vpack.c.b16 %v348, %v346
    %477 = vmatprep.subr.bf16.mxu0 %v350
    %478 = vmatpush1.bf16.msra.mxu0 %v349
    %479 = vmatprep.subr.bf16.mxu0 %v352
    %480 = vmatpush1.bf16.msra.mxu0 %v351
    %481 = vmatprep.subr.bf16.mxu0 %v354
    %482 = vmatpush1.bf16.msra.mxu0 %v353
    %483 = vmatprep.subr.bf16.mxu0 %v356
    %484 = vmatpush1.bf16.msra.mxu0 %v355
    %485 = vmatprep.subr.bf16.mxu0 %v358
    %486 = vmatpush1.bf16.msra.mxu0 %v357
    %487 = vmatprep.subr.bf16.mxu0 %v360
    %488 = vmatpush1.bf16.msra.mxu0 %v359
    %489 = vmatprep.subr.bf16.mxu0 %v362
    %490 = vmatpush1.bf16.msra.mxu0 %v361
    %491 = vmatprep.subr.bf16.mxu0 %v364
    %492 = vmatpush1.bf16.msra.mxu0 %v363
    %493 = vmatprep.subr.bf16.mxu0 %v366
    %494 = vmatpush1.bf16.msra.mxu0 %v365
    %495 = vmatprep.subr.bf16.mxu0 %v368
    %496 = vmatpush1.bf16.msra.mxu0 %v367
    %497 = vmatprep.subr.bf16.mxu0 %v370
    %498 = vmatpush1.bf16.msra.mxu0 %v369
    %499 = vmatprep.subr.bf16.mxu0 %v372
    %500 = vmatpush1.bf16.msra.mxu0 %v371
    %501 = vmatprep.subr.bf16.mxu0 %v374
    %502 = vmatpush1.bf16.msra.mxu0 %v373
    %503 = vmatprep.subr.bf16.mxu0 %v376
    %504 = vmatpush1.bf16.msra.mxu0 %v375
    %505 = vmatprep.subr.bf16.mxu0 %v378
    %506 = vmatpush1.bf16.msra.mxu0 %v377
    %507 = vmatprep.subr.bf16.mxu0 %v380
    %508 = vmatpush1.bf16.msra.mxu0 %v379
    %509 = vmatprep.mubr.bf16.mxu0 %v142
    %510 = vmatmul.mubr.bf16.gmra.mrb[0].mxu0 %v141
    %v511 = vpop.f32.mrb[0].mxu0
    %v512 = vadd.f32 %v150, %v511
    %v513 = vpop.f32.mrb[0].mxu0
    %v514 = vadd.f32 %v154, %v513
    %v515 = vpop.f32.mrb[0].mxu0
    %v516 = vpop.f32.mrb[0].mxu0
    %517 = vdwg.mxu0
    %518 = vmatprep.subr.bf16.mxu0 %v382
    %519 = vmatpush1.bf16.msra.mxu0 %v381
    %520 = vmatprep.subr.bf16.mxu0 %v384
    %521 = vmatpush1.bf16.msra.mxu0 %v383
    %522 = vmatprep.subr.bf16.mxu0 %v386
    %523 = vmatpush1.bf16.msra.mxu0 %v385
    %524 = vmatprep.subr.bf16.mxu0 %v388
    %525 = vmatpush1.bf16.msra.mxu0 %v387
    %526 = vmatprep.subr.bf16.mxu0 %v390
    %527 = vmatpush1.bf16.msra.mxu0 %v389
    %528 = vmatprep.subr.bf16.mxu0 %v392
    %529 = vmatpush1.bf16.msra.mxu0 %v391
    %530 = vmatprep.subr.bf16.mxu0 %v394
    %531 = vmatpush1.bf16.msra.mxu0 %v393
    %532 = vmatprep.subr.bf16.mxu0 %v396
    %533 = vmatpush1.bf16.msra.mxu0 %v395
    %534 = vmatprep.subr.bf16.mxu0 %v398
    %535 = vmatpush1.bf16.msra.mxu0 %v397
    %536 = vmatprep.subr.bf16.mxu0 %v400
    %537 = vmatpush1.bf16.msra.mxu0 %v399
    %538 = vmatprep.subr.bf16.mxu0 %v402
    %539 = vmatpush1.bf16.msra.mxu0 %v401
    %540 = vmatprep.subr.bf16.mxu0 %v404
    %541 = vmatpush1.bf16.msra.mxu0 %v403
    %542 = vmatprep.subr.bf16.mxu0 %v406
    %543 = vmatpush1.bf16.msra.mxu0 %v405
    %544 = vmatprep.subr.bf16.mxu0 %v408
    %545 = vmatpush1.bf16.msra.mxu0 %v407
    %546 = vmatprep.subr.bf16.mxu0 %v410
    %547 = vmatpush1.bf16.msra.mxu0 %v409
    %548 = vmatprep.subr.bf16.mxu0 %v412
    %549 = vmatpush1.bf16.msra.mxu0 %v411
    %550 = vmatprep.mubr.bf16.mxu0 %v144
    %551 = vmatmul.mubr.bf16.gmra.mrb[0].mxu0 %v143
    %v552 = vpop.f32.mrb[0].mxu0
    %v553 = vadd.f32 %v512, %v552
    %v554 = vpop.f32.mrb[0].mxu0
    %v555 = vadd.f32 %v514, %v554
    %v556 = vpop.f32.mrb[0].mxu0
    %v557 = vpop.f32.mrb[0].mxu0
    %558 = vdwg.mxu0
    %vm559 = vcmp.gt.f32.partialorder %v553, 0.0
    %vm560 = vcmp.gt.f32.partialorder %v555, 0.0
    %v561 = vmin.f32 %v553, 0.0
    %v562 = vmin.f32 %v555, 0.0
    %v563 = vmul.f32 %v561, 1.442695
    %v564 = vpow.pop %v563
    %v565 = vmul.f32 %v562, 1.442695
    %v566 = vpow.pop %v565
    %v567 = vsub.f32 %v564, 1.0
    %v568 = vsub.f32 %v566, 1.0
    %v569 = vsel %vm559, %v553, %v567
    %v570 = vsel %vm560, %v555, %v568
    %v571 = vld [vmem:[%s3] sm:$0xf]
    %v572 = vld [vmem:[%s3 + $0x4] sm:$0xf]
    %v573 = vld [vmem:[%s3 + $0x8] sm:$0xf]
    %v574 = vld [vmem:[%s3 + $0xc] sm:$0xf]
    %v575 = vld [vmem:[%s3 + $0x10] sm:$0xf]
    %v576 = vld [vmem:[%s3 + $0x14] sm:$0xf]
    %v577 = vld [vmem:[%s3 + $0x18] sm:$0xf]
    %v578 = vld [vmem:[%s3 + $0x1c] sm:$0xf]
    %v579 = vld [vmem:[%s3 + $0x20] sm:$0xf]
    %v580 = vld [vmem:[%s3 + $0x24] sm:$0xf]
    %v581 = vld [vmem:[%s3 + $0x28] sm:$0xf]
    %v582 = vld [vmem:[%s3 + $0x2c] sm:$0xf]
    %v583 = vld [vmem:[%s3 + $0x30] sm:$0xf]
    %v584 = vld [vmem:[%s3 + $0x34] sm:$0xf]
    %v585 = vld [vmem:[%s3 + $0x38] sm:$0xf]
    %v586 = vld [vmem:[%s3 + $0x3c] sm:$0xf]
    %v587 = vld [vmem:[%s3 + $0x40] sm:$0xf]
    %v588 = vld [vmem:[%s3 + $0x44] sm:$0xf]
    %v589 = vld [vmem:[%s3 + $0x48] sm:$0xf]
    %v590 = vld [vmem:[%s3 + $0x4c] sm:$0xf]
    %v591 = vld [vmem:[%s3 + $0x50] sm:$0xf]
    %v592 = vld [vmem:[%s3 + $0x54] sm:$0xf]
    %v593 = vld [vmem:[%s3 + $0x58] sm:$0xf]
    %v594 = vld [vmem:[%s3 + $0x5c] sm:$0xf]
    %v595 = vld [vmem:[%s3 + $0x60] sm:$0xf]
    %v596 = vld [vmem:[%s3 + $0x64] sm:$0xf]
    %v597 = vld [vmem:[%s3 + $0x68] sm:$0xf]
    %v598 = vld [vmem:[%s3 + $0x6c] sm:$0xf]
    %v599 = vld [vmem:[%s3 + $0x70] sm:$0xf]
    %v600 = vld [vmem:[%s3 + $0x74] sm:$0xf]
    %v601 = vld [vmem:[%s3 + $0x78] sm:$0xf]
    %v602 = vld [vmem:[%s3 + $0x7c] sm:$0xf]
    %v603 = vpack.c.bf16 %v569, %v569
    %v604 = vpack.c.bf16 %v570, %v570
    %v605 = vld [vmem:[%s4] sm:$0x1]
    %v607 = vlaneseq
    %v608 = vshrl.u32 %v607, 7
    %v609 = vsub.s32 0, %v608
    %v610 = vrot.slane %v605, %v609
    %v644 = vunpack.c.l.b16 %v571
    %v645 = vunpack.c.l.b16 %v572
    %v646 = vunpack.c.l.b16 %v573
    %v647 = vunpack.c.l.b16 %v574
    %v648 = vunpack.c.l.b16 %v575
    %v649 = vunpack.c.l.b16 %v576
    %v650 = vunpack.c.l.b16 %v577
    %v651 = vunpack.c.l.b16 %v578
    %v652 = vunpack.c.l.b16 %v579
    %v653 = vunpack.c.l.b16 %v580
    %v654 = vunpack.c.l.b16 %v581
    %v655 = vunpack.c.l.b16 %v582
    %v656 = vunpack.c.l.b16 %v583
    %v657 = vunpack.c.l.b16 %v584
    %v658 = vunpack.c.l.b16 %v585
    %v659 = vunpack.c.l.b16 %v586
    %v660 = vunpack.c.l.b16 %v587
    %v661 = vunpack.c.l.b16 %v588
    %v662 = vunpack.c.l.b16 %v589
    %v663 = vunpack.c.l.b16 %v590
    %v664 = vunpack.c.l.b16 %v591
    %v665 = vunpack.c.l.b16 %v592
    %v666 = vunpack.c.l.b16 %v593
    %v667 = vunpack.c.l.b16 %v594
    %v668 = vunpack.c.l.b16 %v595
    %v669 = vunpack.c.l.b16 %v596
    %v670 = vunpack.c.l.b16 %v597
    %v671 = vunpack.c.l.b16 %v598
    %v672 = vunpack.c.l.b16 %v599
    %v673 = vunpack.c.l.b16 %v600
    %v674 = vunpack.c.l.b16 %v601
    %v675 = vunpack.c.l.b16 %v602
    %v676 = vpack.c.b16 %v645, %v644
    %v677 = vpack.c.b16 %v647, %v646
    %v678 = vpack.c.b16 %v649, %v648
    %v679 = vpack.c.b16 %v651, %v650
    %v680 = vpack.c.b16 %v653, %v652
    %v681 = vpack.c.b16 %v655, %v654
    %v682 = vpack.c.b16 %v657, %v656
    %v683 = vpack.c.b16 %v659, %v658
    %v684 = vpack.c.b16 %v661, %v660
    %v685 = vpack.c.b16 %v663, %v662
    %v686 = vpack.c.b16 %v665, %v664
    %v687 = vpack.c.b16 %v667, %v666
    %v688 = vpack.c.b16 %v669, %v668
    %v689 = vpack.c.b16 %v671, %v670
    %v690 = vpack.c.b16 %v673, %v672
    %v691 = vpack.c.b16 %v675, %v674
    %708 = vmatprep.subr.bf16.mxu0 0
    %709 = vmatpush1.bf16.msra.mxu0 %v676
    %710 = vmatprep.subr.bf16.mxu0 0
    %711 = vmatpush1.bf16.msra.mxu0 %v677
    %712 = vmatprep.subr.bf16.mxu0 0
    %713 = vmatpush1.bf16.msra.mxu0 %v678
    %714 = vmatprep.subr.bf16.mxu0 0
    %715 = vmatpush1.bf16.msra.mxu0 %v679
    %716 = vmatprep.subr.bf16.mxu0 0
    %717 = vmatpush1.bf16.msra.mxu0 %v680
    %718 = vmatprep.subr.bf16.mxu0 0
    %719 = vmatpush1.bf16.msra.mxu0 %v681
    %720 = vmatprep.subr.bf16.mxu0 0
    %721 = vmatpush1.bf16.msra.mxu0 %v682
    %722 = vmatprep.subr.bf16.mxu0 0
    %723 = vmatpush1.bf16.msra.mxu0 %v683
    %724 = vmatprep.subr.bf16.mxu0 0
    %725 = vmatpush1.bf16.msra.mxu0 %v684
    %726 = vmatprep.subr.bf16.mxu0 0
    %727 = vmatpush1.bf16.msra.mxu0 %v685
    %728 = vmatprep.subr.bf16.mxu0 0
    %729 = vmatpush1.bf16.msra.mxu0 %v686
    %730 = vmatprep.subr.bf16.mxu0 0
    %731 = vmatpush1.bf16.msra.mxu0 %v687
    %732 = vmatprep.subr.bf16.mxu0 0
    %733 = vmatpush1.bf16.msra.mxu0 %v688
    %734 = vmatprep.subr.bf16.mxu0 0
    %735 = vmatpush1.bf16.msra.mxu0 %v689
    %736 = vmatprep.subr.bf16.mxu0 0
    %737 = vmatpush1.bf16.msra.mxu0 %v690
    %738 = vmatprep.subr.bf16.mxu0 0
    %739 = vmatpush1.bf16.msra.mxu0 %v691
    %740 = vmatprep.mubr.bf16.mxu0 %v604
    %741 = vmatmul.mubr.bf16.gmra.mrb[0].mxu0 %v603
    %v742 = vpop.f32.mrb[0].mxu0
    %v743 = vadd.f32 %v610, %v742
    %v744 = vpop.f32.mrb[0].mxu0
    %v745 = vpop.f32.mrb[0].mxu0
    %v746 = vpop.f32.mrb[0].mxu0
    %747 = vdwg.mxu0
    %vm748 = vcmp.gt.f32.partialorder %v743, 0.0
    %v749 = vmin.f32 %v743, 0.0
    %v750 = vmul.f32 %v749, 1.442695
    %v751 = vpow.pop %v750
    %v752 = vsub.f32 %v751, 1.0
    %v753 = vsel %vm748, %v743, %v752
    %v754 = vld [vmem:[%s5] sm:$0x1]
    %v756 = vlaneseq
    %v757 = vshrl.u32 %v756, 7
    %v758 = vsub.s32 0, %v757
    %v759 = vrot.slane %v754, %v758
    %v761 = vmul.f32 %v753, %v759
    %vm762 = vcmask 1041408
    %v763 = vsel %vm762, %v761, 0.0
    %764 = vadd.xlane.f32.xlu0 %v763
    %v765 = vpop.xlane.xlu0 %764
    %v766 = vld [vmem:[#allocation3] sm:$0x1]
    %v768 = vlaneseq
    %v769 = vshrl.u32 %v768, 7
    %v770 = vsub.s32 0, %v769
    %v771 = vrot.slane %v766, %v770
    %v773 = vadd.f32 %v765, %v771
    %v774 = vld [vmem:[%s7] sm:$0xff]
    %v775 = vld [vmem:[%s7 + $0x8] sm:$0xff]
    %v776 = vld [vmem:[%s7 + $0x10] sm:$0xff]
    %v777 = vld [vmem:[%s7 + $0x18] sm:$0xff]
    %v778 = vld [vmem:[%s7 + $0x20] sm:$0xff]
    %v779 = vld [vmem:[%s7 + $0x28] sm:$0xff]
    %v780 = vld [vmem:[%s7 + $0x30] sm:$0xff]
    %v781 = vld [vmem:[%s7 + $0x38] sm:$0xff]
    %v782 = vld [vmem:[%s7 + $0x40] sm:$0xff]
    %v783 = vld [vmem:[%s7 + $0x48] sm:$0xff]
    %v784 = vld [vmem:[%s7 + $0x50] sm:$0xff]
    %v785 = vld [vmem:[%s7 + $0x58] sm:$0xff]
    %v786 = vld [vmem:[%s7 + $0x60] sm:$0xff]
    %v787 = vld [vmem:[%s7 + $0x68] sm:$0xff]
    %v788 = vld [vmem:[%s7 + $0x70] sm:$0xff]
    %v789 = vld [vmem:[%s7 + $0x78] sm:$0xff]
    %v790 = vld [vmem:[%s7 + $0x80] sm:$0xff]
    %v791 = vld [vmem:[%s7 + $0x88] sm:$0xff]
    %v792 = vld [vmem:[%s7 + $0x90] sm:$0xff]
    %v793 = vld [vmem:[%s7 + $0x98] sm:$0xff]
    %v794 = vld [vmem:[%s7 + $0xa0] sm:$0xff]
    %v795 = vld [vmem:[%s7 + $0xa8] sm:$0xff]
    %v796 = vld [vmem:[%s7 + $0xb0] sm:$0xff]
    %v797 = vld [vmem:[%s7 + $0xb8] sm:$0xff]
    %v798 = vld [vmem:[%s7 + $0xc0] sm:$0xff]
    %v799 = vld [vmem:[%s7 + $0xc8] sm:$0xff]
    %v800 = vld [vmem:[%s7 + $0xd0] sm:$0xff]
    %v801 = vld [vmem:[%s7 + $0xd8] sm:$0xff]
    %v802 = vld [vmem:[%s7 + $0xe0] sm:$0xff]
    %v803 = vld [vmem:[%s7 + $0xe8] sm:$0xff]
    %v804 = vld [vmem:[%s7 + $0xf0] sm:$0xff]
    %v805 = vld [vmem:[%s7 + $0xf8] sm:$0xff]
    %v806 = vld [vmem:[%s7 + $0x100] sm:$0xff]
    %v807 = vld [vmem:[%s7 + $0x108] sm:$0xff]
    %v808 = vld [vmem:[%s7 + $0x110] sm:$0xff]
    %v809 = vld [vmem:[%s7 + $0x118] sm:$0xff]
    %v810 = vld [vmem:[%s7 + $0x120] sm:$0xff]
    %v811 = vld [vmem:[%s7 + $0x128] sm:$0xff]
    %v812 = vld [vmem:[%s7 + $0x130] sm:$0xff]
    %v813 = vld [vmem:[%s7 + $0x138] sm:$0xff]
    %v814 = vld [vmem:[%s7 + $0x140] sm:$0xff]
    %v815 = vld [vmem:[%s7 + $0x148] sm:$0xff]
    %v816 = vld [vmem:[%s7 + $0x150] sm:$0xff]
    %v817 = vld [vmem:[%s7 + $0x158] sm:$0xff]
    %v818 = vld [vmem:[%s7 + $0x160] sm:$0xff]
    %v819 = vld [vmem:[%s7 + $0x168] sm:$0xff]
    %v820 = vld [vmem:[%s7 + $0x170] sm:$0xff]
    %v821 = vld [vmem:[%s7 + $0x178] sm:$0xff]
    %v822 = vld [vmem:[%s7 + $0x180] sm:$0xff]
    %v823 = vld [vmem:[%s7 + $0x188] sm:$0xff]
    %v824 = vld [vmem:[%s7 + $0x190] sm:$0xff]
    %v825 = vld [vmem:[%s7 + $0x198] sm:$0xff]
    %v826 = vld [vmem:[%s7 + $0x1a0] sm:$0xff]
    %v827 = vld [vmem:[%s7 + $0x1a8] sm:$0xff]
    %v828 = vld [vmem:[%s7 + $0x1b0] sm:$0xff]
    %v829 = vld [vmem:[%s7 + $0x1b8] sm:$0xff]
    %v830 = vld [vmem:[%s7 + $0x1c0] sm:$0xff]
    %v831 = vld [vmem:[%s7 + $0x1c8] sm:$0xff]
    %v832 = vld [vmem:[%s7 + $0x1d0] sm:$0xff]
    %v833 = vld [vmem:[%s7 + $0x1d8] sm:$0xff]
    %v834 = vld [vmem:[%s7 + $0x1e0] sm:$0xff]
    %v835 = vld [vmem:[%s7 + $0x1e8] sm:$0xff]
    %v836 = vld [vmem:[%s7 + $0x1f0] sm:$0xff]
    %v837 = vld [vmem:[%s7 + $0x1f8] sm:$0xff]
    %v838 = vld [vmem:[%s7 + $0x200] sm:$0xff]
    %v839 = vld [vmem:[%s7 + $0x208] sm:$0xff]
    %v840 = vld [vmem:[%s7 + $0x210] sm:$0xff]
    %v841 = vld [vmem:[%s7 + $0x218] sm:$0xff]
    %v842 = vld [vmem:[%s7 + $0x220] sm:$0xff]
    %v843 = vld [vmem:[%s7 + $0x228] sm:$0xff]
    %v844 = vld [vmem:[%s7 + $0x230] sm:$0xff]
    %v845 = vld [vmem:[%s7 + $0x238] sm:$0xff]
    %v846 = vld [vmem:[%s7 + $0x240] sm:$0xff]
    %v847 = vld [vmem:[%s7 + $0x248] sm:$0xff]
    %v848 = vld [vmem:[%s7 + $0x250] sm:$0xff]
    %v849 = vld [vmem:[%s7 + $0x258] sm:$0xff]
    %v850 = vld [vmem:[%s7 + $0x260] sm:$0xff]
    %v851 = vld [vmem:[%s7 + $0x268] sm:$0xff]
    %v852 = vld [vmem:[%s7 + $0x270] sm:$0xff]
    %v853 = vld [vmem:[%s7 + $0x278] sm:$0xff]
    %v854 = vld [vmem:[%s7 + $0x280] sm:$0xff]
    %v855 = vld [vmem:[%s7 + $0x288] sm:$0xff]
    %v856 = vld [vmem:[%s7 + $0x290] sm:$0xff]
    %v857 = vld [vmem:[%s7 + $0x298] sm:$0xff]
    %v858 = vld [vmem:[%s7 + $0x2a0] sm:$0xff]
    %v859 = vld [vmem:[%s7 + $0x2a8] sm:$0xff]
    %v860 = vld [vmem:[%s7 + $0x2b0] sm:$0xff]
    %v861 = vld [vmem:[%s7 + $0x2b8] sm:$0xff]
    %v862 = vld [vmem:[%s7 + $0x2c0] sm:$0xff]
    %v863 = vld [vmem:[%s7 + $0x2c8] sm:$0xff]
    %v864 = vld [vmem:[%s7 + $0x2d0] sm:$0xff]
    %v865 = vld [vmem:[%s7 + $0x2d8] sm:$0xff]
    %v866 = vld [vmem:[%s7 + $0x2e0] sm:$0xff]
    %v867 = vld [vmem:[%s7 + $0x2e8] sm:$0xff]
    %v868 = vld [vmem:[%s7 + $0x2f0] sm:$0xff]
    %v869 = vld [vmem:[%s7 + $0x2f8] sm:$0xff]
    %v870 = vld [vmem:[%s7 + $0x300] sm:$0xff]
    %v871 = vld [vmem:[%s7 + $0x308] sm:$0xff]
    %v872 = vld [vmem:[%s7 + $0x310] sm:$0xff]
    %v873 = vld [vmem:[%s7 + $0x318] sm:$0xff]
    %v874 = vld [vmem:[%s7 + $0x320] sm:$0xff]
    %v875 = vld [vmem:[%s7 + $0x328] sm:$0xff]
    %v876 = vld [vmem:[%s7 + $0x330] sm:$0xff]
    %v877 = vld [vmem:[%s7 + $0x338] sm:$0xff]
    %v878 = vld [vmem:[%s7 + $0x340] sm:$0xff]
    %v879 = vld [vmem:[%s7 + $0x348] sm:$0xff]
    %v880 = vld [vmem:[%s7 + $0x350] sm:$0xff]
    %v881 = vld [vmem:[%s7 + $0x358] sm:$0xff]
    %v882 = vld [vmem:[%s7 + $0x360] sm:$0xff]
    %v883 = vld [vmem:[%s7 + $0x368] sm:$0xff]
    %v884 = vld [vmem:[%s7 + $0x370] sm:$0xff]
    %v885 = vld [vmem:[%s7 + $0x378] sm:$0xff]
    %v886 = vld [vmem:[%s7 + $0x380] sm:$0xff]
    %v887 = vld [vmem:[%s7 + $0x388] sm:$0xff]
    %v888 = vld [vmem:[%s7 + $0x390] sm:$0xff]
    %v889 = vld [vmem:[%s7 + $0x398] sm:$0xff]
    %v890 = vld [vmem:[%s7 + $0x3a0] sm:$0xff]
    %v891 = vld [vmem:[%s7 + $0x3a8] sm:$0xff]
    %v892 = vld [vmem:[%s7 + $0x3b0] sm:$0xff]
    %v893 = vld [vmem:[%s7 + $0x3b8] sm:$0xff]
    %v894 = vld [vmem:[%s7 + $0x3c0] sm:$0xff]
    %v895 = vld [vmem:[%s7 + $0x3c8] sm:$0xff]
    %v896 = vld [vmem:[%s7 + $0x3d0] sm:$0xff]
    %v897 = vld [vmem:[%s7 + $0x3d8] sm:$0xff]
    %v898 = vld [vmem:[%s7 + $0x3e0] sm:$0xff]
    %v899 = vld [vmem:[%s7 + $0x3e8] sm:$0xff]
    %v900 = vld [vmem:[%s7 + $0x3f0] sm:$0xff]
    %v901 = vld [vmem:[%s7 + $0x3f8] sm:$0xff]
    %v902 = vld [vmem:[%s8] sm:$0xf]
    %v904 = vlaneseq
    %v905 = vshrl.u32 %v904, 7
    %v906 = vsub.s32 0, %v905
    %v907 = vrot.slane %v902, %v906
    %v908 = vlaneseq
    %v909 = vshrl.u32 %v908, 7
    %v910 = vsub.s32 1, %v909
    %v911 = vrot.slane %v902, %v910
    %v912 = vlaneseq
    %v913 = vshrl.u32 %v912, 7
    %v914 = vsub.s32 2, %v913
    %v915 = vrot.slane %v902, %v914
    %v916 = vlaneseq
    %v917 = vshrl.u32 %v916, 7
    %v918 = vsub.s32 3, %v917
    %v919 = vrot.slane %v902, %v918
    %v1052 = vunpack.c.l.b16 %v774
    %v1053 = vunpack.c.h.b16 %v774
    %v1054 = vunpack.c.l.b16 %v775
    %v1055 = vunpack.c.h.b16 %v775
    %v1056 = vunpack.c.l.b16 %v776
    %v1057 = vunpack.c.h.b16 %v776
    %v1058 = vunpack.c.l.b16 %v777
    %v1059 = vunpack.c.h.b16 %v777
    %v1060 = vunpack.c.l.b16 %v778
    %v1061 = vunpack.c.h.b16 %v778
    %v1062 = vunpack.c.l.b16 %v779
    %v1063 = vunpack.c.h.b16 %v779
    %v1064 = vunpack.c.l.b16 %v780
    %v1065 = vunpack.c.h.b16 %v780
    %v1066 = vunpack.c.l.b16 %v781
    %v1067 = vunpack.c.h.b16 %v781
    %v1068 = vunpack.c.l.b16 %v782
    %v1069 = vunpack.c.h.b16 %v782
    %v1070 = vunpack.c.l.b16 %v783
    %v1071 = vunpack.c.h.b16 %v783
    %v1072 = vunpack.c.l.b16 %v784
    %v1073 = vunpack.c.h.b16 %v784
    %v1074 = vunpack.c.l.b16 %v785
    %v1075 = vunpack.c.h.b16 %v785
    %v1076 = vunpack.c.l.b16 %v786
    %v1077 = vunpack.c.h.b16 %v786
    %v1078 = vunpack.c.l.b16 %v787
    %v1079 = vunpack.c.h.b16 %v787
    %v1080 = vunpack.c.l.b16 %v788
    %v1081 = vunpack.c.h.b16 %v788
    %v1082 = vunpack.c.l.b16 %v789
    %v1083 = vunpack.c.h.b16 %v789
    %v1084 = vunpack.c.l.b16 %v790
    %v1085 = vunpack.c.h.b16 %v790
    %v1086 = vunpack.c.l.b16 %v791
    %v1087 = vunpack.c.h.b16 %v791
    %v1088 = vunpack.c.l.b16 %v792
    %v1089 = vunpack.c.h.b16 %v792
    %v1090 = vunpack.c.l.b16 %v793
    %v1091 = vunpack.c.h.b16 %v793
    %v1092 = vunpack.c.l.b16 %v794
    %v1093 = vunpack.c.h.b16 %v794
    %v1094 = vunpack.c.l.b16 %v795
    %v1095 = vunpack.c.h.b16 %v795
    %v1096 = vunpack.c.l.b16 %v796
    %v1097 = vunpack.c.h.b16 %v796
    %v1098 = vunpack.c.l.b16 %v797
    %v1099 = vunpack.c.h.b16 %v797
    %v1100 = vunpack.c.l.b16 %v798
    %v1101 = vunpack.c.h.b16 %v798
    %v1102 = vunpack.c.l.b16 %v799
    %v1103 = vunpack.c.h.b16 %v799
    %v1104 = vunpack.c.l.b16 %v800
    %v1105 = vunpack.c.h.b16 %v800
    %v1106 = vunpack.c.l.b16 %v801
    %v1107 = vunpack.c.h.b16 %v801
    %v1108 = vunpack.c.l.b16 %v802
    %v1109 = vunpack.c.h.b16 %v802
    %v1110 = vunpack.c.l.b16 %v803
    %v1111 = vunpack.c.h.b16 %v803
    %v1112 = vunpack.c.l.b16 %v804
    %v1113 = vunpack.c.h.b16 %v804
    %v1114 = vunpack.c.l.b16 %v805
    %v1115 = vunpack.c.h.b16 %v805
    %v1116 = vunpack.c.l.b16 %v806
    %v1117 = vunpack.c.h.b16 %v806
    %v1118 = vunpack.c.l.b16 %v807
    %v1119 = vunpack.c.h.b16 %v807
    %v1120 = vunpack.c.l.b16 %v808
    %v1121 = vunpack.c.h.b16 %v808
    %v1122 = vunpack.c.l.b16 %v809
    %v1123 = vunpack.c.h.b16 %v809
    %v1124 = vunpack.c.l.b16 %v810
    %v1125 = vunpack.c.h.b16 %v810
    %v1126 = vunpack.c.l.b16 %v811
    %v1127 = vunpack.c.h.b16 %v811
    %v1128 = vunpack.c.l.b16 %v812
    %v1129 = vunpack.c.h.b16 %v812
    %v1130 = vunpack.c.l.b16 %v813
    %v1131 = vunpack.c.h.b16 %v813
    %v1132 = vunpack.c.l.b16 %v814
    %v1133 = vunpack.c.h.b16 %v814
    %v1134 = vunpack.c.l.b16 %v815
    %v1135 = vunpack.c.h.b16 %v815
    %v1136 = vunpack.c.l.b16 %v816
    %v1137 = vunpack.c.h.b16 %v816
    %v1138 = vunpack.c.l.b16 %v817
    %v1139 = vunpack.c.h.b16 %v817
    %v1140 = vunpack.c.l.b16 %v818
    %v1141 = vunpack.c.h.b16 %v818
    %v1142 = vunpack.c.l.b16 %v819
    %v1143 = vunpack.c.h.b16 %v819
    %v1144 = vunpack.c.l.b16 %v820
    %v1145 = vunpack.c.h.b16 %v820
    %v1146 = vunpack.c.l.b16 %v821
    %v1147 = vunpack.c.h.b16 %v821
    %v1148 = vunpack.c.l.b16 %v822
    %v1149 = vunpack.c.h.b16 %v822
    %v1150 = vunpack.c.l.b16 %v823
    %v1151 = vunpack.c.h.b16 %v823
    %v1152 = vunpack.c.l.b16 %v824
    %v1153 = vunpack.c.h.b16 %v824
    %v1154 = vunpack.c.l.b16 %v825
    %v1155 = vunpack.c.h.b16 %v825
    %v1156 = vunpack.c.l.b16 %v826
    %v1157 = vunpack.c.h.b16 %v826
    %v1158 = vunpack.c.l.b16 %v827
    %v1159 = vunpack.c.h.b16 %v827
    %v1160 = vunpack.c.l.b16 %v828
    %v1161 = vunpack.c.h.b16 %v828
    %v1162 = vunpack.c.l.b16 %v829
    %v1163 = vunpack.c.h.b16 %v829
    %v1164 = vunpack.c.l.b16 %v830
    %v1165 = vunpack.c.h.b16 %v830
    %v1166 = vunpack.c.l.b16 %v831
    %v1167 = vunpack.c.h.b16 %v831
    %v1168 = vunpack.c.l.b16 %v832
    %v1169 = vunpack.c.h.b16 %v832
    %v1170 = vunpack.c.l.b16 %v833
    %v1171 = vunpack.c.h.b16 %v833
    %v1172 = vunpack.c.l.b16 %v834
    %v1173 = vunpack.c.h.b16 %v834
    %v1174 = vunpack.c.l.b16 %v835
    %v1175 = vunpack.c.h.b16 %v835
    %v1176 = vunpack.c.l.b16 %v836
    %v1177 = vunpack.c.h.b16 %v836
    %v1178 = vunpack.c.l.b16 %v837
    %v1179 = vunpack.c.h.b16 %v837
    %v1180 = vunpack.c.l.b16 %v838
    %v1181 = vunpack.c.h.b16 %v838
    %v1182 = vunpack.c.l.b16 %v839
    %v1183 = vunpack.c.h.b16 %v839
    %v1184 = vunpack.c.l.b16 %v840
    %v1185 = vunpack.c.h.b16 %v840
    %v1186 = vunpack.c.l.b16 %v841
    %v1187 = vunpack.c.h.b16 %v841
    %v1188 = vunpack.c.l.b16 %v842
    %v1189 = vunpack.c.h.b16 %v842
    %v1190 = vunpack.c.l.b16 %v843
    %v1191 = vunpack.c.h.b16 %v843
    %v1192 = vunpack.c.l.b16 %v844
    %v1193 = vunpack.c.h.b16 %v844
    %v1194 = vunpack.c.l.b16 %v845
    %v1195 = vunpack.c.h.b16 %v845
    %v1196 = vunpack.c.l.b16 %v846
    %v1197 = vunpack.c.h.b16 %v846
    %v1198 = vunpack.c.l.b16 %v847
    %v1199 = vunpack.c.h.b16 %v847
    %v1200 = vunpack.c.l.b16 %v848
    %v1201 = vunpack.c.h.b16 %v848
    %v1202 = vunpack.c.l.b16 %v849
    %v1203 = vunpack.c.h.b16 %v849
    %v1204 = vunpack.c.l.b16 %v850
    %v1205 = vunpack.c.h.b16 %v850
    %v1206 = vunpack.c.l.b16 %v851
    %v1207 = vunpack.c.h.b16 %v851
    %v1208 = vunpack.c.l.b16 %v852
    %v1209 = vunpack.c.h.b16 %v852
    %v1210 = vunpack.c.l.b16 %v853
    %v1211 = vunpack.c.h.b16 %v853
    %v1212 = vunpack.c.l.b16 %v854
    %v1213 = vunpack.c.h.b16 %v854
    %v1214 = vunpack.c.l.b16 %v855
    %v1215 = vunpack.c.h.b16 %v855
    %v1216 = vunpack.c.l.b16 %v856
    %v1217 = vunpack.c.h.b16 %v856
    %v1218 = vunpack.c.l.b16 %v857
    %v1219 = vunpack.c.h.b16 %v857
    %v1220 = vunpack.c.l.b16 %v858
    %v1221 = vunpack.c.h.b16 %v858
    %v1222 = vunpack.c.l.b16 %v859
    %v1223 = vunpack.c.h.b16 %v859
    %v1224 = vunpack.c.l.b16 %v860
    %v1225 = vunpack.c.h.b16 %v860
    %v1226 = vunpack.c.l.b16 %v861
    %v1227 = vunpack.c.h.b16 %v861
    %v1228 = vunpack.c.l.b16 %v862
    %v1229 = vunpack.c.h.b16 %v862
    %v1230 = vunpack.c.l.b16 %v863
    %v1231 = vunpack.c.h.b16 %v863
    %v1232 = vunpack.c.l.b16 %v864
    %v1233 = vunpack.c.h.b16 %v864
    %v1234 = vunpack.c.l.b16 %v865
    %v1235 = vunpack.c.h.b16 %v865
    %v1236 = vunpack.c.l.b16 %v866
    %v1237 = vunpack.c.h.b16 %v866
    %v1238 = vunpack.c.l.b16 %v867
    %v1239 = vunpack.c.h.b16 %v867
    %v1240 = vunpack.c.l.b16 %v868
    %v1241 = vunpack.c.h.b16 %v868
    %v1242 = vunpack.c.l.b16 %v869
    %v1243 = vunpack.c.h.b16 %v869
    %v1244 = vunpack.c.l.b16 %v870
    %v1245 = vunpack.c.h.b16 %v870
    %v1246 = vunpack.c.l.b16 %v871
    %v1247 = vunpack.c.h.b16 %v871
    %v1248 = vunpack.c.l.b16 %v872
    %v1249 = vunpack.c.h.b16 %v872
    %v1250 = vunpack.c.l.b16 %v873
    %v1251 = vunpack.c.h.b16 %v873
    %v1252 = vunpack.c.l.b16 %v874
    %v1253 = vunpack.c.h.b16 %v874
    %v1254 = vunpack.c.l.b16 %v875
    %v1255 = vunpack.c.h.b16 %v875
    %v1256 = vunpack.c.l.b16 %v876
    %v1257 = vunpack.c.h.b16 %v876
    %v1258 = vunpack.c.l.b16 %v877
    %v1259 = vunpack.c.h.b16 %v877
    %v1260 = vunpack.c.l.b16 %v878
    %v1261 = vunpack.c.h.b16 %v878
    %v1262 = vunpack.c.l.b16 %v879
    %v1263 = vunpack.c.h.b16 %v879
    %v1264 = vunpack.c.l.b16 %v880
    %v1265 = vunpack.c.h.b16 %v880
    %v1266 = vunpack.c.l.b16 %v881
    %v1267 = vunpack.c.h.b16 %v881
    %v1268 = vunpack.c.l.b16 %v882
    %v1269 = vunpack.c.h.b16 %v882
    %v1270 = vunpack.c.l.b16 %v883
    %v1271 = vunpack.c.h.b16 %v883
    %v1272 = vunpack.c.l.b16 %v884
    %v1273 = vunpack.c.h.b16 %v884
    %v1274 = vunpack.c.l.b16 %v885
    %v1275 = vunpack.c.h.b16 %v885
    %v1276 = vunpack.c.l.b16 %v886
    %v1277 = vunpack.c.h.b16 %v886
    %v1278 = vunpack.c.l.b16 %v887
    %v1279 = vunpack.c.h.b16 %v887
    %v1280 = vunpack.c.l.b16 %v888
    %v1281 = vunpack.c.h.b16 %v888
    %v1282 = vunpack.c.l.b16 %v889
    %v1283 = vunpack.c.h.b16 %v889
    %v1284 = vunpack.c.l.b16 %v890
    %v1285 = vunpack.c.h.b16 %v890
    %v1286 = vunpack.c.l.b16 %v891
    %v1287 = vunpack.c.h.b16 %v891
    %v1288 = vunpack.c.l.b16 %v892
    %v1289 = vunpack.c.h.b16 %v892
    %v1290 = vunpack.c.l.b16 %v893
    %v1291 = vunpack.c.h.b16 %v893
    %v1292 = vunpack.c.l.b16 %v894
    %v1293 = vunpack.c.h.b16 %v894
    %v1294 = vunpack.c.l.b16 %v895
    %v1295 = vunpack.c.h.b16 %v895
    %v1296 = vunpack.c.l.b16 %v896
    %v1297 = vunpack.c.h.b16 %v896
    %v1298 = vunpack.c.l.b16 %v897
    %v1299 = vunpack.c.h.b16 %v897
    %v1300 = vunpack.c.l.b16 %v898
    %v1301 = vunpack.c.h.b16 %v898
    %v1302 = vunpack.c.l.b16 %v899
    %v1303 = vunpack.c.h.b16 %v899
    %v1304 = vunpack.c.l.b16 %v900
    %v1305 = vunpack.c.h.b16 %v900
    %v1306 = vunpack.c.l.b16 %v901
    %v1307 = vunpack.c.h.b16 %v901
    %v1308 = vpack.c.b16 %v1056, %v1052
    %v1309 = vpack.c.b16 %v1057, %v1053
    %v1310 = vpack.c.b16 %v1058, %v1054
    %v1311 = vpack.c.b16 %v1059, %v1055
    %v1312 = vpack.c.b16 %v1064, %v1060
    %v1313 = vpack.c.b16 %v1065, %v1061
    %v1314 = vpack.c.b16 %v1066, %v1062
    %v1315 = vpack.c.b16 %v1067, %v1063
    %v1316 = vpack.c.b16 %v1072, %v1068
    %v1317 = vpack.c.b16 %v1073, %v1069
    %v1318 = vpack.c.b16 %v1074, %v1070
    %v1319 = vpack.c.b16 %v1075, %v1071
    %v1320 = vpack.c.b16 %v1080, %v1076
    %v1321 = vpack.c.b16 %v1081, %v1077
    %v1322 = vpack.c.b16 %v1082, %v1078
    %v1323 = vpack.c.b16 %v1083, %v1079
    %v1324 = vpack.c.b16 %v1088, %v1084
    %v1325 = vpack.c.b16 %v1089, %v1085
    %v1326 = vpack.c.b16 %v1090, %v1086
    %v1327 = vpack.c.b16 %v1091, %v1087
    %v1328 = vpack.c.b16 %v1096, %v1092
    %v1329 = vpack.c.b16 %v1097, %v1093
    %v1330 = vpack.c.b16 %v1098, %v1094
    %v1331 = vpack.c.b16 %v1099, %v1095
    %v1332 = vpack.c.b16 %v1104, %v1100
    %v1333 = vpack.c.b16 %v1105, %v1101
    %v1334 = vpack.c.b16 %v1106, %v1102
    %v1335 = vpack.c.b16 %v1107, %v1103
    %v1336 = vpack.c.b16 %v1112, %v1108
    %v1337 = vpack.c.b16 %v1113, %v1109
    %v1338 = vpack.c.b16 %v1114, %v1110
    %v1339 = vpack.c.b16 %v1115, %v1111
    %v1340 = vpack.c.b16 %v1120, %v1116
    %v1341 = vpack.c.b16 %v1121, %v1117
    %v1342 = vpack.c.b16 %v1122, %v1118
    %v1343 = vpack.c.b16 %v1123, %v1119
    %v1344 = vpack.c.b16 %v1128, %v1124
    %v1345 = vpack.c.b16 %v1129, %v1125
    %v1346 = vpack.c.b16 %v1130, %v1126
    %v1347 = vpack.c.b16 %v1131, %v1127
    %v1348 = vpack.c.b16 %v1136, %v1132
    %v1349 = vpack.c.b16 %v1137, %v1133
    %v1350 = vpack.c.b16 %v1138, %v1134
    %v1351 = vpack.c.b16 %v1139, %v1135
    %v1352 = vpack.c.b16 %v1144, %v1140
    %v1353 = vpack.c.b16 %v1145, %v1141
    %v1354 = vpack.c.b16 %v1146, %v1142
    %v1355 = vpack.c.b16 %v1147, %v1143
    %v1356 = vpack.c.b16 %v1152, %v1148
    %v1357 = vpack.c.b16 %v1153, %v1149
    %v1358 = vpack.c.b16 %v1154, %v1150
    %v1359 = vpack.c.b16 %v1155, %v1151
    %v1360 = vpack.c.b16 %v1160, %v1156
    %v1361 = vpack.c.b16 %v1161, %v1157
    %v1362 = vpack.c.b16 %v1162, %v1158
    %v1363 = vpack.c.b16 %v1163, %v1159
    %v1364 = vpack.c.b16 %v1168, %v1164
    %v1365 = vpack.c.b16 %v1169, %v1165
    %v1366 = vpack.c.b16 %v1170, %v1166
    %v1367 = vpack.c.b16 %v1171, %v1167
    %v1368 = vpack.c.b16 %v1176, %v1172
    %v1369 = vpack.c.b16 %v1177, %v1173
    %v1370 = vpack.c.b16 %v1178, %v1174
    %v1371 = vpack.c.b16 %v1179, %v1175
    %v1372 = vpack.c.b16 %v1184, %v1180
    %v1373 = vpack.c.b16 %v1185, %v1181
    %v1374 = vpack.c.b16 %v1186, %v1182
    %v1375 = vpack.c.b16 %v1187, %v1183
    %v1376 = vpack.c.b16 %v1192, %v1188
    %v1377 = vpack.c.b16 %v1193, %v1189
    %v1378 = vpack.c.b16 %v1194, %v1190
    %v1379 = vpack.c.b16 %v1195, %v1191
    %v1380 = vpack.c.b16 %v1200, %v1196
    %v1381 = vpack.c.b16 %v1201, %v1197
    %v1382 = vpack.c.b16 %v1202, %v1198
    %v1383 = vpack.c.b16 %v1203, %v1199
    %v1384 = vpack.c.b16 %v1208, %v1204
    %v1385 = vpack.c.b16 %v1209, %v1205
    %v1386 = vpack.c.b16 %v1210, %v1206
    %v1387 = vpack.c.b16 %v1211, %v1207
    %v1388 = vpack.c.b16 %v1216, %v1212
    %v1389 = vpack.c.b16 %v1217, %v1213
    %v1390 = vpack.c.b16 %v1218, %v1214
    %v1391 = vpack.c.b16 %v1219, %v1215
    %v1392 = vpack.c.b16 %v1224, %v1220
    %v1393 = vpack.c.b16 %v1225, %v1221
    %v1394 = vpack.c.b16 %v1226, %v1222
    %v1395 = vpack.c.b16 %v1227, %v1223
    %v1396 = vpack.c.b16 %v1232, %v1228
    %v1397 = vpack.c.b16 %v1233, %v1229
    %v1398 = vpack.c.b16 %v1234, %v1230
    %v1399 = vpack.c.b16 %v1235, %v1231
    %v1400 = vpack.c.b16 %v1240, %v1236
    %v1401 = vpack.c.b16 %v1241, %v1237
    %v1402 = vpack.c.b16 %v1242, %v1238
    %v1403 = vpack.c.b16 %v1243, %v1239
    %v1404 = vpack.c.b16 %v1248, %v1244
    %v1405 = vpack.c.b16 %v1249, %v1245
    %v1406 = vpack.c.b16 %v1250, %v1246
    %v1407 = vpack.c.b16 %v1251, %v1247
    %v1408 = vpack.c.b16 %v1256, %v1252
    %v1409 = vpack.c.b16 %v1257, %v1253
    %v1410 = vpack.c.b16 %v1258, %v1254
    %v1411 = vpack.c.b16 %v1259, %v1255
    %v1412 = vpack.c.b16 %v1264, %v1260
    %v1413 = vpack.c.b16 %v1265, %v1261
    %v1414 = vpack.c.b16 %v1266, %v1262
    %v1415 = vpack.c.b16 %v1267, %v1263
    %v1416 = vpack.c.b16 %v1272, %v1268
    %v1417 = vpack.c.b16 %v1273, %v1269
    %v1418 = vpack.c.b16 %v1274, %v1270
    %v1419 = vpack.c.b16 %v1275, %v1271
    %v1420 = vpack.c.b16 %v1280, %v1276
    %v1421 = vpack.c.b16 %v1281, %v1277
    %v1422 = vpack.c.b16 %v1282, %v1278
    %v1423 = vpack.c.b16 %v1283, %v1279
    %v1424 = vpack.c.b16 %v1288, %v1284
    %v1425 = vpack.c.b16 %v1289, %v1285
    %v1426 = vpack.c.b16 %v1290, %v1286
    %v1427 = vpack.c.b16 %v1291, %v1287
    %v1428 = vpack.c.b16 %v1296, %v1292
    %v1429 = vpack.c.b16 %v1297, %v1293
    %v1430 = vpack.c.b16 %v1298, %v1294
    %v1431 = vpack.c.b16 %v1299, %v1295
    %v1432 = vpack.c.b16 %v1304, %v1300
    %v1433 = vpack.c.b16 %v1305, %v1301
    %v1434 = vpack.c.b16 %v1306, %v1302
    %v1435 = vpack.c.b16 %v1307, %v1303
    %1564 = vmatprep.subr.bf16.mxu0 %v1309
    %1565 = vmatpush1.bf16.msra.mxu0 %v1308
    %1566 = vmatprep.subr.bf16.mxu0 %v1313
    %1567 = vmatpush1.bf16.msra.mxu0 %v1312
    %1568 = vmatprep.subr.bf16.mxu0 %v1317
    %1569 = vmatpush1.bf16.msra.mxu0 %v1316
    %1570 = vmatprep.subr.bf16.mxu0 %v1321
    %1571 = vmatpush1.bf16.msra.mxu0 %v1320
    %1572 = vmatprep.subr.bf16.mxu0 %v1325
    %1573 = vmatpush1.bf16.msra.mxu0 %v1324
    %1574 = vmatprep.subr.bf16.mxu0 %v1329
    %1575 = vmatpush1.bf16.msra.mxu0 %v1328
    %1576 = vmatprep.subr.bf16.mxu0 %v1333
    %1577 = vmatpush1.bf16.msra.mxu0 %v1332
    %1578 = vmatprep.subr.bf16.mxu0 %v1337
    %1579 = vmatpush1.bf16.msra.mxu0 %v1336
    %1580 = vmatprep.subr.bf16.mxu0 %v1341
    %1581 = vmatpush1.bf16.msra.mxu0 %v1340
    %1582 = vmatprep.subr.bf16.mxu0 %v1345
    %1583 = vmatpush1.bf16.msra.mxu0 %v1344
    %1584 = vmatprep.subr.bf16.mxu0 %v1349
    %1585 = vmatpush1.bf16.msra.mxu0 %v1348
    %1586 = vmatprep.subr.bf16.mxu0 %v1353
    %1587 = vmatpush1.bf16.msra.mxu0 %v1352
    %1588 = vmatprep.subr.bf16.mxu0 %v1357
    %1589 = vmatpush1.bf16.msra.mxu0 %v1356
    %1590 = vmatprep.subr.bf16.mxu0 %v1361
    %1591 = vmatpush1.bf16.msra.mxu0 %v1360
    %1592 = vmatprep.subr.bf16.mxu0 %v1365
    %1593 = vmatpush1.bf16.msra.mxu0 %v1364
    %1594 = vmatprep.subr.bf16.mxu0 %v1369
    %1595 = vmatpush1.bf16.msra.mxu0 %v1368
    %1596 = vmatprep.mubr.bf16.mxu0 %v142
    %1597 = vmatmul.mubr.bf16.gmra.mrb[0].mxu0 %v141
    %v1598 = vpop.f32.mrb[0].mxu0
    %v1599 = vadd.f32 %v907, %v1598
    %v1600 = vpop.f32.mrb[0].mxu0
    %v1601 = vadd.f32 %v911, %v1600
    %v1602 = vpop.f32.mrb[0].mxu0
    %v1603 = vpop.f32.mrb[0].mxu0
    %1604 = vdwg.mxu0
    %1605 = vmatprep.subr.bf16.mxu0 %v1373
    %1606 = vmatpush1.bf16.msra.mxu0 %v1372
    %1607 = vmatprep.subr.bf16.mxu0 %v1377
    %1608 = vmatpush1.bf16.msra.mxu0 %v1376
    %1609 = vmatprep.subr.bf16.mxu0 %v1381
    %1610 = vmatpush1.bf16.msra.mxu0 %v1380
    %1611 = vmatprep.subr.bf16.mxu0 %v1385
    %1612 = vmatpush1.bf16.msra.mxu0 %v1384
    %1613 = vmatprep.subr.bf16.mxu0 %v1389
    %1614 = vmatpush1.bf16.msra.mxu0 %v1388
    %1615 = vmatprep.subr.bf16.mxu0 %v1393
    %1616 = vmatpush1.bf16.msra.mxu0 %v1392
    %1617 = vmatprep.subr.bf16.mxu0 %v1397
    %1618 = vmatpush1.bf16.msra.mxu0 %v1396
    %1619 = vmatprep.subr.bf16.mxu0 %v1401
    %1620 = vmatpush1.bf16.msra.mxu0 %v1400
    %1621 = vmatprep.subr.bf16.mxu0 %v1405
    %1622 = vmatpush1.bf16.msra.mxu0 %v1404
    %1623 = vmatprep.subr.bf16.mxu0 %v1409
    %1624 = vmatpush1.bf16.msra.mxu0 %v1408
    %1625 = vmatprep.subr.bf16.mxu0 %v1413
    %1626 = vmatpush1.bf16.msra.mxu0 %v1412
    %1627 = vmatprep.subr.bf16.mxu0 %v1417
    %1628 = vmatpush1.bf16.msra.mxu0 %v1416
    %1629 = vmatprep.subr.bf16.mxu0 %v1421
    %1630 = vmatpush1.bf16.msra.mxu0 %v1420
    %1631 = vmatprep.subr.bf16.mxu0 %v1425
    %1632 = vmatpush1.bf16.msra.mxu0 %v1424
    %1633 = vmatprep.subr.bf16.mxu0 %v1429
    %1634 = vmatpush1.bf16.msra.mxu0 %v1428
    %1635 = vmatprep.subr.bf16.mxu0 %v1433
    %1636 = vmatpush1.bf16.msra.mxu0 %v1432
    %1637 = vmatprep.mubr.bf16.mxu0 %v144
    %1638 = vmatmul.mubr.bf16.gmra.mrb[0].mxu0 %v143
    %v1639 = vpop.f32.mrb[0].mxu0
    %v1640 = vadd.f32 %v1599, %v1639
    %v1641 = vpop.f32.mrb[0].mxu0
    %v1642 = vadd.f32 %v1601, %v1641
    %v1643 = vpop.f32.mrb[0].mxu0
    %v1644 = vpop.f32.mrb[0].mxu0
    %1645 = vdwg.mxu0
    %1646 = vmatprep.subr.bf16.mxu0 %v1311
    %1647 = vmatpush1.bf16.msra.mxu0 %v1310
    %1648 = vmatprep.subr.bf16.mxu0 %v1315
    %1649 = vmatpush1.bf16.msra.mxu0 %v1314
    %1650 = vmatprep.subr.bf16.mxu0 %v1319
    %1651 = vmatpush1.bf16.msra.mxu0 %v1318
    %1652 = vmatprep.subr.bf16.mxu0 %v1323
    %1653 = vmatpush1.bf16.msra.mxu0 %v1322
    %1654 = vmatprep.subr.bf16.mxu0 %v1327
    %1655 = vmatpush1.bf16.msra.mxu0 %v1326
    %1656 = vmatprep.subr.bf16.mxu0 %v1331
    %1657 = vmatpush1.bf16.msra.mxu0 %v1330
    %1658 = vmatprep.subr.bf16.mxu0 %v1335
    %1659 = vmatpush1.bf16.msra.mxu0 %v1334
    %1660 = vmatprep.subr.bf16.mxu0 %v1339
    %1661 = vmatpush1.bf16.msra.mxu0 %v1338
    %1662 = vmatprep.subr.bf16.mxu0 %v1343
    %1663 = vmatpush1.bf16.msra.mxu0 %v1342
    %1664 = vmatprep.subr.bf16.mxu0 %v1347
    %1665 = vmatpush1.bf16.msra.mxu0 %v1346
    %1666 = vmatprep.subr.bf16.mxu0 %v1351
    %1667 = vmatpush1.bf16.msra.mxu0 %v1350
    %1668 = vmatprep.subr.bf16.mxu0 %v1355
    %1669 = vmatpush1.bf16.msra.mxu0 %v1354
    %1670 = vmatprep.subr.bf16.mxu0 %v1359
    %1671 = vmatpush1.bf16.msra.mxu0 %v1358
    %1672 = vmatprep.subr.bf16.mxu0 %v1363
    %1673 = vmatpush1.bf16.msra.mxu0 %v1362
    %1674 = vmatprep.subr.bf16.mxu0 %v1367
    %1675 = vmatpush1.bf16.msra.mxu0 %v1366
    %1676 = vmatprep.subr.bf16.mxu0 %v1371
    %1677 = vmatpush1.bf16.msra.mxu0 %v1370
    %1678 = vmatprep.mubr.bf16.mxu0 %v142
    %1679 = vmatmul.mubr.bf16.gmra.mrb[0].mxu0 %v141
    %v1680 = vpop.f32.mrb[0].mxu0
    %v1681 = vadd.f32 %v915, %v1680
    %v1682 = vpop.f32.mrb[0].mxu0
    %v1683 = vadd.f32 %v919, %v1682
    %v1684 = vpop.f32.mrb[0].mxu0
    %v1685 = vpop.f32.mrb[0].mxu0
    %1686 = vdwg.mxu0
    %1687 = vmatprep.subr.bf16.mxu0 %v1375
    %1688 = vmatpush1.bf16.msra.mxu0 %v1374
    %1689 = vmatprep.subr.bf16.mxu0 %v1379
    %1690 = vmatpush1.bf16.msra.mxu0 %v1378
    %1691 = vmatprep.subr.bf16.mxu0 %v1383
    %1692 = vmatpush1.bf16.msra.mxu0 %v1382
    %1693 = vmatprep.subr.bf16.mxu0 %v1387
    %1694 = vmatpush1.bf16.msra.mxu0 %v1386
    %1695 = vmatprep.subr.bf16.mxu0 %v1391
    %1696 = vmatpush1.bf16.msra.mxu0 %v1390
    %1697 = vmatprep.subr.bf16.mxu0 %v1395
    %1698 = vmatpush1.bf16.msra.mxu0 %v1394
    %1699 = vmatprep.subr.bf16.mxu0 %v1399
    %1700 = vmatpush1.bf16.msra.mxu0 %v1398
    %1701 = vmatprep.subr.bf16.mxu0 %v1403
    %1702 = vmatpush1.bf16.msra.mxu0 %v1402
    %1703 = vmatprep.subr.bf16.mxu0 %v1407
    %1704 = vmatpush1.bf16.msra.mxu0 %v1406
    %1705 = vmatprep.subr.bf16.mxu0 %v1411
    %1706 = vmatpush1.bf16.msra.mxu0 %v1410
    %1707 = vmatprep.subr.bf16.mxu0 %v1415
    %1708 = vmatpush1.bf16.msra.mxu0 %v1414
    %1709 = vmatprep.subr.bf16.mxu0 %v1419
    %1710 = vmatpush1.bf16.msra.mxu0 %v1418
    %1711 = vmatprep.subr.bf16.mxu0 %v1423
    %1712 = vmatpush1.bf16.msra.mxu0 %v1422
    %1713 = vmatprep.subr.bf16.mxu0 %v1427
    %1714 = vmatpush1.bf16.msra.mxu0 %v1426
    %1715 = vmatprep.subr.bf16.mxu0 %v1431
    %1716 = vmatpush1.bf16.msra.mxu0 %v1430
    %1717 = vmatprep.subr.bf16.mxu0 %v1435
    %1718 = vmatpush1.bf16.msra.mxu0 %v1434
    %1719 = vmatprep.mubr.bf16.mxu0 %v144
    %1720 = vmatmul.mubr.bf16.gmra.mrb[0].mxu0 %v143
    %v1721 = vpop.f32.mrb[0].mxu0
    %v1722 = vadd.f32 %v1681, %v1721
    %v1723 = vpop.f32.mrb[0].mxu0
    %v1724 = vadd.f32 %v1683, %v1723
    %v1725 = vpop.f32.mrb[0].mxu0
    %v1726 = vpop.f32.mrb[0].mxu0
    %1727 = vdwg.mxu0
    %vm1728 = vcmp.gt.f32.partialorder %v1640, 0.0
    %vm1729 = vcmp.gt.f32.partialorder %v1642, 0.0
    %vm1730 = vcmp.gt.f32.partialorder %v1722, 0.0
    %vm1731 = vcmp.gt.f32.partialorder %v1724, 0.0
    %v1732 = vmin.f32 %v1640, 0.0
    %v1733 = vmin.f32 %v1642, 0.0
    %v1734 = vmin.f32 %v1722, 0.0
    %v1735 = vmin.f32 %v1724, 0.0
    %v1736 = vmul.f32 %v1732, 1.442695
    %v1737 = vpow.pop %v1736
    %v1738 = vmul.f32 %v1733, 1.442695
    %v1739 = vpow.pop %v1738
    %v1740 = vmul.f32 %v1734, 1.442695
    %v1741 = vpow.pop %v1740
    %v1742 = vmul.f32 %v1735, 1.442695
    %v1743 = vpow.pop %v1742
    %v1744 = vsub.f32 %v1737, 1.0
    %v1745 = vsub.f32 %v1739, 1.0
    %v1746 = vsub.f32 %v1741, 1.0
    %v1747 = vsub.f32 %v1743, 1.0
    %v1748 = vsel %vm1728, %v1640, %v1744
    %v1749 = vsel %vm1729, %v1642, %v1745
    %v1750 = vsel %vm1730, %v1722, %v1746
    %v1751 = vsel %vm1731, %v1724, %v1747
    %vm1752 = vcmask 1024
    %v1753 = vsel %vm1752, %v773, -inf
    %v1754 = vrot.slane %v1753, 4
    %v1755 = vmax.f32 %v1753, %v1754
    %v1756 = vrot.slane %v1755, 2
    %v1757 = vmax.f32 %v1755, %v1756
    %v1758 = vrot.slane %v1757, 1
    %v1759 = vmax.f32 %v1757, %v1758
    %v1760 = vsub.f32 %v773, %v1759
    %v1761 = vmul.f32 %v1760, 1.442695
    %v1762 = vpow.pop %v1761
    %v1763 = vsel %vm1752, %v1762, 0.0
    %v1764 = vrot.slane %v1763, 4
    %v1765 = vadd.f32 %v1763, %v1764
    %v1766 = vrot.slane %v1765, 2
    %v1767 = vadd.f32 %v1765, %v1766
    %v1768 = vrot.slane %v1767, 1
    %v1769 = vadd.f32 %v1767, %v1768
    %v1770 = vrcp.pop %v1769
    %v1771 = vmul.f32 %v1762, %v1770
    %1773 = vset.pattern.permute.xlu0 0
    %1774 = vperm.xlu0 %1773, %v1771
    %v1775 = vpop.permute.xlu0 %1774
    %v1777 = vmul.f32 %v1775, %v1748
    %v1778 = vmul.f32 %v1775, %v1749
    %v1779 = vmul.f32 %v1775, %v1750
    %v1780 = vmul.f32 %v1775, %v1751
    %v1781 = vsel %vm762, %v1777, 0.0
    %v1782 = vrot.slane %v1781, 4
    %v1783 = vadd.f32 %v1781, %v1782
    %v1784 = vrot.slane %v1783, 2
    %v1785 = vadd.f32 %v1783, %v1784
    %v1786 = vrot.slane %v1785, 1
    %v1787 = vadd.f32 %v1785, %v1786
    %v1788 = vsel %vm762, %v1778, 0.0
    %v1789 = vrot.slane %v1788, 4
    %v1790 = vadd.f32 %v1788, %v1789
    %v1791 = vrot.slane %v1790, 2
    %v1792 = vadd.f32 %v1790, %v1791
    %v1793 = vrot.slane %v1792, 1
    %v1794 = vadd.f32 %v1792, %v1793
    %v1795 = vsel %vm762, %v1779, 0.0
    %v1796 = vrot.slane %v1795, 4
    %v1797 = vadd.f32 %v1795, %v1796
    %v1798 = vrot.slane %v1797, 2
    %v1799 = vadd.f32 %v1797, %v1798
    %v1800 = vrot.slane %v1799, 1
    %v1801 = vadd.f32 %v1799, %v1800
    %v1802 = vsel %vm762, %v1780, 0.0
    %v1803 = vrot.slane %v1802, 4
    %v1804 = vadd.f32 %v1802, %v1803
    %v1805 = vrot.slane %v1804, 2
    %v1806 = vadd.f32 %v1804, %v1805
    %v1807 = vrot.slane %v1806, 1
    %v1808 = vadd.f32 %v1806, %v1807
    %v1813 = vcombine.low %v1787, %v1794
    %v1814 = vcombine.low %v1801, %v1808
    %v1816 = vunpack.c.l.s4 1966171168
    %v1817 = vunpack.c.0.s8 %v1816
    %v1818 = vlaneseq
    %v1819 = vshrl.u32 %v1818, 7
    %v1820 = vsub.s32 %v1817, %v1819
    %v1821 = vrot.slane %v1813, %v1820
    %v1823 = vunpack.c.l.s4 1966171168
    %v1824 = vunpack.c.0.s8 %v1823
    %v1825 = vlaneseq
    %v1826 = vshrl.u32 %v1825, 7
    %v1827 = vsub.s32 %v1824, %v1826
    %v1828 = vrot.slane %v1814, %v1827
    %v1829 = vcombine.low %v1821, %v1828
    %v1831 = vunpack.c.l.s4 1966171168
    %v1832 = vunpack.c.0.s8 %v1831
    %v1833 = vlaneseq
    %v1834 = vshrl.u32 %v1833, 7
    %v1835 = vsub.s32 %v1832, %v1834
    %v1836 = vrot.slane %v1829, %v1835
    %v1838 = vlaneseq
    %vm1839 = vcmp.ge.s32.totalorder %v1838, 0
    %vm1840 = vcmp.lt.s32.totalorder %v1838, 512
    %vm1841 = vmand %vm1839, %vm1840
    %1842 = vst.msk [vmem:[#allocation2] ss:$2 sm:$0xf] %vm1841, %v1836
    %s1843 = scalar_lea.vmem %s0, 8
    %v1844 = vld [vmem:[%s1843] sm:$0xff]
    %v1845 = vld [vmem:[%s1] sm:$0xff]
    %v1846 = vld [vmem:[%s1 + $0x8] sm:$0xff]
    %v1847 = vld [vmem:[%s1 + $0x10] sm:$0xff]
    %v1848 = vld [vmem:[%s1 + $0x18] sm:$0xff]
    %v1849 = vld [vmem:[%s1 + $0x20] sm:$0xff]
    %v1850 = vld [vmem:[%s1 + $0x28] sm:$0xff]
    %v1851 = vld [vmem:[%s1 + $0x30] sm:$0xff]
    %v1852 = vld [vmem:[%s1 + $0x38] sm:$0xff]
    %v1853 = vld [vmem:[%s1 + $0x40] sm:$0xff]
    %v1854 = vld [vmem:[%s1 + $0x48] sm:$0xff]
    %v1855 = vld [vmem:[%s1 + $0x50] sm:$0xff]
    %v1856 = vld [vmem:[%s1 + $0x58] sm:$0xff]
    %v1857 = vld [vmem:[%s1 + $0x60] sm:$0xff]
    %v1858 = vld [vmem:[%s1 + $0x68] sm:$0xff]
    %v1859 = vld [vmem:[%s1 + $0x70] sm:$0xff]
    %v1860 = vld [vmem:[%s1 + $0x78] sm:$0xff]
    %v1861 = vld [vmem:[%s1 + $0x80] sm:$0xff]
    %v1862 = vld [vmem:[%s1 + $0x88] sm:$0xff]
    %v1863 = vld [vmem:[%s1 + $0x90] sm:$0xff]
    %v1864 = vld [vmem:[%s1 + $0x98] sm:$0xff]
    %v1865 = vld [vmem:[%s1 + $0xa0] sm:$0xff]
    %v1866 = vld [vmem:[%s1 + $0xa8] sm:$0xff]
    %v1867 = vld [vmem:[%s1 + $0xb0] sm:$0xff]
    %v1868 = vld [vmem:[%s1 + $0xb8] sm:$0xff]
    %v1869 = vld [vmem:[%s1 + $0xc0] sm:$0xff]
    %v1870 = vld [vmem:[%s1 + $0xc8] sm:$0xff]
    %v1871 = vld [vmem:[%s1 + $0xd0] sm:$0xff]
    %v1872 = vld [vmem:[%s1 + $0xd8] sm:$0xff]
    %v1873 = vld [vmem:[%s1 + $0xe0] sm:$0xff]
    %v1874 = vld [vmem:[%s1 + $0xe8] sm:$0xff]
    %v1875 = vld [vmem:[%s1 + $0xf0] sm:$0xff]
    %v1876 = vld [vmem:[%s1 + $0xf8] sm:$0xff]
    %v1877 = vld [vmem:[%s1 + $0x100] sm:$0xff]
    %v1878 = vld [vmem:[%s1 + $0x108] sm:$0xff]
    %v1879 = vld [vmem:[%s1 + $0x110] sm:$0xff]
    %v1880 = vld [vmem:[%s1 + $0x118] sm:$0xff]
    %v1881 = vld [vmem:[%s1 + $0x120] sm:$0xff]
    %v1882 = vld [vmem:[%s1 + $0x128] sm:$0xff]
    %v1883 = vld [vmem:[%s1 + $0x130] sm:$0xff]
    %v1884 = vld [vmem:[%s1 + $0x138] sm:$0xff]
    %v1885 = vld [vmem:[%s1 + $0x140] sm:$0xff]
    %v1886 = vld [vmem:[%s1 + $0x148] sm:$0xff]
    %v1887 = vld [vmem:[%s1 + $0x150] sm:$0xff]
    %v1888 = vld [vmem:[%s1 + $0x158] sm:$0xff]
    %v1889 = vld [vmem:[%s1 + $0x160] sm:$0xff]
    %v1890 = vld [vmem:[%s1 + $0x168] sm:$0xff]
    %v1891 = vld [vmem:[%s1 + $0x170] sm:$0xff]
    %v1892 = vld [vmem:[%s1 + $0x178] sm:$0xff]
    %v1893 = vld [vmem:[%s1 + $0x180] sm:$0xff]
    %v1894 = vld [vmem:[%s1 + $0x188] sm:$0xff]
    %v1895 = vld [vmem:[%s1 + $0x190] sm:$0xff]
    %v1896 = vld [vmem:[%s1 + $0x198] sm:$0xff]
    %v1897 = vld [vmem:[%s1 + $0x1a0] sm:$0xff]
    %v1898 = vld [vmem:[%s1 + $0x1a8] sm:$0xff]
    %v1899 = vld [vmem:[%s1 + $0x1b0] sm:$0xff]
    %v1900 = vld [vmem:[%s1 + $0x1b8] sm:$0xff]
    %v1901 = vld [vmem:[%s1 + $0x1c0] sm:$0xff]
    %v1902 = vld [vmem:[%s1 + $0x1c8] sm:$0xff]
    %v1903 = vld [vmem:[%s1 + $0x1d0] sm:$0xff]
    %v1904 = vld [vmem:[%s1 + $0x1d8] sm:$0xff]
    %v1905 = vld [vmem:[%s1 + $0x1e0] sm:$0xff]
    %v1906 = vld [vmem:[%s1 + $0x1e8] sm:$0xff]
    %v1907 = vld [vmem:[%s1 + $0x1f0] sm:$0xff]
    %v1908 = vld [vmem:[%s1 + $0x1f8] sm:$0xff]
    %v1910 = vcombine.high %v1844, %v1844
    %v1912 = vunpack.c.l.s4 1983009808
    %v1913 = vunpack.c.0.s8 %v1912
    %v1914 = vlaneseq
    %v1915 = vshrl.u32 %v1914, 7
    %v1916 = vsub.s32 %v1913, %v1915
    %v1917 = vrot.slane %v1844, %v1916
    %v1919 = vunpack.c.l.s4 1983009808
    %v1920 = vunpack.c.0.s8 %v1919
    %v1921 = vlaneseq
    %v1922 = vshrl.u32 %v1921, 7
    %v1923 = vsub.s32 %v1920, %v1922
    %v1924 = vrot.slane %v1910, %v1923
    %v1925 = vcombine.high %v1917, %v1917
    %v1926 = vcombine.high %v1924, %v1924
    %v1931 = vpack.c.bf16 %v1917, %v1917
    %v1932 = vpack.c.bf16 %v1925, %v1925
    %v1933 = vpack.c.bf16 %v1924, %v1924
    %v1934 = vpack.c.bf16 %v1926, %v1926
    %v1935 = vld [vmem:[%s2] sm:$0x3]
    %v1937 = vlaneseq
    %v1938 = vshrl.u32 %v1937, 7
    %v1939 = vsub.s32 0, %v1938
    %v1940 = vrot.slane %v1935, %v1939
    %v1941 = vlaneseq
    %v1942 = vshrl.u32 %v1941, 7
    %v1943 = vsub.s32 1, %v1942
    %v1944 = vrot.slane %v1935, %v1943
    %v2011 = vunpack.c.l.b16 %v1845
    %v2012 = vunpack.c.h.b16 %v1845
    %v2013 = vunpack.c.l.b16 %v1846
    %v2014 = vunpack.c.h.b16 %v1846
    %v2015 = vunpack.c.l.b16 %v1847
    %v2016 = vunpack.c.h.b16 %v1847
    %v2017 = vunpack.c.l.b16 %v1848
    %v2018 = vunpack.c.h.b16 %v1848
    %v2019 = vunpack.c.l.b16 %v1849
    %v2020 = vunpack.c.h.b16 %v1849
    %v2021 = vunpack.c.l.b16 %v1850
    %v2022 = vunpack.c.h.b16 %v1850
    %v2023 = vunpack.c.l.b16 %v1851
    %v2024 = vunpack.c.h.b16 %v1851
    %v2025 = vunpack.c.l.b16 %v1852
    %v2026 = vunpack.c.h.b16 %v1852
    %v2027 = vunpack.c.l.b16 %v1853
    %v2028 = vunpack.c.h.b16 %v1853
    %v2029 = vunpack.c.l.b16 %v1854
    %v2030 = vunpack.c.h.b16 %v1854
    %v2031 = vunpack.c.l.b16 %v1855
    %v2032 = vunpack.c.h.b16 %v1855
    %v2033 = vunpack.c.l.b16 %v1856
    %v2034 = vunpack.c.h.b16 %v1856
    %v2035 = vunpack.c.l.b16 %v1857
    %v2036 = vunpack.c.h.b16 %v1857
    %v2037 = vunpack.c.l.b16 %v1858
    %v2038 = vunpack.c.h.b16 %v1858
    %v2039 = vunpack.c.l.b16 %v1859
    %v2040 = vunpack.c.h.b16 %v1859
    %v2041 = vunpack.c.l.b16 %v1860
    %v2042 = vunpack.c.h.b16 %v1860
    %v2043 = vunpack.c.l.b16 %v1861
    %v2044 = vunpack.c.h.b16 %v1861
    %v2045 = vunpack.c.l.b16 %v1862
    %v2046 = vunpack.c.h.b16 %v1862
    %v2047 = vunpack.c.l.b16 %v1863
    %v2048 = vunpack.c.h.b16 %v1863
    %v2049 = vunpack.c.l.b16 %v1864
    %v2050 = vunpack.c.h.b16 %v1864
    %v2051 = vunpack.c.l.b16 %v1865
    %v2052 = vunpack.c.h.b16 %v1865
    %v2053 = vunpack.c.l.b16 %v1866
    %v2054 = vunpack.c.h.b16 %v1866
    %v2055 = vunpack.c.l.b16 %v1867
    %v2056 = vunpack.c.h.b16 %v1867
    %v2057 = vunpack.c.l.b16 %v1868
    %v2058 = vunpack.c.h.b16 %v1868
    %v2059 = vunpack.c.l.b16 %v1869
    %v2060 = vunpack.c.h.b16 %v1869
    %v2061 = vunpack.c.l.b16 %v1870
    %v2062 = vunpack.c.h.b16 %v1870
    %v2063 = vunpack.c.l.b16 %v1871
    %v2064 = vunpack.c.h.b16 %v1871
    %v2065 = vunpack.c.l.b16 %v1872
    %v2066 = vunpack.c.h.b16 %v1872
    %v2067 = vunpack.c.l.b16 %v1873
    %v2068 = vunpack.c.h.b16 %v1873
    %v2069 = vunpack.c.l.b16 %v1874
    %v2070 = vunpack.c.h.b16 %v1874
    %v2071 = vunpack.c.l.b16 %v1875
    %v2072 = vunpack.c.h.b16 %v1875
    %v2073 = vunpack.c.l.b16 %v1876
    %v2074 = vunpack.c.h.b16 %v1876
    %v2075 = vunpack.c.l.b16 %v1877
    %v2076 = vunpack.c.h.b16 %v1877
    %v2077 = vunpack.c.l.b16 %v1878
    %v2078 = vunpack.c.h.b16 %v1878
    %v2079 = vunpack.c.l.b16 %v1879
    %v2080 = vunpack.c.h.b16 %v1879
    %v2081 = vunpack.c.l.b16 %v1880
    %v2082 = vunpack.c.h.b16 %v1880
    %v2083 = vunpack.c.l.b16 %v1881
    %v2084 = vunpack.c.h.b16 %v1881
    %v2085 = vunpack.c.l.b16 %v1882
    %v2086 = vunpack.c.h.b16 %v1882
    %v2087 = vunpack.c.l.b16 %v1883
    %v2088 = vunpack.c.h.b16 %v1883
    %v2089 = vunpack.c.l.b16 %v1884
    %v2090 = vunpack.c.h.b16 %v1884
    %v2091 = vunpack.c.l.b16 %v1885
    %v2092 = vunpack.c.h.b16 %v1885
    %v2093 = vunpack.c.l.b16 %v1886
    %v2094 = vunpack.c.h.b16 %v1886
    %v2095 = vunpack.c.l.b16 %v1887
    %v2096 = vunpack.c.h.b16 %v1887
    %v2097 = vunpack.c.l.b16 %v1888
    %v2098 = vunpack.c.h.b16 %v1888
    %v2099 = vunpack.c.l.b16 %v1889
    %v2100 = vunpack.c.h.b16 %v1889
    %v2101 = vunpack.c.l.b16 %v1890
    %v2102 = vunpack.c.h.b16 %v1890
    %v2103 = vunpack.c.l.b16 %v1891
    %v2104 = vunpack.c.h.b16 %v1891
    %v2105 = vunpack.c.l.b16 %v1892
    %v2106 = vunpack.c.h.b16 %v1892
    %v2107 = vunpack.c.l.b16 %v1893
    %v2108 = vunpack.c.h.b16 %v1893
    %v2109 = vunpack.c.l.b16 %v1894
    %v2110 = vunpack.c.h.b16 %v1894
    %v2111 = vunpack.c.l.b16 %v1895
    %v2112 = vunpack.c.h.b16 %v1895
    %v2113 = vunpack.c.l.b16 %v1896
    %v2114 = vunpack.c.h.b16 %v1896
    %v2115 = vunpack.c.l.b16 %v1897
    %v2116 = vunpack.c.h.b16 %v1897
    %v2117 = vunpack.c.l.b16 %v1898
    %v2118 = vunpack.c.h.b16 %v1898
    %v2119 = vunpack.c.l.b16 %v1899
    %v2120 = vunpack.c.h.b16 %v1899
    %v2121 = vunpack.c.l.b16 %v1900
    %v2122 = vunpack.c.h.b16 %v1900
    %v2123 = vunpack.c.l.b16 %v1901
    %v2124 = vunpack.c.h.b16 %v1901
    %v2125 = vunpack.c.l.b16 %v1902
    %v2126 = vunpack.c.h.b16 %v1902
    %v2127 = vunpack.c.l.b16 %v1903
    %v2128 = vunpack.c.h.b16 %v1903
    %v2129 = vunpack.c.l.b16 %v1904
    %v2130 = vunpack.c.h.b16 %v1904
    %v2131 = vunpack.c.l.b16 %v1905
    %v2132 = vunpack.c.h.b16 %v1905
    %v2133 = vunpack.c.l.b16 %v1906
    %v2134 = vunpack.c.h.b16 %v1906
    %v2135 = vunpack.c.l.b16 %v1907
    %v2136 = vunpack.c.h.b16 %v1907
    %v2137 = vunpack.c.l.b16 %v1908
    %v2138 = vunpack.c.h.b16 %v1908
    %v2139 = vpack.c.b16 %v2013, %v2011
    %v2140 = vpack.c.b16 %v2014, %v2012
    %v2141 = vpack.c.b16 %v2017, %v2015
    %v2142 = vpack.c.b16 %v2018, %v2016
    %v2143 = vpack.c.b16 %v2021, %v2019
    %v2144 = vpack.c.b16 %v2022, %v2020
    %v2145 = vpack.c.b16 %v2025, %v2023
    %v2146 = vpack.c.b16 %v2026, %v2024
    %v2147 = vpack.c.b16 %v2029, %v2027
    %v2148 = vpack.c.b16 %v2030, %v2028
    %v2149 = vpack.c.b16 %v2033, %v2031
    %v2150 = vpack.c.b16 %v2034, %v2032
    %v2151 = vpack.c.b16 %v2037, %v2035
    %v2152 = vpack.c.b16 %v2038, %v2036
    %v2153 = vpack.c.b16 %v2041, %v2039
    %v2154 = vpack.c.b16 %v2042, %v2040
    %v2155 = vpack.c.b16 %v2045, %v2043
    %v2156 = vpack.c.b16 %v2046, %v2044
    %v2157 = vpack.c.b16 %v2049, %v2047
    %v2158 = vpack.c.b16 %v2050, %v2048
    %v2159 = vpack.c.b16 %v2053, %v2051
    %v2160 = vpack.c.b16 %v2054, %v2052
    %v2161 = vpack.c.b16 %v2057, %v2055
    %v2162 = vpack.c.b16 %v2058, %v2056
    %v2163 = vpack.c.b16 %v2061, %v2059
    %v2164 = vpack.c.b16 %v2062, %v2060
    %v2165 = vpack.c.b16 %v2065, %v2063
    %v2166 = vpack.c.b16 %v2066, %v2064
    %v2167 = vpack.c.b16 %v2069, %v2067
    %v2168 = vpack.c.b16 %v2070, %v2068
    %v2169 = vpack.c.b16 %v2073, %v2071
    %v2170 = vpack.c.b16 %v2074, %v2072
    %v2171 = vpack.c.b16 %v2077, %v2075
    %v2172 = vpack.c.b16 %v2078, %v2076
    %v2173 = vpack.c.b16 %v2081, %v2079
    %v2174 = vpack.c.b16 %v2082, %v2080
    %v2175 = vpack.c.b16 %v2085, %v2083
    %v2176 = vpack.c.b16 %v2086, %v2084
    %v2177 = vpack.c.b16 %v2089, %v2087
    %v2178 = vpack.c.b16 %v2090, %v2088
    %v2179 = vpack.c.b16 %v2093, %v2091
    %v2180 = vpack.c.b16 %v2094, %v2092
    %v2181 = vpack.c.b16 %v2097, %v2095
    %v2182 = vpack.c.b16 %v2098, %v2096
    %v2183 = vpack.c.b16 %v2101, %v2099
    %v2184 = vpack.c.b16 %v2102, %v2100
    %v2185 = vpack.c.b16 %v2105, %v2103
    %v2186 = vpack.c.b16 %v2106, %v2104
    %v2187 = vpack.c.b16 %v2109, %v2107
    %v2188 = vpack.c.b16 %v2110, %v2108
    %v2189 = vpack.c.b16 %v2113, %v2111
    %v2190 = vpack.c.b16 %v2114, %v2112
    %v2191 = vpack.c.b16 %v2117, %v2115
    %v2192 = vpack.c.b16 %v2118, %v2116
    %v2193 = vpack.c.b16 %v2121, %v2119
    %v2194 = vpack.c.b16 %v2122, %v2120
    %v2195 = vpack.c.b16 %v2125, %v2123
    %v2196 = vpack.c.b16 %v2126, %v2124
    %v2197 = vpack.c.b16 %v2129, %v2127
    %v2198 = vpack.c.b16 %v2130, %v2128
    %v2199 = vpack.c.b16 %v2133, %v2131
    %v2200 = vpack.c.b16 %v2134, %v2132
    %v2201 = vpack.c.b16 %v2137, %v2135
    %v2202 = vpack.c.b16 %v2138, %v2136
    %2267 = vmatprep.subr.bf16.mxu0 %v2140
    %2268 = vmatpush1.bf16.msra.mxu0 %v2139
    %2269 = vmatprep.subr.bf16.mxu0 %v2142
    %2270 = vmatpush1.bf16.msra.mxu0 %v2141
    %2271 = vmatprep.subr.bf16.mxu0 %v2144
    %2272 = vmatpush1.bf16.msra.mxu0 %v2143
    %2273 = vmatprep.subr.bf16.mxu0 %v2146
    %2274 = vmatpush1.bf16.msra.mxu0 %v2145
    %2275 = vmatprep.subr.bf16.mxu0 %v2148
    %2276 = vmatpush1.bf16.msra.mxu0 %v2147
    %2277 = vmatprep.subr.bf16.mxu0 %v2150
    %2278 = vmatpush1.bf16.msra.mxu0 %v2149
    %2279 = vmatprep.subr.bf16.mxu0 %v2152
    %2280 = vmatpush1.bf16.msra.mxu0 %v2151
    %2281 = vmatprep.subr.bf16.mxu0 %v2154
    %2282 = vmatpush1.bf16.msra.mxu0 %v2153
    %2283 = vmatprep.subr.bf16.mxu0 %v2156
    %2284 = vmatpush1.bf16.msra.mxu0 %v2155
    %2285 = vmatprep.subr.bf16.mxu0 %v2158
    %2286 = vmatpush1.bf16.msra.mxu0 %v2157
    %2287 = vmatprep.subr.bf16.mxu0 %v2160
    %2288 = vmatpush1.bf16.msra.mxu0 %v2159
    %2289 = vmatprep.subr.bf16.mxu0 %v2162
    %2290 = vmatpush1.bf16.msra.mxu0 %v2161
    %2291 = vmatprep.subr.bf16.mxu0 %v2164
    %2292 = vmatpush1.bf16.msra.mxu0 %v2163
    %2293 = vmatprep.subr.bf16.mxu0 %v2166
    %2294 = vmatpush1.bf16.msra.mxu0 %v2165
    %2295 = vmatprep.subr.bf16.mxu0 %v2168
    %2296 = vmatpush1.bf16.msra.mxu0 %v2167
    %2297 = vmatprep.subr.bf16.mxu0 %v2170
    %2298 = vmatpush1.bf16.msra.mxu0 %v2169
    %2299 = vmatprep.mubr.bf16.mxu0 %v1932
    %2300 = vmatmul.mubr.bf16.gmra.mrb[0].mxu0 %v1931
    %v2301 = vpop.f32.mrb[0].mxu0
    %v2302 = vadd.f32 %v1940, %v2301
    %v2303 = vpop.f32.mrb[0].mxu0
    %v2304 = vadd.f32 %v1944, %v2303
    %v2305 = vpop.f32.mrb[0].mxu0
    %v2306 = vpop.f32.mrb[0].mxu0
    %2307 = vdwg.mxu0
    %2308 = vmatprep.subr.bf16.mxu0 %v2172
    %2309 = vmatpush1.bf16.msra.mxu0 %v2171
    %2310 = vmatprep.subr.bf16.mxu0 %v2174
    %2311 = vmatpush1.bf16.msra.mxu0 %v2173
    %2312 = vmatprep.subr.bf16.mxu0 %v2176
    %2313 = vmatpush1.bf16.msra.mxu0 %v2175
    %2314 = vmatprep.subr.bf16.mxu0 %v2178
    %2315 = vmatpush1.bf16.msra.mxu0 %v2177
    %2316 = vmatprep.subr.bf16.mxu0 %v2180
    %2317 = vmatpush1.bf16.msra.mxu0 %v2179
    %2318 = vmatprep.subr.bf16.mxu0 %v2182
    %2319 = vmatpush1.bf16.msra.mxu0 %v2181
    %2320 = vmatprep.subr.bf16.mxu0 %v2184
    %2321 = vmatpush1.bf16.msra.mxu0 %v2183
    %2322 = vmatprep.subr.bf16.mxu0 %v2186
    %2323 = vmatpush1.bf16.msra.mxu0 %v2185
    %2324 = vmatprep.subr.bf16.mxu0 %v2188
    %2325 = vmatpush1.bf16.msra.mxu0 %v2187
    %2326 = vmatprep.subr.bf16.mxu0 %v2190
    %2327 = vmatpush1.bf16.msra.mxu0 %v2189
    %2328 = vmatprep.subr.bf16.mxu0 %v2192
    %2329 = vmatpush1.bf16.msra.mxu0 %v2191
    %2330 = vmatprep.subr.bf16.mxu0 %v2194
    %2331 = vmatpush1.bf16.msra.mxu0 %v2193
    %2332 = vmatprep.subr.bf16.mxu0 %v2196
    %2333 = vmatpush1.bf16.msra.mxu0 %v2195
    %2334 = vmatprep.subr.bf16.mxu0 %v2198
    %2335 = vmatpush1.bf16.msra.mxu0 %v2197
    %2336 = vmatprep.subr.bf16.mxu0 %v2200
    %2337 = vmatpush1.bf16.msra.mxu0 %v2199
    %2338 = vmatprep.subr.bf16.mxu0 %v2202
    %2339 = vmatpush1.bf16.msra.mxu0 %v2201
    %2340 = vmatprep.mubr.bf16.mxu0 %v1934
    %2341 = vmatmul.mubr.bf16.gmra.mrb[0].mxu0 %v1933
    %v2342 = vpop.f32.mrb[0].mxu0
    %v2343 = vadd.f32 %v2302, %v2342
    %v2344 = vpop.f32.mrb[0].mxu0
    %v2345 = vadd.f32 %v2304, %v2344
    %v2346 = vpop.f32.mrb[0].mxu0
    %v2347 = vpop.f32.mrb[0].mxu0
    %2348 = vdwg.mxu0
    %vm2349 = vcmp.gt.f32.partialorder %v2343, 0.0
    %vm2350 = vcmp.gt.f32.partialorder %v2345, 0.0
    %v2351 = vmin.f32 %v2343, 0.0
    %v2352 = vmin.f32 %v2345, 0.0
    %v2353 = vmul.f32 %v2351, 1.442695
    %v2354 = vpow.pop %v2353
    %v2355 = vmul.f32 %v2352, 1.442695
    %v2356 = vpow.pop %v2355
    %v2357 = vsub.f32 %v2354, 1.0
    %v2358 = vsub.f32 %v2356, 1.0
    %v2359 = vsel %vm2349, %v2343, %v2357
    %v2360 = vsel %vm2350, %v2345, %v2358
    %v2361 = vld [vmem:[%s3] sm:$0xf]
    %v2362 = vld [vmem:[%s3 + $0x4] sm:$0xf]
    %v2363 = vld [vmem:[%s3 + $0x8] sm:$0xf]
    %v2364 = vld [vmem:[%s3 + $0xc] sm:$0xf]
    %v2365 = vld [vmem:[%s3 + $0x10] sm:$0xf]
    %v2366 = vld [vmem:[%s3 + $0x14] sm:$0xf]
    %v2367 = vld [vmem:[%s3 + $0x18] sm:$0xf]
    %v2368 = vld [vmem:[%s3 + $0x1c] sm:$0xf]
    %v2369 = vld [vmem:[%s3 + $0x20] sm:$0xf]
    %v2370 = vld [vmem:[%s3 + $0x24] sm:$0xf]
    %v2371 = vld [vmem:[%s3 + $0x28] sm:$0xf]
    %v2372 = vld [vmem:[%s3 + $0x2c] sm:$0xf]
    %v2373 = vld [vmem:[%s3 + $0x30] sm:$0xf]
    %v2374 = vld [vmem:[%s3 + $0x34] sm:$0xf]
    %v2375 = vld [vmem:[%s3 + $0x38] sm:$0xf]
    %v2376 = vld [vmem:[%s3 + $0x3c] sm:$0xf]
    %v2377 = vld [vmem:[%s3 + $0x40] sm:$0xf]
    %v2378 = vld [vmem:[%s3 + $0x44] sm:$0xf]
    %v2379 = vld [vmem:[%s3 + $0x48] sm:$0xf]
    %v2380 = vld [vmem:[%s3 + $0x4c] sm:$0xf]
    %v2381 = vld [vmem:[%s3 + $0x50] sm:$0xf]
    %v2382 = vld [vmem:[%s3 + $0x54] sm:$0xf]
    %v2383 = vld [vmem:[%s3 + $0x58] sm:$0xf]
    %v2384 = vld [vmem:[%s3 + $0x5c] sm:$0xf]
    %v2385 = vld [vmem:[%s3 + $0x60] sm:$0xf]
    %v2386 = vld [vmem:[%s3 + $0x64] sm:$0xf]
    %v2387 = vld [vmem:[%s3 + $0x68] sm:$0xf]
    %v2388 = vld [vmem:[%s3 + $0x6c] sm:$0xf]
    %v2389 = vld [vmem:[%s3 + $0x70] sm:$0xf]
    %v2390 = vld [vmem:[%s3 + $0x74] sm:$0xf]
    %v2391 = vld [vmem:[%s3 + $0x78] sm:$0xf]
    %v2392 = vld [vmem:[%s3 + $0x7c] sm:$0xf]
    %v2393 = vpack.c.bf16 %v2359, %v2359
    %v2394 = vpack.c.bf16 %v2360, %v2360
    %v2395 = vld [vmem:[%s4] sm:$0x1]
    %v2397 = vlaneseq
    %v2398 = vshrl.u32 %v2397, 7
    %v2399 = vsub.s32 0, %v2398
    %v2400 = vrot.slane %v2395, %v2399
    %v2434 = vunpack.c.l.b16 %v2361
    %v2435 = vunpack.c.l.b16 %v2362
    %v2436 = vunpack.c.l.b16 %v2363
    %v2437 = vunpack.c.l.b16 %v2364
    %v2438 = vunpack.c.l.b16 %v2365
    %v2439 = vunpack.c.l.b16 %v2366
    %v2440 = vunpack.c.l.b16 %v2367
    %v2441 = vunpack.c.l.b16 %v2368
    %v2442 = vunpack.c.l.b16 %v2369
    %v2443 = vunpack.c.l.b16 %v2370
    %v2444 = vunpack.c.l.b16 %v2371
    %v2445 = vunpack.c.l.b16 %v2372
    %v2446 = vunpack.c.l.b16 %v2373
    %v2447 = vunpack.c.l.b16 %v2374
    %v2448 = vunpack.c.l.b16 %v2375
    %v2449 = vunpack.c.l.b16 %v2376
    %v2450 = vunpack.c.l.b16 %v2377
    %v2451 = vunpack.c.l.b16 %v2378
    %v2452 = vunpack.c.l.b16 %v2379
    %v2453 = vunpack.c.l.b16 %v2380
    %v2454 = vunpack.c.l.b16 %v2381
    %v2455 = vunpack.c.l.b16 %v2382
    %v2456 = vunpack.c.l.b16 %v2383
    %v2457 = vunpack.c.l.b16 %v2384
    %v2458 = vunpack.c.l.b16 %v2385
    %v2459 = vunpack.c.l.b16 %v2386
    %v2460 = vunpack.c.l.b16 %v2387
    %v2461 = vunpack.c.l.b16 %v2388
    %v2462 = vunpack.c.l.b16 %v2389
    %v2463 = vunpack.c.l.b16 %v2390
    %v2464 = vunpack.c.l.b16 %v2391
    %v2465 = vunpack.c.l.b16 %v2392
    %v2466 = vpack.c.b16 %v2435, %v2434
    %v2467 = vpack.c.b16 %v2437, %v2436
    %v2468 = vpack.c.b16 %v2439, %v2438
    %v2469 = vpack.c.b16 %v2441, %v2440
    %v2470 = vpack.c.b16 %v2443, %v2442
    %v2471 = vpack.c.b16 %v2445, %v2444
    %v2472 = vpack.c.b16 %v2447, %v2446
    %v2473 = vpack.c.b16 %v2449, %v2448
    %v2474 = vpack.c.b16 %v2451, %v2450
    %v2475 = vpack.c.b16 %v2453, %v2452
    %v2476 = vpack.c.b16 %v2455, %v2454
    %v2477 = vpack.c.b16 %v2457, %v2456
    %v2478 = vpack.c.b16 %v2459, %v2458
    %v2479 = vpack.c.b16 %v2461, %v2460
    %v2480 = vpack.c.b16 %v2463, %v2462
    %v2481 = vpack.c.b16 %v2465, %v2464
    %2498 = vmatprep.subr.bf16.mxu0 0
    %2499 = vmatpush1.bf16.msra.mxu0 %v2466
    %2500 = vmatprep.subr.bf16.mxu0 0
    %2501 = vmatpush1.bf16.msra.mxu0 %v2467
    %2502 = vmatprep.subr.bf16.mxu0 0
    %2503 = vmatpush1.bf16.msra.mxu0 %v2468
    %2504 = vmatprep.subr.bf16.mxu0 0
    %2505 = vmatpush1.bf16.msra.mxu0 %v2469
    %2506 = vmatprep.subr.bf16.mxu0 0
    %2507 = vmatpush1.bf16.msra.mxu0 %v2470
    %2508 = vmatprep.subr.bf16.mxu0 0
    %2509 = vmatpush1.bf16.msra.mxu0 %v2471
    %2510 = vmatprep.subr.bf16.mxu0 0
    %2511 = vmatpush1.bf16.msra.mxu0 %v2472
    %2512 = vmatprep.subr.bf16.mxu0 0
    %2513 = vmatpush1.bf16.msra.mxu0 %v2473
    %2514 = vmatprep.subr.bf16.mxu0 0
    %2515 = vmatpush1.bf16.msra.mxu0 %v2474
    %2516 = vmatprep.subr.bf16.mxu0 0
    %2517 = vmatpush1.bf16.msra.mxu0 %v2475
    %2518 = vmatprep.subr.bf16.mxu0 0
    %2519 = vmatpush1.bf16.msra.mxu0 %v2476
    %2520 = vmatprep.subr.bf16.mxu0 0
    %2521 = vmatpush1.bf16.msra.mxu0 %v2477
    %2522 = vmatprep.subr.bf16.mxu0 0
    %2523 = vmatpush1.bf16.msra.mxu0 %v2478
    %2524 = vmatprep.subr.bf16.mxu0 0
    %2525 = vmatpush1.bf16.msra.mxu0 %v2479
    %2526 = vmatprep.subr.bf16.mxu0 0
    %2527 = vmatpush1.bf16.msra.mxu0 %v2480
    %2528 = vmatprep.subr.bf16.mxu0 0
    %2529 = vmatpush1.bf16.msra.mxu0 %v2481
    %2530 = vmatprep.mubr.bf16.mxu0 %v2394
    %2531 = vmatmul.mubr.bf16.gmra.mrb[0].mxu0 %v2393
    %v2532 = vpop.f32.mrb[0].mxu0
    %v2533 = vadd.f32 %v2400, %v2532
    %v2534 = vpop.f32.mrb[0].mxu0
    %v2535 = vpop.f32.mrb[0].mxu0
    %v2536 = vpop.f32.mrb[0].mxu0
    %2537 = vdwg.mxu0
    %vm2538 = vcmp.gt.f32.partialorder %v2533, 0.0
    %v2539 = vmin.f32 %v2533, 0.0
    %v2540 = vmul.f32 %v2539, 1.442695
    %v2541 = vpow.pop %v2540
    %v2542 = vsub.f32 %v2541, 1.0
    %v2543 = vsel %vm2538, %v2533, %v2542
    %v2544 = vld [vmem:[%s5] sm:$0x1]
    %v2546 = vlaneseq
    %v2547 = vshrl.u32 %v2546, 7
    %v2548 = vsub.s32 0, %v2547
    %v2549 = vrot.slane %v2544, %v2548
    %v2551 = vmul.f32 %v2543, %v2549
    %v2552 = vsel %vm762, %v2551, 0.0
    %2553 = vadd.xlane.f32.xlu0 %v2552
    %v2554 = vpop.xlane.xlu0 %2553
    %v2555 = vld [vmem:[#allocation3] sm:$0x1]
    %v2557 = vlaneseq
    %v2558 = vshrl.u32 %v2557, 7
    %v2559 = vsub.s32 0, %v2558
    %v2560 = vrot.slane %v2555, %v2559
    %v2562 = vadd.f32 %v2554, %v2560
    %v2563 = vld [vmem:[%s7] sm:$0xff]
    %v2564 = vld [vmem:[%s7 + $0x8] sm:$0xff]
    %v2565 = vld [vmem:[%s7 + $0x10] sm:$0xff]
    %v2566 = vld [vmem:[%s7 + $0x18] sm:$0xff]
    %v2567 = vld [vmem:[%s7 + $0x20] sm:$0xff]
    %v2568 = vld [vmem:[%s7 + $0x28] sm:$0xff]
    %v2569 = vld [vmem:[%s7 + $0x30] sm:$0xff]
    %v2570 = vld [vmem:[%s7 + $0x38] sm:$0xff]
    %v2571 = vld [vmem:[%s7 + $0x40] sm:$0xff]
    %v2572 = vld [vmem:[%s7 + $0x48] sm:$0xff]
    %v2573 = vld [vmem:[%s7 + $0x50] sm:$0xff]
    %v2574 = vld [vmem:[%s7 + $0x58] sm:$0xff]
    %v2575 = vld [vmem:[%s7 + $0x60] sm:$0xff]
    %v2576 = vld [vmem:[%s7 + $0x68] sm:$0xff]
    %v2577 = vld [vmem:[%s7 + $0x70] sm:$0xff]
    %v2578 = vld [vmem:[%s7 + $0x78] sm:$0xff]
    %v2579 = vld [vmem:[%s7 + $0x80] sm:$0xff]
    %v2580 = vld [vmem:[%s7 + $0x88] sm:$0xff]
    %v2581 = vld [vmem:[%s7 + $0x90] sm:$0xff]
    %v2582 = vld [vmem:[%s7 + $0x98] sm:$0xff]
    %v2583 = vld [vmem:[%s7 + $0xa0] sm:$0xff]
    %v2584 = vld [vmem:[%s7 + $0xa8] sm:$0xff]
    %v2585 = vld [vmem:[%s7 + $0xb0] sm:$0xff]
    %v2586 = vld [vmem:[%s7 + $0xb8] sm:$0xff]
    %v2587 = vld [vmem:[%s7 + $0xc0] sm:$0xff]
    %v2588 = vld [vmem:[%s7 + $0xc8] sm:$0xff]
    %v2589 = vld [vmem:[%s7 + $0xd0] sm:$0xff]
    %v2590 = vld [vmem:[%s7 + $0xd8] sm:$0xff]
    %v2591 = vld [vmem:[%s7 + $0xe0] sm:$0xff]
    %v2592 = vld [vmem:[%s7 + $0xe8] sm:$0xff]
    %v2593 = vld [vmem:[%s7 + $0xf0] sm:$0xff]
    %v2594 = vld [vmem:[%s7 + $0xf8] sm:$0xff]
    %v2595 = vld [vmem:[%s7 + $0x100] sm:$0xff]
    %v2596 = vld [vmem:[%s7 + $0x108] sm:$0xff]
    %v2597 = vld [vmem:[%s7 + $0x110] sm:$0xff]
    %v2598 = vld [vmem:[%s7 + $0x118] sm:$0xff]
    %v2599 = vld [vmem:[%s7 + $0x120] sm:$0xff]
    %v2600 = vld [vmem:[%s7 + $0x128] sm:$0xff]
    %v2601 = vld [vmem:[%s7 + $0x130] sm:$0xff]
    %v2602 = vld [vmem:[%s7 + $0x138] sm:$0xff]
    %v2603 = vld [vmem:[%s7 + $0x140] sm:$0xff]
    %v2604 = vld [vmem:[%s7 + $0x148] sm:$0xff]
    %v2605 = vld [vmem:[%s7 + $0x150] sm:$0xff]
    %v2606 = vld [vmem:[%s7 + $0x158] sm:$0xff]
    %v2607 = vld [vmem:[%s7 + $0x160] sm:$0xff]
    %v2608 = vld [vmem:[%s7 + $0x168] sm:$0xff]
    %v2609 = vld [vmem:[%s7 + $0x170] sm:$0xff]
    %v2610 = vld [vmem:[%s7 + $0x178] sm:$0xff]
    %v2611 = vld [vmem:[%s7 + $0x180] sm:$0xff]
    %v2612 = vld [vmem:[%s7 + $0x188] sm:$0xff]
    %v2613 = vld [vmem:[%s7 + $0x190] sm:$0xff]
    %v2614 = vld [vmem:[%s7 + $0x198] sm:$0xff]
    %v2615 = vld [vmem:[%s7 + $0x1a0] sm:$0xff]
    %v2616 = vld [vmem:[%s7 + $0x1a8] sm:$0xff]
    %v2617 = vld [vmem:[%s7 + $0x1b0] sm:$0xff]
    %v2618 = vld [vmem:[%s7 + $0x1b8] sm:$0xff]
    %v2619 = vld [vmem:[%s7 + $0x1c0] sm:$0xff]
    %v2620 = vld [vmem:[%s7 + $0x1c8] sm:$0xff]
    %v2621 = vld [vmem:[%s7 + $0x1d0] sm:$0xff]
    %v2622 = vld [vmem:[%s7 + $0x1d8] sm:$0xff]
    %v2623 = vld [vmem:[%s7 + $0x1e0] sm:$0xff]
    %v2624 = vld [vmem:[%s7 + $0x1e8] sm:$0xff]
    %v2625 = vld [vmem:[%s7 + $0x1f0] sm:$0xff]
    %v2626 = vld [vmem:[%s7 + $0x1f8] sm:$0xff]
    %v2627 = vld [vmem:[%s7 + $0x200] sm:$0xff]
    %v2628 = vld [vmem:[%s7 + $0x208] sm:$0xff]
    %v2629 = vld [vmem:[%s7 + $0x210] sm:$0xff]
    %v2630 = vld [vmem:[%s7 + $0x218] sm:$0xff]
    %v2631 = vld [vmem:[%s7 + $0x220] sm:$0xff]
    %v2632 = vld [vmem:[%s7 + $0x228] sm:$0xff]
    %v2633 = vld [vmem:[%s7 + $0x230] sm:$0xff]
    %v2634 = vld [vmem:[%s7 + $0x238] sm:$0xff]
    %v2635 = vld [vmem:[%s7 + $0x240] sm:$0xff]
    %v2636 = vld [vmem:[%s7 + $0x248] sm:$0xff]
    %v2637 = vld [vmem:[%s7 + $0x250] sm:$0xff]
    %v2638 = vld [vmem:[%s7 + $0x258] sm:$0xff]
    %v2639 = vld [vmem:[%s7 + $0x260] sm:$0xff]
    %v2640 = vld [vmem:[%s7 + $0x268] sm:$0xff]
    %v2641 = vld [vmem:[%s7 + $0x270] sm:$0xff]
    %v2642 = vld [vmem:[%s7 + $0x278] sm:$0xff]
    %v2643 = vld [vmem:[%s7 + $0x280] sm:$0xff]
    %v2644 = vld [vmem:[%s7 + $0x288] sm:$0xff]
    %v2645 = vld [vmem:[%s7 + $0x290] sm:$0xff]
    %v2646 = vld [vmem:[%s7 + $0x298] sm:$0xff]
    %v2647 = vld [vmem:[%s7 + $0x2a0] sm:$0xff]
    %v2648 = vld [vmem:[%s7 + $0x2a8] sm:$0xff]
    %v2649 = vld [vmem:[%s7 + $0x2b0] sm:$0xff]
    %v2650 = vld [vmem:[%s7 + $0x2b8] sm:$0xff]
    %v2651 = vld [vmem:[%s7 + $0x2c0] sm:$0xff]
    %v2652 = vld [vmem:[%s7 + $0x2c8] sm:$0xff]
    %v2653 = vld [vmem:[%s7 + $0x2d0] sm:$0xff]
    %v2654 = vld [vmem:[%s7 + $0x2d8] sm:$0xff]
    %v2655 = vld [vmem:[%s7 + $0x2e0] sm:$0xff]
    %v2656 = vld [vmem:[%s7 + $0x2e8] sm:$0xff]
    %v2657 = vld [vmem:[%s7 + $0x2f0] sm:$0xff]
    %v2658 = vld [vmem:[%s7 + $0x2f8] sm:$0xff]
    %v2659 = vld [vmem:[%s7 + $0x300] sm:$0xff]
    %v2660 = vld [vmem:[%s7 + $0x308] sm:$0xff]
    %v2661 = vld [vmem:[%s7 + $0x310] sm:$0xff]
    %v2662 = vld [vmem:[%s7 + $0x318] sm:$0xff]
    %v2663 = vld [vmem:[%s7 + $0x320] sm:$0xff]
    %v2664 = vld [vmem:[%s7 + $0x328] sm:$0xff]
    %v2665 = vld [vmem:[%s7 + $0x330] sm:$0xff]
    %v2666 = vld [vmem:[%s7 + $0x338] sm:$0xff]
    %v2667 = vld [vmem:[%s7 + $0x340] sm:$0xff]
    %v2668 = vld [vmem:[%s7 + $0x348] sm:$0xff]
    %v2669 = vld [vmem:[%s7 + $0x350] sm:$0xff]
    %v2670 = vld [vmem:[%s7 + $0x358] sm:$0xff]
    %v2671 = vld [vmem:[%s7 + $0x360] sm:$0xff]
    %v2672 = vld [vmem:[%s7 + $0x368] sm:$0xff]
    %v2673 = vld [vmem:[%s7 + $0x370] sm:$0xff]
    %v2674 = vld [vmem:[%s7 + $0x378] sm:$0xff]
    %v2675 = vld [vmem:[%s7 + $0x380] sm:$0xff]
    %v2676 = vld [vmem:[%s7 + $0x388] sm:$0xff]
    %v2677 = vld [vmem:[%s7 + $0x390] sm:$0xff]
    %v2678 = vld [vmem:[%s7 + $0x398] sm:$0xff]
    %v2679 = vld [vmem:[%s7 + $0x3a0] sm:$0xff]
    %v2680 = vld [vmem:[%s7 + $0x3a8] sm:$0xff]
    %v2681 = vld [vmem:[%s7 + $0x3b0] sm:$0xff]
    %v2682 = vld [vmem:[%s7 + $0x3b8] sm:$0xff]
    %v2683 = vld [vmem:[%s7 + $0x3c0] sm:$0xff]
    %v2684 = vld [vmem:[%s7 + $0x3c8] sm:$0xff]
    %v2685 = vld [vmem:[%s7 + $0x3d0] sm:$0xff]
    %v2686 = vld [vmem:[%s7 + $0x3d8] sm:$0xff]
    %v2687 = vld [vmem:[%s7 + $0x3e0] sm:$0xff]
    %v2688 = vld [vmem:[%s7 + $0x3e8] sm:$0xff]
    %v2689 = vld [vmem:[%s7 + $0x3f0] sm:$0xff]
    %v2690 = vld [vmem:[%s7 + $0x3f8] sm:$0xff]
    %v2691 = vld [vmem:[%s8] sm:$0xf]
    %v2693 = vlaneseq
    %v2694 = vshrl.u32 %v2693, 7
    %v2695 = vsub.s32 0, %v2694
    %v2696 = vrot.slane %v2691, %v2695
    %v2697 = vlaneseq
    %v2698 = vshrl.u32 %v2697, 7
    %v2699 = vsub.s32 1, %v2698
    %v2700 = vrot.slane %v2691, %v2699
    %v2701 = vlaneseq
    %v2702 = vshrl.u32 %v2701, 7
    %v2703 = vsub.s32 2, %v2702
    %v2704 = vrot.slane %v2691, %v2703
    %v2705 = vlaneseq
    %v2706 = vshrl.u32 %v2705, 7
    %v2707 = vsub.s32 3, %v2706
    %v2708 = vrot.slane %v2691, %v2707
    %v2841 = vunpack.c.l.b16 %v2563
    %v2842 = vunpack.c.h.b16 %v2563
    %v2843 = vunpack.c.l.b16 %v2564
    %v2844 = vunpack.c.h.b16 %v2564
    %v2845 = vunpack.c.l.b16 %v2565
    %v2846 = vunpack.c.h.b16 %v2565
    %v2847 = vunpack.c.l.b16 %v2566
    %v2848 = vunpack.c.h.b16 %v2566
    %v2849 = vunpack.c.l.b16 %v2567
    %v2850 = vunpack.c.h.b16 %v2567
    %v2851 = vunpack.c.l.b16 %v2568
    %v2852 = vunpack.c.h.b16 %v2568
    %v2853 = vunpack.c.l.b16 %v2569
    %v2854 = vunpack.c.h.b16 %v2569
    %v2855 = vunpack.c.l.b16 %v2570
    %v2856 = vunpack.c.h.b16 %v2570
    %v2857 = vunpack.c.l.b16 %v2571
    %v2858 = vunpack.c.h.b16 %v2571
    %v2859 = vunpack.c.l.b16 %v2572
    %v2860 = vunpack.c.h.b16 %v2572
    %v2861 = vunpack.c.l.b16 %v2573
    %v2862 = vunpack.c.h.b16 %v2573
    %v2863 = vunpack.c.l.b16 %v2574
    %v2864 = vunpack.c.h.b16 %v2574
    %v2865 = vunpack.c.l.b16 %v2575
    %v2866 = vunpack.c.h.b16 %v2575
    %v2867 = vunpack.c.l.b16 %v2576
    %v2868 = vunpack.c.h.b16 %v2576
    %v2869 = vunpack.c.l.b16 %v2577
    %v2870 = vunpack.c.h.b16 %v2577
    %v2871 = vunpack.c.l.b16 %v2578
    %v2872 = vunpack.c.h.b16 %v2578
    %v2873 = vunpack.c.l.b16 %v2579
    %v2874 = vunpack.c.h.b16 %v2579
    %v2875 = vunpack.c.l.b16 %v2580
    %v2876 = vunpack.c.h.b16 %v2580
    %v2877 = vunpack.c.l.b16 %v2581
    %v2878 = vunpack.c.h.b16 %v2581
    %v2879 = vunpack.c.l.b16 %v2582
    %v2880 = vunpack.c.h.b16 %v2582
    %v2881 = vunpack.c.l.b16 %v2583
    %v2882 = vunpack.c.h.b16 %v2583
    %v2883 = vunpack.c.l.b16 %v2584
    %v2884 = vunpack.c.h.b16 %v2584
    %v2885 = vunpack.c.l.b16 %v2585
    %v2886 = vunpack.c.h.b16 %v2585
    %v2887 = vunpack.c.l.b16 %v2586
    %v2888 = vunpack.c.h.b16 %v2586
    %v2889 = vunpack.c.l.b16 %v2587
    %v2890 = vunpack.c.h.b16 %v2587
    %v2891 = vunpack.c.l.b16 %v2588
    %v2892 = vunpack.c.h.b16 %v2588
    %v2893 = vunpack.c.l.b16 %v2589
    %v2894 = vunpack.c.h.b16 %v2589
    %v2895 = vunpack.c.l.b16 %v2590
    %v2896 = vunpack.c.h.b16 %v2590
    %v2897 = vunpack.c.l.b16 %v2591
    %v2898 = vunpack.c.h.b16 %v2591
    %v2899 = vunpack.c.l.b16 %v2592
    %v2900 = vunpack.c.h.b16 %v2592
    %v2901 = vunpack.c.l.b16 %v2593
    %v2902 = vunpack.c.h.b16 %v2593
    %v2903 = vunpack.c.l.b16 %v2594
    %v2904 = vunpack.c.h.b16 %v2594
    %v2905 = vunpack.c.l.b16 %v2595
    %v2906 = vunpack.c.h.b16 %v2595
    %v2907 = vunpack.c.l.b16 %v2596
    %v2908 = vunpack.c.h.b16 %v2596
    %v2909 = vunpack.c.l.b16 %v2597
    %v2910 = vunpack.c.h.b16 %v2597
    %v2911 = vunpack.c.l.b16 %v2598
    %v2912 = vunpack.c.h.b16 %v2598
    %v2913 = vunpack.c.l.b16 %v2599
    %v2914 = vunpack.c.h.b16 %v2599
    %v2915 = vunpack.c.l.b16 %v2600
    %v2916 = vunpack.c.h.b16 %v2600
    %v2917 = vunpack.c.l.b16 %v2601
    %v2918 = vunpack.c.h.b16 %v2601
    %v2919 = vunpack.c.l.b16 %v2602
    %v2920 = vunpack.c.h.b16 %v2602
    %v2921 = vunpack.c.l.b16 %v2603
    %v2922 = vunpack.c.h.b16 %v2603
    %v2923 = vunpack.c.l.b16 %v2604
    %v2924 = vunpack.c.h.b16 %v2604
    %v2925 = vunpack.c.l.b16 %v2605
    %v2926 = vunpack.c.h.b16 %v2605
    %v2927 = vunpack.c.l.b16 %v2606
    %v2928 = vunpack.c.h.b16 %v2606
    %v2929 = vunpack.c.l.b16 %v2607
    %v2930 = vunpack.c.h.b16 %v2607
    %v2931 = vunpack.c.l.b16 %v2608
    %v2932 = vunpack.c.h.b16 %v2608
    %v2933 = vunpack.c.l.b16 %v2609
    %v2934 = vunpack.c.h.b16 %v2609
    %v2935 = vunpack.c.l.b16 %v2610
    %v2936 = vunpack.c.h.b16 %v2610
    %v2937 = vunpack.c.l.b16 %v2611
    %v2938 = vunpack.c.h.b16 %v2611
    %v2939 = vunpack.c.l.b16 %v2612
    %v2940 = vunpack.c.h.b16 %v2612
    %v2941 = vunpack.c.l.b16 %v2613
    %v2942 = vunpack.c.h.b16 %v2613
    %v2943 = vunpack.c.l.b16 %v2614
    %v2944 = vunpack.c.h.b16 %v2614
    %v2945 = vunpack.c.l.b16 %v2615
    %v2946 = vunpack.c.h.b16 %v2615
    %v2947 = vunpack.c.l.b16 %v2616
    %v2948 = vunpack.c.h.b16 %v2616
    %v2949 = vunpack.c.l.b16 %v2617
    %v2950 = vunpack.c.h.b16 %v2617
    %v2951 = vunpack.c.l.b16 %v2618
    %v2952 = vunpack.c.h.b16 %v2618
    %v2953 = vunpack.c.l.b16 %v2619
    %v2954 = vunpack.c.h.b16 %v2619
    %v2955 = vunpack.c.l.b16 %v2620
    %v2956 = vunpack.c.h.b16 %v2620
    %v2957 = vunpack.c.l.b16 %v2621
    %v2958 = vunpack.c.h.b16 %v2621
    %v2959 = vunpack.c.l.b16 %v2622
    %v2960 = vunpack.c.h.b16 %v2622
    %v2961 = vunpack.c.l.b16 %v2623
    %v2962 = vunpack.c.h.b16 %v2623
    %v2963 = vunpack.c.l.b16 %v2624
    %v2964 = vunpack.c.h.b16 %v2624
    %v2965 = vunpack.c.l.b16 %v2625
    %v2966 = vunpack.c.h.b16 %v2625
    %v2967 = vunpack.c.l.b16 %v2626
    %v2968 = vunpack.c.h.b16 %v2626
    %v2969 = vunpack.c.l.b16 %v2627
    %v2970 = vunpack.c.h.b16 %v2627
    %v2971 = vunpack.c.l.b16 %v2628
    %v2972 = vunpack.c.h.b16 %v2628
    %v2973 = vunpack.c.l.b16 %v2629
    %v2974 = vunpack.c.h.b16 %v2629
    %v2975 = vunpack.c.l.b16 %v2630
    %v2976 = vunpack.c.h.b16 %v2630
    %v2977 = vunpack.c.l.b16 %v2631
    %v2978 = vunpack.c.h.b16 %v2631
    %v2979 = vunpack.c.l.b16 %v2632
    %v2980 = vunpack.c.h.b16 %v2632
    %v2981 = vunpack.c.l.b16 %v2633
    %v2982 = vunpack.c.h.b16 %v2633
    %v2983 = vunpack.c.l.b16 %v2634
    %v2984 = vunpack.c.h.b16 %v2634
    %v2985 = vunpack.c.l.b16 %v2635
    %v2986 = vunpack.c.h.b16 %v2635
    %v2987 = vunpack.c.l.b16 %v2636
    %v2988 = vunpack.c.h.b16 %v2636
    %v2989 = vunpack.c.l.b16 %v2637
    %v2990 = vunpack.c.h.b16 %v2637
    %v2991 = vunpack.c.l.b16 %v2638
    %v2992 = vunpack.c.h.b16 %v2638
    %v2993 = vunpack.c.l.b16 %v2639
    %v2994 = vunpack.c.h.b16 %v2639
    %v2995 = vunpack.c.l.b16 %v2640
    %v2996 = vunpack.c.h.b16 %v2640
    %v2997 = vunpack.c.l.b16 %v2641
    %v2998 = vunpack.c.h.b16 %v2641
    %v2999 = vunpack.c.l.b16 %v2642
    %v3000 = vunpack.c.h.b16 %v2642
    %v3001 = vunpack.c.l.b16 %v2643
    %v3002 = vunpack.c.h.b16 %v2643
    %v3003 = vunpack.c.l.b16 %v2644
    %v3004 = vunpack.c.h.b16 %v2644
    %v3005 = vunpack.c.l.b16 %v2645
    %v3006 = vunpack.c.h.b16 %v2645
    %v3007 = vunpack.c.l.b16 %v2646
    %v3008 = vunpack.c.h.b16 %v2646
    %v3009 = vunpack.c.l.b16 %v2647
    %v3010 = vunpack.c.h.b16 %v2647
    %v3011 = vunpack.c.l.b16 %v2648
    %v3012 = vunpack.c.h.b16 %v2648
    %v3013 = vunpack.c.l.b16 %v2649
    %v3014 = vunpack.c.h.b16 %v2649
    %v3015 = vunpack.c.l.b16 %v2650
    %v3016 = vunpack.c.h.b16 %v2650
    %v3017 = vunpack.c.l.b16 %v2651
    %v3018 = vunpack.c.h.b16 %v2651
    %v3019 = vunpack.c.l.b16 %v2652
    %v3020 = vunpack.c.h.b16 %v2652
    %v3021 = vunpack.c.l.b16 %v2653
    %v3022 = vunpack.c.h.b16 %v2653
    %v3023 = vunpack.c.l.b16 %v2654
    %v3024 = vunpack.c.h.b16 %v2654
    %v3025 = vunpack.c.l.b16 %v2655
    %v3026 = vunpack.c.h.b16 %v2655
    %v3027 = vunpack.c.l.b16 %v2656
    %v3028 = vunpack.c.h.b16 %v2656
    %v3029 = vunpack.c.l.b16 %v2657
    %v3030 = vunpack.c.h.b16 %v2657
    %v3031 = vunpack.c.l.b16 %v2658
    %v3032 = vunpack.c.h.b16 %v2658
    %v3033 = vunpack.c.l.b16 %v2659
    %v3034 = vunpack.c.h.b16 %v2659
    %v3035 = vunpack.c.l.b16 %v2660
    %v3036 = vunpack.c.h.b16 %v2660
    %v3037 = vunpack.c.l.b16 %v2661
    %v3038 = vunpack.c.h.b16 %v2661
    %v3039 = vunpack.c.l.b16 %v2662
    %v3040 = vunpack.c.h.b16 %v2662
    %v3041 = vunpack.c.l.b16 %v2663
    %v3042 = vunpack.c.h.b16 %v2663
    %v3043 = vunpack.c.l.b16 %v2664
    %v3044 = vunpack.c.h.b16 %v2664
    %v3045 = vunpack.c.l.b16 %v2665
    %v3046 = vunpack.c.h.b16 %v2665
    %v3047 = vunpack.c.l.b16 %v2666
    %v3048 = vunpack.c.h.b16 %v2666
    %v3049 = vunpack.c.l.b16 %v2667
    %v3050 = vunpack.c.h.b16 %v2667
    %v3051 = vunpack.c.l.b16 %v2668
    %v3052 = vunpack.c.h.b16 %v2668
    %v3053 = vunpack.c.l.b16 %v2669
    %v3054 = vunpack.c.h.b16 %v2669
    %v3055 = vunpack.c.l.b16 %v2670
    %v3056 = vunpack.c.h.b16 %v2670
    %v3057 = vunpack.c.l.b16 %v2671
    %v3058 = vunpack.c.h.b16 %v2671
    %v3059 = vunpack.c.l.b16 %v2672
    %v3060 = vunpack.c.h.b16 %v2672
    %v3061 = vunpack.c.l.b16 %v2673
    %v3062 = vunpack.c.h.b16 %v2673
    %v3063 = vunpack.c.l.b16 %v2674
    %v3064 = vunpack.c.h.b16 %v2674
    %v3065 = vunpack.c.l.b16 %v2675
    %v3066 = vunpack.c.h.b16 %v2675
    %v3067 = vunpack.c.l.b16 %v2676
    %v3068 = vunpack.c.h.b16 %v2676
    %v3069 = vunpack.c.l.b16 %v2677
    %v3070 = vunpack.c.h.b16 %v2677
    %v3071 = vunpack.c.l.b16 %v2678
    %v3072 = vunpack.c.h.b16 %v2678
    %v3073 = vunpack.c.l.b16 %v2679
    %v3074 = vunpack.c.h.b16 %v2679
    %v3075 = vunpack.c.l.b16 %v2680
    %v3076 = vunpack.c.h.b16 %v2680
    %v3077 = vunpack.c.l.b16 %v2681
    %v3078 = vunpack.c.h.b16 %v2681
    %v3079 = vunpack.c.l.b16 %v2682
    %v3080 = vunpack.c.h.b16 %v2682
    %v3081 = vunpack.c.l.b16 %v2683
    %v3082 = vunpack.c.h.b16 %v2683
    %v3083 = vunpack.c.l.b16 %v2684
    %v3084 = vunpack.c.h.b16 %v2684
    %v3085 = vunpack.c.l.b16 %v2685
    %v3086 = vunpack.c.h.b16 %v2685
    %v3087 = vunpack.c.l.b16 %v2686
    %v3088 = vunpack.c.h.b16 %v2686
    %v3089 = vunpack.c.l.b16 %v2687
    %v3090 = vunpack.c.h.b16 %v2687
    %v3091 = vunpack.c.l.b16 %v2688
    %v3092 = vunpack.c.h.b16 %v2688
    %v3093 = vunpack.c.l.b16 %v2689
    %v3094 = vunpack.c.h.b16 %v2689
    %v3095 = vunpack.c.l.b16 %v2690
    %v3096 = vunpack.c.h.b16 %v2690
    %v3097 = vpack.c.b16 %v2845, %v2841
    %v3098 = vpack.c.b16 %v2846, %v2842
    %v3099 = vpack.c.b16 %v2847, %v2843
    %v3100 = vpack.c.b16 %v2848, %v2844
    %v3101 = vpack.c.b16 %v2853, %v2849
    %v3102 = vpack.c.b16 %v2854, %v2850
    %v3103 = vpack.c.b16 %v2855, %v2851
    %v3104 = vpack.c.b16 %v2856, %v2852
    %v3105 = vpack.c.b16 %v2861, %v2857
    %v3106 = vpack.c.b16 %v2862, %v2858
    %v3107 = vpack.c.b16 %v2863, %v2859
    %v3108 = vpack.c.b16 %v2864, %v2860
    %v3109 = vpack.c.b16 %v2869, %v2865
    %v3110 = vpack.c.b16 %v2870, %v2866
    %v3111 = vpack.c.b16 %v2871, %v2867
    %v3112 = vpack.c.b16 %v2872, %v2868
    %v3113 = vpack.c.b16 %v2877, %v2873
    %v3114 = vpack.c.b16 %v2878, %v2874
    %v3115 = vpack.c.b16 %v2879, %v2875
    %v3116 = vpack.c.b16 %v2880, %v2876
    %v3117 = vpack.c.b16 %v2885, %v2881
    %v3118 = vpack.c.b16 %v2886, %v2882
    %v3119 = vpack.c.b16 %v2887, %v2883
    %v3120 = vpack.c.b16 %v2888, %v2884
    %v3121 = vpack.c.b16 %v2893, %v2889
    %v3122 = vpack.c.b16 %v2894, %v2890
    %v3123 = vpack.c.b16 %v2895, %v2891
    %v3124 = vpack.c.b16 %v2896, %v2892
    %v3125 = vpack.c.b16 %v2901, %v2897
    %v3126 = vpack.c.b16 %v2902, %v2898
    %v3127 = vpack.c.b16 %v2903, %v2899
    %v3128 = vpack.c.b16 %v2904, %v2900
    %v3129 = vpack.c.b16 %v2909, %v2905
    %v3130 = vpack.c.b16 %v2910, %v2906
    %v3131 = vpack.c.b16 %v2911, %v2907
    %v3132 = vpack.c.b16 %v2912, %v2908
    %v3133 = vpack.c.b16 %v2917, %v2913
    %v3134 = vpack.c.b16 %v2918, %v2914
    %v3135 = vpack.c.b16 %v2919, %v2915
    %v3136 = vpack.c.b16 %v2920, %v2916
    %v3137 = vpack.c.b16 %v2925, %v2921
    %v3138 = vpack.c.b16 %v2926, %v2922
    %v3139 = vpack.c.b16 %v2927, %v2923
    %v3140 = vpack.c.b16 %v2928, %v2924
    %v3141 = vpack.c.b16 %v2933, %v2929
    %v3142 = vpack.c.b16 %v2934, %v2930
    %v3143 = vpack.c.b16 %v2935, %v2931
    %v3144 = vpack.c.b16 %v2936, %v2932
    %v3145 = vpack.c.b16 %v2941, %v2937
    %v3146 = vpack.c.b16 %v2942, %v2938
    %v3147 = vpack.c.b16 %v2943, %v2939
    %v3148 = vpack.c.b16 %v2944, %v2940
    %v3149 = vpack.c.b16 %v2949, %v2945
    %v3150 = vpack.c.b16 %v2950, %v2946
    %v3151 = vpack.c.b16 %v2951, %v2947
    %v3152 = vpack.c.b16 %v2952, %v2948
    %v3153 = vpack.c.b16 %v2957, %v2953
    %v3154 = vpack.c.b16 %v2958, %v2954
    %v3155 = vpack.c.b16 %v2959, %v2955
    %v3156 = vpack.c.b16 %v2960, %v2956
    %v3157 = vpack.c.b16 %v2965, %v2961
    %v3158 = vpack.c.b16 %v2966, %v2962
    %v3159 = vpack.c.b16 %v2967, %v2963
    %v3160 = vpack.c.b16 %v2968, %v2964
    %v3161 = vpack.c.b16 %v2973, %v2969
    %v3162 = vpack.c.b16 %v2974, %v2970
    %v3163 = vpack.c.b16 %v2975, %v2971
    %v3164 = vpack.c.b16 %v2976, %v2972
    %v3165 = vpack.c.b16 %v2981, %v2977
    %v3166 = vpack.c.b16 %v2982, %v2978
    %v3167 = vpack.c.b16 %v2983, %v2979
    %v3168 = vpack.c.b16 %v2984, %v2980
    %v3169 = vpack.c.b16 %v2989, %v2985
    %v3170 = vpack.c.b16 %v2990, %v2986
    %v3171 = vpack.c.b16 %v2991, %v2987
    %v3172 = vpack.c.b16 %v2992, %v2988
    %v3173 = vpack.c.b16 %v2997, %v2993
    %v3174 = vpack.c.b16 %v2998, %v2994
    %v3175 = vpack.c.b16 %v2999, %v2995
    %v3176 = vpack.c.b16 %v3000, %v2996
    %v3177 = vpack.c.b16 %v3005, %v3001
    %v3178 = vpack.c.b16 %v3006, %v3002
    %v3179 = vpack.c.b16 %v3007, %v3003
    %v3180 = vpack.c.b16 %v3008, %v3004
    %v3181 = vpack.c.b16 %v3013, %v3009
    %v3182 = vpack.c.b16 %v3014, %v3010
    %v3183 = vpack.c.b16 %v3015, %v3011
    %v3184 = vpack.c.b16 %v3016, %v3012
    %v3185 = vpack.c.b16 %v3021, %v3017
    %v3186 = vpack.c.b16 %v3022, %v3018
    %v3187 = vpack.c.b16 %v3023, %v3019
    %v3188 = vpack.c.b16 %v3024, %v3020
    %v3189 = vpack.c.b16 %v3029, %v3025
    %v3190 = vpack.c.b16 %v3030, %v3026
    %v3191 = vpack.c.b16 %v3031, %v3027
    %v3192 = vpack.c.b16 %v3032, %v3028
    %v3193 = vpack.c.b16 %v3037, %v3033
    %v3194 = vpack.c.b16 %v3038, %v3034
    %v3195 = vpack.c.b16 %v3039, %v3035
    %v3196 = vpack.c.b16 %v3040, %v3036
    %v3197 = vpack.c.b16 %v3045, %v3041
    %v3198 = vpack.c.b16 %v3046, %v3042
    %v3199 = vpack.c.b16 %v3047, %v3043
    %v3200 = vpack.c.b16 %v3048, %v3044
    %v3201 = vpack.c.b16 %v3053, %v3049
    %v3202 = vpack.c.b16 %v3054, %v3050
    %v3203 = vpack.c.b16 %v3055, %v3051
    %v3204 = vpack.c.b16 %v3056, %v3052
    %v3205 = vpack.c.b16 %v3061, %v3057
    %v3206 = vpack.c.b16 %v3062, %v3058
    %v3207 = vpack.c.b16 %v3063, %v3059
    %v3208 = vpack.c.b16 %v3064, %v3060
    %v3209 = vpack.c.b16 %v3069, %v3065
    %v3210 = vpack.c.b16 %v3070, %v3066
    %v3211 = vpack.c.b16 %v3071, %v3067
    %v3212 = vpack.c.b16 %v3072, %v3068
    %v3213 = vpack.c.b16 %v3077, %v3073
    %v3214 = vpack.c.b16 %v3078, %v3074
    %v3215 = vpack.c.b16 %v3079, %v3075
    %v3216 = vpack.c.b16 %v3080, %v3076
    %v3217 = vpack.c.b16 %v3085, %v3081
    %v3218 = vpack.c.b16 %v3086, %v3082
    %v3219 = vpack.c.b16 %v3087, %v3083
    %v3220 = vpack.c.b16 %v3088, %v3084
    %v3221 = vpack.c.b16 %v3093, %v3089
    %v3222 = vpack.c.b16 %v3094, %v3090
    %v3223 = vpack.c.b16 %v3095, %v3091
    %v3224 = vpack.c.b16 %v3096, %v3092
    %3353 = vmatprep.subr.bf16.mxu0 %v3098
    %3354 = vmatpush1.bf16.msra.mxu0 %v3097
    %3355 = vmatprep.subr.bf16.mxu0 %v3102
    %3356 = vmatpush1.bf16.msra.mxu0 %v3101
    %3357 = vmatprep.subr.bf16.mxu0 %v3106
    %3358 = vmatpush1.bf16.msra.mxu0 %v3105
    %3359 = vmatprep.subr.bf16.mxu0 %v3110
    %3360 = vmatpush1.bf16.msra.mxu0 %v3109
    %3361 = vmatprep.subr.bf16.mxu0 %v3114
    %3362 = vmatpush1.bf16.msra.mxu0 %v3113
    %3363 = vmatprep.subr.bf16.mxu0 %v3118
    %3364 = vmatpush1.bf16.msra.mxu0 %v3117
    %3365 = vmatprep.subr.bf16.mxu0 %v3122
    %3366 = vmatpush1.bf16.msra.mxu0 %v3121
    %3367 = vmatprep.subr.bf16.mxu0 %v3126
    %3368 = vmatpush1.bf16.msra.mxu0 %v3125
    %3369 = vmatprep.subr.bf16.mxu0 %v3130
    %3370 = vmatpush1.bf16.msra.mxu0 %v3129
    %3371 = vmatprep.subr.bf16.mxu0 %v3134
    %3372 = vmatpush1.bf16.msra.mxu0 %v3133
    %3373 = vmatprep.subr.bf16.mxu0 %v3138
    %3374 = vmatpush1.bf16.msra.mxu0 %v3137
    %3375 = vmatprep.subr.bf16.mxu0 %v3142
    %3376 = vmatpush1.bf16.msra.mxu0 %v3141
    %3377 = vmatprep.subr.bf16.mxu0 %v3146
    %3378 = vmatpush1.bf16.msra.mxu0 %v3145
    %3379 = vmatprep.subr.bf16.mxu0 %v3150
    %3380 = vmatpush1.bf16.msra.mxu0 %v3149
    %3381 = vmatprep.subr.bf16.mxu0 %v3154
    %3382 = vmatpush1.bf16.msra.mxu0 %v3153
    %3383 = vmatprep.subr.bf16.mxu0 %v3158
    %3384 = vmatpush1.bf16.msra.mxu0 %v3157
    %3385 = vmatprep.mubr.bf16.mxu0 %v1932
    %3386 = vmatmul.mubr.bf16.gmra.mrb[0].mxu0 %v1931
    %v3387 = vpop.f32.mrb[0].mxu0
    %v3388 = vadd.f32 %v2696, %v3387
    %v3389 = vpop.f32.mrb[0].mxu0
    %v3390 = vadd.f32 %v2700, %v3389
    %v3391 = vpop.f32.mrb[0].mxu0
    %v3392 = vpop.f32.mrb[0].mxu0
    %3393 = vdwg.mxu0
    %3394 = vmatprep.subr.bf16.mxu0 %v3162
    %3395 = vmatpush1.bf16.msra.mxu0 %v3161
    %3396 = vmatprep.subr.bf16.mxu0 %v3166
    %3397 = vmatpush1.bf16.msra.mxu0 %v3165
    %3398 = vmatprep.subr.bf16.mxu0 %v3170
    %3399 = vmatpush1.bf16.msra.mxu0 %v3169
    %3400 = vmatprep.subr.bf16.mxu0 %v3174
    %3401 = vmatpush1.bf16.msra.mxu0 %v3173
    %3402 = vmatprep.subr.bf16.mxu0 %v3178
    %3403 = vmatpush1.bf16.msra.mxu0 %v3177
    %3404 = vmatprep.subr.bf16.mxu0 %v3182
    %3405 = vmatpush1.bf16.msra.mxu0 %v3181
    %3406 = vmatprep.subr.bf16.mxu0 %v3186
    %3407 = vmatpush1.bf16.msra.mxu0 %v3185
    %3408 = vmatprep.subr.bf16.mxu0 %v3190
    %3409 = vmatpush1.bf16.msra.mxu0 %v3189
    %3410 = vmatprep.subr.bf16.mxu0 %v3194
    %3411 = vmatpush1.bf16.msra.mxu0 %v3193
    %3412 = vmatprep.subr.bf16.mxu0 %v3198
    %3413 = vmatpush1.bf16.msra.mxu0 %v3197
    %3414 = vmatprep.subr.bf16.mxu0 %v3202
    %3415 = vmatpush1.bf16.msra.mxu0 %v3201
    %3416 = vmatprep.subr.bf16.mxu0 %v3206
    %3417 = vmatpush1.bf16.msra.mxu0 %v3205
    %3418 = vmatprep.subr.bf16.mxu0 %v3210
    %3419 = vmatpush1.bf16.msra.mxu0 %v3209
    %3420 = vmatprep.subr.bf16.mxu0 %v3214
    %3421 = vmatpush1.bf16.msra.mxu0 %v3213
    %3422 = vmatprep.subr.bf16.mxu0 %v3218
    %3423 = vmatpush1.bf16.msra.mxu0 %v3217
    %3424 = vmatprep.subr.bf16.mxu0 %v3222
    %3425 = vmatpush1.bf16.msra.mxu0 %v3221
    %3426 = vmatprep.mubr.bf16.mxu0 %v1934
    %3427 = vmatmul.mubr.bf16.gmra.mrb[0].mxu0 %v1933
    %v3428 = vpop.f32.mrb[0].mxu0
    %v3429 = vadd.f32 %v3388, %v3428
    %v3430 = vpop.f32.mrb[0].mxu0
    %v3431 = vadd.f32 %v3390, %v3430
    %v3432 = vpop.f32.mrb[0].mxu0
    %v3433 = vpop.f32.mrb[0].mxu0
    %3434 = vdwg.mxu0
    %3435 = vmatprep.subr.bf16.mxu0 %v3100
    %3436 = vmatpush1.bf16.msra.mxu0 %v3099
    %3437 = vmatprep.subr.bf16.mxu0 %v3104
    %3438 = vmatpush1.bf16.msra.mxu0 %v3103
    %3439 = vmatprep.subr.bf16.mxu0 %v3108
    %3440 = vmatpush1.bf16.msra.mxu0 %v3107
    %3441 = vmatprep.subr.bf16.mxu0 %v3112
    %3442 = vmatpush1.bf16.msra.mxu0 %v3111
    %3443 = vmatprep.subr.bf16.mxu0 %v3116
    %3444 = vmatpush1.bf16.msra.mxu0 %v3115
    %3445 = vmatprep.subr.bf16.mxu0 %v3120
    %3446 = vmatpush1.bf16.msra.mxu0 %v3119
    %3447 = vmatprep.subr.bf16.mxu0 %v3124
    %3448 = vmatpush1.bf16.msra.mxu0 %v3123
    %3449 = vmatprep.subr.bf16.mxu0 %v3128
    %3450 = vmatpush1.bf16.msra.mxu0 %v3127
    %3451 = vmatprep.subr.bf16.mxu0 %v3132
    %3452 = vmatpush1.bf16.msra.mxu0 %v3131
    %3453 = vmatprep.subr.bf16.mxu0 %v3136
    %3454 = vmatpush1.bf16.msra.mxu0 %v3135
    %3455 = vmatprep.subr.bf16.mxu0 %v3140
    %3456 = vmatpush1.bf16.msra.mxu0 %v3139
    %3457 = vmatprep.subr.bf16.mxu0 %v3144
    %3458 = vmatpush1.bf16.msra.mxu0 %v3143
    %3459 = vmatprep.subr.bf16.mxu0 %v3148
    %3460 = vmatpush1.bf16.msra.mxu0 %v3147
    %3461 = vmatprep.subr.bf16.mxu0 %v3152
    %3462 = vmatpush1.bf16.msra.mxu0 %v3151
    %3463 = vmatprep.subr.bf16.mxu0 %v3156
    %3464 = vmatpush1.bf16.msra.mxu0 %v3155
    %3465 = vmatprep.subr.bf16.mxu0 %v3160
    %3466 = vmatpush1.bf16.msra.mxu0 %v3159
    %3467 = vmatprep.mubr.bf16.mxu0 %v1932
    %3468 = vmatmul.mubr.bf16.gmra.mrb[0].mxu0 %v1931
    %v3469 = vpop.f32.mrb[0].mxu0
    %v3470 = vadd.f32 %v2704, %v3469
    %v3471 = vpop.f32.mrb[0].mxu0
    %v3472 = vadd.f32 %v2708, %v3471
    %v3473 = vpop.f32.mrb[0].mxu0
    %v3474 = vpop.f32.mrb[0].mxu0
    %3475 = vdwg.mxu0
    %3476 = vmatprep.subr.bf16.mxu0 %v3164
    %3477 = vmatpush1.bf16.msra.mxu0 %v3163
    %3478 = vmatprep.subr.bf16.mxu0 %v3168
    %3479 = vmatpush1.bf16.msra.mxu0 %v3167
    %3480 = vmatprep.subr.bf16.mxu0 %v3172
    %3481 = vmatpush1.bf16.msra.mxu0 %v3171
    %3482 = vmatprep.subr.bf16.mxu0 %v3176
    %3483 = vmatpush1.bf16.msra.mxu0 %v3175
    %3484 = vmatprep.subr.bf16.mxu0 %v3180
    %3485 = vmatpush1.bf16.msra.mxu0 %v3179
    %3486 = vmatprep.subr.bf16.mxu0 %v3184
    %3487 = vmatpush1.bf16.msra.mxu0 %v3183
    %3488 = vmatprep.subr.bf16.mxu0 %v3188
    %3489 = vmatpush1.bf16.msra.mxu0 %v3187
    %3490 = vmatprep.subr.bf16.mxu0 %v3192
    %3491 = vmatpush1.bf16.msra.mxu0 %v3191
    %3492 = vmatprep.subr.bf16.mxu0 %v3196
    %3493 = vmatpush1.bf16.msra.mxu0 %v3195
    %3494 = vmatprep.subr.bf16.mxu0 %v3200
    %3495 = vmatpush1.bf16.msra.mxu0 %v3199
    %3496 = vmatprep.subr.bf16.mxu0 %v3204
    %3497 = vmatpush1.bf16.msra.mxu0 %v3203
    %3498 = vmatprep.subr.bf16.mxu0 %v3208
    %3499 = vmatpush1.bf16.msra.mxu0 %v3207
    %3500 = vmatprep.subr.bf16.mxu0 %v3212
    %3501 = vmatpush1.bf16.msra.mxu0 %v3211
    %3502 = vmatprep.subr.bf16.mxu0 %v3216
    %3503 = vmatpush1.bf16.msra.mxu0 %v3215
    %3504 = vmatprep.subr.bf16.mxu0 %v3220
    %3505 = vmatpush1.bf16.msra.mxu0 %v3219
    %3506 = vmatprep.subr.bf16.mxu0 %v3224
    %3507 = vmatpush1.bf16.msra.mxu0 %v3223
    %3508 = vmatprep.mubr.bf16.mxu0 %v1934
    %3509 = vmatmul.mubr.bf16.gmra.mrb[0].mxu0 %v1933
    %v3510 = vpop.f32.mrb[0].mxu0
    %v3511 = vadd.f32 %v3470, %v3510
    %v3512 = vpop.f32.mrb[0].mxu0
    %v3513 = vadd.f32 %v3472, %v3512
    %v3514 = vpop.f32.mrb[0].mxu0
    %v3515 = vpop.f32.mrb[0].mxu0
    %3516 = vdwg.mxu0
    %vm3517 = vcmp.gt.f32.partialorder %v3429, 0.0
    %vm3518 = vcmp.gt.f32.partialorder %v3431, 0.0
    %vm3519 = vcmp.gt.f32.partialorder %v3511, 0.0
    %vm3520 = vcmp.gt.f32.partialorder %v3513, 0.0
    %v3521 = vmin.f32 %v3429, 0.0
    %v3522 = vmin.f32 %v3431, 0.0
    %v3523 = vmin.f32 %v3511, 0.0
    %v3524 = vmin.f32 %v3513, 0.0
    %v3525 = vmul.f32 %v3521, 1.442695
    %v3526 = vpow.pop %v3525
    %v3527 = vmul.f32 %v3522, 1.442695
    %v3528 = vpow.pop %v3527
    %v3529 = vmul.f32 %v3523, 1.442695
    %v3530 = vpow.pop %v3529
    %v3531 = vmul.f32 %v3524, 1.442695
    %v3532 = vpow.pop %v3531
    %v3533 = vsub.f32 %v3526, 1.0
    %v3534 = vsub.f32 %v3528, 1.0
    %v3535 = vsub.f32 %v3530, 1.0
    %v3536 = vsub.f32 %v3532, 1.0
    %v3537 = vsel %vm3517, %v3429, %v3533
    %v3538 = vsel %vm3518, %v3431, %v3534
    %v3539 = vsel %vm3519, %v3511, %v3535
    %v3540 = vsel %vm3520, %v3513, %v3536
    %v3541 = vsel %vm1752, %v2562, -inf
    %v3542 = vrot.slane %v3541, 4
    %v3543 = vmax.f32 %v3541, %v3542
    %v3544 = vrot.slane %v3543, 2
    %v3545 = vmax.f32 %v3543, %v3544
    %v3546 = vrot.slane %v3545, 1
    %v3547 = vmax.f32 %v3545, %v3546
    %v3548 = vsub.f32 %v2562, %v3547
    %v3549 = vmul.f32 %v3548, 1.442695
    %v3550 = vpow.pop %v3549
    %v3551 = vsel %vm1752, %v3550, 0.0
    %v3552 = vrot.slane %v3551, 4
    %v3553 = vadd.f32 %v3551, %v3552
    %v3554 = vrot.slane %v3553, 2
    %v3555 = vadd.f32 %v3553, %v3554
    %v3556 = vrot.slane %v3555, 1
    %v3557 = vadd.f32 %v3555, %v3556
    %v3558 = vrcp.pop %v3557
    %v3559 = vmul.f32 %v3550, %v3558
    %3561 = vset.pattern.permute.xlu0 0
    %3562 = vperm.xlu0 %3561, %v3559
    %v3563 = vpop.permute.xlu0 %3562
    %v3565 = vmul.f32 %v3563, %v3537
    %v3566 = vmul.f32 %v3563, %v3538
    %v3567 = vmul.f32 %v3563, %v3539
    %v3568 = vmul.f32 %v3563, %v3540
    %v3569 = vsel %vm762, %v3565, 0.0
    %v3570 = vrot.slane %v3569, 4
    %v3571 = vadd.f32 %v3569, %v3570
    %v3572 = vrot.slane %v3571, 2
    %v3573 = vadd.f32 %v3571, %v3572
    %v3574 = vrot.slane %v3573, 1
    %v3575 = vadd.f32 %v3573, %v3574
    %v3576 = vsel %vm762, %v3566, 0.0
    %v3577 = vrot.slane %v3576, 4
    %v3578 = vadd.f32 %v3576, %v3577
    %v3579 = vrot.slane %v3578, 2
    %v3580 = vadd.f32 %v3578, %v3579
    %v3581 = vrot.slane %v3580, 1
    %v3582 = vadd.f32 %v3580, %v3581
    %v3583 = vsel %vm762, %v3567, 0.0
    %v3584 = vrot.slane %v3583, 4
    %v3585 = vadd.f32 %v3583, %v3584
    %v3586 = vrot.slane %v3585, 2
    %v3587 = vadd.f32 %v3585, %v3586
    %v3588 = vrot.slane %v3587, 1
    %v3589 = vadd.f32 %v3587, %v3588
    %v3590 = vsel %vm762, %v3568, 0.0
    %v3591 = vrot.slane %v3590, 4
    %v3592 = vadd.f32 %v3590, %v3591
    %v3593 = vrot.slane %v3592, 2
    %v3594 = vadd.f32 %v3592, %v3593
    %v3595 = vrot.slane %v3594, 1
    %v3596 = vadd.f32 %v3594, %v3595
    %v3601 = vcombine.low %v3575, %v3582
    %v3602 = vcombine.low %v3589, %v3596
    %v3604 = vunpack.c.l.s4 1966171168
    %v3605 = vunpack.c.0.s8 %v3604
    %v3606 = vlaneseq
    %v3607 = vshrl.u32 %v3606, 7
    %v3608 = vsub.s32 %v3605, %v3607
    %v3609 = vrot.slane %v3601, %v3608
    %v3611 = vunpack.c.l.s4 1966171168
    %v3612 = vunpack.c.0.s8 %v3611
    %v3613 = vlaneseq
    %v3614 = vshrl.u32 %v3613, 7
    %v3615 = vsub.s32 %v3612, %v3614
    %v3616 = vrot.slane %v3602, %v3615
    %v3617 = vcombine.low %v3609, %v3616
    %v3619 = vunpack.c.l.s4 1966171168
    %v3620 = vunpack.c.0.s8 %v3619
    %v3621 = vlaneseq
    %v3622 = vshrl.u32 %v3621, 7
    %v3623 = vsub.s32 %v3620, %v3622
    %v3624 = vrot.slane %v3617, %v3623
    %s3626 = scalar_lea.vmem [#allocation2], 1
    %3627 = vst.msk [vmem:[%s3626] ss:$2 sm:$0xf] %vm1841, %v3624
    %v3628 = vld [vmem:[#allocation2] sm:$0xff]
    %v3629 = vld [vmem:[%s9] sm:$0xff]
    %v3630 = vld [vmem:[%s9 + $0x8] sm:$0xff]
    %v3631 = vld [vmem:[%s9 + $0x10] sm:$0xff]
    %v3632 = vld [vmem:[%s9 + $0x18] sm:$0xff]
    %v3633 = vld [vmem:[%s9 + $0x20] sm:$0xff]
    %v3634 = vld [vmem:[%s9 + $0x28] sm:$0xff]
    %v3635 = vld [vmem:[%s9 + $0x30] sm:$0xff]
    %v3636 = vld [vmem:[%s9 + $0x38] sm:$0xff]
    %v3637 = vld [vmem:[%s9 + $0x40] sm:$0xff]
    %v3638 = vld [vmem:[%s9 + $0x48] sm:$0xff]
    %v3639 = vld [vmem:[%s9 + $0x50] sm:$0xff]
    %v3640 = vld [vmem:[%s9 + $0x58] sm:$0xff]
    %v3641 = vld [vmem:[%s9 + $0x60] sm:$0xff]
    %v3642 = vld [vmem:[%s9 + $0x68] sm:$0xff]
    %v3643 = vld [vmem:[%s9 + $0x70] sm:$0xff]
    %v3644 = vld [vmem:[%s9 + $0x78] sm:$0xff]
    %v3645 = vld [vmem:[%s9 + $0x80] sm:$0xff]
    %v3646 = vld [vmem:[%s9 + $0x88] sm:$0xff]
    %v3647 = vld [vmem:[%s9 + $0x90] sm:$0xff]
    %v3648 = vld [vmem:[%s9 + $0x98] sm:$0xff]
    %v3649 = vld [vmem:[%s9 + $0xa0] sm:$0xff]
    %v3650 = vld [vmem:[%s9 + $0xa8] sm:$0xff]
    %v3651 = vld [vmem:[%s9 + $0xb0] sm:$0xff]
    %v3652 = vld [vmem:[%s9 + $0xb8] sm:$0xff]
    %v3653 = vld [vmem:[%s9 + $0xc0] sm:$0xff]
    %v3654 = vld [vmem:[%s9 + $0xc8] sm:$0xff]
    %v3655 = vld [vmem:[%s9 + $0xd0] sm:$0xff]
    %v3656 = vld [vmem:[%s9 + $0xd8] sm:$0xff]
    %v3657 = vld [vmem:[%s9 + $0xe0] sm:$0xff]
    %v3658 = vld [vmem:[%s9 + $0xe8] sm:$0xff]
    %v3659 = vld [vmem:[%s9 + $0xf0] sm:$0xff]
    %v3660 = vld [vmem:[%s9 + $0xf8] sm:$0xff]
    %v3661 = vld [vmem:[%s9 + $0x100] sm:$0xff]
    %v3662 = vld [vmem:[%s9 + $0x108] sm:$0xff]
    %v3663 = vld [vmem:[%s9 + $0x110] sm:$0xff]
    %v3664 = vld [vmem:[%s9 + $0x118] sm:$0xff]
    %v3665 = vld [vmem:[%s9 + $0x120] sm:$0xff]
    %v3666 = vld [vmem:[%s9 + $0x128] sm:$0xff]
    %v3667 = vld [vmem:[%s9 + $0x130] sm:$0xff]
    %v3668 = vld [vmem:[%s9 + $0x138] sm:$0xff]
    %v3669 = vld [vmem:[%s9 + $0x140] sm:$0xff]
    %v3670 = vld [vmem:[%s9 + $0x148] sm:$0xff]
    %v3671 = vld [vmem:[%s9 + $0x150] sm:$0xff]
    %v3672 = vld [vmem:[%s9 + $0x158] sm:$0xff]
    %v3673 = vld [vmem:[%s9 + $0x160] sm:$0xff]
    %v3674 = vld [vmem:[%s9 + $0x168] sm:$0xff]
    %v3675 = vld [vmem:[%s9 + $0x170] sm:$0xff]
    %v3676 = vld [vmem:[%s9 + $0x178] sm:$0xff]
    %v3677 = vld [vmem:[%s9 + $0x180] sm:$0xff]
    %v3678 = vld [vmem:[%s9 + $0x188] sm:$0xff]
    %v3679 = vld [vmem:[%s9 + $0x190] sm:$0xff]
    %v3680 = vld [vmem:[%s9 + $0x198] sm:$0xff]
    %v3681 = vld [vmem:[%s9 + $0x1a0] sm:$0xff]
    %v3682 = vld [vmem:[%s9 + $0x1a8] sm:$0xff]
    %v3683 = vld [vmem:[%s9 + $0x1b0] sm:$0xff]
    %v3684 = vld [vmem:[%s9 + $0x1b8] sm:$0xff]
    %v3685 = vld [vmem:[%s9 + $0x1c0] sm:$0xff]
    %v3686 = vld [vmem:[%s9 + $0x1c8] sm:$0xff]
    %v3687 = vld [vmem:[%s9 + $0x1d0] sm:$0xff]
    %v3688 = vld [vmem:[%s9 + $0x1d8] sm:$0xff]
    %v3689 = vld [vmem:[%s9 + $0x1e0] sm:$0xff]
    %v3690 = vld [vmem:[%s9 + $0x1e8] sm:$0xff]
    %v3691 = vld [vmem:[%s9 + $0x1f0] sm:$0xff]
    %v3692 = vld [vmem:[%s9 + $0x1f8] sm:$0xff]
    %v3693 = vld [vmem:[%s9 + $0x200] sm:$0xff]
    %v3694 = vld [vmem:[%s9 + $0x208] sm:$0xff]
    %v3695 = vld [vmem:[%s9 + $0x210] sm:$0xff]
    %v3696 = vld [vmem:[%s9 + $0x218] sm:$0xff]
    %v3697 = vld [vmem:[%s9 + $0x220] sm:$0xff]
    %v3698 = vld [vmem:[%s9 + $0x228] sm:$0xff]
    %v3699 = vld [vmem:[%s9 + $0x230] sm:$0xff]
    %v3700 = vld [vmem:[%s9 + $0x238] sm:$0xff]
    %v3701 = vld [vmem:[%s9 + $0x240] sm:$0xff]
    %v3702 = vld [vmem:[%s9 + $0x248] sm:$0xff]
    %v3703 = vld [vmem:[%s9 + $0x250] sm:$0xff]
    %v3704 = vld [vmem:[%s9 + $0x258] sm:$0xff]
    %v3705 = vld [vmem:[%s9 + $0x260] sm:$0xff]
    %v3706 = vld [vmem:[%s9 + $0x268] sm:$0xff]
    %v3707 = vld [vmem:[%s9 + $0x270] sm:$0xff]
    %v3708 = vld [vmem:[%s9 + $0x278] sm:$0xff]
    %v3709 = vld [vmem:[%s9 + $0x280] sm:$0xff]
    %v3710 = vld [vmem:[%s9 + $0x288] sm:$0xff]
    %v3711 = vld [vmem:[%s9 + $0x290] sm:$0xff]
    %v3712 = vld [vmem:[%s9 + $0x298] sm:$0xff]
    %v3713 = vld [vmem:[%s9 + $0x2a0] sm:$0xff]
    %v3714 = vld [vmem:[%s9 + $0x2a8] sm:$0xff]
    %v3715 = vld [vmem:[%s9 + $0x2b0] sm:$0xff]
    %v3716 = vld [vmem:[%s9 + $0x2b8] sm:$0xff]
    %v3717 = vld [vmem:[%s9 + $0x2c0] sm:$0xff]
    %v3718 = vld [vmem:[%s9 + $0x2c8] sm:$0xff]
    %v3719 = vld [vmem:[%s9 + $0x2d0] sm:$0xff]
    %v3720 = vld [vmem:[%s9 + $0x2d8] sm:$0xff]
    %v3721 = vld [vmem:[%s9 + $0x2e0] sm:$0xff]
    %v3722 = vld [vmem:[%s9 + $0x2e8] sm:$0xff]
    %v3723 = vld [vmem:[%s9 + $0x2f0] sm:$0xff]
    %v3724 = vld [vmem:[%s9 + $0x2f8] sm:$0xff]
    %v3725 = vld [vmem:[%s9 + $0x300] sm:$0xff]
    %v3726 = vld [vmem:[%s9 + $0x308] sm:$0xff]
    %v3727 = vld [vmem:[%s9 + $0x310] sm:$0xff]
    %v3728 = vld [vmem:[%s9 + $0x318] sm:$0xff]
    %v3729 = vld [vmem:[%s9 + $0x320] sm:$0xff]
    %v3730 = vld [vmem:[%s9 + $0x328] sm:$0xff]
    %v3731 = vld [vmem:[%s9 + $0x330] sm:$0xff]
    %v3732 = vld [vmem:[%s9 + $0x338] sm:$0xff]
    %v3733 = vld [vmem:[%s9 + $0x340] sm:$0xff]
    %v3734 = vld [vmem:[%s9 + $0x348] sm:$0xff]
    %v3735 = vld [vmem:[%s9 + $0x350] sm:$0xff]
    %v3736 = vld [vmem:[%s9 + $0x358] sm:$0xff]
    %v3737 = vld [vmem:[%s9 + $0x360] sm:$0xff]
    %v3738 = vld [vmem:[%s9 + $0x368] sm:$0xff]
    %v3739 = vld [vmem:[%s9 + $0x370] sm:$0xff]
    %v3740 = vld [vmem:[%s9 + $0x378] sm:$0xff]
    %v3741 = vld [vmem:[%s9 + $0x380] sm:$0xff]
    %v3742 = vld [vmem:[%s9 + $0x388] sm:$0xff]
    %v3743 = vld [vmem:[%s9 + $0x390] sm:$0xff]
    %v3744 = vld [vmem:[%s9 + $0x398] sm:$0xff]
    %v3745 = vld [vmem:[%s9 + $0x3a0] sm:$0xff]
    %v3746 = vld [vmem:[%s9 + $0x3a8] sm:$0xff]
    %v3747 = vld [vmem:[%s9 + $0x3b0] sm:$0xff]
    %v3748 = vld [vmem:[%s9 + $0x3b8] sm:$0xff]
    %v3749 = vld [vmem:[%s9 + $0x3c0] sm:$0xff]
    %v3750 = vld [vmem:[%s9 + $0x3c8] sm:$0xff]
    %v3751 = vld [vmem:[%s9 + $0x3d0] sm:$0xff]
    %v3752 = vld [vmem:[%s9 + $0x3d8] sm:$0xff]
    %v3753 = vld [vmem:[%s9 + $0x3e0] sm:$0xff]
    %v3754 = vld [vmem:[%s9 + $0x3e8] sm:$0xff]
    %v3755 = vld [vmem:[%s9 + $0x3f0] sm:$0xff]
    %v3756 = vld [vmem:[%s9 + $0x3f8] sm:$0xff]
    %v3758 = vcombine.high %v3628, %v3628
    %v3760 = vunpack.c.l.s4 1983009808
    %v3761 = vunpack.c.0.s8 %v3760
    %v3762 = vlaneseq
    %v3763 = vshrl.u32 %v3762, 7
    %v3764 = vsub.s32 %v3761, %v3763
    %v3765 = vrot.slane %v3628, %v3764
    %v3767 = vunpack.c.l.s4 1983009808
    %v3768 = vunpack.c.0.s8 %v3767
    %v3769 = vlaneseq
    %v3770 = vshrl.u32 %v3769, 7
    %v3771 = vsub.s32 %v3768, %v3770
    %v3772 = vrot.slane %v3758, %v3771
    %v3773 = vcombine.high %v3765, %v3765
    %v3774 = vcombine.high %v3772, %v3772
    %v3779 = vpack.c.bf16 %v3765, %v3765
    %v3780 = vpack.c.bf16 %v3773, %v3773
    %v3781 = vpack.c.bf16 %v3772, %v3772
    %v3782 = vpack.c.bf16 %v3774, %v3774
    %v3783 = vld [vmem:[%s10] sm:$0xf]
    %v3785 = vlaneseq
    %v3786 = vshrl.u32 %v3785, 7
    %v3787 = vsub.s32 0, %v3786
    %v3788 = vrot.slane %v3783, %v3787
    %v3789 = vlaneseq
    %v3790 = vshrl.u32 %v3789, 7
    %v3791 = vsub.s32 1, %v3790
    %v3792 = vrot.slane %v3783, %v3791
    %v3793 = vlaneseq
    %v3794 = vshrl.u32 %v3793, 7
    %v3795 = vsub.s32 2, %v3794
    %v3796 = vrot.slane %v3783, %v3795
    %v3797 = vlaneseq
    %v3798 = vshrl.u32 %v3797, 7
    %v3799 = vsub.s32 3, %v3798
    %v3800 = vrot.slane %v3783, %v3799
    %v3933 = vunpack.c.l.b16 %v3629
    %v3934 = vunpack.c.h.b16 %v3629
    %v3935 = vunpack.c.l.b16 %v3630
    %v3936 = vunpack.c.h.b16 %v3630
    %v3937 = vunpack.c.l.b16 %v3631
    %v3938 = vunpack.c.h.b16 %v3631
    %v3939 = vunpack.c.l.b16 %v3632
    %v3940 = vunpack.c.h.b16 %v3632
    %v3941 = vunpack.c.l.b16 %v3633
    %v3942 = vunpack.c.h.b16 %v3633
    %v3943 = vunpack.c.l.b16 %v3634
    %v3944 = vunpack.c.h.b16 %v3634
    %v3945 = vunpack.c.l.b16 %v3635
    %v3946 = vunpack.c.h.b16 %v3635
    %v3947 = vunpack.c.l.b16 %v3636
    %v3948 = vunpack.c.h.b16 %v3636
    %v3949 = vunpack.c.l.b16 %v3637
    %v3950 = vunpack.c.h.b16 %v3637
    %v3951 = vunpack.c.l.b16 %v3638
    %v3952 = vunpack.c.h.b16 %v3638
    %v3953 = vunpack.c.l.b16 %v3639
    %v3954 = vunpack.c.h.b16 %v3639
    %v3955 = vunpack.c.l.b16 %v3640
    %v3956 = vunpack.c.h.b16 %v3640
    %v3957 = vunpack.c.l.b16 %v3641
    %v3958 = vunpack.c.h.b16 %v3641
    %v3959 = vunpack.c.l.b16 %v3642
    %v3960 = vunpack.c.h.b16 %v3642
    %v3961 = vunpack.c.l.b16 %v3643
    %v3962 = vunpack.c.h.b16 %v3643
    %v3963 = vunpack.c.l.b16 %v3644
    %v3964 = vunpack.c.h.b16 %v3644
    %v3965 = vunpack.c.l.b16 %v3645
    %v3966 = vunpack.c.h.b16 %v3645
    %v3967 = vunpack.c.l.b16 %v3646
    %v3968 = vunpack.c.h.b16 %v3646
    %v3969 = vunpack.c.l.b16 %v3647
    %v3970 = vunpack.c.h.b16 %v3647
    %v3971 = vunpack.c.l.b16 %v3648
    %v3972 = vunpack.c.h.b16 %v3648
    %v3973 = vunpack.c.l.b16 %v3649
    %v3974 = vunpack.c.h.b16 %v3649
    %v3975 = vunpack.c.l.b16 %v3650
    %v3976 = vunpack.c.h.b16 %v3650
    %v3977 = vunpack.c.l.b16 %v3651
    %v3978 = vunpack.c.h.b16 %v3651
    %v3979 = vunpack.c.l.b16 %v3652
    %v3980 = vunpack.c.h.b16 %v3652
    %v3981 = vunpack.c.l.b16 %v3653
    %v3982 = vunpack.c.h.b16 %v3653
    %v3983 = vunpack.c.l.b16 %v3654
    %v3984 = vunpack.c.h.b16 %v3654
    %v3985 = vunpack.c.l.b16 %v3655
    %v3986 = vunpack.c.h.b16 %v3655
    %v3987 = vunpack.c.l.b16 %v3656
    %v3988 = vunpack.c.h.b16 %v3656
    %v3989 = vunpack.c.l.b16 %v3657
    %v3990 = vunpack.c.h.b16 %v3657
    %v3991 = vunpack.c.l.b16 %v3658
    %v3992 = vunpack.c.h.b16 %v3658
    %v3993 = vunpack.c.l.b16 %v3659
    %v3994 = vunpack.c.h.b16 %v3659
    %v3995 = vunpack.c.l.b16 %v3660
    %v3996 = vunpack.c.h.b16 %v3660
    %v3997 = vunpack.c.l.b16 %v3661
    %v3998 = vunpack.c.h.b16 %v3661
    %v3999 = vunpack.c.l.b16 %v3662
    %v4000 = vunpack.c.h.b16 %v3662
    %v4001 = vunpack.c.l.b16 %v3663
    %v4002 = vunpack.c.h.b16 %v3663
    %v4003 = vunpack.c.l.b16 %v3664
    %v4004 = vunpack.c.h.b16 %v3664
    %v4005 = vunpack.c.l.b16 %v3665
    %v4006 = vunpack.c.h.b16 %v3665
    %v4007 = vunpack.c.l.b16 %v3666
    %v4008 = vunpack.c.h.b16 %v3666
    %v4009 = vunpack.c.l.b16 %v3667
    %v4010 = vunpack.c.h.b16 %v3667
    %v4011 = vunpack.c.l.b16 %v3668
    %v4012 = vunpack.c.h.b16 %v3668
    %v4013 = vunpack.c.l.b16 %v3669
    %v4014 = vunpack.c.h.b16 %v3669
    %v4015 = vunpack.c.l.b16 %v3670
    %v4016 = vunpack.c.h.b16 %v3670
    %v4017 = vunpack.c.l.b16 %v3671
    %v4018 = vunpack.c.h.b16 %v3671
    %v4019 = vunpack.c.l.b16 %v3672
    %v4020 = vunpack.c.h.b16 %v3672
    %v4021 = vunpack.c.l.b16 %v3673
    %v4022 = vunpack.c.h.b16 %v3673
    %v4023 = vunpack.c.l.b16 %v3674
    %v4024 = vunpack.c.h.b16 %v3674
    %v4025 = vunpack.c.l.b16 %v3675
    %v4026 = vunpack.c.h.b16 %v3675
    %v4027 = vunpack.c.l.b16 %v3676
    %v4028 = vunpack.c.h.b16 %v3676
    %v4029 = vunpack.c.l.b16 %v3677
    %v4030 = vunpack.c.h.b16 %v3677
    %v4031 = vunpack.c.l.b16 %v3678
    %v4032 = vunpack.c.h.b16 %v3678
    %v4033 = vunpack.c.l.b16 %v3679
    %v4034 = vunpack.c.h.b16 %v3679
    %v4035 = vunpack.c.l.b16 %v3680
    %v4036 = vunpack.c.h.b16 %v3680
    %v4037 = vunpack.c.l.b16 %v3681
    %v4038 = vunpack.c.h.b16 %v3681
    %v4039 = vunpack.c.l.b16 %v3682
    %v4040 = vunpack.c.h.b16 %v3682
    %v4041 = vunpack.c.l.b16 %v3683
    %v4042 = vunpack.c.h.b16 %v3683
    %v4043 = vunpack.c.l.b16 %v3684
    %v4044 = vunpack.c.h.b16 %v3684
    %v4045 = vunpack.c.l.b16 %v3685
    %v4046 = vunpack.c.h.b16 %v3685
    %v4047 = vunpack.c.l.b16 %v3686
    %v4048 = vunpack.c.h.b16 %v3686
    %v4049 = vunpack.c.l.b16 %v3687
    %v4050 = vunpack.c.h.b16 %v3687
    %v4051 = vunpack.c.l.b16 %v3688
    %v4052 = vunpack.c.h.b16 %v3688
    %v4053 = vunpack.c.l.b16 %v3689
    %v4054 = vunpack.c.h.b16 %v3689
    %v4055 = vunpack.c.l.b16 %v3690
    %v4056 = vunpack.c.h.b16 %v3690
    %v4057 = vunpack.c.l.b16 %v3691
    %v4058 = vunpack.c.h.b16 %v3691
    %v4059 = vunpack.c.l.b16 %v3692
    %v4060 = vunpack.c.h.b16 %v3692
    %v4061 = vunpack.c.l.b16 %v3693
    %v4062 = vunpack.c.h.b16 %v3693
    %v4063 = vunpack.c.l.b16 %v3694
    %v4064 = vunpack.c.h.b16 %v3694
    %v4065 = vunpack.c.l.b16 %v3695
    %v4066 = vunpack.c.h.b16 %v3695
    %v4067 = vunpack.c.l.b16 %v3696
    %v4068 = vunpack.c.h.b16 %v3696
    %v4069 = vunpack.c.l.b16 %v3697
    %v4070 = vunpack.c.h.b16 %v3697
    %v4071 = vunpack.c.l.b16 %v3698
    %v4072 = vunpack.c.h.b16 %v3698
    %v4073 = vunpack.c.l.b16 %v3699
    %v4074 = vunpack.c.h.b16 %v3699
    %v4075 = vunpack.c.l.b16 %v3700
    %v4076 = vunpack.c.h.b16 %v3700
    %v4077 = vunpack.c.l.b16 %v3701
    %v4078 = vunpack.c.h.b16 %v3701
    %v4079 = vunpack.c.l.b16 %v3702
    %v4080 = vunpack.c.h.b16 %v3702
    %v4081 = vunpack.c.l.b16 %v3703
    %v4082 = vunpack.c.h.b16 %v3703
    %v4083 = vunpack.c.l.b16 %v3704
    %v4084 = vunpack.c.h.b16 %v3704
    %v4085 = vunpack.c.l.b16 %v3705
    %v4086 = vunpack.c.h.b16 %v3705
    %v4087 = vunpack.c.l.b16 %v3706
    %v4088 = vunpack.c.h.b16 %v3706
    %v4089 = vunpack.c.l.b16 %v3707
    %v4090 = vunpack.c.h.b16 %v3707
    %v4091 = vunpack.c.l.b16 %v3708
    %v4092 = vunpack.c.h.b16 %v3708
    %v4093 = vunpack.c.l.b16 %v3709
    %v4094 = vunpack.c.h.b16 %v3709
    %v4095 = vunpack.c.l.b16 %v3710
    %v4096 = vunpack.c.h.b16 %v3710
    %v4097 = vunpack.c.l.b16 %v3711
    %v4098 = vunpack.c.h.b16 %v3711
    %v4099 = vunpack.c.l.b16 %v3712
    %v4100 = vunpack.c.h.b16 %v3712
    %v4101 = vunpack.c.l.b16 %v3713
    %v4102 = vunpack.c.h.b16 %v3713
    %v4103 = vunpack.c.l.b16 %v3714
    %v4104 = vunpack.c.h.b16 %v3714
    %v4105 = vunpack.c.l.b16 %v3715
    %v4106 = vunpack.c.h.b16 %v3715
    %v4107 = vunpack.c.l.b16 %v3716
    %v4108 = vunpack.c.h.b16 %v3716
    %v4109 = vunpack.c.l.b16 %v3717
    %v4110 = vunpack.c.h.b16 %v3717
    %v4111 = vunpack.c.l.b16 %v3718
    %v4112 = vunpack.c.h.b16 %v3718
    %v4113 = vunpack.c.l.b16 %v3719
    %v4114 = vunpack.c.h.b16 %v3719
    %v4115 = vunpack.c.l.b16 %v3720
    %v4116 = vunpack.c.h.b16 %v3720
    %v4117 = vunpack.c.l.b16 %v3721
    %v4118 = vunpack.c.h.b16 %v3721
    %v4119 = vunpack.c.l.b16 %v3722
    %v4120 = vunpack.c.h.b16 %v3722
    %v4121 = vunpack.c.l.b16 %v3723
    %v4122 = vunpack.c.h.b16 %v3723
    %v4123 = vunpack.c.l.b16 %v3724
    %v4124 = vunpack.c.h.b16 %v3724
    %v4125 = vunpack.c.l.b16 %v3725
    %v4126 = vunpack.c.h.b16 %v3725
    %v4127 = vunpack.c.l.b16 %v3726
    %v4128 = vunpack.c.h.b16 %v3726
    %v4129 = vunpack.c.l.b16 %v3727
    %v4130 = vunpack.c.h.b16 %v3727
    %v4131 = vunpack.c.l.b16 %v3728
    %v4132 = vunpack.c.h.b16 %v3728
    %v4133 = vunpack.c.l.b16 %v3729
    %v4134 = vunpack.c.h.b16 %v3729
    %v4135 = vunpack.c.l.b16 %v3730
    %v4136 = vunpack.c.h.b16 %v3730
    %v4137 = vunpack.c.l.b16 %v3731
    %v4138 = vunpack.c.h.b16 %v3731
    %v4139 = vunpack.c.l.b16 %v3732
    %v4140 = vunpack.c.h.b16 %v3732
    %v4141 = vunpack.c.l.b16 %v3733
    %v4142 = vunpack.c.h.b16 %v3733
    %v4143 = vunpack.c.l.b16 %v3734
    %v4144 = vunpack.c.h.b16 %v3734
    %v4145 = vunpack.c.l.b16 %v3735
    %v4146 = vunpack.c.h.b16 %v3735
    %v4147 = vunpack.c.l.b16 %v3736
    %v4148 = vunpack.c.h.b16 %v3736
    %v4149 = vunpack.c.l.b16 %v3737
    %v4150 = vunpack.c.h.b16 %v3737
    %v4151 = vunpack.c.l.b16 %v3738
    %v4152 = vunpack.c.h.b16 %v3738
    %v4153 = vunpack.c.l.b16 %v3739
    %v4154 = vunpack.c.h.b16 %v3739
    %v4155 = vunpack.c.l.b16 %v3740
    %v4156 = vunpack.c.h.b16 %v3740
    %v4157 = vunpack.c.l.b16 %v3741
    %v4158 = vunpack.c.h.b16 %v3741
    %v4159 = vunpack.c.l.b16 %v3742
    %v4160 = vunpack.c.h.b16 %v3742
    %v4161 = vunpack.c.l.b16 %v3743
    %v4162 = vunpack.c.h.b16 %v3743
    %v4163 = vunpack.c.l.b16 %v3744
    %v4164 = vunpack.c.h.b16 %v3744
    %v4165 = vunpack.c.l.b16 %v3745
    %v4166 = vunpack.c.h.b16 %v3745
    %v4167 = vunpack.c.l.b16 %v3746
    %v4168 = vunpack.c.h.b16 %v3746
    %v4169 = vunpack.c.l.b16 %v3747
    %v4170 = vunpack.c.h.b16 %v3747
    %v4171 = vunpack.c.l.b16 %v3748
    %v4172 = vunpack.c.h.b16 %v3748
    %v4173 = vunpack.c.l.b16 %v3749
    %v4174 = vunpack.c.h.b16 %v3749
    %v4175 = vunpack.c.l.b16 %v3750
    %v4176 = vunpack.c.h.b16 %v3750
    %v4177 = vunpack.c.l.b16 %v3751
    %v4178 = vunpack.c.h.b16 %v3751
    %v4179 = vunpack.c.l.b16 %v3752
    %v4180 = vunpack.c.h.b16 %v3752
    %v4181 = vunpack.c.l.b16 %v3753
    %v4182 = vunpack.c.h.b16 %v3753
    %v4183 = vunpack.c.l.b16 %v3754
    %v4184 = vunpack.c.h.b16 %v3754
    %v4185 = vunpack.c.l.b16 %v3755
    %v4186 = vunpack.c.h.b16 %v3755
    %v4187 = vunpack.c.l.b16 %v3756
    %v4188 = vunpack.c.h.b16 %v3756
    %v4189 = vpack.c.b16 %v3937, %v3933
    %v4190 = vpack.c.b16 %v3938, %v3934
    %v4191 = vpack.c.b16 %v3939, %v3935
    %v4192 = vpack.c.b16 %v3940, %v3936
    %v4193 = vpack.c.b16 %v3945, %v3941
    %v4194 = vpack.c.b16 %v3946, %v3942
    %v4195 = vpack.c.b16 %v3947, %v3943
    %v4196 = vpack.c.b16 %v3948, %v3944
    %v4197 = vpack.c.b16 %v3953, %v3949
    %v4198 = vpack.c.b16 %v3954, %v3950
    %v4199 = vpack.c.b16 %v3955, %v3951
    %v4200 = vpack.c.b16 %v3956, %v3952
    %v4201 = vpack.c.b16 %v3961, %v3957
    %v4202 = vpack.c.b16 %v3962, %v3958
    %v4203 = vpack.c.b16 %v3963, %v3959
    %v4204 = vpack.c.b16 %v3964, %v3960
    %v4205 = vpack.c.b16 %v3969, %v3965
    %v4206 = vpack.c.b16 %v3970, %v3966
    %v4207 = vpack.c.b16 %v3971, %v3967
    %v4208 = vpack.c.b16 %v3972, %v3968
    %v4209 = vpack.c.b16 %v3977, %v3973
    %v4210 = vpack.c.b16 %v3978, %v3974
    %v4211 = vpack.c.b16 %v3979, %v3975
    %v4212 = vpack.c.b16 %v3980, %v3976
    %v4213 = vpack.c.b16 %v3985, %v3981
    %v4214 = vpack.c.b16 %v3986, %v3982
    %v4215 = vpack.c.b16 %v3987, %v3983
    %v4216 = vpack.c.b16 %v3988, %v3984
    %v4217 = vpack.c.b16 %v3993, %v3989
    %v4218 = vpack.c.b16 %v3994, %v3990
    %v4219 = vpack.c.b16 %v3995, %v3991
    %v4220 = vpack.c.b16 %v3996, %v3992
    %v4221 = vpack.c.b16 %v4001, %v3997
    %v4222 = vpack.c.b16 %v4002, %v3998
    %v4223 = vpack.c.b16 %v4003, %v3999
    %v4224 = vpack.c.b16 %v4004, %v4000
    %v4225 = vpack.c.b16 %v4009, %v4005
    %v4226 = vpack.c.b16 %v4010, %v4006
    %v4227 = vpack.c.b16 %v4011, %v4007
    %v4228 = vpack.c.b16 %v4012, %v4008
    %v4229 = vpack.c.b16 %v4017, %v4013
    %v4230 = vpack.c.b16 %v4018, %v4014
    %v4231 = vpack.c.b16 %v4019, %v4015
    %v4232 = vpack.c.b16 %v4020, %v4016
    %v4233 = vpack.c.b16 %v4025, %v4021
    %v4234 = vpack.c.b16 %v4026, %v4022
    %v4235 = vpack.c.b16 %v4027, %v4023
    %v4236 = vpack.c.b16 %v4028, %v4024
    %v4237 = vpack.c.b16 %v4033, %v4029
    %v4238 = vpack.c.b16 %v4034, %v4030
    %v4239 = vpack.c.b16 %v4035, %v4031
    %v4240 = vpack.c.b16 %v4036, %v4032
    %v4241 = vpack.c.b16 %v4041, %v4037
    %v4242 = vpack.c.b16 %v4042, %v4038
    %v4243 = vpack.c.b16 %v4043, %v4039
    %v4244 = vpack.c.b16 %v4044, %v4040
    %v4245 = vpack.c.b16 %v4049, %v4045
    %v4246 = vpack.c.b16 %v4050, %v4046
    %v4247 = vpack.c.b16 %v4051, %v4047
    %v4248 = vpack.c.b16 %v4052, %v4048
    %v4249 = vpack.c.b16 %v4057, %v4053
    %v4250 = vpack.c.b16 %v4058, %v4054
    %v4251 = vpack.c.b16 %v4059, %v4055
    %v4252 = vpack.c.b16 %v4060, %v4056
    %v4253 = vpack.c.b16 %v4065, %v4061
    %v4254 = vpack.c.b16 %v4066, %v4062
    %v4255 = vpack.c.b16 %v4067, %v4063
    %v4256 = vpack.c.b16 %v4068, %v4064
    %v4257 = vpack.c.b16 %v4073, %v4069
    %v4258 = vpack.c.b16 %v4074, %v4070
    %v4259 = vpack.c.b16 %v4075, %v4071
    %v4260 = vpack.c.b16 %v4076, %v4072
    %v4261 = vpack.c.b16 %v4081, %v4077
    %v4262 = vpack.c.b16 %v4082, %v4078
    %v4263 = vpack.c.b16 %v4083, %v4079
    %v4264 = vpack.c.b16 %v4084, %v4080
    %v4265 = vpack.c.b16 %v4089, %v4085
    %v4266 = vpack.c.b16 %v4090, %v4086
    %v4267 = vpack.c.b16 %v4091, %v4087
    %v4268 = vpack.c.b16 %v4092, %v4088
    %v4269 = vpack.c.b16 %v4097, %v4093
    %v4270 = vpack.c.b16 %v4098, %v4094
    %v4271 = vpack.c.b16 %v4099, %v4095
    %v4272 = vpack.c.b16 %v4100, %v4096
    %v4273 = vpack.c.b16 %v4105, %v4101
    %v4274 = vpack.c.b16 %v4106, %v4102
    %v4275 = vpack.c.b16 %v4107, %v4103
    %v4276 = vpack.c.b16 %v4108, %v4104
    %v4277 = vpack.c.b16 %v4113, %v4109
    %v4278 = vpack.c.b16 %v4114, %v4110
    %v4279 = vpack.c.b16 %v4115, %v4111
    %v4280 = vpack.c.b16 %v4116, %v4112
    %v4281 = vpack.c.b16 %v4121, %v4117
    %v4282 = vpack.c.b16 %v4122, %v4118
    %v4283 = vpack.c.b16 %v4123, %v4119
    %v4284 = vpack.c.b16 %v4124, %v4120
    %v4285 = vpack.c.b16 %v4129, %v4125
    %v4286 = vpack.c.b16 %v4130, %v4126
    %v4287 = vpack.c.b16 %v4131, %v4127
    %v4288 = vpack.c.b16 %v4132, %v4128
    %v4289 = vpack.c.b16 %v4137, %v4133
    %v4290 = vpack.c.b16 %v4138, %v4134
    %v4291 = vpack.c.b16 %v4139, %v4135
    %v4292 = vpack.c.b16 %v4140, %v4136
    %v4293 = vpack.c.b16 %v4145, %v4141
    %v4294 = vpack.c.b16 %v4146, %v4142
    %v4295 = vpack.c.b16 %v4147, %v4143
    %v4296 = vpack.c.b16 %v4148, %v4144
    %v4297 = vpack.c.b16 %v4153, %v4149
    %v4298 = vpack.c.b16 %v4154, %v4150
    %v4299 = vpack.c.b16 %v4155, %v4151
    %v4300 = vpack.c.b16 %v4156, %v4152
    %v4301 = vpack.c.b16 %v4161, %v4157
    %v4302 = vpack.c.b16 %v4162, %v4158
    %v4303 = vpack.c.b16 %v4163, %v4159
    %v4304 = vpack.c.b16 %v4164, %v4160
    %v4305 = vpack.c.b16 %v4169, %v4165
    %v4306 = vpack.c.b16 %v4170, %v4166
    %v4307 = vpack.c.b16 %v4171, %v4167
    %v4308 = vpack.c.b16 %v4172, %v4168
    %v4309 = vpack.c.b16 %v4177, %v4173
    %v4310 = vpack.c.b16 %v4178, %v4174
    %v4311 = vpack.c.b16 %v4179, %v4175
    %v4312 = vpack.c.b16 %v4180, %v4176
    %v4313 = vpack.c.b16 %v4185, %v4181
    %v4314 = vpack.c.b16 %v4186, %v4182
    %v4315 = vpack.c.b16 %v4187, %v4183
    %v4316 = vpack.c.b16 %v4188, %v4184
    %4445 = vmatprep.subr.bf16.mxu0 %v4190
    %4446 = vmatpush1.bf16.msra.mxu0 %v4189
    %4447 = vmatprep.subr.bf16.mxu0 %v4194
    %4448 = vmatpush1.bf16.msra.mxu0 %v4193
    %4449 = vmatprep.subr.bf16.mxu0 %v4198
    %4450 = vmatpush1.bf16.msra.mxu0 %v4197
    %4451 = vmatprep.subr.bf16.mxu0 %v4202
    %4452 = vmatpush1.bf16.msra.mxu0 %v4201
    %4453 = vmatprep.subr.bf16.mxu0 %v4206
    %4454 = vmatpush1.bf16.msra.mxu0 %v4205
    %4455 = vmatprep.subr.bf16.mxu0 %v4210
    %4456 = vmatpush1.bf16.msra.mxu0 %v4209
    %4457 = vmatprep.subr.bf16.mxu0 %v4214
    %4458 = vmatpush1.bf16.msra.mxu0 %v4213
    %4459 = vmatprep.subr.bf16.mxu0 %v4218
    %4460 = vmatpush1.bf16.msra.mxu0 %v4217
    %4461 = vmatprep.subr.bf16.mxu0 %v4222
    %4462 = vmatpush1.bf16.msra.mxu0 %v4221
    %4463 = vmatprep.subr.bf16.mxu0 %v4226
    %4464 = vmatpush1.bf16.msra.mxu0 %v4225
    %4465 = vmatprep.subr.bf16.mxu0 %v4230
    %4466 = vmatpush1.bf16.msra.mxu0 %v4229
    %4467 = vmatprep.subr.bf16.mxu0 %v4234
    %4468 = vmatpush1.bf16.msra.mxu0 %v4233
    %4469 = vmatprep.subr.bf16.mxu0 %v4238
    %4470 = vmatpush1.bf16.msra.mxu0 %v4237
    %4471 = vmatprep.subr.bf16.mxu0 %v4242
    %4472 = vmatpush1.bf16.msra.mxu0 %v4241
    %4473 = vmatprep.subr.bf16.mxu0 %v4246
    %4474 = vmatpush1.bf16.msra.mxu0 %v4245
    %4475 = vmatprep.subr.bf16.mxu0 %v4250
    %4476 = vmatpush1.bf16.msra.mxu0 %v4249
    %4477 = vmatprep.mubr.bf16.mxu0 %v3780
    %4478 = vmatmul.mubr.bf16.gmra.mrb[0].mxu0 %v3779
    %v4479 = vpop.f32.mrb[0].mxu0
    %v4480 = vadd.f32 %v3788, %v4479
    %v4481 = vpop.f32.mrb[0].mxu0
    %v4482 = vadd.f32 %v3792, %v4481
    %v4483 = vpop.f32.mrb[0].mxu0
    %v4484 = vpop.f32.mrb[0].mxu0
    %4485 = vdwg.mxu0
    %4486 = vmatprep.subr.bf16.mxu0 %v4254
    %4487 = vmatpush1.bf16.msra.mxu0 %v4253
    %4488 = vmatprep.subr.bf16.mxu0 %v4258
    %4489 = vmatpush1.bf16.msra.mxu0 %v4257
    %4490 = vmatprep.subr.bf16.mxu0 %v4262
    %4491 = vmatpush1.bf16.msra.mxu0 %v4261
    %4492 = vmatprep.subr.bf16.mxu0 %v4266
    %4493 = vmatpush1.bf16.msra.mxu0 %v4265
    %4494 = vmatprep.subr.bf16.mxu0 %v4270
    %4495 = vmatpush1.bf16.msra.mxu0 %v4269
    %4496 = vmatprep.subr.bf16.mxu0 %v4274
    %4497 = vmatpush1.bf16.msra.mxu0 %v4273
    %4498 = vmatprep.subr.bf16.mxu0 %v4278
    %4499 = vmatpush1.bf16.msra.mxu0 %v4277
    %4500 = vmatprep.subr.bf16.mxu0 %v4282
    %4501 = vmatpush1.bf16.msra.mxu0 %v4281
    %4502 = vmatprep.subr.bf16.mxu0 %v4286
    %4503 = vmatpush1.bf16.msra.mxu0 %v4285
    %4504 = vmatprep.subr.bf16.mxu0 %v4290
    %4505 = vmatpush1.bf16.msra.mxu0 %v4289
    %4506 = vmatprep.subr.bf16.mxu0 %v4294
    %4507 = vmatpush1.bf16.msra.mxu0 %v4293
    %4508 = vmatprep.subr.bf16.mxu0 %v4298
    %4509 = vmatpush1.bf16.msra.mxu0 %v4297
    %4510 = vmatprep.subr.bf16.mxu0 %v4302
    %4511 = vmatpush1.bf16.msra.mxu0 %v4301
    %4512 = vmatprep.subr.bf16.mxu0 %v4306
    %4513 = vmatpush1.bf16.msra.mxu0 %v4305
    %4514 = vmatprep.subr.bf16.mxu0 %v4310
    %4515 = vmatpush1.bf16.msra.mxu0 %v4309
    %4516 = vmatprep.subr.bf16.mxu0 %v4314
    %4517 = vmatpush1.bf16.msra.mxu0 %v4313
    %4518 = vmatprep.mubr.bf16.mxu0 %v3782
    %4519 = vmatmul.mubr.bf16.gmra.mrb[0].mxu0 %v3781
    %v4520 = vpop.f32.mrb[0].mxu0
    %v4521 = vadd.f32 %v4480, %v4520
    %v4522 = vpop.f32.mrb[0].mxu0
    %v4523 = vadd.f32 %v4482, %v4522
    %v4524 = vpop.f32.mrb[0].mxu0
    %v4525 = vpop.f32.mrb[0].mxu0
    %4526 = vdwg.mxu0
    %4527 = vmatprep.subr.bf16.mxu0 %v4192
    %4528 = vmatpush1.bf16.msra.mxu0 %v4191
    %4529 = vmatprep.subr.bf16.mxu0 %v4196
    %4530 = vmatpush1.bf16.msra.mxu0 %v4195
    %4531 = vmatprep.subr.bf16.mxu0 %v4200
    %4532 = vmatpush1.bf16.msra.mxu0 %v4199
    %4533 = vmatprep.subr.bf16.mxu0 %v4204
    %4534 = vmatpush1.bf16.msra.mxu0 %v4203
    %4535 = vmatprep.subr.bf16.mxu0 %v4208
    %4536 = vmatpush1.bf16.msra.mxu0 %v4207
    %4537 = vmatprep.subr.bf16.mxu0 %v4212
    %4538 = vmatpush1.bf16.msra.mxu0 %v4211
    %4539 = vmatprep.subr.bf16.mxu0 %v4216
    %4540 = vmatpush1.bf16.msra.mxu0 %v4215
    %4541 = vmatprep.subr.bf16.mxu0 %v4220
    %4542 = vmatpush1.bf16.msra.mxu0 %v4219
    %4543 = vmatprep.subr.bf16.mxu0 %v4224
    %4544 = vmatpush1.bf16.msra.mxu0 %v4223
    %4545 = vmatprep.subr.bf16.mxu0 %v4228
    %4546 = vmatpush1.bf16.msra.mxu0 %v4227
    %4547 = vmatprep.subr.bf16.mxu0 %v4232
    %4548 = vmatpush1.bf16.msra.mxu0 %v4231
    %4549 = vmatprep.subr.bf16.mxu0 %v4236
    %4550 = vmatpush1.bf16.msra.mxu0 %v4235
    %4551 = vmatprep.subr.bf16.mxu0 %v4240
    %4552 = vmatpush1.bf16.msra.mxu0 %v4239
    %4553 = vmatprep.subr.bf16.mxu0 %v4244
    %4554 = vmatpush1.bf16.msra.mxu0 %v4243
    %4555 = vmatprep.subr.bf16.mxu0 %v4248
    %4556 = vmatpush1.bf16.msra.mxu0 %v4247
    %4557 = vmatprep.subr.bf16.mxu0 %v4252
    %4558 = vmatpush1.bf16.msra.mxu0 %v4251
    %4559 = vmatprep.mubr.bf16.mxu0 %v3780
    %4560 = vmatmul.mubr.bf16.gmra.mrb[0].mxu0 %v3779
    %v4561 = vpop.f32.mrb[0].mxu0
    %v4562 = vadd.f32 %v3796, %v4561
    %v4563 = vpop.f32.mrb[0].mxu0
    %v4564 = vadd.f32 %v3800, %v4563
    %v4565 = vpop.f32.mrb[0].mxu0
    %v4566 = vpop.f32.mrb[0].mxu0
    %4567 = vdwg.mxu0
    %4568 = vmatprep.subr.bf16.mxu0 %v4256
    %4569 = vmatpush1.bf16.msra.mxu0 %v4255
    %4570 = vmatprep.subr.bf16.mxu0 %v4260
    %4571 = vmatpush1.bf16.msra.mxu0 %v4259
    %4572 = vmatprep.subr.bf16.mxu0 %v4264
    %4573 = vmatpush1.bf16.msra.mxu0 %v4263
    %4574 = vmatprep.subr.bf16.mxu0 %v4268
    %4575 = vmatpush1.bf16.msra.mxu0 %v4267
    %4576 = vmatprep.subr.bf16.mxu0 %v4272
    %4577 = vmatpush1.bf16.msra.mxu0 %v4271
    %4578 = vmatprep.subr.bf16.mxu0 %v4276
    %4579 = vmatpush1.bf16.msra.mxu0 %v4275
    %4580 = vmatprep.subr.bf16.mxu0 %v4280
    %4581 = vmatpush1.bf16.msra.mxu0 %v4279
    %4582 = vmatprep.subr.bf16.mxu0 %v4284
    %4583 = vmatpush1.bf16.msra.mxu0 %v4283
    %4584 = vmatprep.subr.bf16.mxu0 %v4288
    %4585 = vmatpush1.bf16.msra.mxu0 %v4287
    %4586 = vmatprep.subr.bf16.mxu0 %v4292
    %4587 = vmatpush1.bf16.msra.mxu0 %v4291
    %4588 = vmatprep.subr.bf16.mxu0 %v4296
    %4589 = vmatpush1.bf16.msra.mxu0 %v4295
    %4590 = vmatprep.subr.bf16.mxu0 %v4300
    %4591 = vmatpush1.bf16.msra.mxu0 %v4299
    %4592 = vmatprep.subr.bf16.mxu0 %v4304
    %4593 = vmatpush1.bf16.msra.mxu0 %v4303
    %4594 = vmatprep.subr.bf16.mxu0 %v4308
    %4595 = vmatpush1.bf16.msra.mxu0 %v4307
    %4596 = vmatprep.subr.bf16.mxu0 %v4312
    %4597 = vmatpush1.bf16.msra.mxu0 %v4311
    %4598 = vmatprep.subr.bf16.mxu0 %v4316
    %4599 = vmatpush1.bf16.msra.mxu0 %v4315
    %4600 = vmatprep.mubr.bf16.mxu0 %v3782
    %4601 = vmatmul.mubr.bf16.gmra.mrb[0].mxu0 %v3781
    %v4602 = vpop.f32.mrb[0].mxu0
    %v4603 = vadd.f32 %v4562, %v4602
    %v4604 = vpop.f32.mrb[0].mxu0
    %v4605 = vadd.f32 %v4564, %v4604
    %v4606 = vpop.f32.mrb[0].mxu0
    %v4607 = vpop.f32.mrb[0].mxu0
    %4608 = vdwg.mxu0
    %vm4609 = vcmp.gt.f32.partialorder %v4521, 0.0
    %vm4610 = vcmp.gt.f32.partialorder %v4523, 0.0
    %vm4611 = vcmp.gt.f32.partialorder %v4603, 0.0
    %vm4612 = vcmp.gt.f32.partialorder %v4605, 0.0
    %v4613 = vmin.f32 %v4521, 0.0
    %v4614 = vmin.f32 %v4523, 0.0
    %v4615 = vmin.f32 %v4603, 0.0
    %v4616 = vmin.f32 %v4605, 0.0
    %v4617 = vmul.f32 %v4613, 1.442695
    %v4618 = vpow.pop %v4617
    %v4619 = vmul.f32 %v4614, 1.442695
    %v4620 = vpow.pop %v4619
    %v4621 = vmul.f32 %v4615, 1.442695
    %v4622 = vpow.pop %v4621
    %v4623 = vmul.f32 %v4616, 1.442695
    %v4624 = vpow.pop %v4623
    %v4625 = vsub.f32 %v4618, 1.0
    %v4626 = vsub.f32 %v4620, 1.0
    %v4627 = vsub.f32 %v4622, 1.0
    %v4628 = vsub.f32 %v4624, 1.0
    %v4629 = vsel %vm4609, %v4521, %v4625
    %v4630 = vsel %vm4610, %v4523, %v4626
    %v4631 = vsel %vm4611, %v4603, %v4627
    %v4632 = vsel %vm4612, %v4605, %v4628
    %v4633 = vld [vmem:[%s11] sm:$0xff]
    %v4634 = vld [vmem:[%s11 + $0x8] sm:$0xff]
    %v4635 = vld [vmem:[%s11 + $0x10] sm:$0xff]
    %v4636 = vld [vmem:[%s11 + $0x18] sm:$0xff]
    %v4637 = vld [vmem:[%s11 + $0x20] sm:$0xff]
    %v4638 = vld [vmem:[%s11 + $0x28] sm:$0xff]
    %v4639 = vld [vmem:[%s11 + $0x30] sm:$0xff]
    %v4640 = vld [vmem:[%s11 + $0x38] sm:$0xff]
    %v4641 = vld [vmem:[%s11 + $0x40] sm:$0xff]
    %v4642 = vld [vmem:[%s11 + $0x48] sm:$0xff]
    %v4643 = vld [vmem:[%s11 + $0x50] sm:$0xff]
    %v4644 = vld [vmem:[%s11 + $0x58] sm:$0xff]
    %v4645 = vld [vmem:[%s11 + $0x60] sm:$0xff]
    %v4646 = vld [vmem:[%s11 + $0x68] sm:$0xff]
    %v4647 = vld [vmem:[%s11 + $0x70] sm:$0xff]
    %v4648 = vld [vmem:[%s11 + $0x78] sm:$0xff]
    %v4649 = vld [vmem:[%s11 + $0x80] sm:$0xff]
    %v4650 = vld [vmem:[%s11 + $0x88] sm:$0xff]
    %v4651 = vld [vmem:[%s11 + $0x90] sm:$0xff]
    %v4652 = vld [vmem:[%s11 + $0x98] sm:$0xff]
    %v4653 = vld [vmem:[%s11 + $0xa0] sm:$0xff]
    %v4654 = vld [vmem:[%s11 + $0xa8] sm:$0xff]
    %v4655 = vld [vmem:[%s11 + $0xb0] sm:$0xff]
    %v4656 = vld [vmem:[%s11 + $0xb8] sm:$0xff]
    %v4657 = vld [vmem:[%s11 + $0xc0] sm:$0xff]
    %v4658 = vld [vmem:[%s11 + $0xc8] sm:$0xff]
    %v4659 = vld [vmem:[%s11 + $0xd0] sm:$0xff]
    %v4660 = vld [vmem:[%s11 + $0xd8] sm:$0xff]
    %v4661 = vld [vmem:[%s11 + $0xe0] sm:$0xff]
    %v4662 = vld [vmem:[%s11 + $0xe8] sm:$0xff]
    %v4663 = vld [vmem:[%s11 + $0xf0] sm:$0xff]
    %v4664 = vld [vmem:[%s11 + $0xf8] sm:$0xff]
    %v4665 = vld [vmem:[%s11 + $0x100] sm:$0xff]
    %v4666 = vld [vmem:[%s11 + $0x108] sm:$0xff]
    %v4667 = vld [vmem:[%s11 + $0x110] sm:$0xff]
    %v4668 = vld [vmem:[%s11 + $0x118] sm:$0xff]
    %v4669 = vld [vmem:[%s11 + $0x120] sm:$0xff]
    %v4670 = vld [vmem:[%s11 + $0x128] sm:$0xff]
    %v4671 = vld [vmem:[%s11 + $0x130] sm:$0xff]
    %v4672 = vld [vmem:[%s11 + $0x138] sm:$0xff]
    %v4673 = vld [vmem:[%s11 + $0x140] sm:$0xff]
    %v4674 = vld [vmem:[%s11 + $0x148] sm:$0xff]
    %v4675 = vld [vmem:[%s11 + $0x150] sm:$0xff]
    %v4676 = vld [vmem:[%s11 + $0x158] sm:$0xff]
    %v4677 = vld [vmem:[%s11 + $0x160] sm:$0xff]
    %v4678 = vld [vmem:[%s11 + $0x168] sm:$0xff]
    %v4679 = vld [vmem:[%s11 + $0x170] sm:$0xff]
    %v4680 = vld [vmem:[%s11 + $0x178] sm:$0xff]
    %v4681 = vld [vmem:[%s11 + $0x180] sm:$0xff]
    %v4682 = vld [vmem:[%s11 + $0x188] sm:$0xff]
    %v4683 = vld [vmem:[%s11 + $0x190] sm:$0xff]
    %v4684 = vld [vmem:[%s11 + $0x198] sm:$0xff]
    %v4685 = vld [vmem:[%s11 + $0x1a0] sm:$0xff]
    %v4686 = vld [vmem:[%s11 + $0x1a8] sm:$0xff]
    %v4687 = vld [vmem:[%s11 + $0x1b0] sm:$0xff]
    %v4688 = vld [vmem:[%s11 + $0x1b8] sm:$0xff]
    %v4689 = vld [vmem:[%s11 + $0x1c0] sm:$0xff]
    %v4690 = vld [vmem:[%s11 + $0x1c8] sm:$0xff]
    %v4691 = vld [vmem:[%s11 + $0x1d0] sm:$0xff]
    %v4692 = vld [vmem:[%s11 + $0x1d8] sm:$0xff]
    %v4693 = vld [vmem:[%s11 + $0x1e0] sm:$0xff]
    %v4694 = vld [vmem:[%s11 + $0x1e8] sm:$0xff]
    %v4695 = vld [vmem:[%s11 + $0x1f0] sm:$0xff]
    %v4696 = vld [vmem:[%s11 + $0x1f8] sm:$0xff]
    %v4697 = vpack.c.bf16 %v4629, %v4629
    %v4698 = vpack.c.bf16 %v4630, %v4630
    %v4699 = vpack.c.bf16 %v4631, %v4631
    %v4700 = vpack.c.bf16 %v4632, %v4632
    %v4701 = vld [vmem:[%s12] sm:$0x3]
    %v4703 = vlaneseq
    %v4704 = vshrl.u32 %v4703, 7
    %v4705 = vsub.s32 0, %v4704
    %v4706 = vrot.slane %v4701, %v4705
    %v4707 = vlaneseq
    %v4708 = vshrl.u32 %v4707, 7
    %v4709 = vsub.s32 1, %v4708
    %v4710 = vrot.slane %v4701, %v4709
    %v4777 = vunpack.c.l.b16 %v4633
    %v4778 = vunpack.c.h.b16 %v4633
    %v4779 = vunpack.c.l.b16 %v4634
    %v4780 = vunpack.c.h.b16 %v4634
    %v4781 = vunpack.c.l.b16 %v4635
    %v4782 = vunpack.c.h.b16 %v4635
    %v4783 = vunpack.c.l.b16 %v4636
    %v4784 = vunpack.c.h.b16 %v4636
    %v4785 = vunpack.c.l.b16 %v4637
    %v4786 = vunpack.c.h.b16 %v4637
    %v4787 = vunpack.c.l.b16 %v4638
    %v4788 = vunpack.c.h.b16 %v4638
    %v4789 = vunpack.c.l.b16 %v4639
    %v4790 = vunpack.c.h.b16 %v4639
    %v4791 = vunpack.c.l.b16 %v4640
    %v4792 = vunpack.c.h.b16 %v4640
    %v4793 = vunpack.c.l.b16 %v4641
    %v4794 = vunpack.c.h.b16 %v4641
    %v4795 = vunpack.c.l.b16 %v4642
    %v4796 = vunpack.c.h.b16 %v4642
    %v4797 = vunpack.c.l.b16 %v4643
    %v4798 = vunpack.c.h.b16 %v4643
    %v4799 = vunpack.c.l.b16 %v4644
    %v4800 = vunpack.c.h.b16 %v4644
    %v4801 = vunpack.c.l.b16 %v4645
    %v4802 = vunpack.c.h.b16 %v4645
    %v4803 = vunpack.c.l.b16 %v4646
    %v4804 = vunpack.c.h.b16 %v4646
    %v4805 = vunpack.c.l.b16 %v4647
    %v4806 = vunpack.c.h.b16 %v4647
    %v4807 = vunpack.c.l.b16 %v4648
    %v4808 = vunpack.c.h.b16 %v4648
    %v4809 = vunpack.c.l.b16 %v4649
    %v4810 = vunpack.c.h.b16 %v4649
    %v4811 = vunpack.c.l.b16 %v4650
    %v4812 = vunpack.c.h.b16 %v4650
    %v4813 = vunpack.c.l.b16 %v4651
    %v4814 = vunpack.c.h.b16 %v4651
    %v4815 = vunpack.c.l.b16 %v4652
    %v4816 = vunpack.c.h.b16 %v4652
    %v4817 = vunpack.c.l.b16 %v4653
    %v4818 = vunpack.c.h.b16 %v4653
    %v4819 = vunpack.c.l.b16 %v4654
    %v4820 = vunpack.c.h.b16 %v4654
    %v4821 = vunpack.c.l.b16 %v4655
    %v4822 = vunpack.c.h.b16 %v4655
    %v4823 = vunpack.c.l.b16 %v4656
    %v4824 = vunpack.c.h.b16 %v4656
    %v4825 = vunpack.c.l.b16 %v4657
    %v4826 = vunpack.c.h.b16 %v4657
    %v4827 = vunpack.c.l.b16 %v4658
    %v4828 = vunpack.c.h.b16 %v4658
    %v4829 = vunpack.c.l.b16 %v4659
    %v4830 = vunpack.c.h.b16 %v4659
    %v4831 = vunpack.c.l.b16 %v4660
    %v4832 = vunpack.c.h.b16 %v4660
    %v4833 = vunpack.c.l.b16 %v4661
    %v4834 = vunpack.c.h.b16 %v4661
    %v4835 = vunpack.c.l.b16 %v4662
    %v4836 = vunpack.c.h.b16 %v4662
    %v4837 = vunpack.c.l.b16 %v4663
    %v4838 = vunpack.c.h.b16 %v4663
    %v4839 = vunpack.c.l.b16 %v4664
    %v4840 = vunpack.c.h.b16 %v4664
    %v4841 = vunpack.c.l.b16 %v4665
    %v4842 = vunpack.c.h.b16 %v4665
    %v4843 = vunpack.c.l.b16 %v4666
    %v4844 = vunpack.c.h.b16 %v4666
    %v4845 = vunpack.c.l.b16 %v4667
    %v4846 = vunpack.c.h.b16 %v4667
    %v4847 = vunpack.c.l.b16 %v4668
    %v4848 = vunpack.c.h.b16 %v4668
    %v4849 = vunpack.c.l.b16 %v4669
    %v4850 = vunpack.c.h.b16 %v4669
    %v4851 = vunpack.c.l.b16 %v4670
    %v4852 = vunpack.c.h.b16 %v4670
    %v4853 = vunpack.c.l.b16 %v4671
    %v4854 = vunpack.c.h.b16 %v4671
    %v4855 = vunpack.c.l.b16 %v4672
    %v4856 = vunpack.c.h.b16 %v4672
    %v4857 = vunpack.c.l.b16 %v4673
    %v4858 = vunpack.c.h.b16 %v4673
    %v4859 = vunpack.c.l.b16 %v4674
    %v4860 = vunpack.c.h.b16 %v4674
    %v4861 = vunpack.c.l.b16 %v4675
    %v4862 = vunpack.c.h.b16 %v4675
    %v4863 = vunpack.c.l.b16 %v4676
    %v4864 = vunpack.c.h.b16 %v4676
    %v4865 = vunpack.c.l.b16 %v4677
    %v4866 = vunpack.c.h.b16 %v4677
    %v4867 = vunpack.c.l.b16 %v4678
    %v4868 = vunpack.c.h.b16 %v4678
    %v4869 = vunpack.c.l.b16 %v4679
    %v4870 = vunpack.c.h.b16 %v4679
    %v4871 = vunpack.c.l.b16 %v4680
    %v4872 = vunpack.c.h.b16 %v4680
    %v4873 = vunpack.c.l.b16 %v4681
    %v4874 = vunpack.c.h.b16 %v4681
    %v4875 = vunpack.c.l.b16 %v4682
    %v4876 = vunpack.c.h.b16 %v4682
    %v4877 = vunpack.c.l.b16 %v4683
    %v4878 = vunpack.c.h.b16 %v4683
    %v4879 = vunpack.c.l.b16 %v4684
    %v4880 = vunpack.c.h.b16 %v4684
    %v4881 = vunpack.c.l.b16 %v4685
    %v4882 = vunpack.c.h.b16 %v4685
    %v4883 = vunpack.c.l.b16 %v4686
    %v4884 = vunpack.c.h.b16 %v4686
    %v4885 = vunpack.c.l.b16 %v4687
    %v4886 = vunpack.c.h.b16 %v4687
    %v4887 = vunpack.c.l.b16 %v4688
    %v4888 = vunpack.c.h.b16 %v4688
    %v4889 = vunpack.c.l.b16 %v4689
    %v4890 = vunpack.c.h.b16 %v4689
    %v4891 = vunpack.c.l.b16 %v4690
    %v4892 = vunpack.c.h.b16 %v4690
    %v4893 = vunpack.c.l.b16 %v4691
    %v4894 = vunpack.c.h.b16 %v4691
    %v4895 = vunpack.c.l.b16 %v4692
    %v4896 = vunpack.c.h.b16 %v4692
    %v4897 = vunpack.c.l.b16 %v4693
    %v4898 = vunpack.c.h.b16 %v4693
    %v4899 = vunpack.c.l.b16 %v4694
    %v4900 = vunpack.c.h.b16 %v4694
    %v4901 = vunpack.c.l.b16 %v4695
    %v4902 = vunpack.c.h.b16 %v4695
    %v4903 = vunpack.c.l.b16 %v4696
    %v4904 = vunpack.c.h.b16 %v4696
    %v4905 = vpack.c.b16 %v4779, %v4777
    %v4906 = vpack.c.b16 %v4780, %v4778
    %v4907 = vpack.c.b16 %v4783, %v4781
    %v4908 = vpack.c.b16 %v4784, %v4782
    %v4909 = vpack.c.b16 %v4787, %v4785
    %v4910 = vpack.c.b16 %v4788, %v4786
    %v4911 = vpack.c.b16 %v4791, %v4789
    %v4912 = vpack.c.b16 %v4792, %v4790
    %v4913 = vpack.c.b16 %v4795, %v4793
    %v4914 = vpack.c.b16 %v4796, %v4794
    %v4915 = vpack.c.b16 %v4799, %v4797
    %v4916 = vpack.c.b16 %v4800, %v4798
    %v4917 = vpack.c.b16 %v4803, %v4801
    %v4918 = vpack.c.b16 %v4804, %v4802
    %v4919 = vpack.c.b16 %v4807, %v4805
    %v4920 = vpack.c.b16 %v4808, %v4806
    %v4921 = vpack.c.b16 %v4811, %v4809
    %v4922 = vpack.c.b16 %v4812, %v4810
    %v4923 = vpack.c.b16 %v4815, %v4813
    %v4924 = vpack.c.b16 %v4816, %v4814
    %v4925 = vpack.c.b16 %v4819, %v4817
    %v4926 = vpack.c.b16 %v4820, %v4818
    %v4927 = vpack.c.b16 %v4823, %v4821
    %v4928 = vpack.c.b16 %v4824, %v4822
    %v4929 = vpack.c.b16 %v4827, %v4825
    %v4930 = vpack.c.b16 %v4828, %v4826
    %v4931 = vpack.c.b16 %v4831, %v4829
    %v4932 = vpack.c.b16 %v4832, %v4830
    %v4933 = vpack.c.b16 %v4835, %v4833
    %v4934 = vpack.c.b16 %v4836, %v4834
    %v4935 = vpack.c.b16 %v4839, %v4837
    %v4936 = vpack.c.b16 %v4840, %v4838
    %v4937 = vpack.c.b16 %v4843, %v4841
    %v4938 = vpack.c.b16 %v4844, %v4842
    %v4939 = vpack.c.b16 %v4847, %v4845
    %v4940 = vpack.c.b16 %v4848, %v4846
    %v4941 = vpack.c.b16 %v4851, %v4849
    %v4942 = vpack.c.b16 %v4852, %v4850
    %v4943 = vpack.c.b16 %v4855, %v4853
    %v4944 = vpack.c.b16 %v4856, %v4854
    %v4945 = vpack.c.b16 %v4859, %v4857
    %v4946 = vpack.c.b16 %v4860, %v4858
    %v4947 = vpack.c.b16 %v4863, %v4861
    %v4948 = vpack.c.b16 %v4864, %v4862
    %v4949 = vpack.c.b16 %v4867, %v4865
    %v4950 = vpack.c.b16 %v4868, %v4866
    %v4951 = vpack.c.b16 %v4871, %v4869
    %v4952 = vpack.c.b16 %v4872, %v4870
    %v4953 = vpack.c.b16 %v4875, %v4873
    %v4954 = vpack.c.b16 %v4876, %v4874
    %v4955 = vpack.c.b16 %v4879, %v4877
    %v4956 = vpack.c.b16 %v4880, %v4878
    %v4957 = vpack.c.b16 %v4883, %v4881
    %v4958 = vpack.c.b16 %v4884, %v4882
    %v4959 = vpack.c.b16 %v4887, %v4885
    %v4960 = vpack.c.b16 %v4888, %v4886
    %v4961 = vpack.c.b16 %v4891, %v4889
    %v4962 = vpack.c.b16 %v4892, %v4890
    %v4963 = vpack.c.b16 %v4895, %v4893
    %v4964 = vpack.c.b16 %v4896, %v4894
    %v4965 = vpack.c.b16 %v4899, %v4897
    %v4966 = vpack.c.b16 %v4900, %v4898
    %v4967 = vpack.c.b16 %v4903, %v4901
    %v4968 = vpack.c.b16 %v4904, %v4902
    %5033 = vmatprep.subr.bf16.mxu0 %v4906
    %5034 = vmatpush1.bf16.msra.mxu0 %v4905
    %5035 = vmatprep.subr.bf16.mxu0 %v4908
    %5036 = vmatpush1.bf16.msra.mxu0 %v4907
    %5037 = vmatprep.subr.bf16.mxu0 %v4910
    %5038 = vmatpush1.bf16.msra.mxu0 %v4909
    %5039 = vmatprep.subr.bf16.mxu0 %v4912
    %5040 = vmatpush1.bf16.msra.mxu0 %v4911
    %5041 = vmatprep.subr.bf16.mxu0 %v4914
    %5042 = vmatpush1.bf16.msra.mxu0 %v4913
    %5043 = vmatprep.subr.bf16.mxu0 %v4916
    %5044 = vmatpush1.bf16.msra.mxu0 %v4915
    %5045 = vmatprep.subr.bf16.mxu0 %v4918
    %5046 = vmatpush1.bf16.msra.mxu0 %v4917
    %5047 = vmatprep.subr.bf16.mxu0 %v4920
    %5048 = vmatpush1.bf16.msra.mxu0 %v4919
    %5049 = vmatprep.subr.bf16.mxu0 %v4922
    %5050 = vmatpush1.bf16.msra.mxu0 %v4921
    %5051 = vmatprep.subr.bf16.mxu0 %v4924
    %5052 = vmatpush1.bf16.msra.mxu0 %v4923
    %5053 = vmatprep.subr.bf16.mxu0 %v4926
    %5054 = vmatpush1.bf16.msra.mxu0 %v4925
    %5055 = vmatprep.subr.bf16.mxu0 %v4928
    %5056 = vmatpush1.bf16.msra.mxu0 %v4927
    %5057 = vmatprep.subr.bf16.mxu0 %v4930
    %5058 = vmatpush1.bf16.msra.mxu0 %v4929
    %5059 = vmatprep.subr.bf16.mxu0 %v4932
    %5060 = vmatpush1.bf16.msra.mxu0 %v4931
    %5061 = vmatprep.subr.bf16.mxu0 %v4934
    %5062 = vmatpush1.bf16.msra.mxu0 %v4933
    %5063 = vmatprep.subr.bf16.mxu0 %v4936
    %5064 = vmatpush1.bf16.msra.mxu0 %v4935
    %5065 = vmatprep.mubr.bf16.mxu0 %v4698
    %5066 = vmatmul.mubr.bf16.gmra.mrb[0].mxu0 %v4697
    %v5067 = vpop.f32.mrb[0].mxu0
    %v5068 = vadd.f32 %v4706, %v5067
    %v5069 = vpop.f32.mrb[0].mxu0
    %v5070 = vadd.f32 %v4710, %v5069
    %v5071 = vpop.f32.mrb[0].mxu0
    %v5072 = vpop.f32.mrb[0].mxu0
    %5073 = vdwg.mxu0
    %5074 = vmatprep.subr.bf16.mxu0 %v4938
    %5075 = vmatpush1.bf16.msra.mxu0 %v4937
    %5076 = vmatprep.subr.bf16.mxu0 %v4940
    %5077 = vmatpush1.bf16.msra.mxu0 %v4939
    %5078 = vmatprep.subr.bf16.mxu0 %v4942
    %5079 = vmatpush1.bf16.msra.mxu0 %v4941
    %5080 = vmatprep.subr.bf16.mxu0 %v4944
    %5081 = vmatpush1.bf16.msra.mxu0 %v4943
    %5082 = vmatprep.subr.bf16.mxu0 %v4946
    %5083 = vmatpush1.bf16.msra.mxu0 %v4945
    %5084 = vmatprep.subr.bf16.mxu0 %v4948
    %5085 = vmatpush1.bf16.msra.mxu0 %v4947
    %5086 = vmatprep.subr.bf16.mxu0 %v4950
    %5087 = vmatpush1.bf16.msra.mxu0 %v4949
    %5088 = vmatprep.subr.bf16.mxu0 %v4952
    %5089 = vmatpush1.bf16.msra.mxu0 %v4951
    %5090 = vmatprep.subr.bf16.mxu0 %v4954
    %5091 = vmatpush1.bf16.msra.mxu0 %v4953
    %5092 = vmatprep.subr.bf16.mxu0 %v4956
    %5093 = vmatpush1.bf16.msra.mxu0 %v4955
    %5094 = vmatprep.subr.bf16.mxu0 %v4958
    %5095 = vmatpush1.bf16.msra.mxu0 %v4957
    %5096 = vmatprep.subr.bf16.mxu0 %v4960
    %5097 = vmatpush1.bf16.msra.mxu0 %v4959
    %5098 = vmatprep.subr.bf16.mxu0 %v4962
    %5099 = vmatpush1.bf16.msra.mxu0 %v4961
    %5100 = vmatprep.subr.bf16.mxu0 %v4964
    %5101 = vmatpush1.bf16.msra.mxu0 %v4963
    %5102 = vmatprep.subr.bf16.mxu0 %v4966
    %5103 = vmatpush1.bf16.msra.mxu0 %v4965
    %5104 = vmatprep.subr.bf16.mxu0 %v4968
    %5105 = vmatpush1.bf16.msra.mxu0 %v4967
    %5106 = vmatprep.mubr.bf16.mxu0 %v4700
    %5107 = vmatmul.mubr.bf16.gmra.mrb[0].mxu0 %v4699
    %v5108 = vpop.f32.mrb[0].mxu0
    %v5109 = vadd.f32 %v5068, %v5108
    %v5110 = vpop.f32.mrb[0].mxu0
    %v5111 = vadd.f32 %v5070, %v5110
    %v5112 = vpop.f32.mrb[0].mxu0
    %v5113 = vpop.f32.mrb[0].mxu0
    %5114 = vdwg.mxu0
    %vm5115 = vcmp.gt.f32.partialorder %v5109, 0.0
    %vm5116 = vcmp.gt.f32.partialorder %v5111, 0.0
    %v5117 = vmin.f32 %v5109, 0.0
    %v5118 = vmin.f32 %v5111, 0.0
    %v5119 = vmul.f32 %v5117, 1.442695
    %v5120 = vpow.pop %v5119
    %v5121 = vmul.f32 %v5118, 1.442695
    %v5122 = vpow.pop %v5121
    %v5123 = vsub.f32 %v5120, 1.0
    %v5124 = vsub.f32 %v5122, 1.0
    %v5125 = vsel %vm5115, %v5109, %v5123
    %v5126 = vsel %vm5116, %v5111, %v5124
    %v5127 = vld [vmem:[%s13] sm:$0xf]
    %v5128 = vld [vmem:[%s13 + $0x4] sm:$0xf]
    %v5129 = vld [vmem:[%s13 + $0x8] sm:$0xf]
    %v5130 = vld [vmem:[%s13 + $0xc] sm:$0xf]
    %v5131 = vld [vmem:[%s13 + $0x10] sm:$0xf]
    %v5132 = vld [vmem:[%s13 + $0x14] sm:$0xf]
    %v5133 = vld [vmem:[%s13 + $0x18] sm:$0xf]
    %v5134 = vld [vmem:[%s13 + $0x1c] sm:$0xf]
    %v5135 = vld [vmem:[%s13 + $0x20] sm:$0xf]
    %v5136 = vld [vmem:[%s13 + $0x24] sm:$0xf]
    %v5137 = vld [vmem:[%s13 + $0x28] sm:$0xf]
    %v5138 = vld [vmem:[%s13 + $0x2c] sm:$0xf]
    %v5139 = vld [vmem:[%s13 + $0x30] sm:$0xf]
    %v5140 = vld [vmem:[%s13 + $0x34] sm:$0xf]
    %v5141 = vld [vmem:[%s13 + $0x38] sm:$0xf]
    %v5142 = vld [vmem:[%s13 + $0x3c] sm:$0xf]
    %v5143 = vld [vmem:[%s13 + $0x40] sm:$0xf]
    %v5144 = vld [vmem:[%s13 + $0x44] sm:$0xf]
    %v5145 = vld [vmem:[%s13 + $0x48] sm:$0xf]
    %v5146 = vld [vmem:[%s13 + $0x4c] sm:$0xf]
    %v5147 = vld [vmem:[%s13 + $0x50] sm:$0xf]
    %v5148 = vld [vmem:[%s13 + $0x54] sm:$0xf]
    %v5149 = vld [vmem:[%s13 + $0x58] sm:$0xf]
    %v5150 = vld [vmem:[%s13 + $0x5c] sm:$0xf]
    %v5151 = vld [vmem:[%s13 + $0x60] sm:$0xf]
    %v5152 = vld [vmem:[%s13 + $0x64] sm:$0xf]
    %v5153 = vld [vmem:[%s13 + $0x68] sm:$0xf]
    %v5154 = vld [vmem:[%s13 + $0x6c] sm:$0xf]
    %v5155 = vld [vmem:[%s13 + $0x70] sm:$0xf]
    %v5156 = vld [vmem:[%s13 + $0x74] sm:$0xf]
    %v5157 = vld [vmem:[%s13 + $0x78] sm:$0xf]
    %v5158 = vld [vmem:[%s13 + $0x7c] sm:$0xf]
    %v5159 = vpack.c.bf16 %v5125, %v5125
    %v5160 = vpack.c.bf16 %v5126, %v5126
    %v5161 = vld [vmem:[%s14] sm:$0x1]
    %v5163 = vlaneseq
    %v5164 = vshrl.u32 %v5163, 7
    %v5165 = vsub.s32 0, %v5164
    %v5166 = vrot.slane %v5161, %v5165
    %v5200 = vunpack.c.l.b16 %v5127
    %v5201 = vunpack.c.l.b16 %v5128
    %v5202 = vunpack.c.l.b16 %v5129
    %v5203 = vunpack.c.l.b16 %v5130
    %v5204 = vunpack.c.l.b16 %v5131
    %v5205 = vunpack.c.l.b16 %v5132
    %v5206 = vunpack.c.l.b16 %v5133
    %v5207 = vunpack.c.l.b16 %v5134
    %v5208 = vunpack.c.l.b16 %v5135
    %v5209 = vunpack.c.l.b16 %v5136
    %v5210 = vunpack.c.l.b16 %v5137
    %v5211 = vunpack.c.l.b16 %v5138
    %v5212 = vunpack.c.l.b16 %v5139
    %v5213 = vunpack.c.l.b16 %v5140
    %v5214 = vunpack.c.l.b16 %v5141
    %v5215 = vunpack.c.l.b16 %v5142
    %v5216 = vunpack.c.l.b16 %v5143
    %v5217 = vunpack.c.l.b16 %v5144
    %v5218 = vunpack.c.l.b16 %v5145
    %v5219 = vunpack.c.l.b16 %v5146
    %v5220 = vunpack.c.l.b16 %v5147
    %v5221 = vunpack.c.l.b16 %v5148
    %v5222 = vunpack.c.l.b16 %v5149
    %v5223 = vunpack.c.l.b16 %v5150
    %v5224 = vunpack.c.l.b16 %v5151
    %v5225 = vunpack.c.l.b16 %v5152
    %v5226 = vunpack.c.l.b16 %v5153
    %v5227 = vunpack.c.l.b16 %v5154
    %v5228 = vunpack.c.l.b16 %v5155
    %v5229 = vunpack.c.l.b16 %v5156
    %v5230 = vunpack.c.l.b16 %v5157
    %v5231 = vunpack.c.l.b16 %v5158
    %v5232 = vpack.c.b16 %v5201, %v5200
    %v5233 = vpack.c.b16 %v5203, %v5202
    %v5234 = vpack.c.b16 %v5205, %v5204
    %v5235 = vpack.c.b16 %v5207, %v5206
    %v5236 = vpack.c.b16 %v5209, %v5208
    %v5237 = vpack.c.b16 %v5211, %v5210
    %v5238 = vpack.c.b16 %v5213, %v5212
    %v5239 = vpack.c.b16 %v5215, %v5214
    %v5240 = vpack.c.b16 %v5217, %v5216
    %v5241 = vpack.c.b16 %v5219, %v5218
    %v5242 = vpack.c.b16 %v5221, %v5220
    %v5243 = vpack.c.b16 %v5223, %v5222
    %v5244 = vpack.c.b16 %v5225, %v5224
    %v5245 = vpack.c.b16 %v5227, %v5226
    %v5246 = vpack.c.b16 %v5229, %v5228
    %v5247 = vpack.c.b16 %v5231, %v5230
    %5264 = vmatprep.subr.bf16.mxu0 0
    %5265 = vmatpush1.bf16.msra.mxu0 %v5232
    %5266 = vmatprep.subr.bf16.mxu0 0
    %5267 = vmatpush1.bf16.msra.mxu0 %v5233
    %5268 = vmatprep.subr.bf16.mxu0 0
    %5269 = vmatpush1.bf16.msra.mxu0 %v5234
    %5270 = vmatprep.subr.bf16.mxu0 0
    %5271 = vmatpush1.bf16.msra.mxu0 %v5235
    %5272 = vmatprep.subr.bf16.mxu0 0
    %5273 = vmatpush1.bf16.msra.mxu0 %v5236
    %5274 = vmatprep.subr.bf16.mxu0 0
    %5275 = vmatpush1.bf16.msra.mxu0 %v5237
    %5276 = vmatprep.subr.bf16.mxu0 0
    %5277 = vmatpush1.bf16.msra.mxu0 %v5238
    %5278 = vmatprep.subr.bf16.mxu0 0
    %5279 = vmatpush1.bf16.msra.mxu0 %v5239
    %5280 = vmatprep.subr.bf16.mxu0 0
    %5281 = vmatpush1.bf16.msra.mxu0 %v5240
    %5282 = vmatprep.subr.bf16.mxu0 0
    %5283 = vmatpush1.bf16.msra.mxu0 %v5241
    %5284 = vmatprep.subr.bf16.mxu0 0
    %5285 = vmatpush1.bf16.msra.mxu0 %v5242
    %5286 = vmatprep.subr.bf16.mxu0 0
    %5287 = vmatpush1.bf16.msra.mxu0 %v5243
    %5288 = vmatprep.subr.bf16.mxu0 0
    %5289 = vmatpush1.bf16.msra.mxu0 %v5244
    %5290 = vmatprep.subr.bf16.mxu0 0
    %5291 = vmatpush1.bf16.msra.mxu0 %v5245
    %5292 = vmatprep.subr.bf16.mxu0 0
    %5293 = vmatpush1.bf16.msra.mxu0 %v5246
    %5294 = vmatprep.subr.bf16.mxu0 0
    %5295 = vmatpush1.bf16.msra.mxu0 %v5247
    %5296 = vmatprep.mubr.bf16.mxu0 %v5160
    %5297 = vmatmul.mubr.bf16.gmra.mrb[0].mxu0 %v5159
    %v5298 = vpop.f32.mrb[0].mxu0
    %v5299 = vadd.f32 %v5166, %v5298
    %v5300 = vpop.f32.mrb[0].mxu0
    %v5301 = vpop.f32.mrb[0].mxu0
    %v5302 = vpop.f32.mrb[0].mxu0
    %5303 = vdwg.mxu0
    %vm5304 = vcmask 74752
    %v5305 = vsel %vm5304, %v5299, -inf
    %5306 = vmax.xlane.f32.xlu0 %v5305
    %v5307 = vpop.xlane.xlu0 %5306
    %v5308 = vsub.f32 %v5299, %v5307
    %v5309 = vmul.f32 %v5308, 1.442695
    %v5310 = vpow.pop %v5309
    %v5311 = vsel %vm5304, %v5310, 0.0
    %5312 = vadd.xlane.f32.xlu0 %v5311
    %v5313 = vpop.xlane.xlu0 %5312
    %v5314 = vlog2.pop %v5313
    %v5315 = vmul.f32 %v5314, 0.6931472
    %v5316 = vsub.f32 %v5308, %v5315
    %5317 = vst.msk [vmem:[#allocation4] sm:$0x3] %vm5304, %v5316
    // Predicated region
    $region62: #{poolnet_forward.7} parent=1 // pred_check
      _
    $region63: #{poolnet_forward.7} parent=1 // pred_check_branch
      %5319 = sbr.rel (0) target = $region65
    $region64: #{poolnet_forward.7} parent=1 // pred_region
      %s5321 = ssub.s32 32, 32
      %5322 = vsyncadd [#allocation5], %s5321
      %s5324 = sshll.u32 [#allocation4], 4
      %s5325 = int_to_ptr.vmem [resolvable:$true] %s5324
      %5327 = dma.vmem_to_hbm [thread:$0]  %s5325, 32, %s15, [#allocation5]
    $region65: #{poolnet_forward.7} parent=1 // pred_fallthru
      _
    // Predicated region
    $region66: #{poolnet_forward.7} parent=1 // pred_check
      _
    $region67: #{poolnet_forward.7} parent=1 // pred_check_branch
      %5329 = sbr.rel (0) target = $region69
    $region68: #{poolnet_forward.7} parent=1 // pred_region
      %5330 = dma.done [#allocation5], 32
    $region69: #{poolnet_forward.7} parent=1 // pred_fallthru
      _
    %5331 = vsyncpa [#allocation5], 1

</llo_original>
